<compile_context>
chip_gen: v7x
topology: tpu7x:2x2x1
jax: 0.10.0
libtpu: 0.0.40
codegen_flags: <defaults>
</compile_context>

<pallas_src>
import functools

import jax
import jax.numpy as jnp
import numpy as np
from jax import lax
from jax.experimental import pallas as pl
from jax.experimental.pallas import tpu as pltpu


# --------------------------------- kernel ---------------------------------- #

def _cnnet_kernel(bp, n_wb,
                  pat_ref, w1_ref, w2_ref, wf1_ref, wf2_ref, wf3_ref,
                  wfab_ref, b_ref, out_ref):
    """Fully fused CNNet forward for both siamese branches (single invocation).

    Row layouts (all 2-D, channels on the lane axis, batch zero-padded to bp=8k;
    padded batch rows carry tanh(bias) garbage but every op is row-wise and the
    wrapper slices them off):
      pats rows      : (pool-tap w, pi, pj, b)  -> 4 contiguous blocks of sp rows
      p1 rows        : (pi, pj, b), row = (pi*6 + pj)*bp + b     (6x6 pooled map)
      conv2 acc rows : (q = oi*6 + oj, b), q in [0, 22)
      fc stack       : bp rows (8-sublane aligned)
    """
    f32, bf16 = jnp.float32, jnp.bfloat16
    sp = 36 * bp           # rows per conv1 pool-tap block (6*6 pooled positions x bp)
    acc_rows = 22 * bp     # conv2 accumulator rows; valid q have q % 6 < 4, q // 6 < 4

    logits = []
    for br in range(2):
        wi = min(br, n_wb - 1)          # weight_sharing=True -> both branches use set 0
        ball = b_ref[wi]                # (8, 128) f32 (one vreg): all biases packed
        b1, b2 = ball[0:1, 0:32], ball[1:2, 0:64]
        bf1, bf2 = ball[2:3, 0:120], ball[3:4, 0:84]
        bf3 = ball[4:5, :]              # fc3_0 bias, zero-padded to 128 lanes

        # ---- conv1 (1->32, k=3): ONE (4*sp, 9)@(9, 32) bf16 dot covers all 4 taps.
        a1 = jnp.dot(pat_ref[br], w1_ref[wi], preferred_element_type=f32)   # (4*sp, 32)
        # 2x2 maxpool across the taps; tanh deferred past the max (tanh monotone, so
        # max(tanh(x + b)) == tanh(max(x) + b) — exactly the reference semantics).
        m1 = jnp.maximum(jnp.maximum(a1[0:sp], a1[sp:2 * sp]),
                         jnp.maximum(a1[2 * sp:3 * sp], a1[3 * sp:4 * sp]))
        p1 = jnp.tanh(jnp.tanh(m1 + b1))                                     # (sp, 32) f32

        # ---- conv2 (32->64, k=3): 9 shifted-LHS matmul accumulations.  Slicing the
        # LHS (shift is a multiple of bp=8 -> free aligned view) means we only compute
        # the 22*bp rows that are actually consumed downstream.
        acc2 = None
        for s in range(9):                               # s = di*3 + dj
            di, dj = s // 3, s % 3
            shift = (di * 6 + dj) * bp
            lhs = p1[shift:shift + acc_rows].astype(bf16)
            t = jnp.dot(lhs, w2_ref[wi, s], preferred_element_type=f32)      # (22*bp, 64)
            acc2 = t if acc2 is None else acc2 + t
        # NOTE: rows q in {4,5,10,11,16,17} of acc2 are wrap-around garbage; the 2x2
        # pool below only reads pos = (2*qi+a)*6 + (2*qj+c) with pos%6 < 4, pos//6 < 4,
        # so they are never consumed.

        # ---- 2x2 maxpool (tanh deferred again) + fc1 fused into ONE K=256 dot on
        # the lane-concat of the 4 pooled (bp, 64) blocks (feature index = q*64 + c;
        # wf1 is pre-permuted in prepare_params to match).
        blocks = []
        for qi in range(2):
            for qj in range(2):
                blk = None
                for a_ in range(2):
                    for c_ in range(2):
                        pos = (2 * qi + a_) * 6 + (2 * qj + c_)
                        piece = acc2[pos * bp:(pos + 1) * bp]                # (bp, 64)
                        blk = piece if blk is None else jnp.maximum(blk, piece)
                blocks.append(blk + b2)
        feat = jnp.tanh(jnp.tanh(jnp.concatenate(blocks, axis=-1)))          # (bp, 256)

        h3 = jnp.tanh(jnp.dot(feat.astype(bf16), wf1_ref[wi],
                              preferred_element_type=f32) + bf1)             # (bp, 120)
        h4 = jnp.tanh(jnp.dot(h3.astype(bf16), wf2_ref[wi],
                              preferred_element_type=f32) + bf2)             # (bp, 84)
        # fc3_0 (shared by both branches, as in the reference forward).  Weight and
        # bias are zero-padded to 128 output lanes so the store below is a full,
        # unmasked (bp, 128) vst; lanes >= 10 are exactly zero.
        logit = jnp.dot(h4.astype(bf16), wf3_ref[...],
                        preferred_element_type=f32) + bf3                    # (bp, 128)
        logits.append(logit)

    # final fc3 on concat(out1, out2), split-weight form (no lane concat); split
    # weights + bias are zero-padded to 128 lanes -> lanes >= 2 of fin are zero.
    bfc = b_ref[0][5:6, :]
    fin = (jnp.dot(logits[0][:, 0:10].astype(jnp.bfloat16), wfab_ref[0],
                   preferred_element_type=f32)
           + jnp.dot(logits[1][:, 0:10].astype(jnp.bfloat16), wfab_ref[1],
                     preferred_element_type=f32)
           + bfc)                                                            # (bp, 128)

    # Lane/sublane-dense output: three full (bp, 128) unmasked stores, one writeback.
    out_ref[0] = logits[0]
    out_ref[1] = logits[1]
    out_ref[2] = fin


# ------------------------------ input layout -------------------------------- #

def _conv1_pool_patches(img, bp):
    """(B, 14, 14) -> (4*36*bp, 9): conv1 im2col rows ordered (w, pi, pj, b).

    w = 2*wi + wj indexes the 2x2 maxpool tap; rows inside block w are the conv1
    output at spatial (2*pi + wi, 2*pj + wj).  Batch is zero-padded to bp (a multiple
    of 8) so every downstream row block stays sublane-aligned.  This is a one-time,
    fully fusable XLA re-layout of the tiny raw input; no inter-layer glue remains.
    """
    b = img.shape[0]
    pats = jnp.stack([img[:, kh:kh + 12, kw:kw + 12]
                      for kh in range(3) for kw in range(3)], axis=-1)  # (B,12,12,9)
    pats = pats.reshape(b, 6, 2, 6, 2, 9)            # (b, pi, wi, pj, wj, k)
    pats = pats.transpose(2, 4, 1, 3, 0, 5)          # (wi, wj, pi, pj, b, k)
    pats = pats.reshape(4, 6, 6, b, 9)
    pats = jnp.pad(pats, ((0, 0), (0, 0), (0, 0), (0, bp - b), (0, 0)))
    return pats.reshape(4 * 36 * bp, 9)


# ----------------------------- forward wrapper ------------------------------ #

def cnnet_forward_prepared(prep, x):
    """x: (B, 2, 14, 14) float32. Returns (out1 (B,10), out2 (B,10), out (B,2))."""
    b = x.shape[0]
    bp = ((b + 7) // 8) * 8
    n_wb = prep['w1'].shape[0]
    pats = jnp.stack([_conv1_pool_patches(x[:, 0], bp),
                      _conv1_pool_patches(x[:, 1], bp)], axis=0).astype(jnp.bfloat16)

    vmem = pl.BlockSpec(memory_space=pltpu.MemorySpace.VMEM)
    packed = pl.pallas_call(
        functools.partial(_cnnet_kernel, bp, n_wb),
        out_shape=jax.ShapeDtypeStruct((3, bp, 128), jnp.float32),
        in_specs=[vmem] * 8,
        out_specs=vmem,
    )(pats, prep['w1'], prep['w2'], prep['wf1'], prep['wf2'],
      prep['wf3'], prep['wfab'], prep['biases'])
    return packed[0, :b, 0:10], packed[1, :b, 0:10], packed[2, :b, 0:2]


def prepare_params(params, weight_sharing=False):
    """One-time weight re-layout into matmul-ready bf16 blocks (outside jit)."""
    def f(name):
        return np.asarray(params[name], np.float32)

    n_wb = 1 if weight_sharing else 2       # don't ship duplicate weights when sharing
    w1, w2, wf1, wf2, biases = [], [], [], [], []
    f3w, f3b = f('fc3_0_w'), f('fc3_0_b')   # fc3_0 is used for BOTH branches
    fcw, fcb = f('fc3_w'), f('fc3_b')
    for i in range(n_wb):
        c1w, c1b = f(f'conv1_{i}_w'), f(f'conv1_{i}_b')
        c2w, c2b = f(f'conv2_{i}_w'), f(f'conv2_{i}_b')
        f1w, f1b = f(f'fc1_{i}_w'), f(f'fc1_{i}_b')
        f2w, f2b = f(f'fc2_{i}_w'), f(f'fc2_{i}_b')
        w1.append(c1w.reshape(32, 9).T)                                  # (9, 32)
        w2.append(c2w.transpose(2, 3, 1, 0).reshape(9, 32, 64))          # (s, ci, co)
        # fc1 flatten order (PyTorch NCHW): idx = c*4 + qi*2 + qj; kernel feeds q*64+c.
        wf1.append(f1w.reshape(120, 64, 4).transpose(2, 1, 0).reshape(256, 120))
        wf2.append(f2w.T)                                                # (120, 84)
        bb = np.zeros((8, 128), np.float32)                              # packed biases
        bb[0, :32], bb[1, :64], bb[2, :120], bb[3, :84] = c1b, c2b, f1b, f2b
        bb[4, :10], bb[5, :2] = f3b, fcb
        biases.append(bb)

    wf3 = np.zeros((84, 128), np.float32)                # zero-pad to 128 output lanes
    wf3[:, :10] = f3w.T
    wfab = np.zeros((2, 10, 128), np.float32)            # final fc3, split + padded
    wfab[0, :, :2] = fcw[:, :10].T
    wfab[1, :, :2] = fcw[:, 10:].T

    bf = lambda a: jnp.asarray(a, jnp.bfloat16)
    return {
        'w1': bf(np.stack(w1)), 'w2': bf(np.stack(w2)),
        'wf1': bf(np.stack(wf1)), 'wf2': bf(np.stack(wf2)),
        'wf3': bf(wf3), 'wfab': bf(wfab),
        'biases': jnp.asarray(np.stack(biases), jnp.float32),
    }


# -------------------------- deterministic parameters ------------------------ #

def init_params(key):
    # PyTorch-style parameter shapes (Conv2d: OIHW, Linear: (out, in)).
    # fc3_1 exists in the module but is unused in forward(), so it is omitted.
    spec = {
        'conv1_0_w': ((32, 1, 3, 3), 9),    'conv1_0_b': ((32,), 9),
        'conv2_0_w': ((64, 32, 3, 3), 288), 'conv2_0_b': ((64,), 288),
        'fc1_0_w': ((120, 256), 256),       'fc1_0_b': ((120,), 256),
        'fc2_0_w': ((84, 120), 120),        'fc2_0_b': ((84,), 120),
        'fc3_0_w': ((10, 84), 84),          'fc3_0_b': ((10,), 84),
        'conv1_1_w': ((32, 1, 3, 3), 9),    'conv1_1_b': ((32,), 9),
        'conv2_1_w': ((64, 32, 3, 3), 288), 'conv2_1_b': ((64,), 288),
        'fc1_1_w': ((120, 256), 256),       'fc1_1_b': ((120,), 256),
        'fc2_1_w': ((84, 120), 120),        'fc2_1_b': ((84,), 120),
        'fc3_w': ((2, 20), 20),             'fc3_b': ((2,), 20),
    }
    keys = jax.random.split(key, len(spec))
    params = {}
    for k, (name, (shape, fan_in)) in zip(keys, spec.items()):
        bound = 1.0 / np.sqrt(fan_in)
        params[name] = jax.random.uniform(k, shape, jnp.float32, -bound, bound)
    return params


# ------------------------------ pure-JAX reference -------------------------- #

def _conv_ref(x, w, b):
    y = lax.conv_general_dilated(
        x, w, (1, 1), 'VALID',
        dimension_numbers=('NCHW', 'OIHW', 'NCHW'),
        precision=lax.Precision.HIGHEST)
    return y + b.reshape(1, -1, 1, 1)


def _maxpool_ref(x):
    return lax.reduce_window(x, -jnp.inf, lax.max, (1, 1, 2, 2), (1, 1, 2, 2),
                             'VALID')


def _branch_ref(x, c1w, c1b, c2w, c2b, f1w, f1b, f2w, f2b, f3w, f3b):
    h = jnp.tanh(_conv_ref(x, c1w, c1b))
    h = jnp.tanh(_maxpool_ref(h))
    h = jnp.tanh(_conv_ref(h, c2w, c2b))
    h = jnp.tanh(_maxpool_ref(h))
    h = h.reshape(h.shape[0], -1)
    h = jnp.tanh(jnp.dot(h, f1w.T, precision=lax.Precision.HIGHEST) + f1b)
    h = jnp.tanh(jnp.dot(h, f2w.T, precision=lax.Precision.HIGHEST) + f2b)
    return jnp.dot(h, f3w.T, precision=lax.Precision.HIGHEST) + f3b


def cnnet_ref(params, x, weight_sharing=False):
    B = x.shape[0]
    in1 = x[:, 0].reshape(B, 1, 14, 14)
    in2 = x[:, 1].reshape(B, 1, 14, 14)
    out1 = _branch_ref(in1, params['conv1_0_w'], params['conv1_0_b'],
                       params['conv2_0_w'], params['conv2_0_b'],
                       params['fc1_0_w'], params['fc1_0_b'],
                       params['fc2_0_w'], params['fc2_0_b'],
                       params['fc3_0_w'], params['fc3_0_b'])
    sfx = '0' if weight_sharing else '1'
    out2 = _branch_ref(in2, params[f'conv1_{sfx}_w'], params[f'conv1_{sfx}_b'],
                       params[f'conv2_{sfx}_w'], params[f'conv2_{sfx}_b'],
                       params[f'fc1_{sfx}_w'], params[f'fc1_{sfx}_b'],
                       params[f'fc2_{sfx}_w'], params[f'fc2_{sfx}_b'],
                       params['fc3_0_w'], params['fc3_0_b'])
    concat = jnp.concatenate([out1, out2], axis=1)
    out = jnp.dot(concat, params['fc3_w'].T,
                  precision=lax.Precision.HIGHEST) + params['fc3_b']
    return out1, out2, out


# ------------------------------------ main ---------------------------------- #

if __name__ == "__main__":
    key = jax.random.PRNGKey(0)
    k_params, k_x = jax.random.split(key)

    params = init_params(k_params)
    B = 2
    x = jax.random.normal(k_x, (B, 2, 14, 14), jnp.float32)

    fwd = jax.jit(cnnet_forward_prepared)

    # Kernel matmuls use explicit bf16 operands with f32 accumulation; the tolerance
    # is sized for that vs. the fp32 HIGHEST-precision reference.
    for ws in (False, True):
        prep = prepare_params(params, weight_sharing=ws)     # one-time, outside jit
        out1, out2, out = fwd(prep, x)
        jax.block_until_ready((out1, out2, out))

        r1, r2, r = cnnet_ref(params, x, weight_sharing=ws)
        np.testing.assert_allclose(np.asarray(out1), np.asarray(r1), rtol=2e-2, atol=2e-2)
        np.testing.assert_allclose(np.asarray(out2), np.asarray(r2), rtol=2e-2, atol=2e-2)
        np.testing.assert_allclose(np.asarray(out), np.asarray(r), rtol=2e-2, atol=2e-2)
        assert out1.shape == (B, 10) and out2.shape == (B, 10) and out.shape == (B, 2)

    print("KERNEL_OK")
</pallas_src>

<mosaic_0001>
module attributes {stable_mosaic.version = 11 : i64} {
  func.func @_cnnet_kernel(%arg0: memref<2x1152x9xbf16, #tpu.memory_space<vmem>>, %arg1: memref<2x9x32xbf16, #tpu.memory_space<vmem>>, %arg2: memref<2x9x32x64xbf16, #tpu.memory_space<vmem>>, %arg3: memref<2x256x120xbf16, #tpu.memory_space<vmem>>, %arg4: memref<2x120x84xbf16, #tpu.memory_space<vmem>>, %arg5: memref<84x128xbf16, #tpu.memory_space<vmem>>, %arg6: memref<2x10x128xbf16, #tpu.memory_space<vmem>>, %arg7: memref<2x8x128xf32, #tpu.memory_space<vmem>>, %arg8: memref<3x8x128xf32, #tpu.memory_space<vmem>>) attributes {dimension_semantics = [], scalar_prefetch = 0 : i64, scratch_operands = 0 : i64, tpu.core_type = #tpu.core_type<tc>} {
    %c0 = arith.constant 0 : index
    %c0_0 = arith.constant 0 : index
    %c0_1 = arith.constant 0 : index
    %0 = vector.load %arg7[%c0, %c0_0, %c0_1] : memref<2x8x128xf32, #tpu.memory_space<vmem>>, vector<1x8x128xf32>
    %1 = vector.shape_cast %0 : vector<1x8x128xf32> to vector<8x128xf32>
    %2 = vector.extract_strided_slice %1 {offsets = [0, 0], sizes = [1, 32], strides = [1, 1]} : vector<8x128xf32> to vector<1x32xf32>
    %3 = vector.extract_strided_slice %1 {offsets = [1, 0], sizes = [1, 64], strides = [1, 1]} : vector<8x128xf32> to vector<1x64xf32>
    %4 = vector.extract_strided_slice %1 {offsets = [2, 0], sizes = [1, 120], strides = [1, 1]} : vector<8x128xf32> to vector<1x120xf32>
    %5 = vector.extract_strided_slice %1 {offsets = [3, 0], sizes = [1, 84], strides = [1, 1]} : vector<8x128xf32> to vector<1x84xf32>
    %6 = vector.extract_strided_slice %1 {offsets = [4, 0], sizes = [1, 128], strides = [1, 1]} : vector<8x128xf32> to vector<1x128xf32>
    %c0_2 = arith.constant 0 : index
    %c0_3 = arith.constant 0 : index
    %c0_4 = arith.constant 0 : index
    %7 = vector.load %arg0[%c0_2, %c0_3, %c0_4] : memref<2x1152x9xbf16, #tpu.memory_space<vmem>>, vector<1x1152x9xbf16>
    %8 = vector.shape_cast %7 : vector<1x1152x9xbf16> to vector<1152x9xbf16>
    %c0_5 = arith.constant 0 : index
    %c0_6 = arith.constant 0 : index
    %c0_7 = arith.constant 0 : index
    %9 = vector.load %arg1[%c0_5, %c0_6, %c0_7] : memref<2x9x32xbf16, #tpu.memory_space<vmem>>, vector<1x9x32xbf16>
    %10 = vector.shape_cast %9 : vector<1x9x32xbf16> to vector<9x32xbf16>
    %cst = arith.constant dense<0.000000e+00> : vector<1152x32xf32>
    %11 = tpu.matmul %8, %10, %cst {dimension_numbers = #tpu.dot_dimension_numbers<[1], [0], [0], [1], [0, 0, 1, 1], [], []>} : vector<1152x9xbf16>, vector<9x32xbf16>, vector<1152x32xf32> -> vector<1152x32xf32>
    %12 = vector.extract_strided_slice %11 {offsets = [0, 0], sizes = [288, 32], strides = [1, 1]} : vector<1152x32xf32> to vector<288x32xf32>
    %13 = vector.extract_strided_slice %11 {offsets = [288, 0], sizes = [288, 32], strides = [1, 1]} : vector<1152x32xf32> to vector<288x32xf32>
    %14 = arith.maximumf %12, %13 : vector<288x32xf32>
    %15 = vector.extract_strided_slice %11 {offsets = [576, 0], sizes = [288, 32], strides = [1, 1]} : vector<1152x32xf32> to vector<288x32xf32>
    %16 = vector.extract_strided_slice %11 {offsets = [864, 0], sizes = [288, 32], strides = [1, 1]} : vector<1152x32xf32> to vector<288x32xf32>
    %17 = arith.maximumf %15, %16 : vector<288x32xf32>
    %18 = arith.maximumf %14, %17 : vector<288x32xf32>
    %19 = vector.broadcast %2 : vector<1x32xf32> to vector<288x32xf32>
    %20 = arith.addf %18, %19 : vector<288x32xf32>
    %21 = math.tanh %20 : vector<288x32xf32>
    %22 = math.tanh %21 : vector<288x32xf32>
    %23 = vector.extract_strided_slice %22 {offsets = [0, 0], sizes = [176, 32], strides = [1, 1]} : vector<288x32xf32> to vector<176x32xf32>
    %24 = arith.truncf %23 : vector<176x32xf32> to vector<176x32xbf16>
    %c0_8 = arith.constant 0 : index
    %c0_9 = arith.constant 0 : index
    %c0_10 = arith.constant 0 : index
    %c0_11 = arith.constant 0 : index
    %25 = vector.load %arg2[%c0_8, %c0_9, %c0_10, %c0_11] : memref<2x9x32x64xbf16, #tpu.memory_space<vmem>>, vector<1x1x32x64xbf16>
    %26 = vector.shape_cast %25 : vector<1x1x32x64xbf16> to vector<32x64xbf16>
    %cst_12 = arith.constant dense<0.000000e+00> : vector<176x64xf32>
    %27 = tpu.matmul %24, %26, %cst_12 {dimension_numbers = #tpu.dot_dimension_numbers<[1], [0], [0], [1], [0, 0, 1, 1], [], []>} : vector<176x32xbf16>, vector<32x64xbf16>, vector<176x64xf32> -> vector<176x64xf32>
    %28 = vector.extract_strided_slice %22 {offsets = [8, 0], sizes = [176, 32], strides = [1, 1]} : vector<288x32xf32> to vector<176x32xf32>
    %29 = arith.truncf %28 : vector<176x32xf32> to vector<176x32xbf16>
    %c0_13 = arith.constant 0 : index
    %c1 = arith.constant 1 : index
    %c0_14 = arith.constant 0 : index
    %c0_15 = arith.constant 0 : index
    %30 = vector.load %arg2[%c0_13, %c1, %c0_14, %c0_15] : memref<2x9x32x64xbf16, #tpu.memory_space<vmem>>, vector<1x1x32x64xbf16>
    %31 = vector.shape_cast %30 : vector<1x1x32x64xbf16> to vector<32x64xbf16>
    %cst_16 = arith.constant dense<0.000000e+00> : vector<176x64xf32>
    %32 = tpu.matmul %29, %31, %cst_16 {dimension_numbers = #tpu.dot_dimension_numbers<[1], [0], [0], [1], [0, 0, 1, 1], [], []>} : vector<176x32xbf16>, vector<32x64xbf16>, vector<176x64xf32> -> vector<176x64xf32>
    %33 = arith.addf %27, %32 : vector<176x64xf32>
    %34 = vector.extract_strided_slice %22 {offsets = [16, 0], sizes = [176, 32], strides = [1, 1]} : vector<288x32xf32> to vector<176x32xf32>
    %35 = arith.truncf %34 : vector<176x32xf32> to vector<176x32xbf16>
    %c0_17 = arith.constant 0 : index
    %c2 = arith.constant 2 : index
    %c0_18 = arith.constant 0 : index
    %c0_19 = arith.constant 0 : index
    %36 = vector.load %arg2[%c0_17, %c2, %c0_18, %c0_19] : memref<2x9x32x64xbf16, #tpu.memory_space<vmem>>, vector<1x1x32x64xbf16>
    %37 = vector.shape_cast %36 : vector<1x1x32x64xbf16> to vector<32x64xbf16>
    %cst_20 = arith.constant dense<0.000000e+00> : vector<176x64xf32>
    %38 = tpu.matmul %35, %37, %cst_20 {dimension_numbers = #tpu.dot_dimension_numbers<[1], [0], [0], [1], [0, 0, 1, 1], [], []>} : vector<176x32xbf16>, vector<32x64xbf16>, vector<176x64xf32> -> vector<176x64xf32>
    %39 = arith.addf %33, %38 : vector<176x64xf32>
    %40 = vector.extract_strided_slice %22 {offsets = [48, 0], sizes = [176, 32], strides = [1, 1]} : vector<288x32xf32> to vector<176x32xf32>
    %41 = arith.truncf %40 : vector<176x32xf32> to vector<176x32xbf16>
    %c0_21 = arith.constant 0 : index
    %c3 = arith.constant 3 : index
    %c0_22 = arith.constant 0 : index
    %c0_23 = arith.constant 0 : index
    %42 = vector.load %arg2[%c0_21, %c3, %c0_22, %c0_23] : memref<2x9x32x64xbf16, #tpu.memory_space<vmem>>, vector<1x1x32x64xbf16>
    %43 = vector.shape_cast %42 : vector<1x1x32x64xbf16> to vector<32x64xbf16>
    %cst_24 = arith.constant dense<0.000000e+00> : vector<176x64xf32>
    %44 = tpu.matmul %41, %43, %cst_24 {dimension_numbers = #tpu.dot_dimension_numbers<[1], [0], [0], [1], [0, 0, 1, 1], [], []>} : vector<176x32xbf16>, vector<32x64xbf16>, vector<176x64xf32> -> vector<176x64xf32>
    %45 = arith.addf %39, %44 : vector<176x64xf32>
    %46 = vector.extract_strided_slice %22 {offsets = [56, 0], sizes = [176, 32], strides = [1, 1]} : vector<288x32xf32> to vector<176x32xf32>
    %47 = arith.truncf %46 : vector<176x32xf32> to vector<176x32xbf16>
    %c0_25 = arith.constant 0 : index
    %c4 = arith.constant 4 : index
    %c0_26 = arith.constant 0 : index
    %c0_27 = arith.constant 0 : index
    %48 = vector.load %arg2[%c0_25, %c4, %c0_26, %c0_27] : memref<2x9x32x64xbf16, #tpu.memory_space<vmem>>, vector<1x1x32x64xbf16>
    %49 = vector.shape_cast %48 : vector<1x1x32x64xbf16> to vector<32x64xbf16>
    %cst_28 = arith.constant dense<0.000000e+00> : vector<176x64xf32>
    %50 = tpu.matmul %47, %49, %cst_28 {dimension_numbers = #tpu.dot_dimension_numbers<[1], [0], [0], [1], [0, 0, 1, 1], [], []>} : vector<176x32xbf16>, vector<32x64xbf16>, vector<176x64xf32> -> vector<176x64xf32>
    %51 = arith.addf %45, %50 : vector<176x64xf32>
    %52 = vector.extract_strided_slice %22 {offsets = [64, 0], sizes = [176, 32], strides = [1, 1]} : vector<288x32xf32> to vector<176x32xf32>
    %53 = arith.truncf %52 : vector<176x32xf32> to vector<176x32xbf16>
    %c0_29 = arith.constant 0 : index
    %c5 = arith.constant 5 : index
    %c0_30 = arith.constant 0 : index
    %c0_31 = arith.constant 0 : index
    %54 = vector.load %arg2[%c0_29, %c5, %c0_30, %c0_31] : memref<2x9x32x64xbf16, #tpu.memory_space<vmem>>, vector<1x1x32x64xbf16>
    %55 = vector.shape_cast %54 : vector<1x1x32x64xbf16> to vector<32x64xbf16>
    %cst_32 = arith.constant dense<0.000000e+00> : vector<176x64xf32>
    %56 = tpu.matmul %53, %55, %cst_32 {dimension_numbers = #tpu.dot_dimension_numbers<[1], [0], [0], [1], [0, 0, 1, 1], [], []>} : vector<176x32xbf16>, vector<32x64xbf16>, vector<176x64xf32> -> vector<176x64xf32>
    %57 = arith.addf %51, %56 : vector<176x64xf32>
    %58 = vector.extract_strided_slice %22 {offsets = [96, 0], sizes = [176, 32], strides = [1, 1]} : vector<288x32xf32> to vector<176x32xf32>
    %59 = arith.truncf %58 : vector<176x32xf32> to vector<176x32xbf16>
    %c0_33 = arith.constant 0 : index
    %c6 = arith.constant 6 : index
    %c0_34 = arith.constant 0 : index
    %c0_35 = arith.constant 0 : index
    %60 = vector.load %arg2[%c0_33, %c6, %c0_34, %c0_35] : memref<2x9x32x64xbf16, #tpu.memory_space<vmem>>, vector<1x1x32x64xbf16>
    %61 = vector.shape_cast %60 : vector<1x1x32x64xbf16> to vector<32x64xbf16>
    %cst_36 = arith.constant dense<0.000000e+00> : vector<176x64xf32>
    %62 = tpu.matmul %59, %61, %cst_36 {dimension_numbers = #tpu.dot_dimension_numbers<[1], [0], [0], [1], [0, 0, 1, 1], [], []>} : vector<176x32xbf16>, vector<32x64xbf16>, vector<176x64xf32> -> vector<176x64xf32>
    %63 = arith.addf %57, %62 : vector<176x64xf32>
    %64 = vector.extract_strided_slice %22 {offsets = [104, 0], sizes = [176, 32], strides = [1, 1]} : vector<288x32xf32> to vector<176x32xf32>
    %65 = arith.truncf %64 : vector<176x32xf32> to vector<176x32xbf16>
    %c0_37 = arith.constant 0 : index
    %c7 = arith.constant 7 : index
    %c0_38 = arith.constant 0 : index
    %c0_39 = arith.constant 0 : index
    %66 = vector.load %arg2[%c0_37, %c7, %c0_38, %c0_39] : memref<2x9x32x64xbf16, #tpu.memory_space<vmem>>, vector<1x1x32x64xbf16>
    %67 = vector.shape_cast %66 : vector<1x1x32x64xbf16> to vector<32x64xbf16>
    %cst_40 = arith.constant dense<0.000000e+00> : vector<176x64xf32>
    %68 = tpu.matmul %65, %67, %cst_40 {dimension_numbers = #tpu.dot_dimension_numbers<[1], [0], [0], [1], [0, 0, 1, 1], [], []>} : vector<176x32xbf16>, vector<32x64xbf16>, vector<176x64xf32> -> vector<176x64xf32>
    %69 = arith.addf %63, %68 : vector<176x64xf32>
    %70 = vector.extract_strided_slice %22 {offsets = [112, 0], sizes = [176, 32], strides = [1, 1]} : vector<288x32xf32> to vector<176x32xf32>
    %71 = arith.truncf %70 : vector<176x32xf32> to vector<176x32xbf16>
    %c0_41 = arith.constant 0 : index
    %c8 = arith.constant 8 : index
    %c0_42 = arith.constant 0 : index
    %c0_43 = arith.constant 0 : index
    %72 = vector.load %arg2[%c0_41, %c8, %c0_42, %c0_43] : memref<2x9x32x64xbf16, #tpu.memory_space<vmem>>, vector<1x1x32x64xbf16>
    %73 = vector.shape_cast %72 : vector<1x1x32x64xbf16> to vector<32x64xbf16>
    %cst_44 = arith.constant dense<0.000000e+00> : vector<176x64xf32>
    %74 = tpu.matmul %71, %73, %cst_44 {dimension_numbers = #tpu.dot_dimension_numbers<[1], [0], [0], [1], [0, 0, 1, 1], [], []>} : vector<176x32xbf16>, vector<32x64xbf16>, vector<176x64xf32> -> vector<176x64xf32>
    %75 = arith.addf %69, %74 : vector<176x64xf32>
    %76 = vector.extract_strided_slice %75 {offsets = [0, 0], sizes = [8, 64], strides = [1, 1]} : vector<176x64xf32> to vector<8x64xf32>
    %77 = vector.extract_strided_slice %75 {offsets = [8, 0], sizes = [8, 64], strides = [1, 1]} : vector<176x64xf32> to vector<8x64xf32>
    %78 = arith.maximumf %76, %77 : vector<8x64xf32>
    %79 = vector.extract_strided_slice %75 {offsets = [48, 0], sizes = [8, 64], strides = [1, 1]} : vector<176x64xf32> to vector<8x64xf32>
    %80 = arith.maximumf %78, %79 : vector<8x64xf32>
    %81 = vector.extract_strided_slice %75 {offsets = [56, 0], sizes = [8, 64], strides = [1, 1]} : vector<176x64xf32> to vector<8x64xf32>
    %82 = arith.maximumf %80, %81 : vector<8x64xf32>
    %83 = vector.broadcast %3 : vector<1x64xf32> to vector<8x64xf32>
    %84 = arith.addf %82, %83 : vector<8x64xf32>
    %85 = vector.extract_strided_slice %75 {offsets = [16, 0], sizes = [8, 64], strides = [1, 1]} : vector<176x64xf32> to vector<8x64xf32>
    %86 = vector.extract_strided_slice %75 {offsets = [24, 0], sizes = [8, 64], strides = [1, 1]} : vector<176x64xf32> to vector<8x64xf32>
    %87 = arith.maximumf %85, %86 : vector<8x64xf32>
    %88 = vector.extract_strided_slice %75 {offsets = [64, 0], sizes = [8, 64], strides = [1, 1]} : vector<176x64xf32> to vector<8x64xf32>
    %89 = arith.maximumf %87, %88 : vector<8x64xf32>
    %90 = vector.extract_strided_slice %75 {offsets = [72, 0], sizes = [8, 64], strides = [1, 1]} : vector<176x64xf32> to vector<8x64xf32>
    %91 = arith.maximumf %89, %90 : vector<8x64xf32>
    %92 = vector.broadcast %3 : vector<1x64xf32> to vector<8x64xf32>
    %93 = arith.addf %91, %92 : vector<8x64xf32>
    %94 = vector.extract_strided_slice %75 {offsets = [96, 0], sizes = [8, 64], strides = [1, 1]} : vector<176x64xf32> to vector<8x64xf32>
    %95 = vector.extract_strided_slice %75 {offsets = [104, 0], sizes = [8, 64], strides = [1, 1]} : vector<176x64xf32> to vector<8x64xf32>
    %96 = arith.maximumf %94, %95 : vector<8x64xf32>
    %97 = vector.extract_strided_slice %75 {offsets = [144, 0], sizes = [8, 64], strides = [1, 1]} : vector<176x64xf32> to vector<8x64xf32>
    %98 = arith.maximumf %96, %97 : vector<8x64xf32>
    %99 = vector.extract_strided_slice %75 {offsets = [152, 0], sizes = [8, 64], strides = [1, 1]} : vector<176x64xf32> to vector<8x64xf32>
    %100 = arith.maximumf %98, %99 : vector<8x64xf32>
    %101 = vector.broadcast %3 : vector<1x64xf32> to vector<8x64xf32>
    %102 = arith.addf %100, %101 : vector<8x64xf32>
    %103 = vector.extract_strided_slice %75 {offsets = [112, 0], sizes = [8, 64], strides = [1, 1]} : vector<176x64xf32> to vector<8x64xf32>
    %104 = vector.extract_strided_slice %75 {offsets = [120, 0], sizes = [8, 64], strides = [1, 1]} : vector<176x64xf32> to vector<8x64xf32>
    %105 = arith.maximumf %103, %104 : vector<8x64xf32>
    %106 = vector.extract_strided_slice %75 {offsets = [160, 0], sizes = [8, 64], strides = [1, 1]} : vector<176x64xf32> to vector<8x64xf32>
    %107 = arith.maximumf %105, %106 : vector<8x64xf32>
    %108 = vector.extract_strided_slice %75 {offsets = [168, 0], sizes = [8, 64], strides = [1, 1]} : vector<176x64xf32> to vector<8x64xf32>
    %109 = arith.maximumf %107, %108 : vector<8x64xf32>
    %110 = vector.broadcast %3 : vector<1x64xf32> to vector<8x64xf32>
    %111 = arith.addf %109, %110 : vector<8x64xf32>
    %112 = tpu.concatenate %84, %93, %102, %111 in 1 : vector<8x64xf32>, vector<8x64xf32>, vector<8x64xf32>, vector<8x64xf32> -> vector<8x256xf32>
    %113 = math.tanh %112 : vector<8x256xf32>
    %114 = math.tanh %113 : vector<8x256xf32>
    %115 = arith.truncf %114 : vector<8x256xf32> to vector<8x256xbf16>
    %c0_45 = arith.constant 0 : index
    %c0_46 = arith.constant 0 : index
    %c0_47 = arith.constant 0 : index
    %116 = vector.load %arg3[%c0_45, %c0_46, %c0_47] : memref<2x256x120xbf16, #tpu.memory_space<vmem>>, vector<1x256x120xbf16>
    %117 = vector.shape_cast %116 : vector<1x256x120xbf16> to vector<256x120xbf16>
    %cst_48 = arith.constant dense<0.000000e+00> : vector<8x120xf32>
    %118 = tpu.matmul %115, %117, %cst_48 {dimension_numbers = #tpu.dot_dimension_numbers<[1], [0], [0], [1], [0, 0, 1, 1], [], []>} : vector<8x256xbf16>, vector<256x120xbf16>, vector<8x120xf32> -> vector<8x120xf32>
    %119 = vector.broadcast %4 : vector<1x120xf32> to vector<8x120xf32>
    %120 = arith.addf %118, %119 : vector<8x120xf32>
    %121 = math.tanh %120 : vector<8x120xf32>
    %122 = arith.truncf %121 : vector<8x120xf32> to vector<8x120xbf16>
    %c0_49 = arith.constant 0 : index
    %c0_50 = arith.constant 0 : index
    %c0_51 = arith.constant 0 : index
    %123 = vector.load %arg4[%c0_49, %c0_50, %c0_51] : memref<2x120x84xbf16, #tpu.memory_space<vmem>>, vector<1x120x84xbf16>
    %124 = vector.shape_cast %123 : vector<1x120x84xbf16> to vector<120x84xbf16>
    %cst_52 = arith.constant dense<0.000000e+00> : vector<8x84xf32>
    %125 = tpu.matmul %122, %124, %cst_52 {dimension_numbers = #tpu.dot_dimension_numbers<[1], [0], [0], [1], [0, 0, 1, 1], [], []>} : vector<8x120xbf16>, vector<120x84xbf16>, vector<8x84xf32> -> vector<8x84xf32>
    %126 = vector.broadcast %5 : vector<1x84xf32> to vector<8x84xf32>
    %127 = arith.addf %125, %126 : vector<8x84xf32>
    %128 = math.tanh %127 : vector<8x84xf32>
    %129 = arith.truncf %128 : vector<8x84xf32> to vector<8x84xbf16>
    %c0_53 = arith.constant 0 : index
    %c0_54 = arith.constant 0 : index
    %130 = vector.load %arg5[%c0_53, %c0_54] : memref<84x128xbf16, #tpu.memory_space<vmem>>, vector<84x128xbf16>
    %cst_55 = arith.constant dense<0.000000e+00> : vector<8x128xf32>
    %131 = tpu.matmul %129, %130, %cst_55 {dimension_numbers = #tpu.dot_dimension_numbers<[1], [0], [0], [1], [0, 0, 1, 1], [], []>} : vector<8x84xbf16>, vector<84x128xbf16>, vector<8x128xf32> -> vector<8x128xf32>
    %132 = vector.broadcast %6 : vector<1x128xf32> to vector<8x128xf32>
    %133 = arith.addf %131, %132 : vector<8x128xf32>
    %c1_56 = arith.constant 1 : index
    %c0_57 = arith.constant 0 : index
    %c0_58 = arith.constant 0 : index
    %134 = vector.load %arg7[%c1_56, %c0_57, %c0_58] : memref<2x8x128xf32, #tpu.memory_space<vmem>>, vector<1x8x128xf32>
    %135 = vector.shape_cast %134 : vector<1x8x128xf32> to vector<8x128xf32>
    %136 = vector.extract_strided_slice %135 {offsets = [0, 0], sizes = [1, 32], strides = [1, 1]} : vector<8x128xf32> to vector<1x32xf32>
    %137 = vector.extract_strided_slice %135 {offsets = [1, 0], sizes = [1, 64], strides = [1, 1]} : vector<8x128xf32> to vector<1x64xf32>
    %138 = vector.extract_strided_slice %135 {offsets = [2, 0], sizes = [1, 120], strides = [1, 1]} : vector<8x128xf32> to vector<1x120xf32>
    %139 = vector.extract_strided_slice %135 {offsets = [3, 0], sizes = [1, 84], strides = [1, 1]} : vector<8x128xf32> to vector<1x84xf32>
    %140 = vector.extract_strided_slice %135 {offsets = [4, 0], sizes = [1, 128], strides = [1, 1]} : vector<8x128xf32> to vector<1x128xf32>
    %c1_59 = arith.constant 1 : index
    %c0_60 = arith.constant 0 : index
    %c0_61 = arith.constant 0 : index
    %141 = vector.load %arg0[%c1_59, %c0_60, %c0_61] : memref<2x1152x9xbf16, #tpu.memory_space<vmem>>, vector<1x1152x9xbf16>
    %142 = vector.shape_cast %141 : vector<1x1152x9xbf16> to vector<1152x9xbf16>
    %c1_62 = arith.constant 1 : index
    %c0_63 = arith.constant 0 : index
    %c0_64 = arith.constant 0 : index
    %143 = vector.load %arg1[%c1_62, %c0_63, %c0_64] : memref<2x9x32xbf16, #tpu.memory_space<vmem>>, vector<1x9x32xbf16>
    %144 = vector.shape_cast %143 : vector<1x9x32xbf16> to vector<9x32xbf16>
    %cst_65 = arith.constant dense<0.000000e+00> : vector<1152x32xf32>
    %145 = tpu.matmul %142, %144, %cst_65 {dimension_numbers = #tpu.dot_dimension_numbers<[1], [0], [0], [1], [0, 0, 1, 1], [], []>} : vector<1152x9xbf16>, vector<9x32xbf16>, vector<1152x32xf32> -> vector<1152x32xf32>
    %146 = vector.extract_strided_slice %145 {offsets = [0, 0], sizes = [288, 32], strides = [1, 1]} : vector<1152x32xf32> to vector<288x32xf32>
    %147 = vector.extract_strided_slice %145 {offsets = [288, 0], sizes = [288, 32], strides = [1, 1]} : vector<1152x32xf32> to vector<288x32xf32>
    %148 = arith.maximumf %146, %147 : vector<288x32xf32>
    %149 = vector.extract_strided_slice %145 {offsets = [576, 0], sizes = [288, 32], strides = [1, 1]} : vector<1152x32xf32> to vector<288x32xf32>
    %150 = vector.extract_strided_slice %145 {offsets = [864, 0], sizes = [288, 32], strides = [1, 1]} : vector<1152x32xf32> to vector<288x32xf32>
    %151 = arith.maximumf %149, %150 : vector<288x32xf32>
    %152 = arith.maximumf %148, %151 : vector<288x32xf32>
    %153 = vector.broadcast %136 : vector<1x32xf32> to vector<288x32xf32>
    %154 = arith.addf %152, %153 : vector<288x32xf32>
    %155 = math.tanh %154 : vector<288x32xf32>
    %156 = math.tanh %155 : vector<288x32xf32>
    %157 = vector.extract_strided_slice %156 {offsets = [0, 0], sizes = [176, 32], strides = [1, 1]} : vector<288x32xf32> to vector<176x32xf32>
    %158 = arith.truncf %157 : vector<176x32xf32> to vector<176x32xbf16>
    %c1_66 = arith.constant 1 : index
    %c0_67 = arith.constant 0 : index
    %c0_68 = arith.constant 0 : index
    %c0_69 = arith.constant 0 : index
    %159 = vector.load %arg2[%c1_66, %c0_67, %c0_68, %c0_69] : memref<2x9x32x64xbf16, #tpu.memory_space<vmem>>, vector<1x1x32x64xbf16>
    %160 = vector.shape_cast %159 : vector<1x1x32x64xbf16> to vector<32x64xbf16>
    %cst_70 = arith.constant dense<0.000000e+00> : vector<176x64xf32>
    %161 = tpu.matmul %158, %160, %cst_70 {dimension_numbers = #tpu.dot_dimension_numbers<[1], [0], [0], [1], [0, 0, 1, 1], [], []>} : vector<176x32xbf16>, vector<32x64xbf16>, vector<176x64xf32> -> vector<176x64xf32>
    %162 = vector.extract_strided_slice %156 {offsets = [8, 0], sizes = [176, 32], strides = [1, 1]} : vector<288x32xf32> to vector<176x32xf32>
    %163 = arith.truncf %162 : vector<176x32xf32> to vector<176x32xbf16>
    %c1_71 = arith.constant 1 : index
    %c1_72 = arith.constant 1 : index
    %c0_73 = arith.constant 0 : index
    %c0_74 = arith.constant 0 : index
    %164 = vector.load %arg2[%c1_71, %c1_72, %c0_73, %c0_74] : memref<2x9x32x64xbf16, #tpu.memory_space<vmem>>, vector<1x1x32x64xbf16>
    %165 = vector.shape_cast %164 : vector<1x1x32x64xbf16> to vector<32x64xbf16>
    %cst_75 = arith.constant dense<0.000000e+00> : vector<176x64xf32>
    %166 = tpu.matmul %163, %165, %cst_75 {dimension_numbers = #tpu.dot_dimension_numbers<[1], [0], [0], [1], [0, 0, 1, 1], [], []>} : vector<176x32xbf16>, vector<32x64xbf16>, vector<176x64xf32> -> vector<176x64xf32>
    %167 = arith.addf %161, %166 : vector<176x64xf32>
    %168 = vector.extract_strided_slice %156 {offsets = [16, 0], sizes = [176, 32], strides = [1, 1]} : vector<288x32xf32> to vector<176x32xf32>
    %169 = arith.truncf %168 : vector<176x32xf32> to vector<176x32xbf16>
    %c1_76 = arith.constant 1 : index
    %c2_77 = arith.constant 2 : index
    %c0_78 = arith.constant 0 : index
    %c0_79 = arith.constant 0 : index
    %170 = vector.load %arg2[%c1_76, %c2_77, %c0_78, %c0_79] : memref<2x9x32x64xbf16, #tpu.memory_space<vmem>>, vector<1x1x32x64xbf16>
    %171 = vector.shape_cast %170 : vector<1x1x32x64xbf16> to vector<32x64xbf16>
    %cst_80 = arith.constant dense<0.000000e+00> : vector<176x64xf32>
    %172 = tpu.matmul %169, %171, %cst_80 {dimension_numbers = #tpu.dot_dimension_numbers<[1], [0], [0], [1], [0, 0, 1, 1], [], []>} : vector<176x32xbf16>, vector<32x64xbf16>, vector<176x64xf32> -> vector<176x64xf32>
    %173 = arith.addf %167, %172 : vector<176x64xf32>
    %174 = vector.extract_strided_slice %156 {offsets = [48, 0], sizes = [176, 32], strides = [1, 1]} : vector<288x32xf32> to vector<176x32xf32>
    %175 = arith.truncf %174 : vector<176x32xf32> to vector<176x32xbf16>
    %c1_81 = arith.constant 1 : index
    %c3_82 = arith.constant 3 : index
    %c0_83 = arith.constant 0 : index
    %c0_84 = arith.constant 0 : index
    %176 = vector.load %arg2[%c1_81, %c3_82, %c0_83, %c0_84] : memref<2x9x32x64xbf16, #tpu.memory_space<vmem>>, vector<1x1x32x64xbf16>
    %177 = vector.shape_cast %176 : vector<1x1x32x64xbf16> to vector<32x64xbf16>
    %cst_85 = arith.constant dense<0.000000e+00> : vector<176x64xf32>
    %178 = tpu.matmul %175, %177, %cst_85 {dimension_numbers = #tpu.dot_dimension_numbers<[1], [0], [0], [1], [0, 0, 1, 1], [], []>} : vector<176x32xbf16>, vector<32x64xbf16>, vector<176x64xf32> -> vector<176x64xf32>
    %179 = arith.addf %173, %178 : vector<176x64xf32>
    %180 = vector.extract_strided_slice %156 {offsets = [56, 0], sizes = [176, 32], strides = [1, 1]} : vector<288x32xf32> to vector<176x32xf32>
    %181 = arith.truncf %180 : vector<176x32xf32> to vector<176x32xbf16>
    %c1_86 = arith.constant 1 : index
    %c4_87 = arith.constant 4 : index
    %c0_88 = arith.constant 0 : index
    %c0_89 = arith.constant 0 : index
    %182 = vector.load %arg2[%c1_86, %c4_87, %c0_88, %c0_89] : memref<2x9x32x64xbf16, #tpu.memory_space<vmem>>, vector<1x1x32x64xbf16>
    %183 = vector.shape_cast %182 : vector<1x1x32x64xbf16> to vector<32x64xbf16>
    %cst_90 = arith.constant dense<0.000000e+00> : vector<176x64xf32>
    %184 = tpu.matmul %181, %183, %cst_90 {dimension_numbers = #tpu.dot_dimension_numbers<[1], [0], [0], [1], [0, 0, 1, 1], [], []>} : vector<176x32xbf16>, vector<32x64xbf16>, vector<176x64xf32> -> vector<176x64xf32>
    %185 = arith.addf %179, %184 : vector<176x64xf32>
    %186 = vector.extract_strided_slice %156 {offsets = [64, 0], sizes = [176, 32], strides = [1, 1]} : vector<288x32xf32> to vector<176x32xf32>
    %187 = arith.truncf %186 : vector<176x32xf32> to vector<176x32xbf16>
    %c1_91 = arith.constant 1 : index
    %c5_92 = arith.constant 5 : index
    %c0_93 = arith.constant 0 : index
    %c0_94 = arith.constant 0 : index
    %188 = vector.load %arg2[%c1_91, %c5_92, %c0_93, %c0_94] : memref<2x9x32x64xbf16, #tpu.memory_space<vmem>>, vector<1x1x32x64xbf16>
    %189 = vector.shape_cast %188 : vector<1x1x32x64xbf16> to vector<32x64xbf16>
    %cst_95 = arith.constant dense<0.000000e+00> : vector<176x64xf32>
    %190 = tpu.matmul %187, %189, %cst_95 {dimension_numbers = #tpu.dot_dimension_numbers<[1], [0], [0], [1], [0, 0, 1, 1], [], []>} : vector<176x32xbf16>, vector<32x64xbf16>, vector<176x64xf32> -> vector<176x64xf32>
    %191 = arith.addf %185, %190 : vector<176x64xf32>
    %192 = vector.extract_strided_slice %156 {offsets = [96, 0], sizes = [176, 32], strides = [1, 1]} : vector<288x32xf32> to vector<176x32xf32>
    %193 = arith.truncf %192 : vector<176x32xf32> to vector<176x32xbf16>
    %c1_96 = arith.constant 1 : index
    %c6_97 = arith.constant 6 : index
    %c0_98 = arith.constant 0 : index
    %c0_99 = arith.constant 0 : index
    %194 = vector.load %arg2[%c1_96, %c6_97, %c0_98, %c0_99] : memref<2x9x32x64xbf16, #tpu.memory_space<vmem>>, vector<1x1x32x64xbf16>
    %195 = vector.shape_cast %194 : vector<1x1x32x64xbf16> to vector<32x64xbf16>
    %cst_100 = arith.constant dense<0.000000e+00> : vector<176x64xf32>
    %196 = tpu.matmul %193, %195, %cst_100 {dimension_numbers = #tpu.dot_dimension_numbers<[1], [0], [0], [1], [0, 0, 1, 1], [], []>} : vector<176x32xbf16>, vector<32x64xbf16>, vector<176x64xf32> -> vector<176x64xf32>
    %197 = arith.addf %191, %196 : vector<176x64xf32>
    %198 = vector.extract_strided_slice %156 {offsets = [104, 0], sizes = [176, 32], strides = [1, 1]} : vector<288x32xf32> to vector<176x32xf32>
    %199 = arith.truncf %198 : vector<176x32xf32> to vector<176x32xbf16>
    %c1_101 = arith.constant 1 : index
    %c7_102 = arith.constant 7 : index
    %c0_103 = arith.constant 0 : index
    %c0_104 = arith.constant 0 : index
    %200 = vector.load %arg2[%c1_101, %c7_102, %c0_103, %c0_104] : memref<2x9x32x64xbf16, #tpu.memory_space<vmem>>, vector<1x1x32x64xbf16>
    %201 = vector.shape_cast %200 : vector<1x1x32x64xbf16> to vector<32x64xbf16>
    %cst_105 = arith.constant dense<0.000000e+00> : vector<176x64xf32>
    %202 = tpu.matmul %199, %201, %cst_105 {dimension_numbers = #tpu.dot_dimension_numbers<[1], [0], [0], [1], [0, 0, 1, 1], [], []>} : vector<176x32xbf16>, vector<32x64xbf16>, vector<176x64xf32> -> vector<176x64xf32>
    %203 = arith.addf %197, %202 : vector<176x64xf32>
    %204 = vector.extract_strided_slice %156 {offsets = [112, 0], sizes = [176, 32], strides = [1, 1]} : vector<288x32xf32> to vector<176x32xf32>
    %205 = arith.truncf %204 : vector<176x32xf32> to vector<176x32xbf16>
    %c1_106 = arith.constant 1 : index
    %c8_107 = arith.constant 8 : index
    %c0_108 = arith.constant 0 : index
    %c0_109 = arith.constant 0 : index
    %206 = vector.load %arg2[%c1_106, %c8_107, %c0_108, %c0_109] : memref<2x9x32x64xbf16, #tpu.memory_space<vmem>>, vector<1x1x32x64xbf16>
    %207 = vector.shape_cast %206 : vector<1x1x32x64xbf16> to vector<32x64xbf16>
    %cst_110 = arith.constant dense<0.000000e+00> : vector<176x64xf32>
    %208 = tpu.matmul %205, %207, %cst_110 {dimension_numbers = #tpu.dot_dimension_numbers<[1], [0], [0], [1], [0, 0, 1, 1], [], []>} : vector<176x32xbf16>, vector<32x64xbf16>, vector<176x64xf32> -> vector<176x64xf32>
    %209 = arith.addf %203, %208 : vector<176x64xf32>
    %210 = vector.extract_strided_slice %209 {offsets = [0, 0], sizes = [8, 64], strides = [1, 1]} : vector<176x64xf32> to vector<8x64xf32>
    %211 = vector.extract_strided_slice %209 {offsets = [8, 0], sizes = [8, 64], strides = [1, 1]} : vector<176x64xf32> to vector<8x64xf32>
    %212 = arith.maximumf %210, %211 : vector<8x64xf32>
    %213 = vector.extract_strided_slice %209 {offsets = [48, 0], sizes = [8, 64], strides = [1, 1]} : vector<176x64xf32> to vector<8x64xf32>
    %214 = arith.maximumf %212, %213 : vector<8x64xf32>
    %215 = vector.extract_strided_slice %209 {offsets = [56, 0], sizes = [8, 64], strides = [1, 1]} : vector<176x64xf32> to vector<8x64xf32>
    %216 = arith.maximumf %214, %215 : vector<8x64xf32>
    %217 = vector.broadcast %137 : vector<1x64xf32> to vector<8x64xf32>
    %218 = arith.addf %216, %217 : vector<8x64xf32>
    %219 = vector.extract_strided_slice %209 {offsets = [16, 0], sizes = [8, 64], strides = [1, 1]} : vector<176x64xf32> to vector<8x64xf32>
    %220 = vector.extract_strided_slice %209 {offsets = [24, 0], sizes = [8, 64], strides = [1, 1]} : vector<176x64xf32> to vector<8x64xf32>
    %221 = arith.maximumf %219, %220 : vector<8x64xf32>
    %222 = vector.extract_strided_slice %209 {offsets = [64, 0], sizes = [8, 64], strides = [1, 1]} : vector<176x64xf32> to vector<8x64xf32>
    %223 = arith.maximumf %221, %222 : vector<8x64xf32>
    %224 = vector.extract_strided_slice %209 {offsets = [72, 0], sizes = [8, 64], strides = [1, 1]} : vector<176x64xf32> to vector<8x64xf32>
    %225 = arith.maximumf %223, %224 : vector<8x64xf32>
    %226 = vector.broadcast %137 : vector<1x64xf32> to vector<8x64xf32>
    %227 = arith.addf %225, %226 : vector<8x64xf32>
    %228 = vector.extract_strided_slice %209 {offsets = [96, 0], sizes = [8, 64], strides = [1, 1]} : vector<176x64xf32> to vector<8x64xf32>
    %229 = vector.extract_strided_slice %209 {offsets = [104, 0], sizes = [8, 64], strides = [1, 1]} : vector<176x64xf32> to vector<8x64xf32>
    %230 = arith.maximumf %228, %229 : vector<8x64xf32>
    %231 = vector.extract_strided_slice %209 {offsets = [144, 0], sizes = [8, 64], strides = [1, 1]} : vector<176x64xf32> to vector<8x64xf32>
    %232 = arith.maximumf %230, %231 : vector<8x64xf32>
    %233 = vector.extract_strided_slice %209 {offsets = [152, 0], sizes = [8, 64], strides = [1, 1]} : vector<176x64xf32> to vector<8x64xf32>
    %234 = arith.maximumf %232, %233 : vector<8x64xf32>
    %235 = vector.broadcast %137 : vector<1x64xf32> to vector<8x64xf32>
    %236 = arith.addf %234, %235 : vector<8x64xf32>
    %237 = vector.extract_strided_slice %209 {offsets = [112, 0], sizes = [8, 64], strides = [1, 1]} : vector<176x64xf32> to vector<8x64xf32>
    %238 = vector.extract_strided_slice %209 {offsets = [120, 0], sizes = [8, 64], strides = [1, 1]} : vector<176x64xf32> to vector<8x64xf32>
    %239 = arith.maximumf %237, %238 : vector<8x64xf32>
    %240 = vector.extract_strided_slice %209 {offsets = [160, 0], sizes = [8, 64], strides = [1, 1]} : vector<176x64xf32> to vector<8x64xf32>
    %241 = arith.maximumf %239, %240 : vector<8x64xf32>
    %242 = vector.extract_strided_slice %209 {offsets = [168, 0], sizes = [8, 64], strides = [1, 1]} : vector<176x64xf32> to vector<8x64xf32>
    %243 = arith.maximumf %241, %242 : vector<8x64xf32>
    %244 = vector.broadcast %137 : vector<1x64xf32> to vector<8x64xf32>
    %245 = arith.addf %243, %244 : vector<8x64xf32>
    %246 = tpu.concatenate %218, %227, %236, %245 in 1 : vector<8x64xf32>, vector<8x64xf32>, vector<8x64xf32>, vector<8x64xf32> -> vector<8x256xf32>
    %247 = math.tanh %246 : vector<8x256xf32>
    %248 = math.tanh %247 : vector<8x256xf32>
    %249 = arith.truncf %248 : vector<8x256xf32> to vector<8x256xbf16>
    %c1_111 = arith.constant 1 : index
    %c0_112 = arith.constant 0 : index
    %c0_113 = arith.constant 0 : index
    %250 = vector.load %arg3[%c1_111, %c0_112, %c0_113] : memref<2x256x120xbf16, #tpu.memory_space<vmem>>, vector<1x256x120xbf16>
    %251 = vector.shape_cast %250 : vector<1x256x120xbf16> to vector<256x120xbf16>
    %cst_114 = arith.constant dense<0.000000e+00> : vector<8x120xf32>
    %252 = tpu.matmul %249, %251, %cst_114 {dimension_numbers = #tpu.dot_dimension_numbers<[1], [0], [0], [1], [0, 0, 1, 1], [], []>} : vector<8x256xbf16>, vector<256x120xbf16>, vector<8x120xf32> -> vector<8x120xf32>
    %253 = vector.broadcast %138 : vector<1x120xf32> to vector<8x120xf32>
    %254 = arith.addf %252, %253 : vector<8x120xf32>
    %255 = math.tanh %254 : vector<8x120xf32>
    %256 = arith.truncf %255 : vector<8x120xf32> to vector<8x120xbf16>
    %c1_115 = arith.constant 1 : index
    %c0_116 = arith.constant 0 : index
    %c0_117 = arith.constant 0 : index
    %257 = vector.load %arg4[%c1_115, %c0_116, %c0_117] : memref<2x120x84xbf16, #tpu.memory_space<vmem>>, vector<1x120x84xbf16>
    %258 = vector.shape_cast %257 : vector<1x120x84xbf16> to vector<120x84xbf16>
    %cst_118 = arith.constant dense<0.000000e+00> : vector<8x84xf32>
    %259 = tpu.matmul %256, %258, %cst_118 {dimension_numbers = #tpu.dot_dimension_numbers<[1], [0], [0], [1], [0, 0, 1, 1], [], []>} : vector<8x120xbf16>, vector<120x84xbf16>, vector<8x84xf32> -> vector<8x84xf32>
    %260 = vector.broadcast %139 : vector<1x84xf32> to vector<8x84xf32>
    %261 = arith.addf %259, %260 : vector<8x84xf32>
    %262 = math.tanh %261 : vector<8x84xf32>
    %263 = arith.truncf %262 : vector<8x84xf32> to vector<8x84xbf16>
    %c0_119 = arith.constant 0 : index
    %c0_120 = arith.constant 0 : index
    %264 = vector.load %arg5[%c0_119, %c0_120] : memref<84x128xbf16, #tpu.memory_space<vmem>>, vector<84x128xbf16>
    %cst_121 = arith.constant dense<0.000000e+00> : vector<8x128xf32>
    %265 = tpu.matmul %263, %264, %cst_121 {dimension_numbers = #tpu.dot_dimension_numbers<[1], [0], [0], [1], [0, 0, 1, 1], [], []>} : vector<8x84xbf16>, vector<84x128xbf16>, vector<8x128xf32> -> vector<8x128xf32>
    %266 = vector.broadcast %140 : vector<1x128xf32> to vector<8x128xf32>
    %267 = arith.addf %265, %266 : vector<8x128xf32>
    %c0_122 = arith.constant 0 : index
    %c0_123 = arith.constant 0 : index
    %c0_124 = arith.constant 0 : index
    %268 = vector.load %arg7[%c0_122, %c0_123, %c0_124] : memref<2x8x128xf32, #tpu.memory_space<vmem>>, vector<1x8x128xf32>
    %269 = vector.shape_cast %268 : vector<1x8x128xf32> to vector<8x128xf32>
    %270 = vector.extract_strided_slice %269 {offsets = [5, 0], sizes = [1, 128], strides = [1, 1]} : vector<8x128xf32> to vector<1x128xf32>
    %271 = vector.extract_strided_slice %133 {offsets = [0, 0], sizes = [8, 10], strides = [1, 1]} : vector<8x128xf32> to vector<8x10xf32>
    %272 = arith.truncf %271 : vector<8x10xf32> to vector<8x10xbf16>
    %c0_125 = arith.constant 0 : index
    %c0_126 = arith.constant 0 : index
    %c0_127 = arith.constant 0 : index
    %273 = vector.load %arg6[%c0_125, %c0_126, %c0_127] : memref<2x10x128xbf16, #tpu.memory_space<vmem>>, vector<1x10x128xbf16>
    %274 = vector.shape_cast %273 : vector<1x10x128xbf16> to vector<10x128xbf16>
    %cst_128 = arith.constant dense<0.000000e+00> : vector<8x128xf32>
    %275 = tpu.matmul %272, %274, %cst_128 {dimension_numbers = #tpu.dot_dimension_numbers<[1], [0], [0], [1], [0, 0, 1, 1], [], []>} : vector<8x10xbf16>, vector<10x128xbf16>, vector<8x128xf32> -> vector<8x128xf32>
    %276 = vector.extract_strided_slice %267 {offsets = [0, 0], sizes = [8, 10], strides = [1, 1]} : vector<8x128xf32> to vector<8x10xf32>
    %277 = arith.truncf %276 : vector<8x10xf32> to vector<8x10xbf16>
    %c1_129 = arith.constant 1 : index
    %c0_130 = arith.constant 0 : index
    %c0_131 = arith.constant 0 : index
    %278 = vector.load %arg6[%c1_129, %c0_130, %c0_131] : memref<2x10x128xbf16, #tpu.memory_space<vmem>>, vector<1x10x128xbf16>
    %279 = vector.shape_cast %278 : vector<1x10x128xbf16> to vector<10x128xbf16>
    %cst_132 = arith.constant dense<0.000000e+00> : vector<8x128xf32>
    %280 = tpu.matmul %277, %279, %cst_132 {dimension_numbers = #tpu.dot_dimension_numbers<[1], [0], [0], [1], [0, 0, 1, 1], [], []>} : vector<8x10xbf16>, vector<10x128xbf16>, vector<8x128xf32> -> vector<8x128xf32>
    %281 = arith.addf %275, %280 : vector<8x128xf32>
    %282 = vector.broadcast %270 : vector<1x128xf32> to vector<8x128xf32>
    %283 = arith.addf %281, %282 : vector<8x128xf32>
    %c0_133 = arith.constant 0 : index
    %c0_134 = arith.constant 0 : index
    %c0_135 = arith.constant 0 : index
    %284 = vector.load %arg8[%c0_133, %c0_134, %c0_135] : memref<3x8x128xf32, #tpu.memory_space<vmem>>, vector<1x8x128xf32>
    %285 = vector.shape_cast %284 : vector<1x8x128xf32> to vector<8x128xf32>
    %286 = vector.shape_cast %133 : vector<8x128xf32> to vector<1x8x128xf32>
    tpu.vector_store %arg8[%c0_133, %c0_134, %c0_135], %286 {strides = array<i32>} : memref<3x8x128xf32, #tpu.memory_space<vmem>>, vector<1x8x128xf32>,
    %c1_136 = arith.constant 1 : index
    %c0_137 = arith.constant 0 : index
    %c0_138 = arith.constant 0 : index
    %287 = vector.load %arg8[%c1_136, %c0_137, %c0_138] : memref<3x8x128xf32, #tpu.memory_space<vmem>>, vector<1x8x128xf32>
    %288 = vector.shape_cast %287 : vector<1x8x128xf32> to vector<8x128xf32>
    %289 = vector.shape_cast %267 : vector<8x128xf32> to vector<1x8x128xf32>
    tpu.vector_store %arg8[%c1_136, %c0_137, %c0_138], %289 {strides = array<i32>} : memref<3x8x128xf32, #tpu.memory_space<vmem>>, vector<1x8x128xf32>,
    %c2_139 = arith.constant 2 : index
    %c0_140 = arith.constant 0 : index
    %c0_141 = arith.constant 0 : index
    %290 = vector.load %arg8[%c2_139, %c0_140, %c0_141] : memref<3x8x128xf32, #tpu.memory_space<vmem>>, vector<1x8x128xf32>
    %291 = vector.shape_cast %290 : vector<1x8x128xf32> to vector<8x128xf32>
    %292 = vector.shape_cast %283 : vector<8x128xf32> to vector<1x8x128xf32>
    tpu.vector_store %arg8[%c2_139, %c0_140, %c0_141], %292 {strides = array<i32>} : memref<3x8x128xf32, #tpu.memory_space<vmem>>, vector<1x8x128xf32>,
    return
  }
}

</mosaic_0001>

<llo_original>
// kernel: cnnet_forward_prepared.1
$region0: #{cnnet_forward_prepared.1}
  #allocation0 [shape = 'u32[]', space=smem, size = 0x4, offset = 0x4, fixed_abs, tag = 'smem constant byte address 0x4 - core index']
  #allocation1 [shape = 'u32[144,128]{1,0:T(1,128)}', space=vmem, size = 0x12000, scoped, tag = 'internal scratch']
  %s0 = inlined_call_operand.vmem [shape: bf16[2,1152,9], index: 0, kind: input, shape index: {}]
  %s1 = inlined_call_operand.vmem [shape: bf16[2,9,32], index: 1, kind: input, shape index: {}]
  %s2 = inlined_call_operand.vmem [shape: bf16[2,9,32,64], index: 2, kind: input, shape index: {}]
  %s3 = inlined_call_operand.vmem [shape: bf16[2,256,120], index: 3, kind: input, shape index: {}]
  %s4 = inlined_call_operand.vmem [shape: bf16[2,120,84], index: 4, kind: input, shape index: {}]
  %s5 = inlined_call_operand.vmem [shape: bf16[84,128], index: 5, kind: input, shape index: {}]
  %s6 = inlined_call_operand.vmem [shape: bf16[2,10,128], index: 6, kind: input, shape index: {}]
  %s7 = inlined_call_operand.vmem [shape: f32[2,8,128], index: 7, kind: input, shape index: {}]
  %s8 = inlined_call_operand.vmem [shape: f32[3,8,128], index: 8, kind: output, shape index: {}]
  %s9 = sld [smem:[#allocation0]]
  $region42: #{cnnet_forward_prepared.1} parent=0
    _
  %s11 = ssub.s32 1, %s9
  %s12 = scalar_select 0, %s11, %s9
  // Predicated region
  $region2: #{cnnet_forward_prepared.1} parent=0 // pred_check
    _
  $region3: #{cnnet_forward_prepared.1} parent=0 // pred_check_branch
    %14 = sbr.rel (0) target = $region5
  $region4: #{cnnet_forward_prepared.1} parent=0 // pred_region
    _
  $region5: #{cnnet_forward_prepared.1} parent=0 // pred_fallthru
    _
  // Predicated region
  $region6: #{cnnet_forward_prepared.1} parent=0 // pred_check
    _
  $region7: #{cnnet_forward_prepared.1} parent=0 // pred_check_branch
    %16 = sbr.rel (0) target = $region9
  $region8: #{cnnet_forward_prepared.1} parent=0 // pred_region
    _
  $region9: #{cnnet_forward_prepared.1} parent=0 // pred_fallthru
    _
  // Predicated region
  $region10: #{cnnet_forward_prepared.1} parent=0 // pred_check
    _
  $region11: #{cnnet_forward_prepared.1} parent=0 // pred_check_branch
    %18 = sbr.rel (0) target = $region13
  $region12: #{cnnet_forward_prepared.1} parent=0 // pred_region
    _
  $region13: #{cnnet_forward_prepared.1} parent=0 // pred_fallthru
    _
  // Predicated region
  $region14: #{cnnet_forward_prepared.1} parent=0 // pred_check
    _
  $region15: #{cnnet_forward_prepared.1} parent=0 // pred_check_branch
    %20 = sbr.rel (0) target = $region17
  $region16: #{cnnet_forward_prepared.1} parent=0 // pred_region
    _
  $region17: #{cnnet_forward_prepared.1} parent=0 // pred_fallthru
    _
  // Predicated region
  $region18: #{cnnet_forward_prepared.1} parent=0 // pred_check
    _
  $region19: #{cnnet_forward_prepared.1} parent=0 // pred_check_branch
    %22 = sbr.rel (0) target = $region21
  $region20: #{cnnet_forward_prepared.1} parent=0 // pred_region
    _
  $region21: #{cnnet_forward_prepared.1} parent=0 // pred_fallthru
    _
  // Predicated region
  $region22: #{cnnet_forward_prepared.1} parent=0 // pred_check
    _
  $region23: #{cnnet_forward_prepared.1} parent=0 // pred_check_branch
    %24 = sbr.rel (0) target = $region25
  $region24: #{cnnet_forward_prepared.1} parent=0 // pred_region
    _
  $region25: #{cnnet_forward_prepared.1} parent=0 // pred_fallthru
    _
  // Predicated region
  $region26: #{cnnet_forward_prepared.1} parent=0 // pred_check
    _
  $region27: #{cnnet_forward_prepared.1} parent=0 // pred_check_branch
    %26 = sbr.rel (0) target = $region29
  $region28: #{cnnet_forward_prepared.1} parent=0 // pred_region
    _
  $region29: #{cnnet_forward_prepared.1} parent=0 // pred_fallthru
    _
  // Predicated region
  $region30: #{cnnet_forward_prepared.1} parent=0 // pred_check
    _
  $region31: #{cnnet_forward_prepared.1} parent=0 // pred_check_branch
    %28 = sbr.rel (0) target = $region33
  $region32: #{cnnet_forward_prepared.1} parent=0 // pred_region
    _
  $region33: #{cnnet_forward_prepared.1} parent=0 // pred_fallthru
    _
  %v30 = vld [vmem:[%s7] sm:$0xff]
  %v31 = vld [vmem:[%s0] sm:$0xf]
  %v32 = vld [vmem:[%s0 + $0x4] sm:$0xf]
  %v33 = vld [vmem:[%s0 + $0x8] sm:$0xf]
  %v34 = vld [vmem:[%s0 + $0xc] sm:$0xf]
  %v35 = vld [vmem:[%s0 + $0x10] sm:$0xf]
  %v36 = vld [vmem:[%s0 + $0x14] sm:$0xf]
  %v37 = vld [vmem:[%s0 + $0x18] sm:$0xf]
  %v38 = vld [vmem:[%s0 + $0x1c] sm:$0xf]
  %v39 = vld [vmem:[%s0 + $0x20] sm:$0xf]
  %v40 = vld [vmem:[%s0 + $0x24] sm:$0xf]
  %v41 = vld [vmem:[%s0 + $0x28] sm:$0xf]
  %v42 = vld [vmem:[%s0 + $0x2c] sm:$0xf]
  %v43 = vld [vmem:[%s0 + $0x30] sm:$0xf]
  %v44 = vld [vmem:[%s0 + $0x34] sm:$0xf]
  %v45 = vld [vmem:[%s0 + $0x38] sm:$0xf]
  %v46 = vld [vmem:[%s0 + $0x3c] sm:$0xf]
  %v47 = vld [vmem:[%s0 + $0x40] sm:$0xf]
  %v48 = vld [vmem:[%s0 + $0x44] sm:$0xf]
  %v49 = vld [vmem:[%s0 + $0x48] sm:$0xf]
  %v50 = vld [vmem:[%s0 + $0x4c] sm:$0xf]
  %v51 = vld [vmem:[%s0 + $0x50] sm:$0xf]
  %v52 = vld [vmem:[%s0 + $0x54] sm:$0xf]
  %v53 = vld [vmem:[%s0 + $0x58] sm:$0xf]
  %v54 = vld [vmem:[%s0 + $0x5c] sm:$0xf]
  %v55 = vld [vmem:[%s0 + $0x60] sm:$0xf]
  %v56 = vld [vmem:[%s0 + $0x64] sm:$0xf]
  %v57 = vld [vmem:[%s0 + $0x68] sm:$0xf]
  %v58 = vld [vmem:[%s0 + $0x6c] sm:$0xf]
  %v59 = vld [vmem:[%s0 + $0x70] sm:$0xf]
  %v60 = vld [vmem:[%s0 + $0x74] sm:$0xf]
  %v61 = vld [vmem:[%s0 + $0x78] sm:$0xf]
  %v62 = vld [vmem:[%s0 + $0x7c] sm:$0xf]
  %v63 = vld [vmem:[%s0 + $0x80] sm:$0xf]
  %v64 = vld [vmem:[%s0 + $0x84] sm:$0xf]
  %v65 = vld [vmem:[%s0 + $0x88] sm:$0xf]
  %v66 = vld [vmem:[%s0 + $0x8c] sm:$0xf]
  %v67 = vld [vmem:[%s0 + $0x90] sm:$0xf]
  %v68 = vld [vmem:[%s0 + $0x94] sm:$0xf]
  %v69 = vld [vmem:[%s0 + $0x98] sm:$0xf]
  %v70 = vld [vmem:[%s0 + $0x9c] sm:$0xf]
  %v71 = vld [vmem:[%s0 + $0xa0] sm:$0xf]
  %v72 = vld [vmem:[%s0 + $0xa4] sm:$0xf]
  %v73 = vld [vmem:[%s0 + $0xa8] sm:$0xf]
  %v74 = vld [vmem:[%s0 + $0xac] sm:$0xf]
  %v75 = vld [vmem:[%s0 + $0xb0] sm:$0xf]
  %v76 = vld [vmem:[%s0 + $0xb4] sm:$0xf]
  %v77 = vld [vmem:[%s0 + $0xb8] sm:$0xf]
  %v78 = vld [vmem:[%s0 + $0xbc] sm:$0xf]
  %v79 = vld [vmem:[%s0 + $0xc0] sm:$0xf]
  %v80 = vld [vmem:[%s0 + $0xc4] sm:$0xf]
  %v81 = vld [vmem:[%s0 + $0xc8] sm:$0xf]
  %v82 = vld [vmem:[%s0 + $0xcc] sm:$0xf]
  %v83 = vld [vmem:[%s0 + $0xd0] sm:$0xf]
  %v84 = vld [vmem:[%s0 + $0xd4] sm:$0xf]
  %v85 = vld [vmem:[%s0 + $0xd8] sm:$0xf]
  %v86 = vld [vmem:[%s0 + $0xdc] sm:$0xf]
  %v87 = vld [vmem:[%s0 + $0xe0] sm:$0xf]
  %v88 = vld [vmem:[%s0 + $0xe4] sm:$0xf]
  %v89 = vld [vmem:[%s0 + $0xe8] sm:$0xf]
  %v90 = vld [vmem:[%s0 + $0xec] sm:$0xf]
  %v91 = vld [vmem:[%s0 + $0xf0] sm:$0xf]
  %v92 = vld [vmem:[%s0 + $0xf4] sm:$0xf]
  %v93 = vld [vmem:[%s0 + $0xf8] sm:$0xf]
  %v94 = vld [vmem:[%s0 + $0xfc] sm:$0xf]
  %v95 = vld [vmem:[%s0 + $0x100] sm:$0xf]
  %v96 = vld [vmem:[%s0 + $0x104] sm:$0xf]
  %v97 = vld [vmem:[%s0 + $0x108] sm:$0xf]
  %v98 = vld [vmem:[%s0 + $0x10c] sm:$0xf]
  %v99 = vld [vmem:[%s0 + $0x110] sm:$0xf]
  %v100 = vld [vmem:[%s0 + $0x114] sm:$0xf]
  %v101 = vld [vmem:[%s0 + $0x118] sm:$0xf]
  %v102 = vld [vmem:[%s0 + $0x11c] sm:$0xf]
  %v103 = vld [vmem:[%s0 + $0x120] sm:$0xf]
  %v104 = vld [vmem:[%s0 + $0x124] sm:$0xf]
  %v105 = vld [vmem:[%s0 + $0x128] sm:$0xf]
  %v106 = vld [vmem:[%s0 + $0x12c] sm:$0xf]
  %v107 = vld [vmem:[%s0 + $0x130] sm:$0xf]
  %v108 = vld [vmem:[%s0 + $0x134] sm:$0xf]
  %v109 = vld [vmem:[%s0 + $0x138] sm:$0xf]
  %v110 = vld [vmem:[%s0 + $0x13c] sm:$0xf]
  %v111 = vld [vmem:[%s0 + $0x140] sm:$0xf]
  %v112 = vld [vmem:[%s0 + $0x144] sm:$0xf]
  %v113 = vld [vmem:[%s0 + $0x148] sm:$0xf]
  %v114 = vld [vmem:[%s0 + $0x14c] sm:$0xf]
  %v115 = vld [vmem:[%s0 + $0x150] sm:$0xf]
  %v116 = vld [vmem:[%s0 + $0x154] sm:$0xf]
  %v117 = vld [vmem:[%s0 + $0x158] sm:$0xf]
  %v118 = vld [vmem:[%s0 + $0x15c] sm:$0xf]
  %v119 = vld [vmem:[%s0 + $0x160] sm:$0xf]
  %v120 = vld [vmem:[%s0 + $0x164] sm:$0xf]
  %v121 = vld [vmem:[%s0 + $0x168] sm:$0xf]
  %v122 = vld [vmem:[%s0 + $0x16c] sm:$0xf]
  %v123 = vld [vmem:[%s0 + $0x170] sm:$0xf]
  %v124 = vld [vmem:[%s0 + $0x174] sm:$0xf]
  %v125 = vld [vmem:[%s0 + $0x178] sm:$0xf]
  %v126 = vld [vmem:[%s0 + $0x17c] sm:$0xf]
  %v127 = vld [vmem:[%s0 + $0x180] sm:$0xf]
  %v128 = vld [vmem:[%s0 + $0x184] sm:$0xf]
  %v129 = vld [vmem:[%s0 + $0x188] sm:$0xf]
  %v130 = vld [vmem:[%s0 + $0x18c] sm:$0xf]
  %v131 = vld [vmem:[%s0 + $0x190] sm:$0xf]
  %v132 = vld [vmem:[%s0 + $0x194] sm:$0xf]
  %v133 = vld [vmem:[%s0 + $0x198] sm:$0xf]
  %v134 = vld [vmem:[%s0 + $0x19c] sm:$0xf]
  %v135 = vld [vmem:[%s0 + $0x1a0] sm:$0xf]
  %v136 = vld [vmem:[%s0 + $0x1a4] sm:$0xf]
  %v137 = vld [vmem:[%s0 + $0x1a8] sm:$0xf]
  %v138 = vld [vmem:[%s0 + $0x1ac] sm:$0xf]
  %v139 = vld [vmem:[%s0 + $0x1b0] sm:$0xf]
  %v140 = vld [vmem:[%s0 + $0x1b4] sm:$0xf]
  %v141 = vld [vmem:[%s0 + $0x1b8] sm:$0xf]
  %v142 = vld [vmem:[%s0 + $0x1bc] sm:$0xf]
  %v143 = vld [vmem:[%s0 + $0x1c0] sm:$0xf]
  %v144 = vld [vmem:[%s0 + $0x1c4] sm:$0xf]
  %v145 = vld [vmem:[%s0 + $0x1c8] sm:$0xf]
  %v146 = vld [vmem:[%s0 + $0x1cc] sm:$0xf]
  %v147 = vld [vmem:[%s0 + $0x1d0] sm:$0xf]
  %v148 = vld [vmem:[%s0 + $0x1d4] sm:$0xf]
  %v149 = vld [vmem:[%s0 + $0x1d8] sm:$0xf]
  %v150 = vld [vmem:[%s0 + $0x1dc] sm:$0xf]
  %v151 = vld [vmem:[%s0 + $0x1e0] sm:$0xf]
  %v152 = vld [vmem:[%s0 + $0x1e4] sm:$0xf]
  %v153 = vld [vmem:[%s0 + $0x1e8] sm:$0xf]
  %v154 = vld [vmem:[%s0 + $0x1ec] sm:$0xf]
  %v155 = vld [vmem:[%s0 + $0x1f0] sm:$0xf]
  %v156 = vld [vmem:[%s0 + $0x1f4] sm:$0xf]
  %v157 = vld [vmem:[%s0 + $0x1f8] sm:$0xf]
  %v158 = vld [vmem:[%s0 + $0x1fc] sm:$0xf]
  %v159 = vld [vmem:[%s0 + $0x200] sm:$0xf]
  %v160 = vld [vmem:[%s0 + $0x204] sm:$0xf]
  %v161 = vld [vmem:[%s0 + $0x208] sm:$0xf]
  %v162 = vld [vmem:[%s0 + $0x20c] sm:$0xf]
  %v163 = vld [vmem:[%s0 + $0x210] sm:$0xf]
  %v164 = vld [vmem:[%s0 + $0x214] sm:$0xf]
  %v165 = vld [vmem:[%s0 + $0x218] sm:$0xf]
  %v166 = vld [vmem:[%s0 + $0x21c] sm:$0xf]
  %v167 = vld [vmem:[%s0 + $0x220] sm:$0xf]
  %v168 = vld [vmem:[%s0 + $0x224] sm:$0xf]
  %v169 = vld [vmem:[%s0 + $0x228] sm:$0xf]
  %v170 = vld [vmem:[%s0 + $0x22c] sm:$0xf]
  %v171 = vld [vmem:[%s0 + $0x230] sm:$0xf]
  %v172 = vld [vmem:[%s0 + $0x234] sm:$0xf]
  %v173 = vld [vmem:[%s0 + $0x238] sm:$0xf]
  %v174 = vld [vmem:[%s0 + $0x23c] sm:$0xf]
  %v175 = vld [vmem:[%s1] sm:$0xf]
  %v176 = vld [vmem:[%s1 + $0x4] sm:$0x1]
  %v321 = vunpack.c.l.b16 %v31
  %v322 = vunpack.c.l.b16 %v32
  %v323 = vunpack.c.l.b16 %v33
  %v324 = vunpack.c.l.b16 %v34
  %v325 = vunpack.c.l.b16 %v35
  %v326 = vunpack.c.l.b16 %v36
  %v327 = vunpack.c.l.b16 %v37
  %v328 = vunpack.c.l.b16 %v38
  %v329 = vunpack.c.l.b16 %v39
  %v330 = vunpack.c.l.b16 %v40
  %v331 = vunpack.c.l.b16 %v41
  %v332 = vunpack.c.l.b16 %v42
  %v333 = vunpack.c.l.b16 %v43
  %v334 = vunpack.c.l.b16 %v44
  %v335 = vunpack.c.l.b16 %v45
  %v336 = vunpack.c.l.b16 %v46
  %v337 = vunpack.c.l.b16 %v47
  %v338 = vunpack.c.l.b16 %v48
  %v339 = vunpack.c.l.b16 %v49
  %v340 = vunpack.c.l.b16 %v50
  %v341 = vunpack.c.l.b16 %v51
  %v342 = vunpack.c.l.b16 %v52
  %v343 = vunpack.c.l.b16 %v53
  %v344 = vunpack.c.l.b16 %v54
  %v345 = vunpack.c.l.b16 %v55
  %v346 = vunpack.c.l.b16 %v56
  %v347 = vunpack.c.l.b16 %v57
  %v348 = vunpack.c.l.b16 %v58
  %v349 = vunpack.c.l.b16 %v59
  %v350 = vunpack.c.l.b16 %v60
  %v351 = vunpack.c.l.b16 %v61
  %v352 = vunpack.c.l.b16 %v62
  %v353 = vunpack.c.l.b16 %v63
  %v354 = vunpack.c.l.b16 %v64
  %v355 = vunpack.c.l.b16 %v65
  %v356 = vunpack.c.l.b16 %v66
  %v357 = vunpack.c.l.b16 %v67
  %v358 = vunpack.c.l.b16 %v68
  %v359 = vunpack.c.l.b16 %v69
  %v360 = vunpack.c.l.b16 %v70
  %v361 = vunpack.c.l.b16 %v71
  %v362 = vunpack.c.l.b16 %v72
  %v363 = vunpack.c.l.b16 %v73
  %v364 = vunpack.c.l.b16 %v74
  %v365 = vunpack.c.l.b16 %v75
  %v366 = vunpack.c.l.b16 %v76
  %v367 = vunpack.c.l.b16 %v77
  %v368 = vunpack.c.l.b16 %v78
  %v369 = vunpack.c.l.b16 %v79
  %v370 = vunpack.c.l.b16 %v80
  %v371 = vunpack.c.l.b16 %v81
  %v372 = vunpack.c.l.b16 %v82
  %v373 = vunpack.c.l.b16 %v83
  %v374 = vunpack.c.l.b16 %v84
  %v375 = vunpack.c.l.b16 %v85
  %v376 = vunpack.c.l.b16 %v86
  %v377 = vunpack.c.l.b16 %v87
  %v378 = vunpack.c.l.b16 %v88
  %v379 = vunpack.c.l.b16 %v89
  %v380 = vunpack.c.l.b16 %v90
  %v381 = vunpack.c.l.b16 %v91
  %v382 = vunpack.c.l.b16 %v92
  %v383 = vunpack.c.l.b16 %v93
  %v384 = vunpack.c.l.b16 %v94
  %v385 = vunpack.c.l.b16 %v95
  %v386 = vunpack.c.l.b16 %v96
  %v387 = vunpack.c.l.b16 %v97
  %v388 = vunpack.c.l.b16 %v98
  %v389 = vunpack.c.l.b16 %v99
  %v390 = vunpack.c.l.b16 %v100
  %v391 = vunpack.c.l.b16 %v101
  %v392 = vunpack.c.l.b16 %v102
  %v393 = vunpack.c.l.b16 %v103
  %v394 = vunpack.c.l.b16 %v104
  %v395 = vunpack.c.l.b16 %v105
  %v396 = vunpack.c.l.b16 %v106
  %v397 = vunpack.c.l.b16 %v107
  %v398 = vunpack.c.l.b16 %v108
  %v399 = vunpack.c.l.b16 %v109
  %v400 = vunpack.c.l.b16 %v110
  %v401 = vunpack.c.l.b16 %v111
  %v402 = vunpack.c.l.b16 %v112
  %v403 = vunpack.c.l.b16 %v113
  %v404 = vunpack.c.l.b16 %v114
  %v405 = vunpack.c.l.b16 %v115
  %v406 = vunpack.c.l.b16 %v116
  %v407 = vunpack.c.l.b16 %v117
  %v408 = vunpack.c.l.b16 %v118
  %v409 = vunpack.c.l.b16 %v119
  %v410 = vunpack.c.l.b16 %v120
  %v411 = vunpack.c.l.b16 %v121
  %v412 = vunpack.c.l.b16 %v122
  %v413 = vunpack.c.l.b16 %v123
  %v414 = vunpack.c.l.b16 %v124
  %v415 = vunpack.c.l.b16 %v125
  %v416 = vunpack.c.l.b16 %v126
  %v417 = vunpack.c.l.b16 %v127
  %v418 = vunpack.c.l.b16 %v128
  %v419 = vunpack.c.l.b16 %v129
  %v420 = vunpack.c.l.b16 %v130
  %v421 = vunpack.c.l.b16 %v131
  %v422 = vunpack.c.l.b16 %v132
  %v423 = vunpack.c.l.b16 %v133
  %v424 = vunpack.c.l.b16 %v134
  %v425 = vunpack.c.l.b16 %v135
  %v426 = vunpack.c.l.b16 %v136
  %v427 = vunpack.c.l.b16 %v137
  %v428 = vunpack.c.l.b16 %v138
  %v429 = vunpack.c.l.b16 %v139
  %v430 = vunpack.c.l.b16 %v140
  %v431 = vunpack.c.l.b16 %v141
  %v432 = vunpack.c.l.b16 %v142
  %v433 = vunpack.c.l.b16 %v143
  %v434 = vunpack.c.l.b16 %v144
  %v435 = vunpack.c.l.b16 %v145
  %v436 = vunpack.c.l.b16 %v146
  %v437 = vunpack.c.l.b16 %v147
  %v438 = vunpack.c.l.b16 %v148
  %v439 = vunpack.c.l.b16 %v149
  %v440 = vunpack.c.l.b16 %v150
  %v441 = vunpack.c.l.b16 %v151
  %v442 = vunpack.c.l.b16 %v152
  %v443 = vunpack.c.l.b16 %v153
  %v444 = vunpack.c.l.b16 %v154
  %v445 = vunpack.c.l.b16 %v155
  %v446 = vunpack.c.l.b16 %v156
  %v447 = vunpack.c.l.b16 %v157
  %v448 = vunpack.c.l.b16 %v158
  %v449 = vunpack.c.l.b16 %v159
  %v450 = vunpack.c.l.b16 %v160
  %v451 = vunpack.c.l.b16 %v161
  %v452 = vunpack.c.l.b16 %v162
  %v453 = vunpack.c.l.b16 %v163
  %v454 = vunpack.c.l.b16 %v164
  %v455 = vunpack.c.l.b16 %v165
  %v456 = vunpack.c.l.b16 %v166
  %v457 = vunpack.c.l.b16 %v167
  %v458 = vunpack.c.l.b16 %v168
  %v459 = vunpack.c.l.b16 %v169
  %v460 = vunpack.c.l.b16 %v170
  %v461 = vunpack.c.l.b16 %v171
  %v462 = vunpack.c.l.b16 %v172
  %v463 = vunpack.c.l.b16 %v173
  %v464 = vunpack.c.l.b16 %v174
  %v465 = vpack.c.b16 %v322, %v321
  %v466 = vpack.c.b16 %v324, %v323
  %v467 = vpack.c.b16 %v326, %v325
  %v468 = vpack.c.b16 %v328, %v327
  %v469 = vpack.c.b16 %v330, %v329
  %v470 = vpack.c.b16 %v332, %v331
  %v471 = vpack.c.b16 %v334, %v333
  %v472 = vpack.c.b16 %v336, %v335
  %v473 = vpack.c.b16 %v338, %v337
  %v474 = vpack.c.b16 %v340, %v339
  %v475 = vpack.c.b16 %v342, %v341
  %v476 = vpack.c.b16 %v344, %v343
  %v477 = vpack.c.b16 %v346, %v345
  %v478 = vpack.c.b16 %v348, %v347
  %v479 = vpack.c.b16 %v350, %v349
  %v480 = vpack.c.b16 %v352, %v351
  %v481 = vpack.c.b16 %v354, %v353
  %v482 = vpack.c.b16 %v356, %v355
  %v483 = vpack.c.b16 %v358, %v357
  %v484 = vpack.c.b16 %v360, %v359
  %v485 = vpack.c.b16 %v362, %v361
  %v486 = vpack.c.b16 %v364, %v363
  %v487 = vpack.c.b16 %v366, %v365
  %v488 = vpack.c.b16 %v368, %v367
  %v489 = vpack.c.b16 %v370, %v369
  %v490 = vpack.c.b16 %v372, %v371
  %v491 = vpack.c.b16 %v374, %v373
  %v492 = vpack.c.b16 %v376, %v375
  %v493 = vpack.c.b16 %v378, %v377
  %v494 = vpack.c.b16 %v380, %v379
  %v495 = vpack.c.b16 %v382, %v381
  %v496 = vpack.c.b16 %v384, %v383
  %v497 = vpack.c.b16 %v386, %v385
  %v498 = vpack.c.b16 %v388, %v387
  %v499 = vpack.c.b16 %v390, %v389
  %v500 = vpack.c.b16 %v392, %v391
  %v501 = vpack.c.b16 %v394, %v393
  %v502 = vpack.c.b16 %v396, %v395
  %v503 = vpack.c.b16 %v398, %v397
  %v504 = vpack.c.b16 %v400, %v399
  %v505 = vpack.c.b16 %v402, %v401
  %v506 = vpack.c.b16 %v404, %v403
  %v507 = vpack.c.b16 %v406, %v405
  %v508 = vpack.c.b16 %v408, %v407
  %v509 = vpack.c.b16 %v410, %v409
  %v510 = vpack.c.b16 %v412, %v411
  %v511 = vpack.c.b16 %v414, %v413
  %v512 = vpack.c.b16 %v416, %v415
  %v513 = vpack.c.b16 %v418, %v417
  %v514 = vpack.c.b16 %v420, %v419
  %v515 = vpack.c.b16 %v422, %v421
  %v516 = vpack.c.b16 %v424, %v423
  %v517 = vpack.c.b16 %v426, %v425
  %v518 = vpack.c.b16 %v428, %v427
  %v519 = vpack.c.b16 %v430, %v429
  %v520 = vpack.c.b16 %v432, %v431
  %v521 = vpack.c.b16 %v434, %v433
  %v522 = vpack.c.b16 %v436, %v435
  %v523 = vpack.c.b16 %v438, %v437
  %v524 = vpack.c.b16 %v440, %v439
  %v525 = vpack.c.b16 %v442, %v441
  %v526 = vpack.c.b16 %v444, %v443
  %v527 = vpack.c.b16 %v446, %v445
  %v528 = vpack.c.b16 %v448, %v447
  %v529 = vpack.c.b16 %v450, %v449
  %v530 = vpack.c.b16 %v452, %v451
  %v531 = vpack.c.b16 %v454, %v453
  %v532 = vpack.c.b16 %v456, %v455
  %v533 = vpack.c.b16 %v458, %v457
  %v534 = vpack.c.b16 %v460, %v459
  %v535 = vpack.c.b16 %v462, %v461
  %v536 = vpack.c.b16 %v464, %v463
  %v539 = vunpack.c.l.b16 %v175
  %v540 = vunpack.c.l.b16 %v176
  %v541 = vpack.c.b16 %v540, %v539
  %vm542 = vcmask 72704
  %v544 = vsel %vm542, %v465, 0
  %v547 = vsel %vm542, %v466, 0
  %v550 = vsel %vm542, %v467, 0
  %v553 = vsel %vm542, %v468, 0
  %v556 = vsel %vm542, %v469, 0
  %v559 = vsel %vm542, %v470, 0
  %v562 = vsel %vm542, %v471, 0
  %v565 = vsel %vm542, %v472, 0
  %v568 = vsel %vm542, %v473, 0
  %v571 = vsel %vm542, %v474, 0
  %v574 = vsel %vm542, %v475, 0
  %v577 = vsel %vm542, %v476, 0
  %v580 = vsel %vm542, %v477, 0
  %v583 = vsel %vm542, %v478, 0
  %v586 = vsel %vm542, %v479, 0
  %v589 = vsel %vm542, %v480, 0
  %v592 = vsel %vm542, %v481, 0
  %v595 = vsel %vm542, %v482, 0
  %v598 = vsel %vm542, %v483, 0
  %v601 = vsel %vm542, %v484, 0
  %v604 = vsel %vm542, %v485, 0
  %v607 = vsel %vm542, %v486, 0
  %v610 = vsel %vm542, %v487, 0
  %v613 = vsel %vm542, %v488, 0
  %v616 = vsel %vm542, %v489, 0
  %v619 = vsel %vm542, %v490, 0
  %v622 = vsel %vm542, %v491, 0
  %v625 = vsel %vm542, %v492, 0
  %v628 = vsel %vm542, %v493, 0
  %v631 = vsel %vm542, %v494, 0
  %v634 = vsel %vm542, %v495, 0
  %v637 = vsel %vm542, %v496, 0
  %v640 = vsel %vm542, %v497, 0
  %v643 = vsel %vm542, %v498, 0
  %v646 = vsel %vm542, %v499, 0
  %v649 = vsel %vm542, %v500, 0
  %v652 = vsel %vm542, %v501, 0
  %v655 = vsel %vm542, %v502, 0
  %v658 = vsel %vm542, %v503, 0
  %v661 = vsel %vm542, %v504, 0
  %v664 = vsel %vm542, %v505, 0
  %v667 = vsel %vm542, %v506, 0
  %v670 = vsel %vm542, %v507, 0
  %v673 = vsel %vm542, %v508, 0
  %v676 = vsel %vm542, %v509, 0
  %v679 = vsel %vm542, %v510, 0
  %v682 = vsel %vm542, %v511, 0
  %v685 = vsel %vm542, %v512, 0
  %v688 = vsel %vm542, %v513, 0
  %v691 = vsel %vm542, %v514, 0
  %v694 = vsel %vm542, %v515, 0
  %v697 = vsel %vm542, %v516, 0
  %v700 = vsel %vm542, %v517, 0
  %v703 = vsel %vm542, %v518, 0
  %v706 = vsel %vm542, %v519, 0
  %v709 = vsel %vm542, %v520, 0
  %v712 = vsel %vm542, %v521, 0
  %v715 = vsel %vm542, %v522, 0
  %v718 = vsel %vm542, %v523, 0
  %v721 = vsel %vm542, %v524, 0
  %v724 = vsel %vm542, %v525, 0
  %v727 = vsel %vm542, %v526, 0
  %v730 = vsel %vm542, %v527, 0
  %v733 = vsel %vm542, %v528, 0
  %v736 = vsel %vm542, %v529, 0
  %v739 = vsel %vm542, %v530, 0
  %v742 = vsel %vm542, %v531, 0
  %v745 = vsel %vm542, %v532, 0
  %v748 = vsel %vm542, %v533, 0
  %v751 = vsel %vm542, %v534, 0
  %v754 = vsel %vm542, %v535, 0
  %v757 = vsel %vm542, %v536, 0
  %vm759 = vcmask 1043456
  %vm760 = vcmask 1044480
  %v761 = vsel %vm759, 4294967295, 65535
  %v762 = vsel %vm760, %v761, 0
  %v764 = vand.u32 %v541, %v762
  %766 = vmatprep.subr.bf16.mxu0 0
  %767 = vmatpush1.bf16.msra.mxu0 %v764
  %768 = vmatprep.subr.bf16.mxu0 0
  %769 = vmatpush1.bf16.msra.mxu0 0
  %770 = vmatprep.subr.bf16.mxu0 0
  %771 = vmatpush1.bf16.msra.mxu0 0
  %772 = vmatprep.subr.bf16.mxu0 0
  %773 = vmatpush1.bf16.msra.mxu0 0
  %774 = vmatprep.subr.bf16.mxu0 0
  %775 = vmatpush1.bf16.msra.mxu0 0
  %776 = vmatprep.subr.bf16.mxu0 0
  %777 = vmatpush1.bf16.msra.mxu0 0
  %778 = vmatprep.subr.bf16.mxu0 0
  %779 = vmatpush1.bf16.msra.mxu0 0
  %780 = vmatprep.subr.bf16.mxu0 0
  %781 = vmatpush1.bf16.msra.mxu0 0
  %782 = vmatprep.subr.bf16.mxu0 0
  %783 = vmatpush1.bf16.msra.mxu0 0
  %784 = vmatprep.subr.bf16.mxu0 0
  %785 = vmatpush1.bf16.msra.mxu0 0
  %786 = vmatprep.subr.bf16.mxu0 0
  %787 = vmatpush1.bf16.msra.mxu0 0
  %788 = vmatprep.subr.bf16.mxu0 0
  %789 = vmatpush1.bf16.msra.mxu0 0
  %790 = vmatprep.subr.bf16.mxu0 0
  %791 = vmatpush1.bf16.msra.mxu0 0
  %792 = vmatprep.subr.bf16.mxu0 0
  %793 = vmatpush1.bf16.msra.mxu0 0
  %794 = vmatprep.subr.bf16.mxu0 0
  %795 = vmatpush1.bf16.msra.mxu0 0
  %796 = vmatprep.subr.bf16.mxu0 0
  %797 = vmatpush1.bf16.msra.mxu0 0
  %798 = vmatprep.mubr.bf16.mxu0 0
  %799 = vmatmul.mubr.bf16.gmra.mrb[0].mxu0 %v544
  %v800 = vpop.f32.mrb[0].mxu0
  %v801 = vadd.f32 0.0, %v800
  %v802 = vpop.f32.mrb[0].mxu0
  %v803 = vpop.f32.mrb[0].mxu0
  %v804 = vadd.f32 0.0, %v803
  %v805 = vpop.f32.mrb[0].mxu0
  %806 = vmatprep.mubr.bf16.mxu0 0
  %807 = vmatmul.mubr.bf16.gmra.mrb[0].mxu0 %v547
  %v808 = vpop.f32.mrb[0].mxu0
  %v809 = vadd.f32 0.0, %v808
  %v810 = vpop.f32.mrb[0].mxu0
  %v811 = vpop.f32.mrb[0].mxu0
  %v812 = vadd.f32 0.0, %v811
  %v813 = vpop.f32.mrb[0].mxu0
  %814 = vmatprep.mubr.bf16.mxu0 0
  %815 = vmatmul.mubr.bf16.gmra.mrb[0].mxu0 %v550
  %v816 = vpop.f32.mrb[0].mxu0
  %v817 = vadd.f32 0.0, %v816
  %v818 = vpop.f32.mrb[0].mxu0
  %v819 = vpop.f32.mrb[0].mxu0
  %v820 = vadd.f32 0.0, %v819
  %v821 = vpop.f32.mrb[0].mxu0
  %822 = vmatprep.mubr.bf16.mxu0 0
  %823 = vmatmul.mubr.bf16.gmra.mrb[0].mxu0 %v553
  %v824 = vpop.f32.mrb[0].mxu0
  %v825 = vadd.f32 0.0, %v824
  %v826 = vpop.f32.mrb[0].mxu0
  %v827 = vpop.f32.mrb[0].mxu0
  %v828 = vadd.f32 0.0, %v827
  %v829 = vpop.f32.mrb[0].mxu0
  %830 = vmatprep.mubr.bf16.mxu0 0
  %831 = vmatmul.mubr.bf16.gmra.mrb[0].mxu0 %v556
  %v832 = vpop.f32.mrb[0].mxu0
  %v833 = vadd.f32 0.0, %v832
  %v834 = vpop.f32.mrb[0].mxu0
  %v835 = vpop.f32.mrb[0].mxu0
  %v836 = vadd.f32 0.0, %v835
  %v837 = vpop.f32.mrb[0].mxu0
  %838 = vmatprep.mubr.bf16.mxu0 0
  %839 = vmatmul.mubr.bf16.gmra.mrb[0].mxu0 %v559
  %v840 = vpop.f32.mrb[0].mxu0
  %v841 = vadd.f32 0.0, %v840
  %v842 = vpop.f32.mrb[0].mxu0
  %v843 = vpop.f32.mrb[0].mxu0
  %v844 = vadd.f32 0.0, %v843
  %v845 = vpop.f32.mrb[0].mxu0
  %846 = vmatprep.mubr.bf16.mxu0 0
  %847 = vmatmul.mubr.bf16.gmra.mrb[0].mxu0 %v562
  %v848 = vpop.f32.mrb[0].mxu0
  %v849 = vadd.f32 0.0, %v848
  %v850 = vpop.f32.mrb[0].mxu0
  %v851 = vpop.f32.mrb[0].mxu0
  %v852 = vadd.f32 0.0, %v851
  %v853 = vpop.f32.mrb[0].mxu0
  %854 = vmatprep.mubr.bf16.mxu0 0
  %855 = vmatmul.mubr.bf16.gmra.mrb[0].mxu0 %v565
  %v856 = vpop.f32.mrb[0].mxu0
  %v857 = vadd.f32 0.0, %v856
  %v858 = vpop.f32.mrb[0].mxu0
  %v859 = vpop.f32.mrb[0].mxu0
  %v860 = vadd.f32 0.0, %v859
  %v861 = vpop.f32.mrb[0].mxu0
  %862 = vmatprep.mubr.bf16.mxu0 0
  %863 = vmatmul.mubr.bf16.gmra.mrb[0].mxu0 %v568
  %v864 = vpop.f32.mrb[0].mxu0
  %v865 = vadd.f32 0.0, %v864
  %v866 = vpop.f32.mrb[0].mxu0
  %v867 = vpop.f32.mrb[0].mxu0
  %v868 = vadd.f32 0.0, %v867
  %v869 = vpop.f32.mrb[0].mxu0
  %870 = vmatprep.mubr.bf16.mxu0 0
  %871 = vmatmul.mubr.bf16.gmra.mrb[0].mxu0 %v571
  %v872 = vpop.f32.mrb[0].mxu0
  %v873 = vadd.f32 0.0, %v872
  %v874 = vpop.f32.mrb[0].mxu0
  %v875 = vpop.f32.mrb[0].mxu0
  %v876 = vadd.f32 0.0, %v875
  %v877 = vpop.f32.mrb[0].mxu0
  %878 = vmatprep.mubr.bf16.mxu0 0
  %879 = vmatmul.mubr.bf16.gmra.mrb[0].mxu0 %v574
  %v880 = vpop.f32.mrb[0].mxu0
  %v881 = vadd.f32 0.0, %v880
  %v882 = vpop.f32.mrb[0].mxu0
  %v883 = vpop.f32.mrb[0].mxu0
  %v884 = vadd.f32 0.0, %v883
  %v885 = vpop.f32.mrb[0].mxu0
  %886 = vmatprep.mubr.bf16.mxu0 0
  %887 = vmatmul.mubr.bf16.gmra.mrb[0].mxu0 %v577
  %v888 = vpop.f32.mrb[0].mxu0
  %v889 = vadd.f32 0.0, %v888
  %v890 = vpop.f32.mrb[0].mxu0
  %v891 = vpop.f32.mrb[0].mxu0
  %v892 = vadd.f32 0.0, %v891
  %v893 = vpop.f32.mrb[0].mxu0
  %894 = vmatprep.mubr.bf16.mxu0 0
  %895 = vmatmul.mubr.bf16.gmra.mrb[0].mxu0 %v580
  %v896 = vpop.f32.mrb[0].mxu0
  %v897 = vadd.f32 0.0, %v896
  %v898 = vpop.f32.mrb[0].mxu0
  %v899 = vpop.f32.mrb[0].mxu0
  %v900 = vadd.f32 0.0, %v899
  %v901 = vpop.f32.mrb[0].mxu0
  %902 = vmatprep.mubr.bf16.mxu0 0
  %903 = vmatmul.mubr.bf16.gmra.mrb[0].mxu0 %v583
  %v904 = vpop.f32.mrb[0].mxu0
  %v905 = vadd.f32 0.0, %v904
  %v906 = vpop.f32.mrb[0].mxu0
  %v907 = vpop.f32.mrb[0].mxu0
  %v908 = vadd.f32 0.0, %v907
  %v909 = vpop.f32.mrb[0].mxu0
  %910 = vmatprep.mubr.bf16.mxu0 0
  %911 = vmatmul.mubr.bf16.gmra.mrb[0].mxu0 %v586
  %v912 = vpop.f32.mrb[0].mxu0
  %v913 = vadd.f32 0.0, %v912
  %v914 = vpop.f32.mrb[0].mxu0
  %v915 = vpop.f32.mrb[0].mxu0
  %v916 = vadd.f32 0.0, %v915
  %v917 = vpop.f32.mrb[0].mxu0
  %918 = vmatprep.mubr.bf16.mxu0 0
  %919 = vmatmul.mubr.bf16.gmra.mrb[0].mxu0 %v589
  %v920 = vpop.f32.mrb[0].mxu0
  %v921 = vadd.f32 0.0, %v920
  %v922 = vpop.f32.mrb[0].mxu0
  %v923 = vpop.f32.mrb[0].mxu0
  %v924 = vadd.f32 0.0, %v923
  %v925 = vpop.f32.mrb[0].mxu0
  %926 = vmatprep.mubr.bf16.mxu0 0
  %927 = vmatmul.mubr.bf16.gmra.mrb[0].mxu0 %v592
  %v928 = vpop.f32.mrb[0].mxu0
  %v929 = vadd.f32 0.0, %v928
  %v930 = vpop.f32.mrb[0].mxu0
  %v931 = vpop.f32.mrb[0].mxu0
  %v932 = vadd.f32 0.0, %v931
  %v933 = vpop.f32.mrb[0].mxu0
  %934 = vmatprep.mubr.bf16.mxu0 0
  %935 = vmatmul.mubr.bf16.gmra.mrb[0].mxu0 %v595
  %v936 = vpop.f32.mrb[0].mxu0
  %v937 = vadd.f32 0.0, %v936
  %v938 = vpop.f32.mrb[0].mxu0
  %v939 = vpop.f32.mrb[0].mxu0
  %v940 = vadd.f32 0.0, %v939
  %v941 = vpop.f32.mrb[0].mxu0
  %942 = vmatprep.mubr.bf16.mxu0 0
  %943 = vmatmul.mubr.bf16.gmra.mrb[0].mxu0 %v598
  %v944 = vpop.f32.mrb[0].mxu0
  %v945 = vadd.f32 0.0, %v944
  %v946 = vpop.f32.mrb[0].mxu0
  %v947 = vpop.f32.mrb[0].mxu0
  %v948 = vadd.f32 0.0, %v947
  %v949 = vpop.f32.mrb[0].mxu0
  %950 = vmatprep.mubr.bf16.mxu0 0
  %951 = vmatmul.mubr.bf16.gmra.mrb[0].mxu0 %v601
  %v952 = vpop.f32.mrb[0].mxu0
  %v953 = vadd.f32 0.0, %v952
  %v954 = vpop.f32.mrb[0].mxu0
  %v955 = vpop.f32.mrb[0].mxu0
  %v956 = vadd.f32 0.0, %v955
  %v957 = vpop.f32.mrb[0].mxu0
  %958 = vmatprep.mubr.bf16.mxu0 0
  %959 = vmatmul.mubr.bf16.gmra.mrb[0].mxu0 %v604
  %v960 = vpop.f32.mrb[0].mxu0
  %v961 = vadd.f32 0.0, %v960
  %v962 = vpop.f32.mrb[0].mxu0
  %v963 = vpop.f32.mrb[0].mxu0
  %v964 = vadd.f32 0.0, %v963
  %v965 = vpop.f32.mrb[0].mxu0
  %966 = vmatprep.mubr.bf16.mxu0 0
  %967 = vmatmul.mubr.bf16.gmra.mrb[0].mxu0 %v607
  %v968 = vpop.f32.mrb[0].mxu0
  %v969 = vadd.f32 0.0, %v968
  %v970 = vpop.f32.mrb[0].mxu0
  %v971 = vpop.f32.mrb[0].mxu0
  %v972 = vadd.f32 0.0, %v971
  %v973 = vpop.f32.mrb[0].mxu0
  %974 = vmatprep.mubr.bf16.mxu0 0
  %975 = vmatmul.mubr.bf16.gmra.mrb[0].mxu0 %v610
  %v976 = vpop.f32.mrb[0].mxu0
  %v977 = vadd.f32 0.0, %v976
  %v978 = vpop.f32.mrb[0].mxu0
  %v979 = vpop.f32.mrb[0].mxu0
  %v980 = vadd.f32 0.0, %v979
  %v981 = vpop.f32.mrb[0].mxu0
  %982 = vmatprep.mubr.bf16.mxu0 0
  %983 = vmatmul.mubr.bf16.gmra.mrb[0].mxu0 %v613
  %v984 = vpop.f32.mrb[0].mxu0
  %v985 = vadd.f32 0.0, %v984
  %v986 = vpop.f32.mrb[0].mxu0
  %v987 = vpop.f32.mrb[0].mxu0
  %v988 = vadd.f32 0.0, %v987
  %v989 = vpop.f32.mrb[0].mxu0
  %990 = vmatprep.mubr.bf16.mxu0 0
  %991 = vmatmul.mubr.bf16.gmra.mrb[0].mxu0 %v616
  %v992 = vpop.f32.mrb[0].mxu0
  %v993 = vadd.f32 0.0, %v992
  %v994 = vpop.f32.mrb[0].mxu0
  %v995 = vpop.f32.mrb[0].mxu0
  %v996 = vadd.f32 0.0, %v995
  %v997 = vpop.f32.mrb[0].mxu0
  %998 = vmatprep.mubr.bf16.mxu0 0
  %999 = vmatmul.mubr.bf16.gmra.mrb[0].mxu0 %v619
  %v1000 = vpop.f32.mrb[0].mxu0
  %v1001 = vadd.f32 0.0, %v1000
  %v1002 = vpop.f32.mrb[0].mxu0
  %v1003 = vpop.f32.mrb[0].mxu0
  %v1004 = vadd.f32 0.0, %v1003
  %v1005 = vpop.f32.mrb[0].mxu0
  %1006 = vmatprep.mubr.bf16.mxu0 0
  %1007 = vmatmul.mubr.bf16.gmra.mrb[0].mxu0 %v622
  %v1008 = vpop.f32.mrb[0].mxu0
  %v1009 = vadd.f32 0.0, %v1008
  %v1010 = vpop.f32.mrb[0].mxu0
  %v1011 = vpop.f32.mrb[0].mxu0
  %v1012 = vadd.f32 0.0, %v1011
  %v1013 = vpop.f32.mrb[0].mxu0
  %1014 = vmatprep.mubr.bf16.mxu0 0
  %1015 = vmatmul.mubr.bf16.gmra.mrb[0].mxu0 %v625
  %v1016 = vpop.f32.mrb[0].mxu0
  %v1017 = vadd.f32 0.0, %v1016
  %v1018 = vpop.f32.mrb[0].mxu0
  %v1019 = vpop.f32.mrb[0].mxu0
  %v1020 = vadd.f32 0.0, %v1019
  %v1021 = vpop.f32.mrb[0].mxu0
  %1022 = vmatprep.mubr.bf16.mxu0 0
  %1023 = vmatmul.mubr.bf16.gmra.mrb[0].mxu0 %v628
  %v1024 = vpop.f32.mrb[0].mxu0
  %v1025 = vadd.f32 0.0, %v1024
  %v1026 = vpop.f32.mrb[0].mxu0
  %v1027 = vpop.f32.mrb[0].mxu0
  %v1028 = vadd.f32 0.0, %v1027
  %v1029 = vpop.f32.mrb[0].mxu0
  %1030 = vmatprep.mubr.bf16.mxu0 0
  %1031 = vmatmul.mubr.bf16.gmra.mrb[0].mxu0 %v631
  %v1032 = vpop.f32.mrb[0].mxu0
  %v1033 = vadd.f32 0.0, %v1032
  %v1034 = vpop.f32.mrb[0].mxu0
  %v1035 = vpop.f32.mrb[0].mxu0
  %v1036 = vadd.f32 0.0, %v1035
  %v1037 = vpop.f32.mrb[0].mxu0
  %1038 = vmatprep.mubr.bf16.mxu0 0
  %1039 = vmatmul.mubr.bf16.gmra.mrb[0].mxu0 %v634
  %v1040 = vpop.f32.mrb[0].mxu0
  %v1041 = vadd.f32 0.0, %v1040
  %v1042 = vpop.f32.mrb[0].mxu0
  %v1043 = vpop.f32.mrb[0].mxu0
  %v1044 = vadd.f32 0.0, %v1043
  %v1045 = vpop.f32.mrb[0].mxu0
  %1046 = vmatprep.mubr.bf16.mxu0 0
  %1047 = vmatmul.mubr.bf16.gmra.mrb[0].mxu0 %v637
  %v1048 = vpop.f32.mrb[0].mxu0
  %v1049 = vadd.f32 0.0, %v1048
  %v1050 = vpop.f32.mrb[0].mxu0
  %v1051 = vpop.f32.mrb[0].mxu0
  %v1052 = vadd.f32 0.0, %v1051
  %v1053 = vpop.f32.mrb[0].mxu0
  %1054 = vmatprep.mubr.bf16.mxu0 0
  %1055 = vmatmul.mubr.bf16.gmra.mrb[0].mxu0 %v640
  %v1056 = vpop.f32.mrb[0].mxu0
  %v1057 = vadd.f32 0.0, %v1056
  %v1058 = vpop.f32.mrb[0].mxu0
  %v1059 = vpop.f32.mrb[0].mxu0
  %v1060 = vadd.f32 0.0, %v1059
  %v1061 = vpop.f32.mrb[0].mxu0
  %1062 = vmatprep.mubr.bf16.mxu0 0
  %1063 = vmatmul.mubr.bf16.gmra.mrb[0].mxu0 %v643
  %v1064 = vpop.f32.mrb[0].mxu0
  %v1065 = vadd.f32 0.0, %v1064
  %v1066 = vpop.f32.mrb[0].mxu0
  %v1067 = vpop.f32.mrb[0].mxu0
  %v1068 = vadd.f32 0.0, %v1067
  %v1069 = vpop.f32.mrb[0].mxu0
  %1070 = vmatprep.mubr.bf16.mxu0 0
  %1071 = vmatmul.mubr.bf16.gmra.mrb[0].mxu0 %v646
  %v1072 = vpop.f32.mrb[0].mxu0
  %v1073 = vadd.f32 0.0, %v1072
  %v1074 = vpop.f32.mrb[0].mxu0
  %v1075 = vpop.f32.mrb[0].mxu0
  %v1076 = vadd.f32 0.0, %v1075
  %v1077 = vpop.f32.mrb[0].mxu0
  %1078 = vmatprep.mubr.bf16.mxu0 0
  %1079 = vmatmul.mubr.bf16.gmra.mrb[0].mxu0 %v649
  %v1080 = vpop.f32.mrb[0].mxu0
  %v1081 = vadd.f32 0.0, %v1080
  %v1082 = vpop.f32.mrb[0].mxu0
  %v1083 = vpop.f32.mrb[0].mxu0
  %v1084 = vadd.f32 0.0, %v1083
  %v1085 = vpop.f32.mrb[0].mxu0
  %1086 = vmatprep.mubr.bf16.mxu0 0
  %1087 = vmatmul.mubr.bf16.gmra.mrb[0].mxu0 %v652
  %v1088 = vpop.f32.mrb[0].mxu0
  %v1089 = vadd.f32 0.0, %v1088
  %v1090 = vpop.f32.mrb[0].mxu0
  %v1091 = vpop.f32.mrb[0].mxu0
  %v1092 = vadd.f32 0.0, %v1091
  %v1093 = vpop.f32.mrb[0].mxu0
  %1094 = vmatprep.mubr.bf16.mxu0 0
  %1095 = vmatmul.mubr.bf16.gmra.mrb[0].mxu0 %v655
  %v1096 = vpop.f32.mrb[0].mxu0
  %v1097 = vadd.f32 0.0, %v1096
  %v1098 = vpop.f32.mrb[0].mxu0
  %v1099 = vpop.f32.mrb[0].mxu0
  %v1100 = vadd.f32 0.0, %v1099
  %v1101 = vpop.f32.mrb[0].mxu0
  %1102 = vmatprep.mubr.bf16.mxu0 0
  %1103 = vmatmul.mubr.bf16.gmra.mrb[0].mxu0 %v658
  %v1104 = vpop.f32.mrb[0].mxu0
  %v1105 = vadd.f32 0.0, %v1104
  %v1106 = vpop.f32.mrb[0].mxu0
  %v1107 = vpop.f32.mrb[0].mxu0
  %v1108 = vadd.f32 0.0, %v1107
  %v1109 = vpop.f32.mrb[0].mxu0
  %1110 = vmatprep.mubr.bf16.mxu0 0
  %1111 = vmatmul.mubr.bf16.gmra.mrb[0].mxu0 %v661
  %v1112 = vpop.f32.mrb[0].mxu0
  %v1113 = vadd.f32 0.0, %v1112
  %v1114 = vpop.f32.mrb[0].mxu0
  %v1115 = vpop.f32.mrb[0].mxu0
  %v1116 = vadd.f32 0.0, %v1115
  %v1117 = vpop.f32.mrb[0].mxu0
  %1118 = vmatprep.mubr.bf16.mxu0 0
  %1119 = vmatmul.mubr.bf16.gmra.mrb[0].mxu0 %v664
  %v1120 = vpop.f32.mrb[0].mxu0
  %v1121 = vadd.f32 0.0, %v1120
  %v1122 = vpop.f32.mrb[0].mxu0
  %v1123 = vpop.f32.mrb[0].mxu0
  %v1124 = vadd.f32 0.0, %v1123
  %v1125 = vpop.f32.mrb[0].mxu0
  %1126 = vmatprep.mubr.bf16.mxu0 0
  %1127 = vmatmul.mubr.bf16.gmra.mrb[0].mxu0 %v667
  %v1128 = vpop.f32.mrb[0].mxu0
  %v1129 = vadd.f32 0.0, %v1128
  %v1130 = vpop.f32.mrb[0].mxu0
  %v1131 = vpop.f32.mrb[0].mxu0
  %v1132 = vadd.f32 0.0, %v1131
  %v1133 = vpop.f32.mrb[0].mxu0
  %1134 = vmatprep.mubr.bf16.mxu0 0
  %1135 = vmatmul.mubr.bf16.gmra.mrb[0].mxu0 %v670
  %v1136 = vpop.f32.mrb[0].mxu0
  %v1137 = vadd.f32 0.0, %v1136
  %v1138 = vpop.f32.mrb[0].mxu0
  %v1139 = vpop.f32.mrb[0].mxu0
  %v1140 = vadd.f32 0.0, %v1139
  %v1141 = vpop.f32.mrb[0].mxu0
  %1142 = vmatprep.mubr.bf16.mxu0 0
  %1143 = vmatmul.mubr.bf16.gmra.mrb[0].mxu0 %v673
  %v1144 = vpop.f32.mrb[0].mxu0
  %v1145 = vadd.f32 0.0, %v1144
  %v1146 = vpop.f32.mrb[0].mxu0
  %v1147 = vpop.f32.mrb[0].mxu0
  %v1148 = vadd.f32 0.0, %v1147
  %v1149 = vpop.f32.mrb[0].mxu0
  %1150 = vmatprep.mubr.bf16.mxu0 0
  %1151 = vmatmul.mubr.bf16.gmra.mrb[0].mxu0 %v676
  %v1152 = vpop.f32.mrb[0].mxu0
  %v1153 = vadd.f32 0.0, %v1152
  %v1154 = vpop.f32.mrb[0].mxu0
  %v1155 = vpop.f32.mrb[0].mxu0
  %v1156 = vadd.f32 0.0, %v1155
  %v1157 = vpop.f32.mrb[0].mxu0
  %1158 = vmatprep.mubr.bf16.mxu0 0
  %1159 = vmatmul.mubr.bf16.gmra.mrb[0].mxu0 %v679
  %v1160 = vpop.f32.mrb[0].mxu0
  %v1161 = vadd.f32 0.0, %v1160
  %v1162 = vpop.f32.mrb[0].mxu0
  %v1163 = vpop.f32.mrb[0].mxu0
  %v1164 = vadd.f32 0.0, %v1163
  %v1165 = vpop.f32.mrb[0].mxu0
  %1166 = vmatprep.mubr.bf16.mxu0 0
  %1167 = vmatmul.mubr.bf16.gmra.mrb[0].mxu0 %v682
  %v1168 = vpop.f32.mrb[0].mxu0
  %v1169 = vadd.f32 0.0, %v1168
  %v1170 = vpop.f32.mrb[0].mxu0
  %v1171 = vpop.f32.mrb[0].mxu0
  %v1172 = vadd.f32 0.0, %v1171
  %v1173 = vpop.f32.mrb[0].mxu0
  %1174 = vmatprep.mubr.bf16.mxu0 0
  %1175 = vmatmul.mubr.bf16.gmra.mrb[0].mxu0 %v685
  %v1176 = vpop.f32.mrb[0].mxu0
  %v1177 = vadd.f32 0.0, %v1176
  %v1178 = vpop.f32.mrb[0].mxu0
  %v1179 = vpop.f32.mrb[0].mxu0
  %v1180 = vadd.f32 0.0, %v1179
  %v1181 = vpop.f32.mrb[0].mxu0
  %1182 = vmatprep.mubr.bf16.mxu0 0
  %1183 = vmatmul.mubr.bf16.gmra.mrb[0].mxu0 %v688
  %v1184 = vpop.f32.mrb[0].mxu0
  %v1185 = vadd.f32 0.0, %v1184
  %v1186 = vpop.f32.mrb[0].mxu0
  %v1187 = vpop.f32.mrb[0].mxu0
  %v1188 = vadd.f32 0.0, %v1187
  %v1189 = vpop.f32.mrb[0].mxu0
  %1190 = vmatprep.mubr.bf16.mxu0 0
  %1191 = vmatmul.mubr.bf16.gmra.mrb[0].mxu0 %v691
  %v1192 = vpop.f32.mrb[0].mxu0
  %v1193 = vadd.f32 0.0, %v1192
  %v1194 = vpop.f32.mrb[0].mxu0
  %v1195 = vpop.f32.mrb[0].mxu0
  %v1196 = vadd.f32 0.0, %v1195
  %v1197 = vpop.f32.mrb[0].mxu0
  %1198 = vmatprep.mubr.bf16.mxu0 0
  %1199 = vmatmul.mubr.bf16.gmra.mrb[0].mxu0 %v694
  %v1200 = vpop.f32.mrb[0].mxu0
  %v1201 = vadd.f32 0.0, %v1200
  %v1202 = vpop.f32.mrb[0].mxu0
  %v1203 = vpop.f32.mrb[0].mxu0
  %v1204 = vadd.f32 0.0, %v1203
  %v1205 = vpop.f32.mrb[0].mxu0
  %1206 = vmatprep.mubr.bf16.mxu0 0
  %1207 = vmatmul.mubr.bf16.gmra.mrb[0].mxu0 %v697
  %v1208 = vpop.f32.mrb[0].mxu0
  %v1209 = vadd.f32 0.0, %v1208
  %v1210 = vpop.f32.mrb[0].mxu0
  %v1211 = vpop.f32.mrb[0].mxu0
  %v1212 = vadd.f32 0.0, %v1211
  %v1213 = vpop.f32.mrb[0].mxu0
  %1214 = vmatprep.mubr.bf16.mxu0 0
  %1215 = vmatmul.mubr.bf16.gmra.mrb[0].mxu0 %v700
  %v1216 = vpop.f32.mrb[0].mxu0
  %v1217 = vadd.f32 0.0, %v1216
  %v1218 = vpop.f32.mrb[0].mxu0
  %v1219 = vpop.f32.mrb[0].mxu0
  %v1220 = vadd.f32 0.0, %v1219
  %v1221 = vpop.f32.mrb[0].mxu0
  %1222 = vmatprep.mubr.bf16.mxu0 0
  %1223 = vmatmul.mubr.bf16.gmra.mrb[0].mxu0 %v703
  %v1224 = vpop.f32.mrb[0].mxu0
  %v1225 = vadd.f32 0.0, %v1224
  %v1226 = vpop.f32.mrb[0].mxu0
  %v1227 = vpop.f32.mrb[0].mxu0
  %v1228 = vadd.f32 0.0, %v1227
  %v1229 = vpop.f32.mrb[0].mxu0
  %1230 = vmatprep.mubr.bf16.mxu0 0
  %1231 = vmatmul.mubr.bf16.gmra.mrb[0].mxu0 %v706
  %v1232 = vpop.f32.mrb[0].mxu0
  %v1233 = vadd.f32 0.0, %v1232
  %v1234 = vpop.f32.mrb[0].mxu0
  %v1235 = vpop.f32.mrb[0].mxu0
  %v1236 = vadd.f32 0.0, %v1235
  %v1237 = vpop.f32.mrb[0].mxu0
  %1238 = vmatprep.mubr.bf16.mxu0 0
  %1239 = vmatmul.mubr.bf16.gmra.mrb[0].mxu0 %v709
  %v1240 = vpop.f32.mrb[0].mxu0
  %v1241 = vadd.f32 0.0, %v1240
  %v1242 = vpop.f32.mrb[0].mxu0
  %v1243 = vpop.f32.mrb[0].mxu0
  %v1244 = vadd.f32 0.0, %v1243
  %v1245 = vpop.f32.mrb[0].mxu0
  %1246 = vmatprep.mubr.bf16.mxu0 0
  %1247 = vmatmul.mubr.bf16.gmra.mrb[0].mxu0 %v712
  %v1248 = vpop.f32.mrb[0].mxu0
  %v1249 = vadd.f32 0.0, %v1248
  %v1250 = vpop.f32.mrb[0].mxu0
  %v1251 = vpop.f32.mrb[0].mxu0
  %v1252 = vadd.f32 0.0, %v1251
  %v1253 = vpop.f32.mrb[0].mxu0
  %1254 = vmatprep.mubr.bf16.mxu0 0
  %1255 = vmatmul.mubr.bf16.gmra.mrb[0].mxu0 %v715
  %v1256 = vpop.f32.mrb[0].mxu0
  %v1257 = vadd.f32 0.0, %v1256
  %v1258 = vpop.f32.mrb[0].mxu0
  %v1259 = vpop.f32.mrb[0].mxu0
  %v1260 = vadd.f32 0.0, %v1259
  %v1261 = vpop.f32.mrb[0].mxu0
  %1262 = vmatprep.mubr.bf16.mxu0 0
  %1263 = vmatmul.mubr.bf16.gmra.mrb[0].mxu0 %v718
  %v1264 = vpop.f32.mrb[0].mxu0
  %v1265 = vadd.f32 0.0, %v1264
  %v1266 = vpop.f32.mrb[0].mxu0
  %v1267 = vpop.f32.mrb[0].mxu0
  %v1268 = vadd.f32 0.0, %v1267
  %v1269 = vpop.f32.mrb[0].mxu0
  %1270 = vmatprep.mubr.bf16.mxu0 0
  %1271 = vmatmul.mubr.bf16.gmra.mrb[0].mxu0 %v721
  %v1272 = vpop.f32.mrb[0].mxu0
  %v1273 = vadd.f32 0.0, %v1272
  %v1274 = vpop.f32.mrb[0].mxu0
  %v1275 = vpop.f32.mrb[0].mxu0
  %v1276 = vadd.f32 0.0, %v1275
  %v1277 = vpop.f32.mrb[0].mxu0
  %1278 = vmatprep.mubr.bf16.mxu0 0
  %1279 = vmatmul.mubr.bf16.gmra.mrb[0].mxu0 %v724
  %v1280 = vpop.f32.mrb[0].mxu0
  %v1281 = vadd.f32 0.0, %v1280
  %v1282 = vpop.f32.mrb[0].mxu0
  %v1283 = vpop.f32.mrb[0].mxu0
  %v1284 = vadd.f32 0.0, %v1283
  %v1285 = vpop.f32.mrb[0].mxu0
  %1286 = vmatprep.mubr.bf16.mxu0 0
  %1287 = vmatmul.mubr.bf16.gmra.mrb[0].mxu0 %v727
  %v1288 = vpop.f32.mrb[0].mxu0
  %v1289 = vadd.f32 0.0, %v1288
  %v1290 = vpop.f32.mrb[0].mxu0
  %v1291 = vpop.f32.mrb[0].mxu0
  %v1292 = vadd.f32 0.0, %v1291
  %v1293 = vpop.f32.mrb[0].mxu0
  %1294 = vmatprep.mubr.bf16.mxu0 0
  %1295 = vmatmul.mubr.bf16.gmra.mrb[0].mxu0 %v730
  %v1296 = vpop.f32.mrb[0].mxu0
  %v1297 = vadd.f32 0.0, %v1296
  %v1298 = vpop.f32.mrb[0].mxu0
  %v1299 = vpop.f32.mrb[0].mxu0
  %v1300 = vadd.f32 0.0, %v1299
  %v1301 = vpop.f32.mrb[0].mxu0
  %1302 = vmatprep.mubr.bf16.mxu0 0
  %1303 = vmatmul.mubr.bf16.gmra.mrb[0].mxu0 %v733
  %v1304 = vpop.f32.mrb[0].mxu0
  %v1305 = vadd.f32 0.0, %v1304
  %v1306 = vpop.f32.mrb[0].mxu0
  %v1307 = vpop.f32.mrb[0].mxu0
  %v1308 = vadd.f32 0.0, %v1307
  %v1309 = vpop.f32.mrb[0].mxu0
  %1310 = vmatprep.mubr.bf16.mxu0 0
  %1311 = vmatmul.mubr.bf16.gmra.mrb[0].mxu0 %v736
  %v1312 = vpop.f32.mrb[0].mxu0
  %v1313 = vadd.f32 0.0, %v1312
  %v1314 = vpop.f32.mrb[0].mxu0
  %v1315 = vpop.f32.mrb[0].mxu0
  %v1316 = vadd.f32 0.0, %v1315
  %v1317 = vpop.f32.mrb[0].mxu0
  %1318 = vmatprep.mubr.bf16.mxu0 0
  %1319 = vmatmul.mubr.bf16.gmra.mrb[0].mxu0 %v739
  %v1320 = vpop.f32.mrb[0].mxu0
  %v1321 = vadd.f32 0.0, %v1320
  %v1322 = vpop.f32.mrb[0].mxu0
  %v1323 = vpop.f32.mrb[0].mxu0
  %v1324 = vadd.f32 0.0, %v1323
  %v1325 = vpop.f32.mrb[0].mxu0
  %1326 = vmatprep.mubr.bf16.mxu0 0
  %1327 = vmatmul.mubr.bf16.gmra.mrb[0].mxu0 %v742
  %v1328 = vpop.f32.mrb[0].mxu0
  %v1329 = vadd.f32 0.0, %v1328
  %v1330 = vpop.f32.mrb[0].mxu0
  %v1331 = vpop.f32.mrb[0].mxu0
  %v1332 = vadd.f32 0.0, %v1331
  %v1333 = vpop.f32.mrb[0].mxu0
  %1334 = vmatprep.mubr.bf16.mxu0 0
  %1335 = vmatmul.mubr.bf16.gmra.mrb[0].mxu0 %v745
  %v1336 = vpop.f32.mrb[0].mxu0
  %v1337 = vadd.f32 0.0, %v1336
  %v1338 = vpop.f32.mrb[0].mxu0
  %v1339 = vpop.f32.mrb[0].mxu0
  %v1340 = vadd.f32 0.0, %v1339
  %v1341 = vpop.f32.mrb[0].mxu0
  %1342 = vmatprep.mubr.bf16.mxu0 0
  %1343 = vmatmul.mubr.bf16.gmra.mrb[0].mxu0 %v748
  %v1344 = vpop.f32.mrb[0].mxu0
  %v1345 = vadd.f32 0.0, %v1344
  %v1346 = vpop.f32.mrb[0].mxu0
  %v1347 = vpop.f32.mrb[0].mxu0
  %v1348 = vadd.f32 0.0, %v1347
  %v1349 = vpop.f32.mrb[0].mxu0
  %1350 = vmatprep.mubr.bf16.mxu0 0
  %1351 = vmatmul.mubr.bf16.gmra.mrb[0].mxu0 %v751
  %v1352 = vpop.f32.mrb[0].mxu0
  %v1353 = vadd.f32 0.0, %v1352
  %v1354 = vpop.f32.mrb[0].mxu0
  %v1355 = vpop.f32.mrb[0].mxu0
  %v1356 = vadd.f32 0.0, %v1355
  %v1357 = vpop.f32.mrb[0].mxu0
  %1358 = vmatprep.mubr.bf16.mxu0 0
  %1359 = vmatmul.mubr.bf16.gmra.mrb[0].mxu0 %v754
  %v1360 = vpop.f32.mrb[0].mxu0
  %v1361 = vadd.f32 0.0, %v1360
  %v1362 = vpop.f32.mrb[0].mxu0
  %v1363 = vpop.f32.mrb[0].mxu0
  %v1364 = vadd.f32 0.0, %v1363
  %v1365 = vpop.f32.mrb[0].mxu0
  %1366 = vmatprep.mubr.bf16.mxu0 0
  %1367 = vmatmul.mubr.bf16.gmra.mrb[0].mxu0 %v757
  %v1368 = vpop.f32.mrb[0].mxu0
  %v1369 = vadd.f32 0.0, %v1368
  %v1370 = vpop.f32.mrb[0].mxu0
  %v1371 = vpop.f32.mrb[0].mxu0
  %v1372 = vadd.f32 0.0, %v1371
  %v1373 = vpop.f32.mrb[0].mxu0
  %1374 = vdwg.mxu0
  %v1375 = vmax.f32 %v801, %v945
  %v1376 = vmax.f32 %v804, %v948
  %v1377 = vmax.f32 %v809, %v953
  %v1378 = vmax.f32 %v812, %v956
  %v1379 = vmax.f32 %v817, %v961
  %v1380 = vmax.f32 %v820, %v964
  %v1381 = vmax.f32 %v825, %v969
  %v1382 = vmax.f32 %v828, %v972
  %v1383 = vmax.f32 %v833, %v977
  %v1384 = vmax.f32 %v836, %v980
  %v1385 = vmax.f32 %v841, %v985
  %v1386 = vmax.f32 %v844, %v988
  %v1387 = vmax.f32 %v849, %v993
  %v1388 = vmax.f32 %v852, %v996
  %v1389 = vmax.f32 %v857, %v1001
  %v1390 = vmax.f32 %v860, %v1004
  %v1391 = vmax.f32 %v865, %v1009
  %v1392 = vmax.f32 %v868, %v1012
  %v1393 = vmax.f32 %v873, %v1017
  %v1394 = vmax.f32 %v876, %v1020
  %v1395 = vmax.f32 %v881, %v1025
  %v1396 = vmax.f32 %v884, %v1028
  %v1397 = vmax.f32 %v889, %v1033
  %v1398 = vmax.f32 %v892, %v1036
  %v1399 = vmax.f32 %v897, %v1041
  %v1400 = vmax.f32 %v900, %v1044
  %v1401 = vmax.f32 %v905, %v1049
  %v1402 = vmax.f32 %v908, %v1052
  %v1403 = vmax.f32 %v913, %v1057
  %v1404 = vmax.f32 %v916, %v1060
  %v1405 = vmax.f32 %v921, %v1065
  %v1406 = vmax.f32 %v924, %v1068
  %v1407 = vmax.f32 %v929, %v1073
  %v1408 = vmax.f32 %v932, %v1076
  %v1409 = vmax.f32 %v937, %v1081
  %v1410 = vmax.f32 %v940, %v1084
  %v1411 = vmax.f32 %v1089, %v1233
  %v1412 = vmax.f32 %v1092, %v1236
  %v1413 = vmax.f32 %v1097, %v1241
  %v1414 = vmax.f32 %v1100, %v1244
  %v1415 = vmax.f32 %v1105, %v1249
  %v1416 = vmax.f32 %v1108, %v1252
  %v1417 = vmax.f32 %v1113, %v1257
  %v1418 = vmax.f32 %v1116, %v1260
  %v1419 = vmax.f32 %v1121, %v1265
  %v1420 = vmax.f32 %v1124, %v1268
  %v1421 = vmax.f32 %v1129, %v1273
  %v1422 = vmax.f32 %v1132, %v1276
  %v1423 = vmax.f32 %v1137, %v1281
  %v1424 = vmax.f32 %v1140, %v1284
  %v1425 = vmax.f32 %v1145, %v1289
  %v1426 = vmax.f32 %v1148, %v1292
  %v1427 = vmax.f32 %v1153, %v1297
  %v1428 = vmax.f32 %v1156, %v1300
  %v1429 = vmax.f32 %v1161, %v1305
  %v1430 = vmax.f32 %v1164, %v1308
  %v1431 = vmax.f32 %v1169, %v1313
  %v1432 = vmax.f32 %v1172, %v1316
  %v1433 = vmax.f32 %v1177, %v1321
  %v1434 = vmax.f32 %v1180, %v1324
  %v1435 = vmax.f32 %v1185, %v1329
  %v1436 = vmax.f32 %v1188, %v1332
  %v1437 = vmax.f32 %v1193, %v1337
  %v1438 = vmax.f32 %v1196, %v1340
  %v1439 = vmax.f32 %v1201, %v1345
  %v1440 = vmax.f32 %v1204, %v1348
  %v1441 = vmax.f32 %v1209, %v1353
  %v1442 = vmax.f32 %v1212, %v1356
  %v1443 = vmax.f32 %v1217, %v1361
  %v1444 = vmax.f32 %v1220, %v1364
  %v1445 = vmax.f32 %v1225, %v1369
  %v1446 = vmax.f32 %v1228, %v1372
  %v1447 = vmax.f32 %v1375, %v1411
  %v1448 = vmax.f32 %v1376, %v1412
  %v1449 = vmax.f32 %v1377, %v1413
  %v1450 = vmax.f32 %v1378, %v1414
  %v1451 = vmax.f32 %v1379, %v1415
  %v1452 = vmax.f32 %v1380, %v1416
  %v1453 = vmax.f32 %v1381, %v1417
  %v1454 = vmax.f32 %v1382, %v1418
  %v1455 = vmax.f32 %v1383, %v1419
  %v1456 = vmax.f32 %v1384, %v1420
  %v1457 = vmax.f32 %v1385, %v1421
  %v1458 = vmax.f32 %v1386, %v1422
  %v1459 = vmax.f32 %v1387, %v1423
  %v1460 = vmax.f32 %v1388, %v1424
  %v1461 = vmax.f32 %v1389, %v1425
  %v1462 = vmax.f32 %v1390, %v1426
  %v1463 = vmax.f32 %v1391, %v1427
  %v1464 = vmax.f32 %v1392, %v1428
  %v1465 = vmax.f32 %v1393, %v1429
  %v1466 = vmax.f32 %v1394, %v1430
  %v1467 = vmax.f32 %v1395, %v1431
  %v1468 = vmax.f32 %v1396, %v1432
  %v1469 = vmax.f32 %v1397, %v1433
  %v1470 = vmax.f32 %v1398, %v1434
  %v1471 = vmax.f32 %v1399, %v1435
  %v1472 = vmax.f32 %v1400, %v1436
  %v1473 = vmax.f32 %v1401, %v1437
  %v1474 = vmax.f32 %v1402, %v1438
  %v1475 = vmax.f32 %v1403, %v1439
  %v1476 = vmax.f32 %v1404, %v1440
  %v1477 = vmax.f32 %v1405, %v1441
  %v1478 = vmax.f32 %v1406, %v1442
  %v1479 = vmax.f32 %v1407, %v1443
  %v1480 = vmax.f32 %v1408, %v1444
  %v1481 = vmax.f32 %v1409, %v1445
  %v1482 = vmax.f32 %v1410, %v1446
  %v1483 = vlaneseq
  %v1484 = vshrl.u32 %v1483, 7
  %v1485 = vsub.s32 0, %v1484
  %v1486 = vrot.slane %v30, %v1485
  %v1487 = vadd.f32 %v1447, %v1486
  %v1488 = vadd.f32 %v1448, %v1486
  %v1489 = vadd.f32 %v1449, %v1486
  %v1490 = vadd.f32 %v1450, %v1486
  %v1491 = vadd.f32 %v1451, %v1486
  %v1492 = vadd.f32 %v1452, %v1486
  %v1493 = vadd.f32 %v1453, %v1486
  %v1494 = vadd.f32 %v1454, %v1486
  %v1495 = vadd.f32 %v1455, %v1486
  %v1496 = vadd.f32 %v1456, %v1486
  %v1497 = vadd.f32 %v1457, %v1486
  %v1498 = vadd.f32 %v1458, %v1486
  %v1499 = vadd.f32 %v1459, %v1486
  %v1500 = vadd.f32 %v1460, %v1486
  %v1501 = vadd.f32 %v1461, %v1486
  %v1502 = vadd.f32 %v1462, %v1486
  %v1503 = vadd.f32 %v1463, %v1486
  %v1504 = vadd.f32 %v1464, %v1486
  %v1505 = vadd.f32 %v1465, %v1486
  %v1506 = vadd.f32 %v1466, %v1486
  %v1507 = vadd.f32 %v1467, %v1486
  %v1508 = vadd.f32 %v1468, %v1486
  %v1509 = vadd.f32 %v1469, %v1486
  %v1510 = vadd.f32 %v1470, %v1486
  %v1511 = vadd.f32 %v1471, %v1486
  %v1512 = vadd.f32 %v1472, %v1486
  %v1513 = vadd.f32 %v1473, %v1486
  %v1514 = vadd.f32 %v1474, %v1486
  %v1515 = vadd.f32 %v1475, %v1486
  %v1516 = vadd.f32 %v1476, %v1486
  %v1517 = vadd.f32 %v1477, %v1486
  %v1518 = vadd.f32 %v1478, %v1486
  %v1519 = vadd.f32 %v1479, %v1486
  %v1520 = vadd.f32 %v1480, %v1486
  %v1521 = vadd.f32 %v1481, %v1486
  %v1522 = vadd.f32 %v1482, %v1486
  %v1523 = vtanh.pop %v1487
  %v1524 = vtanh.pop %v1488
  %v1525 = vtanh.pop %v1489
  %v1526 = vtanh.pop %v1490
  %v1527 = vtanh.pop %v1491
  %v1528 = vtanh.pop %v1492
  %v1529 = vtanh.pop %v1493
  %v1530 = vtanh.pop %v1494
  %v1531 = vtanh.pop %v1495
  %v1532 = vtanh.pop %v1496
  %v1533 = vtanh.pop %v1497
  %v1534 = vtanh.pop %v1498
  %v1535 = vtanh.pop %v1499
  %v1536 = vtanh.pop %v1500
  %v1537 = vtanh.pop %v1501
  %v1538 = vtanh.pop %v1502
  %v1539 = vtanh.pop %v1503
  %v1540 = vtanh.pop %v1504
  %v1541 = vtanh.pop %v1505
  %v1542 = vtanh.pop %v1506
  %v1543 = vtanh.pop %v1507
  %v1544 = vtanh.pop %v1508
  %v1545 = vtanh.pop %v1509
  %v1546 = vtanh.pop %v1510
  %v1547 = vtanh.pop %v1511
  %v1548 = vtanh.pop %v1512
  %v1549 = vtanh.pop %v1513
  %v1550 = vtanh.pop %v1514
  %v1551 = vtanh.pop %v1515
  %v1552 = vtanh.pop %v1516
  %v1553 = vtanh.pop %v1517
  %v1554 = vtanh.pop %v1518
  %v1555 = vtanh.pop %v1519
  %v1556 = vtanh.pop %v1520
  %v1557 = vtanh.pop %v1521
  %v1558 = vtanh.pop %v1522
  %v1559 = vtanh.pop %v1523
  %v1560 = vtanh.pop %v1524
  %v1561 = vtanh.pop %v1525
  %v1562 = vtanh.pop %v1526
  %v1563 = vtanh.pop %v1527
  %v1564 = vtanh.pop %v1528
  %v1565 = vtanh.pop %v1529
  %v1566 = vtanh.pop %v1530
  %v1567 = vtanh.pop %v1531
  %v1568 = vtanh.pop %v1532
  %v1569 = vtanh.pop %v1533
  %v1570 = vtanh.pop %v1534
  %v1571 = vtanh.pop %v1535
  %v1572 = vtanh.pop %v1536
  %v1573 = vtanh.pop %v1537
  %v1574 = vtanh.pop %v1538
  %v1575 = vtanh.pop %v1539
  %v1576 = vtanh.pop %v1540
  %v1577 = vtanh.pop %v1541
  %v1578 = vtanh.pop %v1542
  %v1579 = vtanh.pop %v1543
  %v1580 = vtanh.pop %v1544
  %v1581 = vtanh.pop %v1545
  %v1582 = vtanh.pop %v1546
  %v1583 = vtanh.pop %v1547
  %v1584 = vtanh.pop %v1548
  %v1585 = vtanh.pop %v1549
  %v1586 = vtanh.pop %v1550
  %v1587 = vtanh.pop %v1551
  %v1588 = vtanh.pop %v1552
  %v1589 = vtanh.pop %v1553
  %v1590 = vtanh.pop %v1554
  %v1591 = vtanh.pop %v1555
  %v1592 = vtanh.pop %v1556
  %v1593 = vtanh.pop %v1557
  %v1594 = vtanh.pop %v1558
  %v1595 = vpack.c.bf16 %v1560, %v1559
  %v1596 = vpack.c.bf16 %v1562, %v1561
  %v1597 = vpack.c.bf16 %v1564, %v1563
  %v1598 = vpack.c.bf16 %v1566, %v1565
  %v1599 = vpack.c.bf16 %v1568, %v1567
  %v1600 = vpack.c.bf16 %v1570, %v1569
  %v1601 = vpack.c.bf16 %v1572, %v1571
  %v1602 = vpack.c.bf16 %v1574, %v1573
  %v1603 = vpack.c.bf16 %v1576, %v1575
  %v1604 = vpack.c.bf16 %v1578, %v1577
  %v1605 = vpack.c.bf16 %v1580, %v1579
  %v1606 = vld [vmem:[%s2] sm:$0xf]
  %v1607 = vld [vmem:[%s2 + $0x4] sm:$0xf]
  %v1608 = vld [vmem:[%s2 + $0x8] sm:$0xf]
  %v1609 = vld [vmem:[%s2 + $0xc] sm:$0xf]
  %v1610 = vpack.c.bf16 %v1561, %v1560
  %v1611 = vpack.c.bf16 %v1563, %v1562
  %v1612 = vpack.c.bf16 %v1565, %v1564
  %v1613 = vpack.c.bf16 %v1567, %v1566
  %v1614 = vpack.c.bf16 %v1569, %v1568
  %v1615 = vpack.c.bf16 %v1571, %v1570
  %v1616 = vpack.c.bf16 %v1573, %v1572
  %v1617 = vpack.c.bf16 %v1575, %v1574
  %v1618 = vpack.c.bf16 %v1577, %v1576
  %v1619 = vpack.c.bf16 %v1579, %v1578
  %v1620 = vpack.c.bf16 %v1581, %v1580
  %s1621 = scalar_lea.vmem %s2, 16
  %v1622 = vld [vmem:[%s1621] sm:$0xf]
  %v1623 = vld [vmem:[%s1621 + $0x4] sm:$0xf]
  %v1624 = vld [vmem:[%s1621 + $0x8] sm:$0xf]
  %v1625 = vld [vmem:[%s1621 + $0xc] sm:$0xf]
  %v1630 = vunpack.c.l.b16 %v1622
  %v1631 = vunpack.c.l.b16 %v1623
  %v1632 = vunpack.c.l.b16 %v1624
  %v1633 = vunpack.c.l.b16 %v1625
  %v1634 = vpack.c.b16 %v1631, %v1630
  %v1635 = vpack.c.b16 %v1633, %v1632
  %vm1638 = vcmask 261120
  %v1640 = vsel %vm1638, %v1610, 0
  %v1643 = vsel %vm1638, %v1611, 0
  %v1646 = vsel %vm1638, %v1612, 0
  %v1649 = vsel %vm1638, %v1613, 0
  %v1652 = vsel %vm1638, %v1614, 0
  %v1655 = vsel %vm1638, %v1615, 0
  %v1658 = vsel %vm1638, %v1616, 0
  %v1661 = vsel %vm1638, %v1617, 0
  %v1664 = vsel %vm1638, %v1618, 0
  %v1667 = vsel %vm1638, %v1619, 0
  %v1670 = vsel %vm1638, %v1620, 0
  %1672 = vmatprep.subr.bf16.mxu0 0
  %1673 = vmatpush1.bf16.msra.mxu0 %v1634
  %1674 = vmatprep.subr.bf16.mxu0 0
  %1675 = vmatpush1.bf16.msra.mxu0 %v1635
  %1676 = vmatprep.subr.bf16.mxu0 0
  %1677 = vmatpush1.bf16.msra.mxu0 0
  %1678 = vmatprep.subr.bf16.mxu0 0
  %1679 = vmatpush1.bf16.msra.mxu0 0
  %1680 = vmatprep.subr.bf16.mxu0 0
  %1681 = vmatpush1.bf16.msra.mxu0 0
  %1682 = vmatprep.subr.bf16.mxu0 0
  %1683 = vmatpush1.bf16.msra.mxu0 0
  %1684 = vmatprep.subr.bf16.mxu0 0
  %1685 = vmatpush1.bf16.msra.mxu0 0
  %1686 = vmatprep.subr.bf16.mxu0 0
  %1687 = vmatpush1.bf16.msra.mxu0 0
  %1688 = vmatprep.subr.bf16.mxu0 0
  %1689 = vmatpush1.bf16.msra.mxu0 0
  %1690 = vmatprep.subr.bf16.mxu0 0
  %1691 = vmatpush1.bf16.msra.mxu0 0
  %1692 = vmatprep.subr.bf16.mxu0 0
  %1693 = vmatpush1.bf16.msra.mxu0 0
  %1694 = vmatprep.subr.bf16.mxu0 0
  %1695 = vmatpush1.bf16.msra.mxu0 0
  %1696 = vmatprep.subr.bf16.mxu0 0
  %1697 = vmatpush1.bf16.msra.mxu0 0
  %1698 = vmatprep.subr.bf16.mxu0 0
  %1699 = vmatpush1.bf16.msra.mxu0 0
  %1700 = vmatprep.subr.bf16.mxu0 0
  %1701 = vmatpush1.bf16.msra.mxu0 0
  %1702 = vmatprep.subr.bf16.mxu0 0
  %1703 = vmatpush1.bf16.msra.mxu0 0
  %1704 = vmatprep.mubr.bf16.mxu0 0
  %1705 = vmatmul.mubr.bf16.gmra.mrb[0].mxu0 %v1640
  %v1706 = vpop.f32.mrb[0].mxu0
  %v1707 = vadd.f32 0.0, %v1706
  %v1708 = vpop.f32.mrb[0].mxu0
  %v1709 = vpop.f32.mrb[0].mxu0
  %v1710 = vadd.f32 0.0, %v1709
  %v1711 = vpop.f32.mrb[0].mxu0
  %1712 = vmatprep.mubr.bf16.mxu0 0
  %1713 = vmatmul.mubr.bf16.gmra.mrb[0].mxu0 %v1643
  %v1714 = vpop.f32.mrb[0].mxu0
  %v1715 = vadd.f32 0.0, %v1714
  %v1716 = vpop.f32.mrb[0].mxu0
  %v1717 = vpop.f32.mrb[0].mxu0
  %v1718 = vadd.f32 0.0, %v1717
  %v1719 = vpop.f32.mrb[0].mxu0
  %1720 = vmatprep.mubr.bf16.mxu0 0
  %1721 = vmatmul.mubr.bf16.gmra.mrb[0].mxu0 %v1646
  %v1722 = vpop.f32.mrb[0].mxu0
  %v1723 = vpop.f32.mrb[0].mxu0
  %v1724 = vpop.f32.mrb[0].mxu0
  %v1725 = vpop.f32.mrb[0].mxu0
  %1726 = vmatprep.mubr.bf16.mxu0 0
  %1727 = vmatmul.mubr.bf16.gmra.mrb[0].mxu0 %v1649
  %v1728 = vpop.f32.mrb[0].mxu0
  %v1729 = vadd.f32 0.0, %v1728
  %v1730 = vpop.f32.mrb[0].mxu0
  %v1731 = vpop.f32.mrb[0].mxu0
  %v1732 = vadd.f32 0.0, %v1731
  %v1733 = vpop.f32.mrb[0].mxu0
  %1734 = vmatprep.mubr.bf16.mxu0 0
  %1735 = vmatmul.mubr.bf16.gmra.mrb[0].mxu0 %v1652
  %v1736 = vpop.f32.mrb[0].mxu0
  %v1737 = vadd.f32 0.0, %v1736
  %v1738 = vpop.f32.mrb[0].mxu0
  %v1739 = vpop.f32.mrb[0].mxu0
  %v1740 = vadd.f32 0.0, %v1739
  %v1741 = vpop.f32.mrb[0].mxu0
  %1742 = vmatprep.mubr.bf16.mxu0 0
  %1743 = vmatmul.mubr.bf16.gmra.mrb[0].mxu0 %v1655
  %v1744 = vpop.f32.mrb[0].mxu0
  %v1745 = vpop.f32.mrb[0].mxu0
  %v1746 = vpop.f32.mrb[0].mxu0
  %v1747 = vpop.f32.mrb[0].mxu0
  %1748 = vmatprep.mubr.bf16.mxu0 0
  %1749 = vmatmul.mubr.bf16.gmra.mrb[0].mxu0 %v1658
  %v1750 = vpop.f32.mrb[0].mxu0
  %v1751 = vadd.f32 0.0, %v1750
  %v1752 = vpop.f32.mrb[0].mxu0
  %v1753 = vpop.f32.mrb[0].mxu0
  %v1754 = vadd.f32 0.0, %v1753
  %v1755 = vpop.f32.mrb[0].mxu0
  %1756 = vmatprep.mubr.bf16.mxu0 0
  %1757 = vmatmul.mubr.bf16.gmra.mrb[0].mxu0 %v1661
  %v1758 = vpop.f32.mrb[0].mxu0
  %v1759 = vadd.f32 0.0, %v1758
  %v1760 = vpop.f32.mrb[0].mxu0
  %v1761 = vpop.f32.mrb[0].mxu0
  %v1762 = vadd.f32 0.0, %v1761
  %v1763 = vpop.f32.mrb[0].mxu0
  %1764 = vmatprep.mubr.bf16.mxu0 0
  %1765 = vmatmul.mubr.bf16.gmra.mrb[0].mxu0 %v1664
  %v1766 = vpop.f32.mrb[0].mxu0
  %v1767 = vpop.f32.mrb[0].mxu0
  %v1768 = vpop.f32.mrb[0].mxu0
  %v1769 = vpop.f32.mrb[0].mxu0
  %1770 = vmatprep.mubr.bf16.mxu0 0
  %1771 = vmatmul.mubr.bf16.gmra.mrb[0].mxu0 %v1667
  %v1772 = vpop.f32.mrb[0].mxu0
  %v1773 = vadd.f32 0.0, %v1772
  %v1774 = vpop.f32.mrb[0].mxu0
  %v1775 = vpop.f32.mrb[0].mxu0
  %v1776 = vadd.f32 0.0, %v1775
  %v1777 = vpop.f32.mrb[0].mxu0
  %1778 = vmatprep.mubr.bf16.mxu0 0
  %1779 = vmatmul.mubr.bf16.gmra.mrb[0].mxu0 %v1670
  %v1780 = vpop.f32.mrb[0].mxu0
  %v1781 = vadd.f32 0.0, %v1780
  %v1782 = vpop.f32.mrb[0].mxu0
  %v1783 = vpop.f32.mrb[0].mxu0
  %v1784 = vadd.f32 0.0, %v1783
  %v1785 = vpop.f32.mrb[0].mxu0
  %1786 = vdwg.mxu0
  %v1791 = vunpack.c.l.b16 %v1606
  %v1792 = vunpack.c.l.b16 %v1607
  %v1793 = vunpack.c.l.b16 %v1608
  %v1794 = vunpack.c.l.b16 %v1609
  %v1795 = vpack.c.b16 %v1792, %v1791
  %v1796 = vpack.c.b16 %v1794, %v1793
  %v1800 = vsel %vm1638, %v1595, 0
  %v1803 = vsel %vm1638, %v1596, 0
  %v1806 = vsel %vm1638, %v1597, 0
  %v1809 = vsel %vm1638, %v1598, 0
  %v1812 = vsel %vm1638, %v1599, 0
  %v1815 = vsel %vm1638, %v1600, 0
  %v1818 = vsel %vm1638, %v1601, 0
  %v1821 = vsel %vm1638, %v1602, 0
  %v1824 = vsel %vm1638, %v1603, 0
  %v1827 = vsel %vm1638, %v1604, 0
  %v1830 = vsel %vm1638, %v1605, 0
  %1832 = vmatprep.subr.bf16.mxu0 0
  %1833 = vmatpush1.bf16.msra.mxu0 %v1795
  %1834 = vmatprep.subr.bf16.mxu0 0
  %1835 = vmatpush1.bf16.msra.mxu0 %v1796
  %1836 = vmatprep.subr.bf16.mxu0 0
  %1837 = vmatpush1.bf16.msra.mxu0 0
  %1838 = vmatprep.subr.bf16.mxu0 0
  %1839 = vmatpush1.bf16.msra.mxu0 0
  %1840 = vmatprep.subr.bf16.mxu0 0
  %1841 = vmatpush1.bf16.msra.mxu0 0
  %1842 = vmatprep.subr.bf16.mxu0 0
  %1843 = vmatpush1.bf16.msra.mxu0 0
  %1844 = vmatprep.subr.bf16.mxu0 0
  %1845 = vmatpush1.bf16.msra.mxu0 0
  %1846 = vmatprep.subr.bf16.mxu0 0
  %1847 = vmatpush1.bf16.msra.mxu0 0
  %1848 = vmatprep.subr.bf16.mxu0 0
  %1849 = vmatpush1.bf16.msra.mxu0 0
  %1850 = vmatprep.subr.bf16.mxu0 0
  %1851 = vmatpush1.bf16.msra.mxu0 0
  %1852 = vmatprep.subr.bf16.mxu0 0
  %1853 = vmatpush1.bf16.msra.mxu0 0
  %1854 = vmatprep.subr.bf16.mxu0 0
  %1855 = vmatpush1.bf16.msra.mxu0 0
  %1856 = vmatprep.subr.bf16.mxu0 0
  %1857 = vmatpush1.bf16.msra.mxu0 0
  %1858 = vmatprep.subr.bf16.mxu0 0
  %1859 = vmatpush1.bf16.msra.mxu0 0
  %1860 = vmatprep.subr.bf16.mxu0 0
  %1861 = vmatpush1.bf16.msra.mxu0 0
  %1862 = vmatprep.subr.bf16.mxu0 0
  %1863 = vmatpush1.bf16.msra.mxu0 0
  %1864 = vmatprep.mubr.bf16.mxu0 0
  %1865 = vmatmul.mubr.bf16.gmra.mrb[0].mxu0 %v1800
  %v1866 = vpop.f32.mrb[0].mxu0
  %v1867 = vadd.f32 %v1707, %v1866
  %v1868 = vpop.f32.mrb[0].mxu0
  %v1869 = vpop.f32.mrb[0].mxu0
  %v1870 = vadd.f32 %v1710, %v1869
  %v1871 = vpop.f32.mrb[0].mxu0
  %1872 = vmatprep.mubr.bf16.mxu0 0
  %1873 = vmatmul.mubr.bf16.gmra.mrb[0].mxu0 %v1803
  %v1874 = vpop.f32.mrb[0].mxu0
  %v1875 = vadd.f32 %v1715, %v1874
  %v1876 = vpop.f32.mrb[0].mxu0
  %v1877 = vpop.f32.mrb[0].mxu0
  %v1878 = vadd.f32 %v1718, %v1877
  %v1879 = vpop.f32.mrb[0].mxu0
  %1880 = vmatprep.mubr.bf16.mxu0 0
  %1881 = vmatmul.mubr.bf16.gmra.mrb[0].mxu0 %v1806
  %v1882 = vpop.f32.mrb[0].mxu0
  %v1883 = vpop.f32.mrb[0].mxu0
  %v1884 = vpop.f32.mrb[0].mxu0
  %v1885 = vpop.f32.mrb[0].mxu0
  %1886 = vmatprep.mubr.bf16.mxu0 0
  %1887 = vmatmul.mubr.bf16.gmra.mrb[0].mxu0 %v1809
  %v1888 = vpop.f32.mrb[0].mxu0
  %v1889 = vadd.f32 %v1729, %v1888
  %v1890 = vpop.f32.mrb[0].mxu0
  %v1891 = vpop.f32.mrb[0].mxu0
  %v1892 = vadd.f32 %v1732, %v1891
  %v1893 = vpop.f32.mrb[0].mxu0
  %1894 = vmatprep.mubr.bf16.mxu0 0
  %1895 = vmatmul.mubr.bf16.gmra.mrb[0].mxu0 %v1812
  %v1896 = vpop.f32.mrb[0].mxu0
  %v1897 = vadd.f32 %v1737, %v1896
  %v1898 = vpop.f32.mrb[0].mxu0
  %v1899 = vpop.f32.mrb[0].mxu0
  %v1900 = vadd.f32 %v1740, %v1899
  %v1901 = vpop.f32.mrb[0].mxu0
  %1902 = vmatprep.mubr.bf16.mxu0 0
  %1903 = vmatmul.mubr.bf16.gmra.mrb[0].mxu0 %v1815
  %v1904 = vpop.f32.mrb[0].mxu0
  %v1905 = vpop.f32.mrb[0].mxu0
  %v1906 = vpop.f32.mrb[0].mxu0
  %v1907 = vpop.f32.mrb[0].mxu0
  %1908 = vmatprep.mubr.bf16.mxu0 0
  %1909 = vmatmul.mubr.bf16.gmra.mrb[0].mxu0 %v1818
  %v1910 = vpop.f32.mrb[0].mxu0
  %v1911 = vadd.f32 %v1751, %v1910
  %v1912 = vpop.f32.mrb[0].mxu0
  %v1913 = vpop.f32.mrb[0].mxu0
  %v1914 = vadd.f32 %v1754, %v1913
  %v1915 = vpop.f32.mrb[0].mxu0
  %1916 = vmatprep.mubr.bf16.mxu0 0
  %1917 = vmatmul.mubr.bf16.gmra.mrb[0].mxu0 %v1821
  %v1918 = vpop.f32.mrb[0].mxu0
  %v1919 = vadd.f32 %v1759, %v1918
  %v1920 = vpop.f32.mrb[0].mxu0
  %v1921 = vpop.f32.mrb[0].mxu0
  %v1922 = vadd.f32 %v1762, %v1921
  %v1923 = vpop.f32.mrb[0].mxu0
  %1924 = vmatprep.mubr.bf16.mxu0 0
  %1925 = vmatmul.mubr.bf16.gmra.mrb[0].mxu0 %v1824
  %v1926 = vpop.f32.mrb[0].mxu0
  %v1927 = vpop.f32.mrb[0].mxu0
  %v1928 = vpop.f32.mrb[0].mxu0
  %v1929 = vpop.f32.mrb[0].mxu0
  %1930 = vmatprep.mubr.bf16.mxu0 0
  %1931 = vmatmul.mubr.bf16.gmra.mrb[0].mxu0 %v1827
  %v1932 = vpop.f32.mrb[0].mxu0
  %v1933 = vadd.f32 %v1773, %v1932
  %v1934 = vpop.f32.mrb[0].mxu0
  %v1935 = vpop.f32.mrb[0].mxu0
  %v1936 = vadd.f32 %v1776, %v1935
  %v1937 = vpop.f32.mrb[0].mxu0
  %1938 = vmatprep.mubr.bf16.mxu0 0
  %1939 = vmatmul.mubr.bf16.gmra.mrb[0].mxu0 %v1830
  %v1940 = vpop.f32.mrb[0].mxu0
  %v1941 = vadd.f32 %v1781, %v1940
  %v1942 = vpop.f32.mrb[0].mxu0
  %v1943 = vpop.f32.mrb[0].mxu0
  %v1944 = vadd.f32 %v1784, %v1943
  %v1945 = vpop.f32.mrb[0].mxu0
  %1946 = vdwg.mxu0
  %v1947 = vpack.c.bf16 %v1582, %v1581
  %s1948 = scalar_lea.vmem %s2, 32
  %v1949 = vld [vmem:[%s1948] sm:$0xf]
  %v1950 = vld [vmem:[%s1948 + $0x4] sm:$0xf]
  %v1951 = vld [vmem:[%s1948 + $0x8] sm:$0xf]
  %v1952 = vld [vmem:[%s1948 + $0xc] sm:$0xf]
  %v1957 = vunpack.c.l.b16 %v1949
  %v1958 = vunpack.c.l.b16 %v1950
  %v1959 = vunpack.c.l.b16 %v1951
  %v1960 = vunpack.c.l.b16 %v1952
  %v1961 = vpack.c.b16 %v1958, %v1957
  %v1962 = vpack.c.b16 %v1960, %v1959
  %v1966 = vsel %vm1638, %v1947, 0
  %1968 = vmatprep.subr.bf16.mxu0 0
  %1969 = vmatpush1.bf16.msra.mxu0 %v1961
  %1970 = vmatprep.subr.bf16.mxu0 0
  %1971 = vmatpush1.bf16.msra.mxu0 %v1962
  %1972 = vmatprep.subr.bf16.mxu0 0
  %1973 = vmatpush1.bf16.msra.mxu0 0
  %1974 = vmatprep.subr.bf16.mxu0 0
  %1975 = vmatpush1.bf16.msra.mxu0 0
  %1976 = vmatprep.subr.bf16.mxu0 0
  %1977 = vmatpush1.bf16.msra.mxu0 0
  %1978 = vmatprep.subr.bf16.mxu0 0
  %1979 = vmatpush1.bf16.msra.mxu0 0
  %1980 = vmatprep.subr.bf16.mxu0 0
  %1981 = vmatpush1.bf16.msra.mxu0 0
  %1982 = vmatprep.subr.bf16.mxu0 0
  %1983 = vmatpush1.bf16.msra.mxu0 0
  %1984 = vmatprep.subr.bf16.mxu0 0
  %1985 = vmatpush1.bf16.msra.mxu0 0
  %1986 = vmatprep.subr.bf16.mxu0 0
  %1987 = vmatpush1.bf16.msra.mxu0 0
  %1988 = vmatprep.subr.bf16.mxu0 0
  %1989 = vmatpush1.bf16.msra.mxu0 0
  %1990 = vmatprep.subr.bf16.mxu0 0
  %1991 = vmatpush1.bf16.msra.mxu0 0
  %1992 = vmatprep.subr.bf16.mxu0 0
  %1993 = vmatpush1.bf16.msra.mxu0 0
  %1994 = vmatprep.subr.bf16.mxu0 0
  %1995 = vmatpush1.bf16.msra.mxu0 0
  %1996 = vmatprep.subr.bf16.mxu0 0
  %1997 = vmatpush1.bf16.msra.mxu0 0
  %1998 = vmatprep.subr.bf16.mxu0 0
  %1999 = vmatpush1.bf16.msra.mxu0 0
  %2000 = vmatprep.mubr.bf16.mxu0 0
  %2001 = vmatmul.mubr.bf16.gmra.mrb[0].mxu0 %v1803
  %v2002 = vpop.f32.mrb[0].mxu0
  %v2003 = vadd.f32 0.0, %v2002
  %v2004 = vpop.f32.mrb[0].mxu0
  %v2005 = vpop.f32.mrb[0].mxu0
  %v2006 = vadd.f32 0.0, %v2005
  %v2007 = vpop.f32.mrb[0].mxu0
  %2008 = vmatprep.mubr.bf16.mxu0 0
  %2009 = vmatmul.mubr.bf16.gmra.mrb[0].mxu0 %v1806
  %v2010 = vpop.f32.mrb[0].mxu0
  %v2011 = vadd.f32 0.0, %v2010
  %v2012 = vpop.f32.mrb[0].mxu0
  %v2013 = vpop.f32.mrb[0].mxu0
  %v2014 = vadd.f32 0.0, %v2013
  %v2015 = vpop.f32.mrb[0].mxu0
  %2016 = vmatprep.mubr.bf16.mxu0 0
  %2017 = vmatmul.mubr.bf16.gmra.mrb[0].mxu0 %v1809
  %v2018 = vpop.f32.mrb[0].mxu0
  %v2019 = vpop.f32.mrb[0].mxu0
  %v2020 = vpop.f32.mrb[0].mxu0
  %v2021 = vpop.f32.mrb[0].mxu0
  %2022 = vmatprep.mubr.bf16.mxu0 0
  %2023 = vmatmul.mubr.bf16.gmra.mrb[0].mxu0 %v1812
  %v2024 = vpop.f32.mrb[0].mxu0
  %v2025 = vadd.f32 0.0, %v2024
  %v2026 = vpop.f32.mrb[0].mxu0
  %v2027 = vpop.f32.mrb[0].mxu0
  %v2028 = vadd.f32 0.0, %v2027
  %v2029 = vpop.f32.mrb[0].mxu0
  %2030 = vmatprep.mubr.bf16.mxu0 0
  %2031 = vmatmul.mubr.bf16.gmra.mrb[0].mxu0 %v1815
  %v2032 = vpop.f32.mrb[0].mxu0
  %v2033 = vadd.f32 0.0, %v2032
  %v2034 = vpop.f32.mrb[0].mxu0
  %v2035 = vpop.f32.mrb[0].mxu0
  %v2036 = vadd.f32 0.0, %v2035
  %v2037 = vpop.f32.mrb[0].mxu0
  %2038 = vmatprep.mubr.bf16.mxu0 0
  %2039 = vmatmul.mubr.bf16.gmra.mrb[0].mxu0 %v1818
  %v2040 = vpop.f32.mrb[0].mxu0
  %v2041 = vpop.f32.mrb[0].mxu0
  %v2042 = vpop.f32.mrb[0].mxu0
  %v2043 = vpop.f32.mrb[0].mxu0
  %2044 = vmatprep.mubr.bf16.mxu0 0
  %2045 = vmatmul.mubr.bf16.gmra.mrb[0].mxu0 %v1821
  %v2046 = vpop.f32.mrb[0].mxu0
  %v2047 = vadd.f32 0.0, %v2046
  %v2048 = vpop.f32.mrb[0].mxu0
  %v2049 = vpop.f32.mrb[0].mxu0
  %v2050 = vadd.f32 0.0, %v2049
  %v2051 = vpop.f32.mrb[0].mxu0
  %2052 = vmatprep.mubr.bf16.mxu0 0
  %2053 = vmatmul.mubr.bf16.gmra.mrb[0].mxu0 %v1824
  %v2054 = vpop.f32.mrb[0].mxu0
  %v2055 = vadd.f32 0.0, %v2054
  %v2056 = vpop.f32.mrb[0].mxu0
  %v2057 = vpop.f32.mrb[0].mxu0
  %v2058 = vadd.f32 0.0, %v2057
  %v2059 = vpop.f32.mrb[0].mxu0
  %2060 = vmatprep.mubr.bf16.mxu0 0
  %2061 = vmatmul.mubr.bf16.gmra.mrb[0].mxu0 %v1827
  %v2062 = vpop.f32.mrb[0].mxu0
  %v2063 = vpop.f32.mrb[0].mxu0
  %v2064 = vpop.f32.mrb[0].mxu0
  %v2065 = vpop.f32.mrb[0].mxu0
  %2066 = vmatprep.mubr.bf16.mxu0 0
  %2067 = vmatmul.mubr.bf16.gmra.mrb[0].mxu0 %v1830
  %v2068 = vpop.f32.mrb[0].mxu0
  %v2069 = vadd.f32 0.0, %v2068
  %v2070 = vpop.f32.mrb[0].mxu0
  %v2071 = vpop.f32.mrb[0].mxu0
  %v2072 = vadd.f32 0.0, %v2071
  %v2073 = vpop.f32.mrb[0].mxu0
  %2074 = vmatprep.mubr.bf16.mxu0 0
  %2075 = vmatmul.mubr.bf16.gmra.mrb[0].mxu0 %v1966
  %v2076 = vpop.f32.mrb[0].mxu0
  %v2077 = vadd.f32 0.0, %v2076
  %v2078 = vpop.f32.mrb[0].mxu0
  %v2079 = vpop.f32.mrb[0].mxu0
  %v2080 = vadd.f32 0.0, %v2079
  %v2081 = vpop.f32.mrb[0].mxu0
  %2082 = vdwg.mxu0
  %v2083 = vadd.f32 %v1867, %v2003
  %v2084 = vadd.f32 %v1870, %v2006
  %v2085 = vadd.f32 %v1875, %v2011
  %v2086 = vadd.f32 %v1878, %v2014
  %v2087 = vadd.f32 %v1889, %v2025
  %v2088 = vadd.f32 %v1892, %v2028
  %v2089 = vadd.f32 %v1897, %v2033
  %v2090 = vadd.f32 %v1900, %v2036
  %v2091 = vadd.f32 %v1911, %v2047
  %v2092 = vadd.f32 %v1914, %v2050
  %v2093 = vadd.f32 %v1919, %v2055
  %v2094 = vadd.f32 %v1922, %v2058
  %v2095 = vadd.f32 %v1933, %v2069
  %v2096 = vadd.f32 %v1936, %v2072
  %v2097 = vadd.f32 %v1941, %v2077
  %v2098 = vadd.f32 %v1944, %v2080
  %v2099 = vpack.c.bf16 %v1584, %v1583
  %v2100 = vpack.c.bf16 %v1586, %v1585
  %s2101 = scalar_lea.vmem %s2, 48
  %v2102 = vld [vmem:[%s2101] sm:$0xf]
  %v2103 = vld [vmem:[%s2101 + $0x4] sm:$0xf]
  %v2104 = vld [vmem:[%s2101 + $0x8] sm:$0xf]
  %v2105 = vld [vmem:[%s2101 + $0xc] sm:$0xf]
  %v2110 = vunpack.c.l.b16 %v2102
  %v2111 = vunpack.c.l.b16 %v2103
  %v2112 = vunpack.c.l.b16 %v2104
  %v2113 = vunpack.c.l.b16 %v2105
  %v2114 = vpack.c.b16 %v2111, %v2110
  %v2115 = vpack.c.b16 %v2113, %v2112
  %v2119 = vsel %vm1638, %v2099, 0
  %v2122 = vsel %vm1638, %v2100, 0
  %2124 = vmatprep.subr.bf16.mxu0 0
  %2125 = vmatpush1.bf16.msra.mxu0 %v2114
  %2126 = vmatprep.subr.bf16.mxu0 0
  %2127 = vmatpush1.bf16.msra.mxu0 %v2115
  %2128 = vmatprep.subr.bf16.mxu0 0
  %2129 = vmatpush1.bf16.msra.mxu0 0
  %2130 = vmatprep.subr.bf16.mxu0 0
  %2131 = vmatpush1.bf16.msra.mxu0 0
  %2132 = vmatprep.subr.bf16.mxu0 0
  %2133 = vmatpush1.bf16.msra.mxu0 0
  %2134 = vmatprep.subr.bf16.mxu0 0
  %2135 = vmatpush1.bf16.msra.mxu0 0
  %2136 = vmatprep.subr.bf16.mxu0 0
  %2137 = vmatpush1.bf16.msra.mxu0 0
  %2138 = vmatprep.subr.bf16.mxu0 0
  %2139 = vmatpush1.bf16.msra.mxu0 0
  %2140 = vmatprep.subr.bf16.mxu0 0
  %2141 = vmatpush1.bf16.msra.mxu0 0
  %2142 = vmatprep.subr.bf16.mxu0 0
  %2143 = vmatpush1.bf16.msra.mxu0 0
  %2144 = vmatprep.subr.bf16.mxu0 0
  %2145 = vmatpush1.bf16.msra.mxu0 0
  %2146 = vmatprep.subr.bf16.mxu0 0
  %2147 = vmatpush1.bf16.msra.mxu0 0
  %2148 = vmatprep.subr.bf16.mxu0 0
  %2149 = vmatpush1.bf16.msra.mxu0 0
  %2150 = vmatprep.subr.bf16.mxu0 0
  %2151 = vmatpush1.bf16.msra.mxu0 0
  %2152 = vmatprep.subr.bf16.mxu0 0
  %2153 = vmatpush1.bf16.msra.mxu0 0
  %2154 = vmatprep.subr.bf16.mxu0 0
  %2155 = vmatpush1.bf16.msra.mxu0 0
  %2156 = vmatprep.mubr.bf16.mxu0 0
  %2157 = vmatmul.mubr.bf16.gmra.mrb[0].mxu0 %v1809
  %v2158 = vpop.f32.mrb[0].mxu0
  %v2159 = vadd.f32 0.0, %v2158
  %v2160 = vpop.f32.mrb[0].mxu0
  %v2161 = vpop.f32.mrb[0].mxu0
  %v2162 = vadd.f32 0.0, %v2161
  %v2163 = vpop.f32.mrb[0].mxu0
  %2164 = vmatprep.mubr.bf16.mxu0 0
  %2165 = vmatmul.mubr.bf16.gmra.mrb[0].mxu0 %v1812
  %v2166 = vpop.f32.mrb[0].mxu0
  %v2167 = vadd.f32 0.0, %v2166
  %v2168 = vpop.f32.mrb[0].mxu0
  %v2169 = vpop.f32.mrb[0].mxu0
  %v2170 = vadd.f32 0.0, %v2169
  %v2171 = vpop.f32.mrb[0].mxu0
  %2172 = vmatprep.mubr.bf16.mxu0 0
  %2173 = vmatmul.mubr.bf16.gmra.mrb[0].mxu0 %v1815
  %v2174 = vpop.f32.mrb[0].mxu0
  %v2175 = vpop.f32.mrb[0].mxu0
  %v2176 = vpop.f32.mrb[0].mxu0
  %v2177 = vpop.f32.mrb[0].mxu0
  %2178 = vmatprep.mubr.bf16.mxu0 0
  %2179 = vmatmul.mubr.bf16.gmra.mrb[0].mxu0 %v1818
  %v2180 = vpop.f32.mrb[0].mxu0
  %v2181 = vadd.f32 0.0, %v2180
  %v2182 = vpop.f32.mrb[0].mxu0
  %v2183 = vpop.f32.mrb[0].mxu0
  %v2184 = vadd.f32 0.0, %v2183
  %v2185 = vpop.f32.mrb[0].mxu0
  %2186 = vmatprep.mubr.bf16.mxu0 0
  %2187 = vmatmul.mubr.bf16.gmra.mrb[0].mxu0 %v1821
  %v2188 = vpop.f32.mrb[0].mxu0
  %v2189 = vadd.f32 0.0, %v2188
  %v2190 = vpop.f32.mrb[0].mxu0
  %v2191 = vpop.f32.mrb[0].mxu0
  %v2192 = vadd.f32 0.0, %v2191
  %v2193 = vpop.f32.mrb[0].mxu0
  %2194 = vmatprep.mubr.bf16.mxu0 0
  %2195 = vmatmul.mubr.bf16.gmra.mrb[0].mxu0 %v1824
  %v2196 = vpop.f32.mrb[0].mxu0
  %v2197 = vpop.f32.mrb[0].mxu0
  %v2198 = vpop.f32.mrb[0].mxu0
  %v2199 = vpop.f32.mrb[0].mxu0
  %2200 = vmatprep.mubr.bf16.mxu0 0
  %2201 = vmatmul.mubr.bf16.gmra.mrb[0].mxu0 %v1827
  %v2202 = vpop.f32.mrb[0].mxu0
  %v2203 = vadd.f32 0.0, %v2202
  %v2204 = vpop.f32.mrb[0].mxu0
  %v2205 = vpop.f32.mrb[0].mxu0
  %v2206 = vadd.f32 0.0, %v2205
  %v2207 = vpop.f32.mrb[0].mxu0
  %2208 = vmatprep.mubr.bf16.mxu0 0
  %2209 = vmatmul.mubr.bf16.gmra.mrb[0].mxu0 %v1830
  %v2210 = vpop.f32.mrb[0].mxu0
  %v2211 = vadd.f32 0.0, %v2210
  %v2212 = vpop.f32.mrb[0].mxu0
  %v2213 = vpop.f32.mrb[0].mxu0
  %v2214 = vadd.f32 0.0, %v2213
  %v2215 = vpop.f32.mrb[0].mxu0
  %2216 = vmatprep.mubr.bf16.mxu0 0
  %2217 = vmatmul.mubr.bf16.gmra.mrb[0].mxu0 %v1966
  %v2218 = vpop.f32.mrb[0].mxu0
  %v2219 = vpop.f32.mrb[0].mxu0
  %v2220 = vpop.f32.mrb[0].mxu0
  %v2221 = vpop.f32.mrb[0].mxu0
  %2222 = vmatprep.mubr.bf16.mxu0 0
  %2223 = vmatmul.mubr.bf16.gmra.mrb[0].mxu0 %v2119
  %v2224 = vpop.f32.mrb[0].mxu0
  %v2225 = vadd.f32 0.0, %v2224
  %v2226 = vpop.f32.mrb[0].mxu0
  %v2227 = vpop.f32.mrb[0].mxu0
  %v2228 = vadd.f32 0.0, %v2227
  %v2229 = vpop.f32.mrb[0].mxu0
  %2230 = vmatprep.mubr.bf16.mxu0 0
  %2231 = vmatmul.mubr.bf16.gmra.mrb[0].mxu0 %v2122
  %v2232 = vpop.f32.mrb[0].mxu0
  %v2233 = vadd.f32 0.0, %v2232
  %v2234 = vpop.f32.mrb[0].mxu0
  %v2235 = vpop.f32.mrb[0].mxu0
  %v2236 = vadd.f32 0.0, %v2235
  %v2237 = vpop.f32.mrb[0].mxu0
  %2238 = vdwg.mxu0
  %v2239 = vadd.f32 %v2083, %v2159
  %v2240 = vadd.f32 %v2084, %v2162
  %v2241 = vadd.f32 %v2085, %v2167
  %v2242 = vadd.f32 %v2086, %v2170
  %v2243 = vadd.f32 %v2087, %v2181
  %v2244 = vadd.f32 %v2088, %v2184
  %v2245 = vadd.f32 %v2089, %v2189
  %v2246 = vadd.f32 %v2090, %v2192
  %v2247 = vadd.f32 %v2091, %v2203
  %v2248 = vadd.f32 %v2092, %v2206
  %v2249 = vadd.f32 %v2093, %v2211
  %v2250 = vadd.f32 %v2094, %v2214
  %v2251 = vadd.f32 %v2095, %v2225
  %v2252 = vadd.f32 %v2096, %v2228
  %v2253 = vadd.f32 %v2097, %v2233
  %v2254 = vadd.f32 %v2098, %v2236
  %v2255 = vpack.c.bf16 %v1583, %v1582
  %v2256 = vpack.c.bf16 %v1585, %v1584
  %v2257 = vpack.c.bf16 %v1587, %v1586
  %s2258 = scalar_lea.vmem %s2, 64
  %v2259 = vld [vmem:[%s2258] sm:$0xf]
  %v2260 = vld [vmem:[%s2258 + $0x4] sm:$0xf]
  %v2261 = vld [vmem:[%s2258 + $0x8] sm:$0xf]
  %v2262 = vld [vmem:[%s2258 + $0xc] sm:$0xf]
  %v2267 = vunpack.c.l.b16 %v2259
  %v2268 = vunpack.c.l.b16 %v2260
  %v2269 = vunpack.c.l.b16 %v2261
  %v2270 = vunpack.c.l.b16 %v2262
  %v2271 = vpack.c.b16 %v2268, %v2267
  %v2272 = vpack.c.b16 %v2270, %v2269
  %v2276 = vsel %vm1638, %v2255, 0
  %v2279 = vsel %vm1638, %v2256, 0
  %v2282 = vsel %vm1638, %v2257, 0
  %2284 = vmatprep.subr.bf16.mxu0 0
  %2285 = vmatpush1.bf16.msra.mxu0 %v2271
  %2286 = vmatprep.subr.bf16.mxu0 0
  %2287 = vmatpush1.bf16.msra.mxu0 %v2272
  %2288 = vmatprep.subr.bf16.mxu0 0
  %2289 = vmatpush1.bf16.msra.mxu0 0
  %2290 = vmatprep.subr.bf16.mxu0 0
  %2291 = vmatpush1.bf16.msra.mxu0 0
  %2292 = vmatprep.subr.bf16.mxu0 0
  %2293 = vmatpush1.bf16.msra.mxu0 0
  %2294 = vmatprep.subr.bf16.mxu0 0
  %2295 = vmatpush1.bf16.msra.mxu0 0
  %2296 = vmatprep.subr.bf16.mxu0 0
  %2297 = vmatpush1.bf16.msra.mxu0 0
  %2298 = vmatprep.subr.bf16.mxu0 0
  %2299 = vmatpush1.bf16.msra.mxu0 0
  %2300 = vmatprep.subr.bf16.mxu0 0
  %2301 = vmatpush1.bf16.msra.mxu0 0
  %2302 = vmatprep.subr.bf16.mxu0 0
  %2303 = vmatpush1.bf16.msra.mxu0 0
  %2304 = vmatprep.subr.bf16.mxu0 0
  %2305 = vmatpush1.bf16.msra.mxu0 0
  %2306 = vmatprep.subr.bf16.mxu0 0
  %2307 = vmatpush1.bf16.msra.mxu0 0
  %2308 = vmatprep.subr.bf16.mxu0 0
  %2309 = vmatpush1.bf16.msra.mxu0 0
  %2310 = vmatprep.subr.bf16.mxu0 0
  %2311 = vmatpush1.bf16.msra.mxu0 0
  %2312 = vmatprep.subr.bf16.mxu0 0
  %2313 = vmatpush1.bf16.msra.mxu0 0
  %2314 = vmatprep.subr.bf16.mxu0 0
  %2315 = vmatpush1.bf16.msra.mxu0 0
  %2316 = vmatprep.mubr.bf16.mxu0 0
  %2317 = vmatmul.mubr.bf16.gmra.mrb[0].mxu0 %v1649
  %v2318 = vpop.f32.mrb[0].mxu0
  %v2319 = vadd.f32 0.0, %v2318
  %v2320 = vpop.f32.mrb[0].mxu0
  %v2321 = vpop.f32.mrb[0].mxu0
  %v2322 = vadd.f32 0.0, %v2321
  %v2323 = vpop.f32.mrb[0].mxu0
  %2324 = vmatprep.mubr.bf16.mxu0 0
  %2325 = vmatmul.mubr.bf16.gmra.mrb[0].mxu0 %v1652
  %v2326 = vpop.f32.mrb[0].mxu0
  %v2327 = vadd.f32 0.0, %v2326
  %v2328 = vpop.f32.mrb[0].mxu0
  %v2329 = vpop.f32.mrb[0].mxu0
  %v2330 = vadd.f32 0.0, %v2329
  %v2331 = vpop.f32.mrb[0].mxu0
  %2332 = vmatprep.mubr.bf16.mxu0 0
  %2333 = vmatmul.mubr.bf16.gmra.mrb[0].mxu0 %v1655
  %v2334 = vpop.f32.mrb[0].mxu0
  %v2335 = vpop.f32.mrb[0].mxu0
  %v2336 = vpop.f32.mrb[0].mxu0
  %v2337 = vpop.f32.mrb[0].mxu0
  %2338 = vmatprep.mubr.bf16.mxu0 0
  %2339 = vmatmul.mubr.bf16.gmra.mrb[0].mxu0 %v1658
  %v2340 = vpop.f32.mrb[0].mxu0
  %v2341 = vadd.f32 0.0, %v2340
  %v2342 = vpop.f32.mrb[0].mxu0
  %v2343 = vpop.f32.mrb[0].mxu0
  %v2344 = vadd.f32 0.0, %v2343
  %v2345 = vpop.f32.mrb[0].mxu0
  %2346 = vmatprep.mubr.bf16.mxu0 0
  %2347 = vmatmul.mubr.bf16.gmra.mrb[0].mxu0 %v1661
  %v2348 = vpop.f32.mrb[0].mxu0
  %v2349 = vadd.f32 0.0, %v2348
  %v2350 = vpop.f32.mrb[0].mxu0
  %v2351 = vpop.f32.mrb[0].mxu0
  %v2352 = vadd.f32 0.0, %v2351
  %v2353 = vpop.f32.mrb[0].mxu0
  %2354 = vmatprep.mubr.bf16.mxu0 0
  %2355 = vmatmul.mubr.bf16.gmra.mrb[0].mxu0 %v1664
  %v2356 = vpop.f32.mrb[0].mxu0
  %v2357 = vpop.f32.mrb[0].mxu0
  %v2358 = vpop.f32.mrb[0].mxu0
  %v2359 = vpop.f32.mrb[0].mxu0
  %2360 = vmatprep.mubr.bf16.mxu0 0
  %2361 = vmatmul.mubr.bf16.gmra.mrb[0].mxu0 %v1667
  %v2362 = vpop.f32.mrb[0].mxu0
  %v2363 = vadd.f32 0.0, %v2362
  %v2364 = vpop.f32.mrb[0].mxu0
  %v2365 = vpop.f32.mrb[0].mxu0
  %v2366 = vadd.f32 0.0, %v2365
  %v2367 = vpop.f32.mrb[0].mxu0
  %2368 = vmatprep.mubr.bf16.mxu0 0
  %2369 = vmatmul.mubr.bf16.gmra.mrb[0].mxu0 %v1670
  %v2370 = vpop.f32.mrb[0].mxu0
  %v2371 = vadd.f32 0.0, %v2370
  %v2372 = vpop.f32.mrb[0].mxu0
  %v2373 = vpop.f32.mrb[0].mxu0
  %v2374 = vadd.f32 0.0, %v2373
  %v2375 = vpop.f32.mrb[0].mxu0
  %2376 = vmatprep.mubr.bf16.mxu0 0
  %2377 = vmatmul.mubr.bf16.gmra.mrb[0].mxu0 %v2276
  %v2378 = vpop.f32.mrb[0].mxu0
  %v2379 = vpop.f32.mrb[0].mxu0
  %v2380 = vpop.f32.mrb[0].mxu0
  %v2381 = vpop.f32.mrb[0].mxu0
  %2382 = vmatprep.mubr.bf16.mxu0 0
  %2383 = vmatmul.mubr.bf16.gmra.mrb[0].mxu0 %v2279
  %v2384 = vpop.f32.mrb[0].mxu0
  %v2385 = vadd.f32 0.0, %v2384
  %v2386 = vpop.f32.mrb[0].mxu0
  %v2387 = vpop.f32.mrb[0].mxu0
  %v2388 = vadd.f32 0.0, %v2387
  %v2389 = vpop.f32.mrb[0].mxu0
  %2390 = vmatprep.mubr.bf16.mxu0 0
  %2391 = vmatmul.mubr.bf16.gmra.mrb[0].mxu0 %v2282
  %v2392 = vpop.f32.mrb[0].mxu0
  %v2393 = vadd.f32 0.0, %v2392
  %v2394 = vpop.f32.mrb[0].mxu0
  %v2395 = vpop.f32.mrb[0].mxu0
  %v2396 = vadd.f32 0.0, %v2395
  %v2397 = vpop.f32.mrb[0].mxu0
  %2398 = vdwg.mxu0
  %v2399 = vadd.f32 %v2239, %v2319
  %v2400 = vadd.f32 %v2240, %v2322
  %v2401 = vadd.f32 %v2241, %v2327
  %v2402 = vadd.f32 %v2242, %v2330
  %v2403 = vadd.f32 %v2243, %v2341
  %v2404 = vadd.f32 %v2244, %v2344
  %v2405 = vadd.f32 %v2245, %v2349
  %v2406 = vadd.f32 %v2246, %v2352
  %v2407 = vadd.f32 %v2247, %v2363
  %v2408 = vadd.f32 %v2248, %v2366
  %v2409 = vadd.f32 %v2249, %v2371
  %v2410 = vadd.f32 %v2250, %v2374
  %v2411 = vadd.f32 %v2251, %v2385
  %v2412 = vadd.f32 %v2252, %v2388
  %v2413 = vadd.f32 %v2253, %v2393
  %v2414 = vadd.f32 %v2254, %v2396
  %v2415 = vpack.c.bf16 %v1588, %v1587
  %s2416 = scalar_lea.vmem %s2, 80
  %v2417 = vld [vmem:[%s2416] sm:$0xf]
  %v2418 = vld [vmem:[%s2416 + $0x4] sm:$0xf]
  %v2419 = vld [vmem:[%s2416 + $0x8] sm:$0xf]
  %v2420 = vld [vmem:[%s2416 + $0xc] sm:$0xf]
  %v2425 = vunpack.c.l.b16 %v2417
  %v2426 = vunpack.c.l.b16 %v2418
  %v2427 = vunpack.c.l.b16 %v2419
  %v2428 = vunpack.c.l.b16 %v2420
  %v2429 = vpack.c.b16 %v2426, %v2425
  %v2430 = vpack.c.b16 %v2428, %v2427
  %v2434 = vsel %vm1638, %v2415, 0
  %2436 = vmatprep.subr.bf16.mxu0 0
  %2437 = vmatpush1.bf16.msra.mxu0 %v2429
  %2438 = vmatprep.subr.bf16.mxu0 0
  %2439 = vmatpush1.bf16.msra.mxu0 %v2430
  %2440 = vmatprep.subr.bf16.mxu0 0
  %2441 = vmatpush1.bf16.msra.mxu0 0
  %2442 = vmatprep.subr.bf16.mxu0 0
  %2443 = vmatpush1.bf16.msra.mxu0 0
  %2444 = vmatprep.subr.bf16.mxu0 0
  %2445 = vmatpush1.bf16.msra.mxu0 0
  %2446 = vmatprep.subr.bf16.mxu0 0
  %2447 = vmatpush1.bf16.msra.mxu0 0
  %2448 = vmatprep.subr.bf16.mxu0 0
  %2449 = vmatpush1.bf16.msra.mxu0 0
  %2450 = vmatprep.subr.bf16.mxu0 0
  %2451 = vmatpush1.bf16.msra.mxu0 0
  %2452 = vmatprep.subr.bf16.mxu0 0
  %2453 = vmatpush1.bf16.msra.mxu0 0
  %2454 = vmatprep.subr.bf16.mxu0 0
  %2455 = vmatpush1.bf16.msra.mxu0 0
  %2456 = vmatprep.subr.bf16.mxu0 0
  %2457 = vmatpush1.bf16.msra.mxu0 0
  %2458 = vmatprep.subr.bf16.mxu0 0
  %2459 = vmatpush1.bf16.msra.mxu0 0
  %2460 = vmatprep.subr.bf16.mxu0 0
  %2461 = vmatpush1.bf16.msra.mxu0 0
  %2462 = vmatprep.subr.bf16.mxu0 0
  %2463 = vmatpush1.bf16.msra.mxu0 0
  %2464 = vmatprep.subr.bf16.mxu0 0
  %2465 = vmatpush1.bf16.msra.mxu0 0
  %2466 = vmatprep.subr.bf16.mxu0 0
  %2467 = vmatpush1.bf16.msra.mxu0 0
  %2468 = vmatprep.mubr.bf16.mxu0 0
  %2469 = vmatmul.mubr.bf16.gmra.mrb[0].mxu0 %v1812
  %v2470 = vpop.f32.mrb[0].mxu0
  %v2471 = vadd.f32 0.0, %v2470
  %v2472 = vpop.f32.mrb[0].mxu0
  %v2473 = vpop.f32.mrb[0].mxu0
  %v2474 = vadd.f32 0.0, %v2473
  %v2475 = vpop.f32.mrb[0].mxu0
  %2476 = vmatprep.mubr.bf16.mxu0 0
  %2477 = vmatmul.mubr.bf16.gmra.mrb[0].mxu0 %v1815
  %v2478 = vpop.f32.mrb[0].mxu0
  %v2479 = vadd.f32 0.0, %v2478
  %v2480 = vpop.f32.mrb[0].mxu0
  %v2481 = vpop.f32.mrb[0].mxu0
  %v2482 = vadd.f32 0.0, %v2481
  %v2483 = vpop.f32.mrb[0].mxu0
  %2484 = vmatprep.mubr.bf16.mxu0 0
  %2485 = vmatmul.mubr.bf16.gmra.mrb[0].mxu0 %v1818
  %v2486 = vpop.f32.mrb[0].mxu0
  %v2487 = vpop.f32.mrb[0].mxu0
  %v2488 = vpop.f32.mrb[0].mxu0
  %v2489 = vpop.f32.mrb[0].mxu0
  %2490 = vmatprep.mubr.bf16.mxu0 0
  %2491 = vmatmul.mubr.bf16.gmra.mrb[0].mxu0 %v1821
  %v2492 = vpop.f32.mrb[0].mxu0
  %v2493 = vadd.f32 0.0, %v2492
  %v2494 = vpop.f32.mrb[0].mxu0
  %v2495 = vpop.f32.mrb[0].mxu0
  %v2496 = vadd.f32 0.0, %v2495
  %v2497 = vpop.f32.mrb[0].mxu0
  %2498 = vmatprep.mubr.bf16.mxu0 0
  %2499 = vmatmul.mubr.bf16.gmra.mrb[0].mxu0 %v1824
  %v2500 = vpop.f32.mrb[0].mxu0
  %v2501 = vadd.f32 0.0, %v2500
  %v2502 = vpop.f32.mrb[0].mxu0
  %v2503 = vpop.f32.mrb[0].mxu0
  %v2504 = vadd.f32 0.0, %v2503
  %v2505 = vpop.f32.mrb[0].mxu0
  %2506 = vmatprep.mubr.bf16.mxu0 0
  %2507 = vmatmul.mubr.bf16.gmra.mrb[0].mxu0 %v1827
  %v2508 = vpop.f32.mrb[0].mxu0
  %v2509 = vpop.f32.mrb[0].mxu0
  %v2510 = vpop.f32.mrb[0].mxu0
  %v2511 = vpop.f32.mrb[0].mxu0
  %2512 = vmatprep.mubr.bf16.mxu0 0
  %2513 = vmatmul.mubr.bf16.gmra.mrb[0].mxu0 %v1830
  %v2514 = vpop.f32.mrb[0].mxu0
  %v2515 = vadd.f32 0.0, %v2514
  %v2516 = vpop.f32.mrb[0].mxu0
  %v2517 = vpop.f32.mrb[0].mxu0
  %v2518 = vadd.f32 0.0, %v2517
  %v2519 = vpop.f32.mrb[0].mxu0
  %2520 = vmatprep.mubr.bf16.mxu0 0
  %2521 = vmatmul.mubr.bf16.gmra.mrb[0].mxu0 %v1966
  %v2522 = vpop.f32.mrb[0].mxu0
  %v2523 = vadd.f32 0.0, %v2522
  %v2524 = vpop.f32.mrb[0].mxu0
  %v2525 = vpop.f32.mrb[0].mxu0
  %v2526 = vadd.f32 0.0, %v2525
  %v2527 = vpop.f32.mrb[0].mxu0
  %2528 = vmatprep.mubr.bf16.mxu0 0
  %2529 = vmatmul.mubr.bf16.gmra.mrb[0].mxu0 %v2119
  %v2530 = vpop.f32.mrb[0].mxu0
  %v2531 = vpop.f32.mrb[0].mxu0
  %v2532 = vpop.f32.mrb[0].mxu0
  %v2533 = vpop.f32.mrb[0].mxu0
  %2534 = vmatprep.mubr.bf16.mxu0 0
  %2535 = vmatmul.mubr.bf16.gmra.mrb[0].mxu0 %v2122
  %v2536 = vpop.f32.mrb[0].mxu0
  %v2537 = vadd.f32 0.0, %v2536
  %v2538 = vpop.f32.mrb[0].mxu0
  %v2539 = vpop.f32.mrb[0].mxu0
  %v2540 = vadd.f32 0.0, %v2539
  %v2541 = vpop.f32.mrb[0].mxu0
  %2542 = vmatprep.mubr.bf16.mxu0 0
  %2543 = vmatmul.mubr.bf16.gmra.mrb[0].mxu0 %v2434
  %v2544 = vpop.f32.mrb[0].mxu0
  %v2545 = vadd.f32 0.0, %v2544
  %v2546 = vpop.f32.mrb[0].mxu0
  %v2547 = vpop.f32.mrb[0].mxu0
  %v2548 = vadd.f32 0.0, %v2547
  %v2549 = vpop.f32.mrb[0].mxu0
  %2550 = vdwg.mxu0
  %v2551 = vadd.f32 %v2399, %v2471
  %v2552 = vadd.f32 %v2400, %v2474
  %v2553 = vadd.f32 %v2401, %v2479
  %v2554 = vadd.f32 %v2402, %v2482
  %v2555 = vadd.f32 %v2403, %v2493
  %v2556 = vadd.f32 %v2404, %v2496
  %v2557 = vadd.f32 %v2405, %v2501
  %v2558 = vadd.f32 %v2406, %v2504
  %v2559 = vadd.f32 %v2407, %v2515
  %v2560 = vadd.f32 %v2408, %v2518
  %v2561 = vadd.f32 %v2409, %v2523
  %v2562 = vadd.f32 %v2410, %v2526
  %v2563 = vadd.f32 %v2411, %v2537
  %v2564 = vadd.f32 %v2412, %v2540
  %v2565 = vadd.f32 %v2413, %v2545
  %v2566 = vadd.f32 %v2414, %v2548
  %v2567 = vpack.c.bf16 %v1590, %v1589
  %v2568 = vpack.c.bf16 %v1592, %v1591
  %s2569 = scalar_lea.vmem %s2, 96
  %v2570 = vld [vmem:[%s2569] sm:$0xf]
  %v2571 = vld [vmem:[%s2569 + $0x4] sm:$0xf]
  %v2572 = vld [vmem:[%s2569 + $0x8] sm:$0xf]
  %v2573 = vld [vmem:[%s2569 + $0xc] sm:$0xf]
  %v2578 = vunpack.c.l.b16 %v2570
  %v2579 = vunpack.c.l.b16 %v2571
  %v2580 = vunpack.c.l.b16 %v2572
  %v2581 = vunpack.c.l.b16 %v2573
  %v2582 = vpack.c.b16 %v2579, %v2578
  %v2583 = vpack.c.b16 %v2581, %v2580
  %v2587 = vsel %vm1638, %v2567, 0
  %v2590 = vsel %vm1638, %v2568, 0
  %2592 = vmatprep.subr.bf16.mxu0 0
  %2593 = vmatpush1.bf16.msra.mxu0 %v2582
  %2594 = vmatprep.subr.bf16.mxu0 0
  %2595 = vmatpush1.bf16.msra.mxu0 %v2583
  %2596 = vmatprep.subr.bf16.mxu0 0
  %2597 = vmatpush1.bf16.msra.mxu0 0
  %2598 = vmatprep.subr.bf16.mxu0 0
  %2599 = vmatpush1.bf16.msra.mxu0 0
  %2600 = vmatprep.subr.bf16.mxu0 0
  %2601 = vmatpush1.bf16.msra.mxu0 0
  %2602 = vmatprep.subr.bf16.mxu0 0
  %2603 = vmatpush1.bf16.msra.mxu0 0
  %2604 = vmatprep.subr.bf16.mxu0 0
  %2605 = vmatpush1.bf16.msra.mxu0 0
  %2606 = vmatprep.subr.bf16.mxu0 0
  %2607 = vmatpush1.bf16.msra.mxu0 0
  %2608 = vmatprep.subr.bf16.mxu0 0
  %2609 = vmatpush1.bf16.msra.mxu0 0
  %2610 = vmatprep.subr.bf16.mxu0 0
  %2611 = vmatpush1.bf16.msra.mxu0 0
  %2612 = vmatprep.subr.bf16.mxu0 0
  %2613 = vmatpush1.bf16.msra.mxu0 0
  %2614 = vmatprep.subr.bf16.mxu0 0
  %2615 = vmatpush1.bf16.msra.mxu0 0
  %2616 = vmatprep.subr.bf16.mxu0 0
  %2617 = vmatpush1.bf16.msra.mxu0 0
  %2618 = vmatprep.subr.bf16.mxu0 0
  %2619 = vmatpush1.bf16.msra.mxu0 0
  %2620 = vmatprep.subr.bf16.mxu0 0
  %2621 = vmatpush1.bf16.msra.mxu0 0
  %2622 = vmatprep.subr.bf16.mxu0 0
  %2623 = vmatpush1.bf16.msra.mxu0 0
  %2624 = vmatprep.mubr.bf16.mxu0 0
  %2625 = vmatmul.mubr.bf16.gmra.mrb[0].mxu0 %v1818
  %v2626 = vpop.f32.mrb[0].mxu0
  %v2627 = vadd.f32 0.0, %v2626
  %v2628 = vpop.f32.mrb[0].mxu0
  %v2629 = vpop.f32.mrb[0].mxu0
  %v2630 = vadd.f32 0.0, %v2629
  %v2631 = vpop.f32.mrb[0].mxu0
  %2632 = vmatprep.mubr.bf16.mxu0 0
  %2633 = vmatmul.mubr.bf16.gmra.mrb[0].mxu0 %v1821
  %v2634 = vpop.f32.mrb[0].mxu0
  %v2635 = vadd.f32 0.0, %v2634
  %v2636 = vpop.f32.mrb[0].mxu0
  %v2637 = vpop.f32.mrb[0].mxu0
  %v2638 = vadd.f32 0.0, %v2637
  %v2639 = vpop.f32.mrb[0].mxu0
  %2640 = vmatprep.mubr.bf16.mxu0 0
  %2641 = vmatmul.mubr.bf16.gmra.mrb[0].mxu0 %v1824
  %v2642 = vpop.f32.mrb[0].mxu0
  %v2643 = vpop.f32.mrb[0].mxu0
  %v2644 = vpop.f32.mrb[0].mxu0
  %v2645 = vpop.f32.mrb[0].mxu0
  %2646 = vmatprep.mubr.bf16.mxu0 0
  %2647 = vmatmul.mubr.bf16.gmra.mrb[0].mxu0 %v1827
  %v2648 = vpop.f32.mrb[0].mxu0
  %v2649 = vadd.f32 0.0, %v2648
  %v2650 = vpop.f32.mrb[0].mxu0
  %v2651 = vpop.f32.mrb[0].mxu0
  %v2652 = vadd.f32 0.0, %v2651
  %v2653 = vpop.f32.mrb[0].mxu0
  %2654 = vmatprep.mubr.bf16.mxu0 0
  %2655 = vmatmul.mubr.bf16.gmra.mrb[0].mxu0 %v1830
  %v2656 = vpop.f32.mrb[0].mxu0
  %v2657 = vadd.f32 0.0, %v2656
  %v2658 = vpop.f32.mrb[0].mxu0
  %v2659 = vpop.f32.mrb[0].mxu0
  %v2660 = vadd.f32 0.0, %v2659
  %v2661 = vpop.f32.mrb[0].mxu0
  %2662 = vmatprep.mubr.bf16.mxu0 0
  %2663 = vmatmul.mubr.bf16.gmra.mrb[0].mxu0 %v1966
  %v2664 = vpop.f32.mrb[0].mxu0
  %v2665 = vpop.f32.mrb[0].mxu0
  %v2666 = vpop.f32.mrb[0].mxu0
  %v2667 = vpop.f32.mrb[0].mxu0
  %2668 = vmatprep.mubr.bf16.mxu0 0
  %2669 = vmatmul.mubr.bf16.gmra.mrb[0].mxu0 %v2119
  %v2670 = vpop.f32.mrb[0].mxu0
  %v2671 = vadd.f32 0.0, %v2670
  %v2672 = vpop.f32.mrb[0].mxu0
  %v2673 = vpop.f32.mrb[0].mxu0
  %v2674 = vadd.f32 0.0, %v2673
  %v2675 = vpop.f32.mrb[0].mxu0
  %2676 = vmatprep.mubr.bf16.mxu0 0
  %2677 = vmatmul.mubr.bf16.gmra.mrb[0].mxu0 %v2122
  %v2678 = vpop.f32.mrb[0].mxu0
  %v2679 = vadd.f32 0.0, %v2678
  %v2680 = vpop.f32.mrb[0].mxu0
  %v2681 = vpop.f32.mrb[0].mxu0
  %v2682 = vadd.f32 0.0, %v2681
  %v2683 = vpop.f32.mrb[0].mxu0
  %2684 = vmatprep.mubr.bf16.mxu0 0
  %2685 = vmatmul.mubr.bf16.gmra.mrb[0].mxu0 %v2434
  %v2686 = vpop.f32.mrb[0].mxu0
  %v2687 = vpop.f32.mrb[0].mxu0
  %v2688 = vpop.f32.mrb[0].mxu0
  %v2689 = vpop.f32.mrb[0].mxu0
  %2690 = vmatprep.mubr.bf16.mxu0 0
  %2691 = vmatmul.mubr.bf16.gmra.mrb[0].mxu0 %v2587
  %v2692 = vpop.f32.mrb[0].mxu0
  %v2693 = vadd.f32 0.0, %v2692
  %v2694 = vpop.f32.mrb[0].mxu0
  %v2695 = vpop.f32.mrb[0].mxu0
  %v2696 = vadd.f32 0.0, %v2695
  %v2697 = vpop.f32.mrb[0].mxu0
  %2698 = vmatprep.mubr.bf16.mxu0 0
  %2699 = vmatmul.mubr.bf16.gmra.mrb[0].mxu0 %v2590
  %v2700 = vpop.f32.mrb[0].mxu0
  %v2701 = vadd.f32 0.0, %v2700
  %v2702 = vpop.f32.mrb[0].mxu0
  %v2703 = vpop.f32.mrb[0].mxu0
  %v2704 = vadd.f32 0.0, %v2703
  %v2705 = vpop.f32.mrb[0].mxu0
  %2706 = vdwg.mxu0
  %v2707 = vadd.f32 %v2551, %v2627
  %v2708 = vadd.f32 %v2552, %v2630
  %v2709 = vadd.f32 %v2553, %v2635
  %v2710 = vadd.f32 %v2554, %v2638
  %v2711 = vadd.f32 %v2555, %v2649
  %v2712 = vadd.f32 %v2556, %v2652
  %v2713 = vadd.f32 %v2557, %v2657
  %v2714 = vadd.f32 %v2558, %v2660
  %v2715 = vadd.f32 %v2559, %v2671
  %v2716 = vadd.f32 %v2560, %v2674
  %v2717 = vadd.f32 %v2561, %v2679
  %v2718 = vadd.f32 %v2562, %v2682
  %v2719 = vadd.f32 %v2563, %v2693
  %v2720 = vadd.f32 %v2564, %v2696
  %v2721 = vadd.f32 %v2565, %v2701
  %v2722 = vadd.f32 %v2566, %v2704
  %v2723 = vpack.c.bf16 %v1589, %v1588
  %v2724 = vpack.c.bf16 %v1591, %v1590
  %v2725 = vpack.c.bf16 %v1593, %v1592
  %s2726 = scalar_lea.vmem %s2, 112
  %v2727 = vld [vmem:[%s2726] sm:$0xf]
  %v2728 = vld [vmem:[%s2726 + $0x4] sm:$0xf]
  %v2729 = vld [vmem:[%s2726 + $0x8] sm:$0xf]
  %v2730 = vld [vmem:[%s2726 + $0xc] sm:$0xf]
  %v2735 = vunpack.c.l.b16 %v2727
  %v2736 = vunpack.c.l.b16 %v2728
  %v2737 = vunpack.c.l.b16 %v2729
  %v2738 = vunpack.c.l.b16 %v2730
  %v2739 = vpack.c.b16 %v2736, %v2735
  %v2740 = vpack.c.b16 %v2738, %v2737
  %v2744 = vsel %vm1638, %v2723, 0
  %v2747 = vsel %vm1638, %v2724, 0
  %v2750 = vsel %vm1638, %v2725, 0
  %2752 = vmatprep.subr.bf16.mxu0 0
  %2753 = vmatpush1.bf16.msra.mxu0 %v2739
  %2754 = vmatprep.subr.bf16.mxu0 0
  %2755 = vmatpush1.bf16.msra.mxu0 %v2740
  %2756 = vmatprep.subr.bf16.mxu0 0
  %2757 = vmatpush1.bf16.msra.mxu0 0
  %2758 = vmatprep.subr.bf16.mxu0 0
  %2759 = vmatpush1.bf16.msra.mxu0 0
  %2760 = vmatprep.subr.bf16.mxu0 0
  %2761 = vmatpush1.bf16.msra.mxu0 0
  %2762 = vmatprep.subr.bf16.mxu0 0
  %2763 = vmatpush1.bf16.msra.mxu0 0
  %2764 = vmatprep.subr.bf16.mxu0 0
  %2765 = vmatpush1.bf16.msra.mxu0 0
  %2766 = vmatprep.subr.bf16.mxu0 0
  %2767 = vmatpush1.bf16.msra.mxu0 0
  %2768 = vmatprep.subr.bf16.mxu0 0
  %2769 = vmatpush1.bf16.msra.mxu0 0
  %2770 = vmatprep.subr.bf16.mxu0 0
  %2771 = vmatpush1.bf16.msra.mxu0 0
  %2772 = vmatprep.subr.bf16.mxu0 0
  %2773 = vmatpush1.bf16.msra.mxu0 0
  %2774 = vmatprep.subr.bf16.mxu0 0
  %2775 = vmatpush1.bf16.msra.mxu0 0
  %2776 = vmatprep.subr.bf16.mxu0 0
  %2777 = vmatpush1.bf16.msra.mxu0 0
  %2778 = vmatprep.subr.bf16.mxu0 0
  %2779 = vmatpush1.bf16.msra.mxu0 0
  %2780 = vmatprep.subr.bf16.mxu0 0
  %2781 = vmatpush1.bf16.msra.mxu0 0
  %2782 = vmatprep.subr.bf16.mxu0 0
  %2783 = vmatpush1.bf16.msra.mxu0 0
  %2784 = vmatprep.mubr.bf16.mxu0 0
  %2785 = vmatmul.mubr.bf16.gmra.mrb[0].mxu0 %v1658
  %v2786 = vpop.f32.mrb[0].mxu0
  %v2787 = vadd.f32 0.0, %v2786
  %v2788 = vpop.f32.mrb[0].mxu0
  %v2789 = vpop.f32.mrb[0].mxu0
  %v2790 = vadd.f32 0.0, %v2789
  %v2791 = vpop.f32.mrb[0].mxu0
  %2792 = vmatprep.mubr.bf16.mxu0 0
  %2793 = vmatmul.mubr.bf16.gmra.mrb[0].mxu0 %v1661
  %v2794 = vpop.f32.mrb[0].mxu0
  %v2795 = vadd.f32 0.0, %v2794
  %v2796 = vpop.f32.mrb[0].mxu0
  %v2797 = vpop.f32.mrb[0].mxu0
  %v2798 = vadd.f32 0.0, %v2797
  %v2799 = vpop.f32.mrb[0].mxu0
  %2800 = vmatprep.mubr.bf16.mxu0 0
  %2801 = vmatmul.mubr.bf16.gmra.mrb[0].mxu0 %v1664
  %v2802 = vpop.f32.mrb[0].mxu0
  %v2803 = vpop.f32.mrb[0].mxu0
  %v2804 = vpop.f32.mrb[0].mxu0
  %v2805 = vpop.f32.mrb[0].mxu0
  %2806 = vmatprep.mubr.bf16.mxu0 0
  %2807 = vmatmul.mubr.bf16.gmra.mrb[0].mxu0 %v1667
  %v2808 = vpop.f32.mrb[0].mxu0
  %v2809 = vadd.f32 0.0, %v2808
  %v2810 = vpop.f32.mrb[0].mxu0
  %v2811 = vpop.f32.mrb[0].mxu0
  %v2812 = vadd.f32 0.0, %v2811
  %v2813 = vpop.f32.mrb[0].mxu0
  %2814 = vmatprep.mubr.bf16.mxu0 0
  %2815 = vmatmul.mubr.bf16.gmra.mrb[0].mxu0 %v1670
  %v2816 = vpop.f32.mrb[0].mxu0
  %v2817 = vadd.f32 0.0, %v2816
  %v2818 = vpop.f32.mrb[0].mxu0
  %v2819 = vpop.f32.mrb[0].mxu0
  %v2820 = vadd.f32 0.0, %v2819
  %v2821 = vpop.f32.mrb[0].mxu0
  %2822 = vmatprep.mubr.bf16.mxu0 0
  %2823 = vmatmul.mubr.bf16.gmra.mrb[0].mxu0 %v2276
  %v2824 = vpop.f32.mrb[0].mxu0
  %v2825 = vpop.f32.mrb[0].mxu0
  %v2826 = vpop.f32.mrb[0].mxu0
  %v2827 = vpop.f32.mrb[0].mxu0
  %2828 = vmatprep.mubr.bf16.mxu0 0
  %2829 = vmatmul.mubr.bf16.gmra.mrb[0].mxu0 %v2279
  %v2830 = vpop.f32.mrb[0].mxu0
  %v2831 = vadd.f32 0.0, %v2830
  %v2832 = vpop.f32.mrb[0].mxu0
  %v2833 = vpop.f32.mrb[0].mxu0
  %v2834 = vadd.f32 0.0, %v2833
  %v2835 = vpop.f32.mrb[0].mxu0
  %2836 = vmatprep.mubr.bf16.mxu0 0
  %2837 = vmatmul.mubr.bf16.gmra.mrb[0].mxu0 %v2282
  %v2838 = vpop.f32.mrb[0].mxu0
  %v2839 = vadd.f32 0.0, %v2838
  %v2840 = vpop.f32.mrb[0].mxu0
  %v2841 = vpop.f32.mrb[0].mxu0
  %v2842 = vadd.f32 0.0, %v2841
  %v2843 = vpop.f32.mrb[0].mxu0
  %2844 = vmatprep.mubr.bf16.mxu0 0
  %2845 = vmatmul.mubr.bf16.gmra.mrb[0].mxu0 %v2744
  %v2846 = vpop.f32.mrb[0].mxu0
  %v2847 = vpop.f32.mrb[0].mxu0
  %v2848 = vpop.f32.mrb[0].mxu0
  %v2849 = vpop.f32.mrb[0].mxu0
  %2850 = vmatprep.mubr.bf16.mxu0 0
  %2851 = vmatmul.mubr.bf16.gmra.mrb[0].mxu0 %v2747
  %v2852 = vpop.f32.mrb[0].mxu0
  %v2853 = vadd.f32 0.0, %v2852
  %v2854 = vpop.f32.mrb[0].mxu0
  %v2855 = vpop.f32.mrb[0].mxu0
  %v2856 = vadd.f32 0.0, %v2855
  %v2857 = vpop.f32.mrb[0].mxu0
  %2858 = vmatprep.mubr.bf16.mxu0 0
  %2859 = vmatmul.mubr.bf16.gmra.mrb[0].mxu0 %v2750
  %v2860 = vpop.f32.mrb[0].mxu0
  %v2861 = vadd.f32 0.0, %v2860
  %v2862 = vpop.f32.mrb[0].mxu0
  %v2863 = vpop.f32.mrb[0].mxu0
  %v2864 = vadd.f32 0.0, %v2863
  %v2865 = vpop.f32.mrb[0].mxu0
  %2866 = vdwg.mxu0
  %v2867 = vadd.f32 %v2707, %v2787
  %v2868 = vadd.f32 %v2708, %v2790
  %v2869 = vadd.f32 %v2709, %v2795
  %v2870 = vadd.f32 %v2710, %v2798
  %v2871 = vadd.f32 %v2711, %v2809
  %v2872 = vadd.f32 %v2712, %v2812
  %v2873 = vadd.f32 %v2713, %v2817
  %v2874 = vadd.f32 %v2714, %v2820
  %v2875 = vadd.f32 %v2715, %v2831
  %v2876 = vadd.f32 %v2716, %v2834
  %v2877 = vadd.f32 %v2717, %v2839
  %v2878 = vadd.f32 %v2718, %v2842
  %v2879 = vadd.f32 %v2719, %v2853
  %v2880 = vadd.f32 %v2720, %v2856
  %v2881 = vadd.f32 %v2721, %v2861
  %v2882 = vadd.f32 %v2722, %v2864
  %v2883 = vpack.c.bf16 %v1594, %v1593
  %s2884 = scalar_lea.vmem %s2, 128
  %v2885 = vld [vmem:[%s2884] sm:$0xf]
  %v2886 = vld [vmem:[%s2884 + $0x4] sm:$0xf]
  %v2887 = vld [vmem:[%s2884 + $0x8] sm:$0xf]
  %v2888 = vld [vmem:[%s2884 + $0xc] sm:$0xf]
  %v2893 = vunpack.c.l.b16 %v2885
  %v2894 = vunpack.c.l.b16 %v2886
  %v2895 = vunpack.c.l.b16 %v2887
  %v2896 = vunpack.c.l.b16 %v2888
  %v2897 = vpack.c.b16 %v2894, %v2893
  %v2898 = vpack.c.b16 %v2896, %v2895
  %v2902 = vsel %vm1638, %v2883, 0
  %2904 = vmatprep.subr.bf16.mxu0 0
  %2905 = vmatpush1.bf16.msra.mxu0 %v2897
  %2906 = vmatprep.subr.bf16.mxu0 0
  %2907 = vmatpush1.bf16.msra.mxu0 %v2898
  %2908 = vmatprep.subr.bf16.mxu0 0
  %2909 = vmatpush1.bf16.msra.mxu0 0
  %2910 = vmatprep.subr.bf16.mxu0 0
  %2911 = vmatpush1.bf16.msra.mxu0 0
  %2912 = vmatprep.subr.bf16.mxu0 0
  %2913 = vmatpush1.bf16.msra.mxu0 0
  %2914 = vmatprep.subr.bf16.mxu0 0
  %2915 = vmatpush1.bf16.msra.mxu0 0
  %2916 = vmatprep.subr.bf16.mxu0 0
  %2917 = vmatpush1.bf16.msra.mxu0 0
  %2918 = vmatprep.subr.bf16.mxu0 0
  %2919 = vmatpush1.bf16.msra.mxu0 0
  %2920 = vmatprep.subr.bf16.mxu0 0
  %2921 = vmatpush1.bf16.msra.mxu0 0
  %2922 = vmatprep.subr.bf16.mxu0 0
  %2923 = vmatpush1.bf16.msra.mxu0 0
  %2924 = vmatprep.subr.bf16.mxu0 0
  %2925 = vmatpush1.bf16.msra.mxu0 0
  %2926 = vmatprep.subr.bf16.mxu0 0
  %2927 = vmatpush1.bf16.msra.mxu0 0
  %2928 = vmatprep.subr.bf16.mxu0 0
  %2929 = vmatpush1.bf16.msra.mxu0 0
  %2930 = vmatprep.subr.bf16.mxu0 0
  %2931 = vmatpush1.bf16.msra.mxu0 0
  %2932 = vmatprep.subr.bf16.mxu0 0
  %2933 = vmatpush1.bf16.msra.mxu0 0
  %2934 = vmatprep.subr.bf16.mxu0 0
  %2935 = vmatpush1.bf16.msra.mxu0 0
  %2936 = vmatprep.mubr.bf16.mxu0 0
  %2937 = vmatmul.mubr.bf16.gmra.mrb[0].mxu0 %v1821
  %v2938 = vpop.f32.mrb[0].mxu0
  %v2939 = vadd.f32 0.0, %v2938
  %v2940 = vpop.f32.mrb[0].mxu0
  %v2941 = vpop.f32.mrb[0].mxu0
  %v2942 = vadd.f32 0.0, %v2941
  %v2943 = vpop.f32.mrb[0].mxu0
  %2944 = vmatprep.mubr.bf16.mxu0 0
  %2945 = vmatmul.mubr.bf16.gmra.mrb[0].mxu0 %v1824
  %v2946 = vpop.f32.mrb[0].mxu0
  %v2947 = vadd.f32 0.0, %v2946
  %v2948 = vpop.f32.mrb[0].mxu0
  %v2949 = vpop.f32.mrb[0].mxu0
  %v2950 = vadd.f32 0.0, %v2949
  %v2951 = vpop.f32.mrb[0].mxu0
  %2952 = vmatprep.mubr.bf16.mxu0 0
  %2953 = vmatmul.mubr.bf16.gmra.mrb[0].mxu0 %v1827
  %v2954 = vpop.f32.mrb[0].mxu0
  %v2955 = vpop.f32.mrb[0].mxu0
  %v2956 = vpop.f32.mrb[0].mxu0
  %v2957 = vpop.f32.mrb[0].mxu0
  %2958 = vmatprep.mubr.bf16.mxu0 0
  %2959 = vmatmul.mubr.bf16.gmra.mrb[0].mxu0 %v1830
  %v2960 = vpop.f32.mrb[0].mxu0
  %v2961 = vadd.f32 0.0, %v2960
  %v2962 = vpop.f32.mrb[0].mxu0
  %v2963 = vpop.f32.mrb[0].mxu0
  %v2964 = vadd.f32 0.0, %v2963
  %v2965 = vpop.f32.mrb[0].mxu0
  %2966 = vmatprep.mubr.bf16.mxu0 0
  %2967 = vmatmul.mubr.bf16.gmra.mrb[0].mxu0 %v1966
  %v2968 = vpop.f32.mrb[0].mxu0
  %v2969 = vadd.f32 0.0, %v2968
  %v2970 = vpop.f32.mrb[0].mxu0
  %v2971 = vpop.f32.mrb[0].mxu0
  %v2972 = vadd.f32 0.0, %v2971
  %v2973 = vpop.f32.mrb[0].mxu0
  %2974 = vmatprep.mubr.bf16.mxu0 0
  %2975 = vmatmul.mubr.bf16.gmra.mrb[0].mxu0 %v2119
  %v2976 = vpop.f32.mrb[0].mxu0
  %v2977 = vpop.f32.mrb[0].mxu0
  %v2978 = vpop.f32.mrb[0].mxu0
  %v2979 = vpop.f32.mrb[0].mxu0
  %2980 = vmatprep.mubr.bf16.mxu0 0
  %2981 = vmatmul.mubr.bf16.gmra.mrb[0].mxu0 %v2122
  %v2982 = vpop.f32.mrb[0].mxu0
  %v2983 = vadd.f32 0.0, %v2982
  %v2984 = vpop.f32.mrb[0].mxu0
  %v2985 = vpop.f32.mrb[0].mxu0
  %v2986 = vadd.f32 0.0, %v2985
  %v2987 = vpop.f32.mrb[0].mxu0
  %2988 = vmatprep.mubr.bf16.mxu0 0
  %2989 = vmatmul.mubr.bf16.gmra.mrb[0].mxu0 %v2434
  %v2990 = vpop.f32.mrb[0].mxu0
  %v2991 = vadd.f32 0.0, %v2990
  %v2992 = vpop.f32.mrb[0].mxu0
  %v2993 = vpop.f32.mrb[0].mxu0
  %v2994 = vadd.f32 0.0, %v2993
  %v2995 = vpop.f32.mrb[0].mxu0
  %2996 = vmatprep.mubr.bf16.mxu0 0
  %2997 = vmatmul.mubr.bf16.gmra.mrb[0].mxu0 %v2587
  %v2998 = vpop.f32.mrb[0].mxu0
  %v2999 = vpop.f32.mrb[0].mxu0
  %v3000 = vpop.f32.mrb[0].mxu0
  %v3001 = vpop.f32.mrb[0].mxu0
  %3002 = vmatprep.mubr.bf16.mxu0 0
  %3003 = vmatmul.mubr.bf16.gmra.mrb[0].mxu0 %v2590
  %v3004 = vpop.f32.mrb[0].mxu0
  %v3005 = vadd.f32 0.0, %v3004
  %v3006 = vpop.f32.mrb[0].mxu0
  %v3007 = vpop.f32.mrb[0].mxu0
  %v3008 = vadd.f32 0.0, %v3007
  %v3009 = vpop.f32.mrb[0].mxu0
  %3010 = vmatprep.mubr.bf16.mxu0 0
  %3011 = vmatmul.mubr.bf16.gmra.mrb[0].mxu0 %v2902
  %v3012 = vpop.f32.mrb[0].mxu0
  %v3013 = vadd.f32 0.0, %v3012
  %v3014 = vpop.f32.mrb[0].mxu0
  %v3015 = vpop.f32.mrb[0].mxu0
  %v3016 = vadd.f32 0.0, %v3015
  %v3017 = vpop.f32.mrb[0].mxu0
  %3018 = vdwg.mxu0
  %v3019 = vadd.f32 %v2867, %v2939
  %v3020 = vadd.f32 %v2868, %v2942
  %v3021 = vadd.f32 %v2869, %v2947
  %v3022 = vadd.f32 %v2870, %v2950
  %v3023 = vadd.f32 %v2871, %v2961
  %v3024 = vadd.f32 %v2872, %v2964
  %v3025 = vadd.f32 %v2873, %v2969
  %v3026 = vadd.f32 %v2874, %v2972
  %v3027 = vadd.f32 %v2875, %v2983
  %v3028 = vadd.f32 %v2876, %v2986
  %v3029 = vadd.f32 %v2877, %v2991
  %v3030 = vadd.f32 %v2878, %v2994
  %v3031 = vadd.f32 %v2879, %v3005
  %v3032 = vadd.f32 %v2880, %v3008
  %v3033 = vadd.f32 %v2881, %v3013
  %v3034 = vadd.f32 %v2882, %v3016
  %v3035 = vmax.f32 %v3019, %v3020
  %v3036 = vmax.f32 %v3035, %v3023
  %v3037 = vmax.f32 %v3036, %v3024
  %v3038 = vlaneseq
  %v3039 = vshrl.u32 %v3038, 7
  %v3040 = vsub.s32 1, %v3039
  %v3041 = vrot.slane %v30, %v3040
  %v3042 = vadd.f32 %v3037, %v3041
  %v3043 = vmax.f32 %v3021, %v3022
  %v3044 = vmax.f32 %v3043, %v3025
  %v3045 = vmax.f32 %v3044, %v3026
  %v3046 = vadd.f32 %v3045, %v3041
  %v3047 = vmax.f32 %v3027, %v3028
  %v3048 = vmax.f32 %v3047, %v3031
  %v3049 = vmax.f32 %v3048, %v3032
  %v3050 = vadd.f32 %v3049, %v3041
  %v3051 = vmax.f32 %v3029, %v3030
  %v3052 = vmax.f32 %v3051, %v3033
  %v3053 = vmax.f32 %v3052, %v3034
  %v3054 = vadd.f32 %v3053, %v3041
  %3056 = vrot.lane.b32.xlu0 %v3046, 64
  %v3057 = vpop.permute.xlu0 %3056
  %3060 = vrot.lane.b32.xlu0 %v3054, 64
  %v3061 = vpop.permute.xlu0 %3060
  %vm3063 = vcmask 523264
  %v3064 = vsel %vm3063, %v3042, %v3057
  %v3065 = vsel %vm3063, %v3050, %v3061
  %v3066 = vtanh.pop %v3064
  %v3067 = vtanh.pop %v3065
  %v3068 = vtanh.pop %v3066
  %v3069 = vtanh.pop %v3067
  %v3070 = vpack.c.bf16 %v3068, %v3068
  %v3071 = vpack.c.bf16 %v3069, %v3069
  %v3072 = vld [vmem:[%s3] sm:$0xf]
  %v3073 = vld [vmem:[%s3 + $0x4] sm:$0xf]
  %v3074 = vld [vmem:[%s3 + $0x8] sm:$0xf]
  %v3075 = vld [vmem:[%s3 + $0xc] sm:$0xf]
  %v3076 = vld [vmem:[%s3 + $0x10] sm:$0xf]
  %v3077 = vld [vmem:[%s3 + $0x14] sm:$0xf]
  %v3078 = vld [vmem:[%s3 + $0x18] sm:$0xf]
  %v3079 = vld [vmem:[%s3 + $0x1c] sm:$0xf]
  %v3080 = vld [vmem:[%s3 + $0x20] sm:$0xf]
  %v3081 = vld [vmem:[%s3 + $0x24] sm:$0xf]
  %v3082 = vld [vmem:[%s3 + $0x28] sm:$0xf]
  %v3083 = vld [vmem:[%s3 + $0x2c] sm:$0xf]
  %v3084 = vld [vmem:[%s3 + $0x30] sm:$0xf]
  %v3085 = vld [vmem:[%s3 + $0x34] sm:$0xf]
  %v3086 = vld [vmem:[%s3 + $0x38] sm:$0xf]
  %v3087 = vld [vmem:[%s3 + $0x3c] sm:$0xf]
  %v3088 = vld [vmem:[%s3 + $0x40] sm:$0xf]
  %v3089 = vld [vmem:[%s3 + $0x44] sm:$0xf]
  %v3090 = vld [vmem:[%s3 + $0x48] sm:$0xf]
  %v3091 = vld [vmem:[%s3 + $0x4c] sm:$0xf]
  %v3092 = vld [vmem:[%s3 + $0x50] sm:$0xf]
  %v3093 = vld [vmem:[%s3 + $0x54] sm:$0xf]
  %v3094 = vld [vmem:[%s3 + $0x58] sm:$0xf]
  %v3095 = vld [vmem:[%s3 + $0x5c] sm:$0xf]
  %v3096 = vld [vmem:[%s3 + $0x60] sm:$0xf]
  %v3097 = vld [vmem:[%s3 + $0x64] sm:$0xf]
  %v3098 = vld [vmem:[%s3 + $0x68] sm:$0xf]
  %v3099 = vld [vmem:[%s3 + $0x6c] sm:$0xf]
  %v3100 = vld [vmem:[%s3 + $0x70] sm:$0xf]
  %v3101 = vld [vmem:[%s3 + $0x74] sm:$0xf]
  %v3102 = vld [vmem:[%s3 + $0x78] sm:$0xf]
  %v3103 = vld [vmem:[%s3 + $0x7c] sm:$0xf]
  %v3104 = vlaneseq
  %v3105 = vshrl.u32 %v3104, 7
  %v3106 = vsub.s32 2, %v3105
  %v3107 = vrot.slane %v30, %v3106
  %v3140 = vunpack.c.l.b16 %v3072
  %v3141 = vunpack.c.l.b16 %v3073
  %v3142 = vunpack.c.l.b16 %v3074
  %v3143 = vunpack.c.l.b16 %v3075
  %v3144 = vunpack.c.l.b16 %v3076
  %v3145 = vunpack.c.l.b16 %v3077
  %v3146 = vunpack.c.l.b16 %v3078
  %v3147 = vunpack.c.l.b16 %v3079
  %v3148 = vunpack.c.l.b16 %v3080
  %v3149 = vunpack.c.l.b16 %v3081
  %v3150 = vunpack.c.l.b16 %v3082
  %v3151 = vunpack.c.l.b16 %v3083
  %v3152 = vunpack.c.l.b16 %v3084
  %v3153 = vunpack.c.l.b16 %v3085
  %v3154 = vunpack.c.l.b16 %v3086
  %v3155 = vunpack.c.l.b16 %v3087
  %v3156 = vunpack.c.l.b16 %v3088
  %v3157 = vunpack.c.l.b16 %v3089
  %v3158 = vunpack.c.l.b16 %v3090
  %v3159 = vunpack.c.l.b16 %v3091
  %v3160 = vunpack.c.l.b16 %v3092
  %v3161 = vunpack.c.l.b16 %v3093
  %v3162 = vunpack.c.l.b16 %v3094
  %v3163 = vunpack.c.l.b16 %v3095
  %v3164 = vunpack.c.l.b16 %v3096
  %v3165 = vunpack.c.l.b16 %v3097
  %v3166 = vunpack.c.l.b16 %v3098
  %v3167 = vunpack.c.l.b16 %v3099
  %v3168 = vunpack.c.l.b16 %v3100
  %v3169 = vunpack.c.l.b16 %v3101
  %v3170 = vunpack.c.l.b16 %v3102
  %v3171 = vunpack.c.l.b16 %v3103
  %v3172 = vpack.c.b16 %v3141, %v3140
  %v3173 = vpack.c.b16 %v3143, %v3142
  %v3174 = vpack.c.b16 %v3145, %v3144
  %v3175 = vpack.c.b16 %v3147, %v3146
  %v3176 = vpack.c.b16 %v3149, %v3148
  %v3177 = vpack.c.b16 %v3151, %v3150
  %v3178 = vpack.c.b16 %v3153, %v3152
  %v3179 = vpack.c.b16 %v3155, %v3154
  %v3180 = vpack.c.b16 %v3157, %v3156
  %v3181 = vpack.c.b16 %v3159, %v3158
  %v3182 = vpack.c.b16 %v3161, %v3160
  %v3183 = vpack.c.b16 %v3163, %v3162
  %v3184 = vpack.c.b16 %v3165, %v3164
  %v3185 = vpack.c.b16 %v3167, %v3166
  %v3186 = vpack.c.b16 %v3169, %v3168
  %v3187 = vpack.c.b16 %v3171, %v3170
  %3204 = vmatprep.subr.bf16.mxu0 0
  %3205 = vmatpush1.bf16.msra.mxu0 %v3172
  %3206 = vmatprep.subr.bf16.mxu0 0
  %3207 = vmatpush1.bf16.msra.mxu0 %v3173
  %3208 = vmatprep.subr.bf16.mxu0 0
  %3209 = vmatpush1.bf16.msra.mxu0 %v3174
  %3210 = vmatprep.subr.bf16.mxu0 0
  %3211 = vmatpush1.bf16.msra.mxu0 %v3175
  %3212 = vmatprep.subr.bf16.mxu0 0
  %3213 = vmatpush1.bf16.msra.mxu0 %v3176
  %3214 = vmatprep.subr.bf16.mxu0 0
  %3215 = vmatpush1.bf16.msra.mxu0 %v3177
  %3216 = vmatprep.subr.bf16.mxu0 0
  %3217 = vmatpush1.bf16.msra.mxu0 %v3178
  %3218 = vmatprep.subr.bf16.mxu0 0
  %3219 = vmatpush1.bf16.msra.mxu0 %v3179
  %3220 = vmatprep.subr.bf16.mxu0 0
  %3221 = vmatpush1.bf16.msra.mxu0 %v3180
  %3222 = vmatprep.subr.bf16.mxu0 0
  %3223 = vmatpush1.bf16.msra.mxu0 %v3181
  %3224 = vmatprep.subr.bf16.mxu0 0
  %3225 = vmatpush1.bf16.msra.mxu0 %v3182
  %3226 = vmatprep.subr.bf16.mxu0 0
  %3227 = vmatpush1.bf16.msra.mxu0 %v3183
  %3228 = vmatprep.subr.bf16.mxu0 0
  %3229 = vmatpush1.bf16.msra.mxu0 %v3184
  %3230 = vmatprep.subr.bf16.mxu0 0
  %3231 = vmatpush1.bf16.msra.mxu0 %v3185
  %3232 = vmatprep.subr.bf16.mxu0 0
  %3233 = vmatpush1.bf16.msra.mxu0 %v3186
  %3234 = vmatprep.subr.bf16.mxu0 0
  %3235 = vmatpush1.bf16.msra.mxu0 %v3187
  %3236 = vmatprep.mubr.bf16.mxu0 %v3071
  %3237 = vmatmul.mubr.bf16.gmra.mrb[0].mxu0 %v3070
  %v3238 = vpop.f32.mrb[0].mxu0
  %v3239 = vadd.f32 %v3107, %v3238
  %v3240 = vpop.f32.mrb[0].mxu0
  %v3241 = vpop.f32.mrb[0].mxu0
  %v3242 = vpop.f32.mrb[0].mxu0
  %3243 = vdwg.mxu0
  %v3244 = vtanh.pop %v3239
  %v3245 = vpack.c.bf16 %v3244, %v3244
  %v3246 = vld [vmem:[%s4] sm:$0xf]
  %v3247 = vld [vmem:[%s4 + $0x4] sm:$0xf]
  %v3248 = vld [vmem:[%s4 + $0x8] sm:$0xf]
  %v3249 = vld [vmem:[%s4 + $0xc] sm:$0xf]
  %v3250 = vld [vmem:[%s4 + $0x10] sm:$0xf]
  %v3251 = vld [vmem:[%s4 + $0x14] sm:$0xf]
  %v3252 = vld [vmem:[%s4 + $0x18] sm:$0xf]
  %v3253 = vld [vmem:[%s4 + $0x1c] sm:$0xf]
  %v3254 = vld [vmem:[%s4 + $0x20] sm:$0xf]
  %v3255 = vld [vmem:[%s4 + $0x24] sm:$0xf]
  %v3256 = vld [vmem:[%s4 + $0x28] sm:$0xf]
  %v3257 = vld [vmem:[%s4 + $0x2c] sm:$0xf]
  %v3258 = vld [vmem:[%s4 + $0x30] sm:$0xf]
  %v3259 = vld [vmem:[%s4 + $0x34] sm:$0xf]
  %v3260 = vld [vmem:[%s4 + $0x38] sm:$0xf]
  %v3261 = vlaneseq
  %v3262 = vshrl.u32 %v3261, 7
  %v3263 = vsub.s32 3, %v3262
  %v3264 = vrot.slane %v30, %v3263
  %v3280 = vunpack.c.l.b16 %v3246
  %v3281 = vunpack.c.l.b16 %v3247
  %v3282 = vunpack.c.l.b16 %v3248
  %v3283 = vunpack.c.l.b16 %v3249
  %v3284 = vunpack.c.l.b16 %v3250
  %v3285 = vunpack.c.l.b16 %v3251
  %v3286 = vunpack.c.l.b16 %v3252
  %v3287 = vunpack.c.l.b16 %v3253
  %v3288 = vunpack.c.l.b16 %v3254
  %v3289 = vunpack.c.l.b16 %v3255
  %v3290 = vunpack.c.l.b16 %v3256
  %v3291 = vunpack.c.l.b16 %v3257
  %v3292 = vunpack.c.l.b16 %v3258
  %v3293 = vunpack.c.l.b16 %v3259
  %v3294 = vunpack.c.l.b16 %v3260
  %v3295 = vpack.c.b16 %v3281, %v3280
  %v3296 = vpack.c.b16 %v3283, %v3282
  %v3297 = vpack.c.b16 %v3285, %v3284
  %v3298 = vpack.c.b16 %v3287, %v3286
  %v3299 = vpack.c.b16 %v3289, %v3288
  %v3300 = vpack.c.b16 %v3291, %v3290
  %v3301 = vpack.c.b16 %v3293, %v3292
  %v3302 = vpack.c.b16 %v3294, %v3294
  %vm3310 = vcmask 982016
  %v3312 = vsel %vm3310, %v3245, 0
  %v3315 = vsel %vm759, %v3302, 0
  %3317 = vmatprep.subr.bf16.mxu0 0
  %3318 = vmatpush1.bf16.msra.mxu0 %v3295
  %3319 = vmatprep.subr.bf16.mxu0 0
  %3320 = vmatpush1.bf16.msra.mxu0 %v3296
  %3321 = vmatprep.subr.bf16.mxu0 0
  %3322 = vmatpush1.bf16.msra.mxu0 %v3297
  %3323 = vmatprep.subr.bf16.mxu0 0
  %3324 = vmatpush1.bf16.msra.mxu0 %v3298
  %3325 = vmatprep.subr.bf16.mxu0 0
  %3326 = vmatpush1.bf16.msra.mxu0 %v3299
  %3327 = vmatprep.subr.bf16.mxu0 0
  %3328 = vmatpush1.bf16.msra.mxu0 %v3300
  %3329 = vmatprep.subr.bf16.mxu0 0
  %3330 = vmatpush1.bf16.msra.mxu0 %v3301
  %3331 = vmatprep.subr.bf16.mxu0 0
  %3332 = vmatpush1.bf16.msra.mxu0 %v3315
  %3333 = vmatprep.subr.bf16.mxu0 0
  %3334 = vmatpush1.bf16.msra.mxu0 0
  %3335 = vmatprep.subr.bf16.mxu0 0
  %3336 = vmatpush1.bf16.msra.mxu0 0
  %3337 = vmatprep.subr.bf16.mxu0 0
  %3338 = vmatpush1.bf16.msra.mxu0 0
  %3339 = vmatprep.subr.bf16.mxu0 0
  %3340 = vmatpush1.bf16.msra.mxu0 0
  %3341 = vmatprep.subr.bf16.mxu0 0
  %3342 = vmatpush1.bf16.msra.mxu0 0
  %3343 = vmatprep.subr.bf16.mxu0 0
  %3344 = vmatpush1.bf16.msra.mxu0 0
  %3345 = vmatprep.subr.bf16.mxu0 0
  %3346 = vmatpush1.bf16.msra.mxu0 0
  %3347 = vmatprep.subr.bf16.mxu0 0
  %3348 = vmatpush1.bf16.msra.mxu0 0
  %3349 = vmatprep.mubr.bf16.mxu0 0
  %3350 = vmatmul.mubr.bf16.gmra.mrb[0].mxu0 %v3312
  %v3351 = vpop.f32.mrb[0].mxu0
  %v3352 = vadd.f32 %v3264, %v3351
  %v3353 = vpop.f32.mrb[0].mxu0
  %v3354 = vpop.f32.mrb[0].mxu0
  %v3355 = vpop.f32.mrb[0].mxu0
  %3356 = vdwg.mxu0
  %v3357 = vtanh.pop %v3352
  %v3358 = vpack.c.bf16 %v3357, %v3357
  %v3359 = vld [vmem:[%s5] sm:$0xf]
  %v3360 = vld [vmem:[%s5 + $0x4] sm:$0xf]
  %v3361 = vld [vmem:[%s5 + $0x8] sm:$0xf]
  %v3362 = vld [vmem:[%s5 + $0xc] sm:$0xf]
  %v3363 = vld [vmem:[%s5 + $0x10] sm:$0xf]
  %v3364 = vld [vmem:[%s5 + $0x14] sm:$0xf]
  %v3365 = vld [vmem:[%s5 + $0x18] sm:$0xf]
  %v3366 = vld [vmem:[%s5 + $0x1c] sm:$0xf]
  %v3367 = vld [vmem:[%s5 + $0x20] sm:$0xf]
  %v3368 = vld [vmem:[%s5 + $0x24] sm:$0xf]
  %v3369 = vld [vmem:[%s5 + $0x28] sm:$0x3]
  %v3370 = vlaneseq
  %v3371 = vshrl.u32 %v3370, 7
  %v3372 = vsub.s32 4, %v3371
  %v3373 = vrot.slane %v30, %v3372
  %v3385 = vunpack.c.l.b16 %v3359
  %v3386 = vunpack.c.l.b16 %v3360
  %v3387 = vunpack.c.l.b16 %v3361
  %v3388 = vunpack.c.l.b16 %v3362
  %v3389 = vunpack.c.l.b16 %v3363
  %v3390 = vunpack.c.l.b16 %v3364
  %v3391 = vunpack.c.l.b16 %v3365
  %v3392 = vunpack.c.l.b16 %v3366
  %v3393 = vunpack.c.l.b16 %v3367
  %v3394 = vunpack.c.l.b16 %v3368
  %v3395 = vunpack.c.l.b16 %v3369
  %v3396 = vpack.c.b16 %v3386, %v3385
  %v3397 = vpack.c.b16 %v3388, %v3387
  %v3398 = vpack.c.b16 %v3390, %v3389
  %v3399 = vpack.c.b16 %v3392, %v3391
  %v3400 = vpack.c.b16 %v3394, %v3393
  %v3401 = vpack.c.b16 %v3395, %v3395
  %vm3407 = vcmask 687104
  %v3409 = vsel %vm3407, %v3358, 0
  %vm3411 = vcmask 1041408
  %v3413 = vsel %vm3411, %v3401, 0
  %3415 = vmatprep.subr.bf16.mxu0 0
  %3416 = vmatpush1.bf16.msra.mxu0 %v3396
  %3417 = vmatprep.subr.bf16.mxu0 0
  %3418 = vmatpush1.bf16.msra.mxu0 %v3397
  %3419 = vmatprep.subr.bf16.mxu0 0
  %3420 = vmatpush1.bf16.msra.mxu0 %v3398
  %3421 = vmatprep.subr.bf16.mxu0 0
  %3422 = vmatpush1.bf16.msra.mxu0 %v3399
  %3423 = vmatprep.subr.bf16.mxu0 0
  %3424 = vmatpush1.bf16.msra.mxu0 %v3400
  %3425 = vmatprep.subr.bf16.mxu0 0
  %3426 = vmatpush1.bf16.msra.mxu0 %v3413
  %3427 = vmatprep.subr.bf16.mxu0 0
  %3428 = vmatpush1.bf16.msra.mxu0 0
  %3429 = vmatprep.subr.bf16.mxu0 0
  %3430 = vmatpush1.bf16.msra.mxu0 0
  %3431 = vmatprep.subr.bf16.mxu0 0
  %3432 = vmatpush1.bf16.msra.mxu0 0
  %3433 = vmatprep.subr.bf16.mxu0 0
  %3434 = vmatpush1.bf16.msra.mxu0 0
  %3435 = vmatprep.subr.bf16.mxu0 0
  %3436 = vmatpush1.bf16.msra.mxu0 0
  %3437 = vmatprep.subr.bf16.mxu0 0
  %3438 = vmatpush1.bf16.msra.mxu0 0
  %3439 = vmatprep.subr.bf16.mxu0 0
  %3440 = vmatpush1.bf16.msra.mxu0 0
  %3441 = vmatprep.subr.bf16.mxu0 0
  %3442 = vmatpush1.bf16.msra.mxu0 0
  %3443 = vmatprep.subr.bf16.mxu0 0
  %3444 = vmatpush1.bf16.msra.mxu0 0
  %3445 = vmatprep.subr.bf16.mxu0 0
  %3446 = vmatpush1.bf16.msra.mxu0 0
  %3447 = vmatprep.mubr.bf16.mxu0 0
  %3448 = vmatmul.mubr.bf16.gmra.mrb[0].mxu0 %v3409
  %v3449 = vpop.f32.mrb[0].mxu0
  %v3450 = vadd.f32 %v3373, %v3449
  %v3451 = vpop.f32.mrb[0].mxu0
  %v3452 = vpop.f32.mrb[0].mxu0
  %v3453 = vpop.f32.mrb[0].mxu0
  %3454 = vdwg.mxu0
  %s3455 = scalar_lea.vmem %s7, 8
  %v3456 = vld [vmem:[%s3455] sm:$0xff]
  %s3457 = scalar_lea.vmem %s0, 576
  %v3458 = vld [vmem:[%s3457] sm:$0xf]
  %v3459 = vld [vmem:[%s3457 + $0x4] sm:$0xf]
  %v3460 = vld [vmem:[%s3457 + $0x8] sm:$0xf]
  %v3461 = vld [vmem:[%s3457 + $0xc] sm:$0xf]
  %v3462 = vld [vmem:[%s3457 + $0x10] sm:$0xf]
  %v3463 = vld [vmem:[%s3457 + $0x14] sm:$0xf]
  %v3464 = vld [vmem:[%s3457 + $0x18] sm:$0xf]
  %v3465 = vld [vmem:[%s3457 + $0x1c] sm:$0xf]
  %v3466 = vld [vmem:[%s3457 + $0x20] sm:$0xf]
  %v3467 = vld [vmem:[%s3457 + $0x24] sm:$0xf]
  %v3468 = vld [vmem:[%s3457 + $0x28] sm:$0xf]
  %v3469 = vld [vmem:[%s3457 + $0x2c] sm:$0xf]
  %v3470 = vld [vmem:[%s3457 + $0x30] sm:$0xf]
  %v3471 = vld [vmem:[%s3457 + $0x34] sm:$0xf]
  %v3472 = vld [vmem:[%s3457 + $0x38] sm:$0xf]
  %v3473 = vld [vmem:[%s3457 + $0x3c] sm:$0xf]
  %v3474 = vld [vmem:[%s3457 + $0x40] sm:$0xf]
  %v3475 = vld [vmem:[%s3457 + $0x44] sm:$0xf]
  %v3476 = vld [vmem:[%s3457 + $0x48] sm:$0xf]
  %v3477 = vld [vmem:[%s3457 + $0x4c] sm:$0xf]
  %v3478 = vld [vmem:[%s3457 + $0x50] sm:$0xf]
  %v3479 = vld [vmem:[%s3457 + $0x54] sm:$0xf]
  %v3480 = vld [vmem:[%s3457 + $0x58] sm:$0xf]
  %v3481 = vld [vmem:[%s3457 + $0x5c] sm:$0xf]
  %v3482 = vld [vmem:[%s3457 + $0x60] sm:$0xf]
  %v3483 = vld [vmem:[%s3457 + $0x64] sm:$0xf]
  %v3484 = vld [vmem:[%s3457 + $0x68] sm:$0xf]
  %v3485 = vld [vmem:[%s3457 + $0x6c] sm:$0xf]
  %v3486 = vld [vmem:[%s3457 + $0x70] sm:$0xf]
  %v3487 = vld [vmem:[%s3457 + $0x74] sm:$0xf]
  %v3488 = vld [vmem:[%s3457 + $0x78] sm:$0xf]
  %v3489 = vld [vmem:[%s3457 + $0x7c] sm:$0xf]
  %v3490 = vld [vmem:[%s3457 + $0x80] sm:$0xf]
  %v3491 = vld [vmem:[%s3457 + $0x84] sm:$0xf]
  %v3492 = vld [vmem:[%s3457 + $0x88] sm:$0xf]
  %v3493 = vld [vmem:[%s3457 + $0x8c] sm:$0xf]
  %v3494 = vld [vmem:[%s3457 + $0x90] sm:$0xf]
  %v3495 = vld [vmem:[%s3457 + $0x94] sm:$0xf]
  %v3496 = vld [vmem:[%s3457 + $0x98] sm:$0xf]
  %v3497 = vld [vmem:[%s3457 + $0x9c] sm:$0xf]
  %v3498 = vld [vmem:[%s3457 + $0xa0] sm:$0xf]
  %v3499 = vld [vmem:[%s3457 + $0xa4] sm:$0xf]
  %v3500 = vld [vmem:[%s3457 + $0xa8] sm:$0xf]
  %v3501 = vld [vmem:[%s3457 + $0xac] sm:$0xf]
  %v3502 = vld [vmem:[%s3457 + $0xb0] sm:$0xf]
  %v3503 = vld [vmem:[%s3457 + $0xb4] sm:$0xf]
  %v3504 = vld [vmem:[%s3457 + $0xb8] sm:$0xf]
  %v3505 = vld [vmem:[%s3457 + $0xbc] sm:$0xf]
  %v3506 = vld [vmem:[%s3457 + $0xc0] sm:$0xf]
  %v3507 = vld [vmem:[%s3457 + $0xc4] sm:$0xf]
  %v3508 = vld [vmem:[%s3457 + $0xc8] sm:$0xf]
  %v3509 = vld [vmem:[%s3457 + $0xcc] sm:$0xf]
  %v3510 = vld [vmem:[%s3457 + $0xd0] sm:$0xf]
  %v3511 = vld [vmem:[%s3457 + $0xd4] sm:$0xf]
  %v3512 = vld [vmem:[%s3457 + $0xd8] sm:$0xf]
  %v3513 = vld [vmem:[%s3457 + $0xdc] sm:$0xf]
  %v3514 = vld [vmem:[%s3457 + $0xe0] sm:$0xf]
  %v3515 = vld [vmem:[%s3457 + $0xe4] sm:$0xf]
  %v3516 = vld [vmem:[%s3457 + $0xe8] sm:$0xf]
  %v3517 = vld [vmem:[%s3457 + $0xec] sm:$0xf]
  %v3518 = vld [vmem:[%s3457 + $0xf0] sm:$0xf]
  %v3519 = vld [vmem:[%s3457 + $0xf4] sm:$0xf]
  %v3520 = vld [vmem:[%s3457 + $0xf8] sm:$0xf]
  %v3521 = vld [vmem:[%s3457 + $0xfc] sm:$0xf]
  %v3522 = vld [vmem:[%s3457 + $0x100] sm:$0xf]
  %v3523 = vld [vmem:[%s3457 + $0x104] sm:$0xf]
  %v3524 = vld [vmem:[%s3457 + $0x108] sm:$0xf]
  %v3525 = vld [vmem:[%s3457 + $0x10c] sm:$0xf]
  %v3526 = vld [vmem:[%s3457 + $0x110] sm:$0xf]
  %v3527 = vld [vmem:[%s3457 + $0x114] sm:$0xf]
  %v3528 = vld [vmem:[%s3457 + $0x118] sm:$0xf]
  %v3529 = vld [vmem:[%s3457 + $0x11c] sm:$0xf]
  %v3530 = vld [vmem:[%s3457 + $0x120] sm:$0xf]
  %v3531 = vld [vmem:[%s3457 + $0x124] sm:$0xf]
  %v3532 = vld [vmem:[%s3457 + $0x128] sm:$0xf]
  %v3533 = vld [vmem:[%s3457 + $0x12c] sm:$0xf]
  %v3534 = vld [vmem:[%s3457 + $0x130] sm:$0xf]
  %v3535 = vld [vmem:[%s3457 + $0x134] sm:$0xf]
  %v3536 = vld [vmem:[%s3457 + $0x138] sm:$0xf]
  %v3537 = vld [vmem:[%s3457 + $0x13c] sm:$0xf]
  %v3538 = vld [vmem:[%s3457 + $0x140] sm:$0xf]
  %v3539 = vld [vmem:[%s3457 + $0x144] sm:$0xf]
  %v3540 = vld [vmem:[%s3457 + $0x148] sm:$0xf]
  %v3541 = vld [vmem:[%s3457 + $0x14c] sm:$0xf]
  %v3542 = vld [vmem:[%s3457 + $0x150] sm:$0xf]
  %v3543 = vld [vmem:[%s3457 + $0x154] sm:$0xf]
  %v3544 = vld [vmem:[%s3457 + $0x158] sm:$0xf]
  %v3545 = vld [vmem:[%s3457 + $0x15c] sm:$0xf]
  %v3546 = vld [vmem:[%s3457 + $0x160] sm:$0xf]
  %v3547 = vld [vmem:[%s3457 + $0x164] sm:$0xf]
  %v3548 = vld [vmem:[%s3457 + $0x168] sm:$0xf]
  %v3549 = vld [vmem:[%s3457 + $0x16c] sm:$0xf]
  %v3550 = vld [vmem:[%s3457 + $0x170] sm:$0xf]
  %v3551 = vld [vmem:[%s3457 + $0x174] sm:$0xf]
  %v3552 = vld [vmem:[%s3457 + $0x178] sm:$0xf]
  %v3553 = vld [vmem:[%s3457 + $0x17c] sm:$0xf]
  %v3554 = vld [vmem:[%s3457 + $0x180] sm:$0xf]
  %v3555 = vld [vmem:[%s3457 + $0x184] sm:$0xf]
  %v3556 = vld [vmem:[%s3457 + $0x188] sm:$0xf]
  %v3557 = vld [vmem:[%s3457 + $0x18c] sm:$0xf]
  %v3558 = vld [vmem:[%s3457 + $0x190] sm:$0xf]
  %v3559 = vld [vmem:[%s3457 + $0x194] sm:$0xf]
  %v3560 = vld [vmem:[%s3457 + $0x198] sm:$0xf]
  %v3561 = vld [vmem:[%s3457 + $0x19c] sm:$0xf]
  %v3562 = vld [vmem:[%s3457 + $0x1a0] sm:$0xf]
  %v3563 = vld [vmem:[%s3457 + $0x1a4] sm:$0xf]
  %v3564 = vld [vmem:[%s3457 + $0x1a8] sm:$0xf]
  %v3565 = vld [vmem:[%s3457 + $0x1ac] sm:$0xf]
  %v3566 = vld [vmem:[%s3457 + $0x1b0] sm:$0xf]
  %v3567 = vld [vmem:[%s3457 + $0x1b4] sm:$0xf]
  %v3568 = vld [vmem:[%s3457 + $0x1b8] sm:$0xf]
  %v3569 = vld [vmem:[%s3457 + $0x1bc] sm:$0xf]
  %v3570 = vld [vmem:[%s3457 + $0x1c0] sm:$0xf]
  %v3571 = vld [vmem:[%s3457 + $0x1c4] sm:$0xf]
  %v3572 = vld [vmem:[%s3457 + $0x1c8] sm:$0xf]
  %v3573 = vld [vmem:[%s3457 + $0x1cc] sm:$0xf]
  %v3574 = vld [vmem:[%s3457 + $0x1d0] sm:$0xf]
  %v3575 = vld [vmem:[%s3457 + $0x1d4] sm:$0xf]
  %v3576 = vld [vmem:[%s3457 + $0x1d8] sm:$0xf]
  %v3577 = vld [vmem:[%s3457 + $0x1dc] sm:$0xf]
  %v3578 = vld [vmem:[%s3457 + $0x1e0] sm:$0xf]
  %v3579 = vld [vmem:[%s3457 + $0x1e4] sm:$0xf]
  %v3580 = vld [vmem:[%s3457 + $0x1e8] sm:$0xf]
  %v3581 = vld [vmem:[%s3457 + $0x1ec] sm:$0xf]
  %v3582 = vld [vmem:[%s3457 + $0x1f0] sm:$0xf]
  %v3583 = vld [vmem:[%s3457 + $0x1f4] sm:$0xf]
  %v3584 = vld [vmem:[%s3457 + $0x1f8] sm:$0xf]
  %v3585 = vld [vmem:[%s3457 + $0x1fc] sm:$0xf]
  %v3586 = vld [vmem:[%s3457 + $0x200] sm:$0xf]
  %v3587 = vld [vmem:[%s3457 + $0x204] sm:$0xf]
  %v3588 = vld [vmem:[%s3457 + $0x208] sm:$0xf]
  %v3589 = vld [vmem:[%s3457 + $0x20c] sm:$0xf]
  %v3590 = vld [vmem:[%s3457 + $0x210] sm:$0xf]
  %v3591 = vld [vmem:[%s3457 + $0x214] sm:$0xf]
  %v3592 = vld [vmem:[%s3457 + $0x218] sm:$0xf]
  %v3593 = vld [vmem:[%s3457 + $0x21c] sm:$0xf]
  %v3594 = vld [vmem:[%s3457 + $0x220] sm:$0xf]
  %v3595 = vld [vmem:[%s3457 + $0x224] sm:$0xf]
  %v3596 = vld [vmem:[%s3457 + $0x228] sm:$0xf]
  %v3597 = vld [vmem:[%s3457 + $0x22c] sm:$0xf]
  %v3598 = vld [vmem:[%s3457 + $0x230] sm:$0xf]
  %v3599 = vld [vmem:[%s3457 + $0x234] sm:$0xf]
  %v3600 = vld [vmem:[%s3457 + $0x238] sm:$0xf]
  %v3601 = vld [vmem:[%s3457 + $0x23c] sm:$0xf]
  %s3602 = scalar_lea.vmem %s1, 8
  %v3603 = vld [vmem:[%s3602] sm:$0xf]
  %v3604 = vld [vmem:[%s3602 + $0x4] sm:$0x1]
  %v3749 = vunpack.c.l.b16 %v3458
  %v3750 = vunpack.c.l.b16 %v3459
  %v3751 = vunpack.c.l.b16 %v3460
  %v3752 = vunpack.c.l.b16 %v3461
  %v3753 = vunpack.c.l.b16 %v3462
  %v3754 = vunpack.c.l.b16 %v3463
  %v3755 = vunpack.c.l.b16 %v3464
  %v3756 = vunpack.c.l.b16 %v3465
  %v3757 = vunpack.c.l.b16 %v3466
  %v3758 = vunpack.c.l.b16 %v3467
  %v3759 = vunpack.c.l.b16 %v3468
  %v3760 = vunpack.c.l.b16 %v3469
  %v3761 = vunpack.c.l.b16 %v3470
  %v3762 = vunpack.c.l.b16 %v3471
  %v3763 = vunpack.c.l.b16 %v3472
  %v3764 = vunpack.c.l.b16 %v3473
  %v3765 = vunpack.c.l.b16 %v3474
  %v3766 = vunpack.c.l.b16 %v3475
  %v3767 = vunpack.c.l.b16 %v3476
  %v3768 = vunpack.c.l.b16 %v3477
  %v3769 = vunpack.c.l.b16 %v3478
  %v3770 = vunpack.c.l.b16 %v3479
  %v3771 = vunpack.c.l.b16 %v3480
  %v3772 = vunpack.c.l.b16 %v3481
  %v3773 = vunpack.c.l.b16 %v3482
  %v3774 = vunpack.c.l.b16 %v3483
  %v3775 = vunpack.c.l.b16 %v3484
  %v3776 = vunpack.c.l.b16 %v3485
  %v3777 = vunpack.c.l.b16 %v3486
  %v3778 = vunpack.c.l.b16 %v3487
  %v3779 = vunpack.c.l.b16 %v3488
  %v3780 = vunpack.c.l.b16 %v3489
  %v3781 = vunpack.c.l.b16 %v3490
  %v3782 = vunpack.c.l.b16 %v3491
  %v3783 = vunpack.c.l.b16 %v3492
  %v3784 = vunpack.c.l.b16 %v3493
  %v3785 = vunpack.c.l.b16 %v3494
  %v3786 = vunpack.c.l.b16 %v3495
  %v3787 = vunpack.c.l.b16 %v3496
  %v3788 = vunpack.c.l.b16 %v3497
  %v3789 = vunpack.c.l.b16 %v3498
  %v3790 = vunpack.c.l.b16 %v3499
  %v3791 = vunpack.c.l.b16 %v3500
  %v3792 = vunpack.c.l.b16 %v3501
  %v3793 = vunpack.c.l.b16 %v3502
  %v3794 = vunpack.c.l.b16 %v3503
  %v3795 = vunpack.c.l.b16 %v3504
  %v3796 = vunpack.c.l.b16 %v3505
  %v3797 = vunpack.c.l.b16 %v3506
  %v3798 = vunpack.c.l.b16 %v3507
  %v3799 = vunpack.c.l.b16 %v3508
  %v3800 = vunpack.c.l.b16 %v3509
  %v3801 = vunpack.c.l.b16 %v3510
  %v3802 = vunpack.c.l.b16 %v3511
  %v3803 = vunpack.c.l.b16 %v3512
  %v3804 = vunpack.c.l.b16 %v3513
  %v3805 = vunpack.c.l.b16 %v3514
  %v3806 = vunpack.c.l.b16 %v3515
  %v3807 = vunpack.c.l.b16 %v3516
  %v3808 = vunpack.c.l.b16 %v3517
  %v3809 = vunpack.c.l.b16 %v3518
  %v3810 = vunpack.c.l.b16 %v3519
  %v3811 = vunpack.c.l.b16 %v3520
  %v3812 = vunpack.c.l.b16 %v3521
  %v3813 = vunpack.c.l.b16 %v3522
  %v3814 = vunpack.c.l.b16 %v3523
  %v3815 = vunpack.c.l.b16 %v3524
  %v3816 = vunpack.c.l.b16 %v3525
  %v3817 = vunpack.c.l.b16 %v3526
  %v3818 = vunpack.c.l.b16 %v3527
  %v3819 = vunpack.c.l.b16 %v3528
  %v3820 = vunpack.c.l.b16 %v3529
  %v3821 = vunpack.c.l.b16 %v3530
  %v3822 = vunpack.c.l.b16 %v3531
  %v3823 = vunpack.c.l.b16 %v3532
  %v3824 = vunpack.c.l.b16 %v3533
  %v3825 = vunpack.c.l.b16 %v3534
  %v3826 = vunpack.c.l.b16 %v3535
  %v3827 = vunpack.c.l.b16 %v3536
  %v3828 = vunpack.c.l.b16 %v3537
  %v3829 = vunpack.c.l.b16 %v3538
  %v3830 = vunpack.c.l.b16 %v3539
  %v3831 = vunpack.c.l.b16 %v3540
  %v3832 = vunpack.c.l.b16 %v3541
  %v3833 = vunpack.c.l.b16 %v3542
  %v3834 = vunpack.c.l.b16 %v3543
  %v3835 = vunpack.c.l.b16 %v3544
  %v3836 = vunpack.c.l.b16 %v3545
  %v3837 = vunpack.c.l.b16 %v3546
  %v3838 = vunpack.c.l.b16 %v3547
  %v3839 = vunpack.c.l.b16 %v3548
  %v3840 = vunpack.c.l.b16 %v3549
  %v3841 = vunpack.c.l.b16 %v3550
  %v3842 = vunpack.c.l.b16 %v3551
  %v3843 = vunpack.c.l.b16 %v3552
  %v3844 = vunpack.c.l.b16 %v3553
  %v3845 = vunpack.c.l.b16 %v3554
  %v3846 = vunpack.c.l.b16 %v3555
  %v3847 = vunpack.c.l.b16 %v3556
  %v3848 = vunpack.c.l.b16 %v3557
  %v3849 = vunpack.c.l.b16 %v3558
  %v3850 = vunpack.c.l.b16 %v3559
  %v3851 = vunpack.c.l.b16 %v3560
  %v3852 = vunpack.c.l.b16 %v3561
  %v3853 = vunpack.c.l.b16 %v3562
  %v3854 = vunpack.c.l.b16 %v3563
  %v3855 = vunpack.c.l.b16 %v3564
  %v3856 = vunpack.c.l.b16 %v3565
  %v3857 = vunpack.c.l.b16 %v3566
  %v3858 = vunpack.c.l.b16 %v3567
  %v3859 = vunpack.c.l.b16 %v3568
  %v3860 = vunpack.c.l.b16 %v3569
  %v3861 = vunpack.c.l.b16 %v3570
  %v3862 = vunpack.c.l.b16 %v3571
  %v3863 = vunpack.c.l.b16 %v3572
  %v3864 = vunpack.c.l.b16 %v3573
  %v3865 = vunpack.c.l.b16 %v3574
  %v3866 = vunpack.c.l.b16 %v3575
  %v3867 = vunpack.c.l.b16 %v3576
  %v3868 = vunpack.c.l.b16 %v3577
  %v3869 = vunpack.c.l.b16 %v3578
  %v3870 = vunpack.c.l.b16 %v3579
  %v3871 = vunpack.c.l.b16 %v3580
  %v3872 = vunpack.c.l.b16 %v3581
  %v3873 = vunpack.c.l.b16 %v3582
  %v3874 = vunpack.c.l.b16 %v3583
  %v3875 = vunpack.c.l.b16 %v3584
  %v3876 = vunpack.c.l.b16 %v3585
  %v3877 = vunpack.c.l.b16 %v3586
  %v3878 = vunpack.c.l.b16 %v3587
  %v3879 = vunpack.c.l.b16 %v3588
  %v3880 = vunpack.c.l.b16 %v3589
  %v3881 = vunpack.c.l.b16 %v3590
  %v3882 = vunpack.c.l.b16 %v3591
  %v3883 = vunpack.c.l.b16 %v3592
  %v3884 = vunpack.c.l.b16 %v3593
  %v3885 = vunpack.c.l.b16 %v3594
  %v3886 = vunpack.c.l.b16 %v3595
  %v3887 = vunpack.c.l.b16 %v3596
  %v3888 = vunpack.c.l.b16 %v3597
  %v3889 = vunpack.c.l.b16 %v3598
  %v3890 = vunpack.c.l.b16 %v3599
  %v3891 = vunpack.c.l.b16 %v3600
  %v3892 = vunpack.c.l.b16 %v3601
  %v3893 = vpack.c.b16 %v3750, %v3749
  %v3894 = vpack.c.b16 %v3752, %v3751
  %v3895 = vpack.c.b16 %v3754, %v3753
  %v3896 = vpack.c.b16 %v3756, %v3755
  %v3897 = vpack.c.b16 %v3758, %v3757
  %v3898 = vpack.c.b16 %v3760, %v3759
  %v3899 = vpack.c.b16 %v3762, %v3761
  %v3900 = vpack.c.b16 %v3764, %v3763
  %v3901 = vpack.c.b16 %v3766, %v3765
  %v3902 = vpack.c.b16 %v3768, %v3767
  %v3903 = vpack.c.b16 %v3770, %v3769
  %v3904 = vpack.c.b16 %v3772, %v3771
  %v3905 = vpack.c.b16 %v3774, %v3773
  %v3906 = vpack.c.b16 %v3776, %v3775
  %v3907 = vpack.c.b16 %v3778, %v3777
  %v3908 = vpack.c.b16 %v3780, %v3779
  %v3909 = vpack.c.b16 %v3782, %v3781
  %v3910 = vpack.c.b16 %v3784, %v3783
  %v3911 = vpack.c.b16 %v3786, %v3785
  %v3912 = vpack.c.b16 %v3788, %v3787
  %v3913 = vpack.c.b16 %v3790, %v3789
  %v3914 = vpack.c.b16 %v3792, %v3791
  %v3915 = vpack.c.b16 %v3794, %v3793
  %v3916 = vpack.c.b16 %v3796, %v3795
  %v3917 = vpack.c.b16 %v3798, %v3797
  %v3918 = vpack.c.b16 %v3800, %v3799
  %v3919 = vpack.c.b16 %v3802, %v3801
  %v3920 = vpack.c.b16 %v3804, %v3803
  %v3921 = vpack.c.b16 %v3806, %v3805
  %v3922 = vpack.c.b16 %v3808, %v3807
  %v3923 = vpack.c.b16 %v3810, %v3809
  %v3924 = vpack.c.b16 %v3812, %v3811
  %v3925 = vpack.c.b16 %v3814, %v3813
  %v3926 = vpack.c.b16 %v3816, %v3815
  %v3927 = vpack.c.b16 %v3818, %v3817
  %v3928 = vpack.c.b16 %v3820, %v3819
  %v3929 = vpack.c.b16 %v3822, %v3821
  %v3930 = vpack.c.b16 %v3824, %v3823
  %v3931 = vpack.c.b16 %v3826, %v3825
  %v3932 = vpack.c.b16 %v3828, %v3827
  %v3933 = vpack.c.b16 %v3830, %v3829
  %v3934 = vpack.c.b16 %v3832, %v3831
  %v3935 = vpack.c.b16 %v3834, %v3833
  %v3936 = vpack.c.b16 %v3836, %v3835
  %v3937 = vpack.c.b16 %v3838, %v3837
  %v3938 = vpack.c.b16 %v3840, %v3839
  %v3939 = vpack.c.b16 %v3842, %v3841
  %v3940 = vpack.c.b16 %v3844, %v3843
  %v3941 = vpack.c.b16 %v3846, %v3845
  %v3942 = vpack.c.b16 %v3848, %v3847
  %v3943 = vpack.c.b16 %v3850, %v3849
  %v3944 = vpack.c.b16 %v3852, %v3851
  %v3945 = vpack.c.b16 %v3854, %v3853
  %v3946 = vpack.c.b16 %v3856, %v3855
  %v3947 = vpack.c.b16 %v3858, %v3857
  %v3948 = vpack.c.b16 %v3860, %v3859
  %v3949 = vpack.c.b16 %v3862, %v3861
  %v3950 = vpack.c.b16 %v3864, %v3863
  %v3951 = vpack.c.b16 %v3866, %v3865
  %v3952 = vpack.c.b16 %v3868, %v3867
  %v3953 = vpack.c.b16 %v3870, %v3869
  %v3954 = vpack.c.b16 %v3872, %v3871
  %v3955 = vpack.c.b16 %v3874, %v3873
  %v3956 = vpack.c.b16 %v3876, %v3875
  %v3957 = vpack.c.b16 %v3878, %v3877
  %v3958 = vpack.c.b16 %v3880, %v3879
  %v3959 = vpack.c.b16 %v3882, %v3881
  %v3960 = vpack.c.b16 %v3884, %v3883
  %v3961 = vpack.c.b16 %v3886, %v3885
  %v3962 = vpack.c.b16 %v3888, %v3887
  %v3963 = vpack.c.b16 %v3890, %v3889
  %v3964 = vpack.c.b16 %v3892, %v3891
  %v3967 = vunpack.c.l.b16 %v3603
  %v3968 = vunpack.c.l.b16 %v3604
  %v3969 = vpack.c.b16 %v3968, %v3967
  %v3971 = vsel %vm542, %v3893, 0
  %v3974 = vsel %vm542, %v3894, 0
  %v3977 = vsel %vm542, %v3895, 0
  %v3980 = vsel %vm542, %v3896, 0
  %v3983 = vsel %vm542, %v3897, 0
  %v3986 = vsel %vm542, %v3898, 0
  %v3989 = vsel %vm542, %v3899, 0
  %v3992 = vsel %vm542, %v3900, 0
  %v3995 = vsel %vm542, %v3901, 0
  %v3998 = vsel %vm542, %v3902, 0
  %v4001 = vsel %vm542, %v3903, 0
  %v4004 = vsel %vm542, %v3904, 0
  %v4007 = vsel %vm542, %v3905, 0
  %v4010 = vsel %vm542, %v3906, 0
  %v4013 = vsel %vm542, %v3907, 0
  %v4016 = vsel %vm542, %v3908, 0
  %v4019 = vsel %vm542, %v3909, 0
  %v4022 = vsel %vm542, %v3910, 0
  %v4025 = vsel %vm542, %v3911, 0
  %v4028 = vsel %vm542, %v3912, 0
  %v4031 = vsel %vm542, %v3913, 0
  %v4034 = vsel %vm542, %v3914, 0
  %v4037 = vsel %vm542, %v3915, 0
  %v4040 = vsel %vm542, %v3916, 0
  %v4043 = vsel %vm542, %v3917, 0
  %v4046 = vsel %vm542, %v3918, 0
  %v4049 = vsel %vm542, %v3919, 0
  %v4052 = vsel %vm542, %v3920, 0
  %v4055 = vsel %vm542, %v3921, 0
  %v4058 = vsel %vm542, %v3922, 0
  %v4061 = vsel %vm542, %v3923, 0
  %v4064 = vsel %vm542, %v3924, 0
  %v4067 = vsel %vm542, %v3925, 0
  %v4070 = vsel %vm542, %v3926, 0
  %v4073 = vsel %vm542, %v3927, 0
  %v4076 = vsel %vm542, %v3928, 0
  %v4079 = vsel %vm542, %v3929, 0
  %v4082 = vsel %vm542, %v3930, 0
  %v4085 = vsel %vm542, %v3931, 0
  %v4088 = vsel %vm542, %v3932, 0
  %v4091 = vsel %vm542, %v3933, 0
  %v4094 = vsel %vm542, %v3934, 0
  %v4097 = vsel %vm542, %v3935, 0
  %v4100 = vsel %vm542, %v3936, 0
  %v4103 = vsel %vm542, %v3937, 0
  %v4106 = vsel %vm542, %v3938, 0
  %v4109 = vsel %vm542, %v3939, 0
  %v4112 = vsel %vm542, %v3940, 0
  %v4115 = vsel %vm542, %v3941, 0
  %v4118 = vsel %vm542, %v3942, 0
  %v4121 = vsel %vm542, %v3943, 0
  %v4124 = vsel %vm542, %v3944, 0
  %v4127 = vsel %vm542, %v3945, 0
  %v4130 = vsel %vm542, %v3946, 0
  %v4133 = vsel %vm542, %v3947, 0
  %v4136 = vsel %vm542, %v3948, 0
  %v4139 = vsel %vm542, %v3949, 0
  %v4142 = vsel %vm542, %v3950, 0
  %v4145 = vsel %vm542, %v3951, 0
  %v4148 = vsel %vm542, %v3952, 0
  %v4151 = vsel %vm542, %v3953, 0
  %v4154 = vsel %vm542, %v3954, 0
  %v4157 = vsel %vm542, %v3955, 0
  %v4160 = vsel %vm542, %v3956, 0
  %v4163 = vsel %vm542, %v3957, 0
  %v4166 = vsel %vm542, %v3958, 0
  %v4169 = vsel %vm542, %v3959, 0
  %v4172 = vsel %vm542, %v3960, 0
  %v4175 = vsel %vm542, %v3961, 0
  %v4178 = vsel %vm542, %v3962, 0
  %v4181 = vsel %vm542, %v3963, 0
  %v4184 = vsel %vm542, %v3964, 0
  %v4187 = vand.u32 %v3969, %v762
  %4189 = vmatprep.subr.bf16.mxu0 0
  %4190 = vmatpush1.bf16.msra.mxu0 %v4187
  %4191 = vmatprep.subr.bf16.mxu0 0
  %4192 = vmatpush1.bf16.msra.mxu0 0
  %4193 = vmatprep.subr.bf16.mxu0 0
  %4194 = vmatpush1.bf16.msra.mxu0 0
  %4195 = vmatprep.subr.bf16.mxu0 0
  %4196 = vmatpush1.bf16.msra.mxu0 0
  %4197 = vmatprep.subr.bf16.mxu0 0
  %4198 = vmatpush1.bf16.msra.mxu0 0
  %4199 = vmatprep.subr.bf16.mxu0 0
  %4200 = vmatpush1.bf16.msra.mxu0 0
  %4201 = vmatprep.subr.bf16.mxu0 0
  %4202 = vmatpush1.bf16.msra.mxu0 0
  %4203 = vmatprep.subr.bf16.mxu0 0
  %4204 = vmatpush1.bf16.msra.mxu0 0
  %4205 = vmatprep.subr.bf16.mxu0 0
  %4206 = vmatpush1.bf16.msra.mxu0 0
  %4207 = vmatprep.subr.bf16.mxu0 0
  %4208 = vmatpush1.bf16.msra.mxu0 0
  %4209 = vmatprep.subr.bf16.mxu0 0
  %4210 = vmatpush1.bf16.msra.mxu0 0
  %4211 = vmatprep.subr.bf16.mxu0 0
  %4212 = vmatpush1.bf16.msra.mxu0 0
  %4213 = vmatprep.subr.bf16.mxu0 0
  %4214 = vmatpush1.bf16.msra.mxu0 0
  %4215 = vmatprep.subr.bf16.mxu0 0
  %4216 = vmatpush1.bf16.msra.mxu0 0
  %4217 = vmatprep.subr.bf16.mxu0 0
  %4218 = vmatpush1.bf16.msra.mxu0 0
  %4219 = vmatprep.subr.bf16.mxu0 0
  %4220 = vmatpush1.bf16.msra.mxu0 0
  %4221 = vmatprep.mubr.bf16.mxu0 0
  %4222 = vmatmul.mubr.bf16.gmra.mrb[0].mxu0 %v3971
  %v4223 = vpop.f32.mrb[0].mxu0
  %v4224 = vadd.f32 0.0, %v4223
  %v4225 = vpop.f32.mrb[0].mxu0
  %v4226 = vpop.f32.mrb[0].mxu0
  %v4227 = vadd.f32 0.0, %v4226
  %v4228 = vpop.f32.mrb[0].mxu0
  %4229 = vmatprep.mubr.bf16.mxu0 0
  %4230 = vmatmul.mubr.bf16.gmra.mrb[0].mxu0 %v3974
  %v4231 = vpop.f32.mrb[0].mxu0
  %v4232 = vadd.f32 0.0, %v4231
  %v4233 = vpop.f32.mrb[0].mxu0
  %v4234 = vpop.f32.mrb[0].mxu0
  %v4235 = vadd.f32 0.0, %v4234
  %v4236 = vpop.f32.mrb[0].mxu0
  %4237 = vmatprep.mubr.bf16.mxu0 0
  %4238 = vmatmul.mubr.bf16.gmra.mrb[0].mxu0 %v3977
  %v4239 = vpop.f32.mrb[0].mxu0
  %v4240 = vadd.f32 0.0, %v4239
  %v4241 = vpop.f32.mrb[0].mxu0
  %v4242 = vpop.f32.mrb[0].mxu0
  %v4243 = vadd.f32 0.0, %v4242
  %v4244 = vpop.f32.mrb[0].mxu0
  %4245 = vmatprep.mubr.bf16.mxu0 0
  %4246 = vmatmul.mubr.bf16.gmra.mrb[0].mxu0 %v3980
  %v4247 = vpop.f32.mrb[0].mxu0
  %v4248 = vadd.f32 0.0, %v4247
  %v4249 = vpop.f32.mrb[0].mxu0
  %v4250 = vpop.f32.mrb[0].mxu0
  %v4251 = vadd.f32 0.0, %v4250
  %v4252 = vpop.f32.mrb[0].mxu0
  %4253 = vmatprep.mubr.bf16.mxu0 0
  %4254 = vmatmul.mubr.bf16.gmra.mrb[0].mxu0 %v3983
  %v4255 = vpop.f32.mrb[0].mxu0
  %v4256 = vadd.f32 0.0, %v4255
  %v4257 = vpop.f32.mrb[0].mxu0
  %v4258 = vpop.f32.mrb[0].mxu0
  %v4259 = vadd.f32 0.0, %v4258
  %v4260 = vpop.f32.mrb[0].mxu0
  %4261 = vmatprep.mubr.bf16.mxu0 0
  %4262 = vmatmul.mubr.bf16.gmra.mrb[0].mxu0 %v3986
  %v4263 = vpop.f32.mrb[0].mxu0
  %v4264 = vadd.f32 0.0, %v4263
  %v4265 = vpop.f32.mrb[0].mxu0
  %v4266 = vpop.f32.mrb[0].mxu0
  %v4267 = vadd.f32 0.0, %v4266
  %v4268 = vpop.f32.mrb[0].mxu0
  %4269 = vmatprep.mubr.bf16.mxu0 0
  %4270 = vmatmul.mubr.bf16.gmra.mrb[0].mxu0 %v3989
  %v4271 = vpop.f32.mrb[0].mxu0
  %v4272 = vadd.f32 0.0, %v4271
  %v4273 = vpop.f32.mrb[0].mxu0
  %v4274 = vpop.f32.mrb[0].mxu0
  %v4275 = vadd.f32 0.0, %v4274
  %v4276 = vpop.f32.mrb[0].mxu0
  %4277 = vmatprep.mubr.bf16.mxu0 0
  %4278 = vmatmul.mubr.bf16.gmra.mrb[0].mxu0 %v3992
  %v4279 = vpop.f32.mrb[0].mxu0
  %v4280 = vadd.f32 0.0, %v4279
  %v4281 = vpop.f32.mrb[0].mxu0
  %v4282 = vpop.f32.mrb[0].mxu0
  %v4283 = vadd.f32 0.0, %v4282
  %v4284 = vpop.f32.mrb[0].mxu0
  %4285 = vmatprep.mubr.bf16.mxu0 0
  %4286 = vmatmul.mubr.bf16.gmra.mrb[0].mxu0 %v3995
  %v4287 = vpop.f32.mrb[0].mxu0
  %v4288 = vadd.f32 0.0, %v4287
  %v4289 = vpop.f32.mrb[0].mxu0
  %v4290 = vpop.f32.mrb[0].mxu0
  %v4291 = vadd.f32 0.0, %v4290
  %v4292 = vpop.f32.mrb[0].mxu0
  %4293 = vmatprep.mubr.bf16.mxu0 0
  %4294 = vmatmul.mubr.bf16.gmra.mrb[0].mxu0 %v3998
  %v4295 = vpop.f32.mrb[0].mxu0
  %v4296 = vadd.f32 0.0, %v4295
  %v4297 = vpop.f32.mrb[0].mxu0
  %v4298 = vpop.f32.mrb[0].mxu0
  %v4299 = vadd.f32 0.0, %v4298
  %v4300 = vpop.f32.mrb[0].mxu0
  %4301 = vmatprep.mubr.bf16.mxu0 0
  %4302 = vmatmul.mubr.bf16.gmra.mrb[0].mxu0 %v4001
  %v4303 = vpop.f32.mrb[0].mxu0
  %v4304 = vadd.f32 0.0, %v4303
  %v4305 = vpop.f32.mrb[0].mxu0
  %v4306 = vpop.f32.mrb[0].mxu0
  %v4307 = vadd.f32 0.0, %v4306
  %v4308 = vpop.f32.mrb[0].mxu0
  %4309 = vmatprep.mubr.bf16.mxu0 0
  %4310 = vmatmul.mubr.bf16.gmra.mrb[0].mxu0 %v4004
  %v4311 = vpop.f32.mrb[0].mxu0
  %v4312 = vadd.f32 0.0, %v4311
  %v4313 = vpop.f32.mrb[0].mxu0
  %v4314 = vpop.f32.mrb[0].mxu0
  %v4315 = vadd.f32 0.0, %v4314
  %v4316 = vpop.f32.mrb[0].mxu0
  %4317 = vmatprep.mubr.bf16.mxu0 0
  %4318 = vmatmul.mubr.bf16.gmra.mrb[0].mxu0 %v4007
  %v4319 = vpop.f32.mrb[0].mxu0
  %v4320 = vadd.f32 0.0, %v4319
  %v4321 = vpop.f32.mrb[0].mxu0
  %v4322 = vpop.f32.mrb[0].mxu0
  %v4323 = vadd.f32 0.0, %v4322
  %v4324 = vpop.f32.mrb[0].mxu0
  %4325 = vmatprep.mubr.bf16.mxu0 0
  %4326 = vmatmul.mubr.bf16.gmra.mrb[0].mxu0 %v4010
  %v4327 = vpop.f32.mrb[0].mxu0
  %v4328 = vadd.f32 0.0, %v4327
  %v4329 = vpop.f32.mrb[0].mxu0
  %v4330 = vpop.f32.mrb[0].mxu0
  %v4331 = vadd.f32 0.0, %v4330
  %v4332 = vpop.f32.mrb[0].mxu0
  %4333 = vmatprep.mubr.bf16.mxu0 0
  %4334 = vmatmul.mubr.bf16.gmra.mrb[0].mxu0 %v4013
  %v4335 = vpop.f32.mrb[0].mxu0
  %v4336 = vadd.f32 0.0, %v4335
  %v4337 = vpop.f32.mrb[0].mxu0
  %v4338 = vpop.f32.mrb[0].mxu0
  %v4339 = vadd.f32 0.0, %v4338
  %v4340 = vpop.f32.mrb[0].mxu0
  %4341 = vmatprep.mubr.bf16.mxu0 0
  %4342 = vmatmul.mubr.bf16.gmra.mrb[0].mxu0 %v4016
  %v4343 = vpop.f32.mrb[0].mxu0
  %v4344 = vadd.f32 0.0, %v4343
  %v4345 = vpop.f32.mrb[0].mxu0
  %v4346 = vpop.f32.mrb[0].mxu0
  %v4347 = vadd.f32 0.0, %v4346
  %v4348 = vpop.f32.mrb[0].mxu0
  %4349 = vmatprep.mubr.bf16.mxu0 0
  %4350 = vmatmul.mubr.bf16.gmra.mrb[0].mxu0 %v4019
  %v4351 = vpop.f32.mrb[0].mxu0
  %v4352 = vadd.f32 0.0, %v4351
  %v4353 = vpop.f32.mrb[0].mxu0
  %v4354 = vpop.f32.mrb[0].mxu0
  %v4355 = vadd.f32 0.0, %v4354
  %v4356 = vpop.f32.mrb[0].mxu0
  %4357 = vmatprep.mubr.bf16.mxu0 0
  %4358 = vmatmul.mubr.bf16.gmra.mrb[0].mxu0 %v4022
  %v4359 = vpop.f32.mrb[0].mxu0
  %v4360 = vadd.f32 0.0, %v4359
  %v4361 = vpop.f32.mrb[0].mxu0
  %v4362 = vpop.f32.mrb[0].mxu0
  %v4363 = vadd.f32 0.0, %v4362
  %v4364 = vpop.f32.mrb[0].mxu0
  %4365 = vmatprep.mubr.bf16.mxu0 0
  %4366 = vmatmul.mubr.bf16.gmra.mrb[0].mxu0 %v4025
  %v4367 = vpop.f32.mrb[0].mxu0
  %v4368 = vadd.f32 0.0, %v4367
  %v4369 = vpop.f32.mrb[0].mxu0
  %v4370 = vpop.f32.mrb[0].mxu0
  %v4371 = vadd.f32 0.0, %v4370
  %v4372 = vpop.f32.mrb[0].mxu0
  %4373 = vmatprep.mubr.bf16.mxu0 0
  %4374 = vmatmul.mubr.bf16.gmra.mrb[0].mxu0 %v4028
  %v4375 = vpop.f32.mrb[0].mxu0
  %v4376 = vadd.f32 0.0, %v4375
  %v4377 = vpop.f32.mrb[0].mxu0
  %v4378 = vpop.f32.mrb[0].mxu0
  %v4379 = vadd.f32 0.0, %v4378
  %v4380 = vpop.f32.mrb[0].mxu0
  %4381 = vmatprep.mubr.bf16.mxu0 0
  %4382 = vmatmul.mubr.bf16.gmra.mrb[0].mxu0 %v4031
  %v4383 = vpop.f32.mrb[0].mxu0
  %v4384 = vadd.f32 0.0, %v4383
  %v4385 = vpop.f32.mrb[0].mxu0
  %v4386 = vpop.f32.mrb[0].mxu0
  %v4387 = vadd.f32 0.0, %v4386
  %v4388 = vpop.f32.mrb[0].mxu0
  %4389 = vmatprep.mubr.bf16.mxu0 0
  %4390 = vmatmul.mubr.bf16.gmra.mrb[0].mxu0 %v4034
  %v4391 = vpop.f32.mrb[0].mxu0
  %v4392 = vadd.f32 0.0, %v4391
  %v4393 = vpop.f32.mrb[0].mxu0
  %v4394 = vpop.f32.mrb[0].mxu0
  %v4395 = vadd.f32 0.0, %v4394
  %v4396 = vpop.f32.mrb[0].mxu0
  %4397 = vmatprep.mubr.bf16.mxu0 0
  %4398 = vmatmul.mubr.bf16.gmra.mrb[0].mxu0 %v4037
  %v4399 = vpop.f32.mrb[0].mxu0
  %v4400 = vadd.f32 0.0, %v4399
  %v4401 = vpop.f32.mrb[0].mxu0
  %v4402 = vpop.f32.mrb[0].mxu0
  %v4403 = vadd.f32 0.0, %v4402
  %v4404 = vpop.f32.mrb[0].mxu0
  %4405 = vmatprep.mubr.bf16.mxu0 0
  %4406 = vmatmul.mubr.bf16.gmra.mrb[0].mxu0 %v4040
  %v4407 = vpop.f32.mrb[0].mxu0
  %v4408 = vadd.f32 0.0, %v4407
  %v4409 = vpop.f32.mrb[0].mxu0
  %v4410 = vpop.f32.mrb[0].mxu0
  %v4411 = vadd.f32 0.0, %v4410
  %v4412 = vpop.f32.mrb[0].mxu0
  %4413 = vmatprep.mubr.bf16.mxu0 0
  %4414 = vmatmul.mubr.bf16.gmra.mrb[0].mxu0 %v4043
  %v4415 = vpop.f32.mrb[0].mxu0
  %v4416 = vadd.f32 0.0, %v4415
  %v4417 = vpop.f32.mrb[0].mxu0
  %v4418 = vpop.f32.mrb[0].mxu0
  %v4419 = vadd.f32 0.0, %v4418
  %v4420 = vpop.f32.mrb[0].mxu0
  %4421 = vmatprep.mubr.bf16.mxu0 0
  %4422 = vmatmul.mubr.bf16.gmra.mrb[0].mxu0 %v4046
  %v4423 = vpop.f32.mrb[0].mxu0
  %v4424 = vadd.f32 0.0, %v4423
  %v4425 = vpop.f32.mrb[0].mxu0
  %v4426 = vpop.f32.mrb[0].mxu0
  %v4427 = vadd.f32 0.0, %v4426
  %v4428 = vpop.f32.mrb[0].mxu0
  %4429 = vmatprep.mubr.bf16.mxu0 0
  %4430 = vmatmul.mubr.bf16.gmra.mrb[0].mxu0 %v4049
  %v4431 = vpop.f32.mrb[0].mxu0
  %v4432 = vadd.f32 0.0, %v4431
  %v4433 = vpop.f32.mrb[0].mxu0
  %v4434 = vpop.f32.mrb[0].mxu0
  %v4435 = vadd.f32 0.0, %v4434
  %v4436 = vpop.f32.mrb[0].mxu0
  %4437 = vmatprep.mubr.bf16.mxu0 0
  %4438 = vmatmul.mubr.bf16.gmra.mrb[0].mxu0 %v4052
  %v4439 = vpop.f32.mrb[0].mxu0
  %v4440 = vadd.f32 0.0, %v4439
  %v4441 = vpop.f32.mrb[0].mxu0
  %v4442 = vpop.f32.mrb[0].mxu0
  %v4443 = vadd.f32 0.0, %v4442
  %v4444 = vpop.f32.mrb[0].mxu0
  %4445 = vmatprep.mubr.bf16.mxu0 0
  %4446 = vmatmul.mubr.bf16.gmra.mrb[0].mxu0 %v4055
  %v4447 = vpop.f32.mrb[0].mxu0
  %v4448 = vadd.f32 0.0, %v4447
  %v4449 = vpop.f32.mrb[0].mxu0
  %v4450 = vpop.f32.mrb[0].mxu0
  %v4451 = vadd.f32 0.0, %v4450
  %v4452 = vpop.f32.mrb[0].mxu0
  %4453 = vmatprep.mubr.bf16.mxu0 0
  %4454 = vmatmul.mubr.bf16.gmra.mrb[0].mxu0 %v4058
  %v4455 = vpop.f32.mrb[0].mxu0
  %v4456 = vadd.f32 0.0, %v4455
  %v4457 = vpop.f32.mrb[0].mxu0
  %v4458 = vpop.f32.mrb[0].mxu0
  %v4459 = vadd.f32 0.0, %v4458
  %v4460 = vpop.f32.mrb[0].mxu0
  %4461 = vmatprep.mubr.bf16.mxu0 0
  %4462 = vmatmul.mubr.bf16.gmra.mrb[0].mxu0 %v4061
  %v4463 = vpop.f32.mrb[0].mxu0
  %v4464 = vadd.f32 0.0, %v4463
  %v4465 = vpop.f32.mrb[0].mxu0
  %v4466 = vpop.f32.mrb[0].mxu0
  %v4467 = vadd.f32 0.0, %v4466
  %v4468 = vpop.f32.mrb[0].mxu0
  %4469 = vmatprep.mubr.bf16.mxu0 0
  %4470 = vmatmul.mubr.bf16.gmra.mrb[0].mxu0 %v4064
  %v4471 = vpop.f32.mrb[0].mxu0
  %v4472 = vadd.f32 0.0, %v4471
  %v4473 = vpop.f32.mrb[0].mxu0
  %v4474 = vpop.f32.mrb[0].mxu0
  %v4475 = vadd.f32 0.0, %v4474
  %v4476 = vpop.f32.mrb[0].mxu0
  %4477 = vmatprep.mubr.bf16.mxu0 0
  %4478 = vmatmul.mubr.bf16.gmra.mrb[0].mxu0 %v4067
  %v4479 = vpop.f32.mrb[0].mxu0
  %v4480 = vadd.f32 0.0, %v4479
  %v4481 = vpop.f32.mrb[0].mxu0
  %v4482 = vpop.f32.mrb[0].mxu0
  %v4483 = vadd.f32 0.0, %v4482
  %v4484 = vpop.f32.mrb[0].mxu0
  %4485 = vmatprep.mubr.bf16.mxu0 0
  %4486 = vmatmul.mubr.bf16.gmra.mrb[0].mxu0 %v4070
  %v4487 = vpop.f32.mrb[0].mxu0
  %v4488 = vadd.f32 0.0, %v4487
  %v4489 = vpop.f32.mrb[0].mxu0
  %v4490 = vpop.f32.mrb[0].mxu0
  %v4491 = vadd.f32 0.0, %v4490
  %v4492 = vpop.f32.mrb[0].mxu0
  %4493 = vmatprep.mubr.bf16.mxu0 0
  %4494 = vmatmul.mubr.bf16.gmra.mrb[0].mxu0 %v4073
  %v4495 = vpop.f32.mrb[0].mxu0
  %v4496 = vadd.f32 0.0, %v4495
  %v4497 = vpop.f32.mrb[0].mxu0
  %v4498 = vpop.f32.mrb[0].mxu0
  %v4499 = vadd.f32 0.0, %v4498
  %v4500 = vpop.f32.mrb[0].mxu0
  %4501 = vmatprep.mubr.bf16.mxu0 0
  %4502 = vmatmul.mubr.bf16.gmra.mrb[0].mxu0 %v4076
  %v4503 = vpop.f32.mrb[0].mxu0
  %v4504 = vadd.f32 0.0, %v4503
  %v4505 = vpop.f32.mrb[0].mxu0
  %v4506 = vpop.f32.mrb[0].mxu0
  %v4507 = vadd.f32 0.0, %v4506
  %v4508 = vpop.f32.mrb[0].mxu0
  %4509 = vmatprep.mubr.bf16.mxu0 0
  %4510 = vmatmul.mubr.bf16.gmra.mrb[0].mxu0 %v4079
  %v4511 = vpop.f32.mrb[0].mxu0
  %v4512 = vadd.f32 0.0, %v4511
  %v4513 = vpop.f32.mrb[0].mxu0
  %v4514 = vpop.f32.mrb[0].mxu0
  %v4515 = vadd.f32 0.0, %v4514
  %v4516 = vpop.f32.mrb[0].mxu0
  %4517 = vmatprep.mubr.bf16.mxu0 0
  %4518 = vmatmul.mubr.bf16.gmra.mrb[0].mxu0 %v4082
  %v4519 = vpop.f32.mrb[0].mxu0
  %v4520 = vadd.f32 0.0, %v4519
  %v4521 = vpop.f32.mrb[0].mxu0
  %v4522 = vpop.f32.mrb[0].mxu0
  %v4523 = vadd.f32 0.0, %v4522
  %v4524 = vpop.f32.mrb[0].mxu0
  %4525 = vmatprep.mubr.bf16.mxu0 0
  %4526 = vmatmul.mubr.bf16.gmra.mrb[0].mxu0 %v4085
  %v4527 = vpop.f32.mrb[0].mxu0
  %v4528 = vadd.f32 0.0, %v4527
  %v4529 = vpop.f32.mrb[0].mxu0
  %v4530 = vpop.f32.mrb[0].mxu0
  %v4531 = vadd.f32 0.0, %v4530
  %v4532 = vpop.f32.mrb[0].mxu0
  %4533 = vmatprep.mubr.bf16.mxu0 0
  %4534 = vmatmul.mubr.bf16.gmra.mrb[0].mxu0 %v4088
  %v4535 = vpop.f32.mrb[0].mxu0
  %v4536 = vadd.f32 0.0, %v4535
  %v4537 = vpop.f32.mrb[0].mxu0
  %v4538 = vpop.f32.mrb[0].mxu0
  %v4539 = vadd.f32 0.0, %v4538
  %v4540 = vpop.f32.mrb[0].mxu0
  %4541 = vmatprep.mubr.bf16.mxu0 0
  %4542 = vmatmul.mubr.bf16.gmra.mrb[0].mxu0 %v4091
  %v4543 = vpop.f32.mrb[0].mxu0
  %v4544 = vadd.f32 0.0, %v4543
  %v4545 = vpop.f32.mrb[0].mxu0
  %v4546 = vpop.f32.mrb[0].mxu0
  %v4547 = vadd.f32 0.0, %v4546
  %v4548 = vpop.f32.mrb[0].mxu0
  %4549 = vmatprep.mubr.bf16.mxu0 0
  %4550 = vmatmul.mubr.bf16.gmra.mrb[0].mxu0 %v4094
  %v4551 = vpop.f32.mrb[0].mxu0
  %v4552 = vadd.f32 0.0, %v4551
  %v4553 = vpop.f32.mrb[0].mxu0
  %v4554 = vpop.f32.mrb[0].mxu0
  %v4555 = vadd.f32 0.0, %v4554
  %v4556 = vpop.f32.mrb[0].mxu0
  %4557 = vmatprep.mubr.bf16.mxu0 0
  %4558 = vmatmul.mubr.bf16.gmra.mrb[0].mxu0 %v4097
  %v4559 = vpop.f32.mrb[0].mxu0
  %v4560 = vadd.f32 0.0, %v4559
  %v4561 = vpop.f32.mrb[0].mxu0
  %v4562 = vpop.f32.mrb[0].mxu0
  %v4563 = vadd.f32 0.0, %v4562
  %v4564 = vpop.f32.mrb[0].mxu0
  %4565 = vmatprep.mubr.bf16.mxu0 0
  %4566 = vmatmul.mubr.bf16.gmra.mrb[0].mxu0 %v4100
  %v4567 = vpop.f32.mrb[0].mxu0
  %v4568 = vadd.f32 0.0, %v4567
  %v4569 = vpop.f32.mrb[0].mxu0
  %v4570 = vpop.f32.mrb[0].mxu0
  %v4571 = vadd.f32 0.0, %v4570
  %v4572 = vpop.f32.mrb[0].mxu0
  %4573 = vmatprep.mubr.bf16.mxu0 0
  %4574 = vmatmul.mubr.bf16.gmra.mrb[0].mxu0 %v4103
  %v4575 = vpop.f32.mrb[0].mxu0
  %v4576 = vadd.f32 0.0, %v4575
  %v4577 = vpop.f32.mrb[0].mxu0
  %v4578 = vpop.f32.mrb[0].mxu0
  %v4579 = vadd.f32 0.0, %v4578
  %v4580 = vpop.f32.mrb[0].mxu0
  %4581 = vmatprep.mubr.bf16.mxu0 0
  %4582 = vmatmul.mubr.bf16.gmra.mrb[0].mxu0 %v4106
  %v4583 = vpop.f32.mrb[0].mxu0
  %v4584 = vadd.f32 0.0, %v4583
  %v4585 = vpop.f32.mrb[0].mxu0
  %v4586 = vpop.f32.mrb[0].mxu0
  %v4587 = vadd.f32 0.0, %v4586
  %v4588 = vpop.f32.mrb[0].mxu0
  %4589 = vmatprep.mubr.bf16.mxu0 0
  %4590 = vmatmul.mubr.bf16.gmra.mrb[0].mxu0 %v4109
  %v4591 = vpop.f32.mrb[0].mxu0
  %v4592 = vadd.f32 0.0, %v4591
  %v4593 = vpop.f32.mrb[0].mxu0
  %v4594 = vpop.f32.mrb[0].mxu0
  %v4595 = vadd.f32 0.0, %v4594
  %v4596 = vpop.f32.mrb[0].mxu0
  %4597 = vmatprep.mubr.bf16.mxu0 0
  %4598 = vmatmul.mubr.bf16.gmra.mrb[0].mxu0 %v4112
  %v4599 = vpop.f32.mrb[0].mxu0
  %v4600 = vadd.f32 0.0, %v4599
  %v4601 = vpop.f32.mrb[0].mxu0
  %v4602 = vpop.f32.mrb[0].mxu0
  %v4603 = vadd.f32 0.0, %v4602
  %v4604 = vpop.f32.mrb[0].mxu0
  %4605 = vmatprep.mubr.bf16.mxu0 0
  %4606 = vmatmul.mubr.bf16.gmra.mrb[0].mxu0 %v4115
  %v4607 = vpop.f32.mrb[0].mxu0
  %v4608 = vadd.f32 0.0, %v4607
  %v4609 = vpop.f32.mrb[0].mxu0
  %v4610 = vpop.f32.mrb[0].mxu0
  %v4611 = vadd.f32 0.0, %v4610
  %v4612 = vpop.f32.mrb[0].mxu0
  %4613 = vmatprep.mubr.bf16.mxu0 0
  %4614 = vmatmul.mubr.bf16.gmra.mrb[0].mxu0 %v4118
  %v4615 = vpop.f32.mrb[0].mxu0
  %v4616 = vadd.f32 0.0, %v4615
  %v4617 = vpop.f32.mrb[0].mxu0
  %v4618 = vpop.f32.mrb[0].mxu0
  %v4619 = vadd.f32 0.0, %v4618
  %v4620 = vpop.f32.mrb[0].mxu0
  %4621 = vmatprep.mubr.bf16.mxu0 0
  %4622 = vmatmul.mubr.bf16.gmra.mrb[0].mxu0 %v4121
  %v4623 = vpop.f32.mrb[0].mxu0
  %v4624 = vadd.f32 0.0, %v4623
  %v4625 = vpop.f32.mrb[0].mxu0
  %v4626 = vpop.f32.mrb[0].mxu0
  %v4627 = vadd.f32 0.0, %v4626
  %v4628 = vpop.f32.mrb[0].mxu0
  %4629 = vmatprep.mubr.bf16.mxu0 0
  %4630 = vmatmul.mubr.bf16.gmra.mrb[0].mxu0 %v4124
  %v4631 = vpop.f32.mrb[0].mxu0
  %v4632 = vadd.f32 0.0, %v4631
  %v4633 = vpop.f32.mrb[0].mxu0
  %v4634 = vpop.f32.mrb[0].mxu0
  %v4635 = vadd.f32 0.0, %v4634
  %v4636 = vpop.f32.mrb[0].mxu0
  %4637 = vmatprep.mubr.bf16.mxu0 0
  %4638 = vmatmul.mubr.bf16.gmra.mrb[0].mxu0 %v4127
  %v4639 = vpop.f32.mrb[0].mxu0
  %v4640 = vadd.f32 0.0, %v4639
  %v4641 = vpop.f32.mrb[0].mxu0
  %v4642 = vpop.f32.mrb[0].mxu0
  %v4643 = vadd.f32 0.0, %v4642
  %v4644 = vpop.f32.mrb[0].mxu0
  %4645 = vmatprep.mubr.bf16.mxu0 0
  %4646 = vmatmul.mubr.bf16.gmra.mrb[0].mxu0 %v4130
  %v4647 = vpop.f32.mrb[0].mxu0
  %v4648 = vadd.f32 0.0, %v4647
  %v4649 = vpop.f32.mrb[0].mxu0
  %v4650 = vpop.f32.mrb[0].mxu0
  %v4651 = vadd.f32 0.0, %v4650
  %v4652 = vpop.f32.mrb[0].mxu0
  %4653 = vmatprep.mubr.bf16.mxu0 0
  %4654 = vmatmul.mubr.bf16.gmra.mrb[0].mxu0 %v4133
  %v4655 = vpop.f32.mrb[0].mxu0
  %v4656 = vadd.f32 0.0, %v4655
  %v4657 = vpop.f32.mrb[0].mxu0
  %v4658 = vpop.f32.mrb[0].mxu0
  %v4659 = vadd.f32 0.0, %v4658
  %v4660 = vpop.f32.mrb[0].mxu0
  %4661 = vmatprep.mubr.bf16.mxu0 0
  %4662 = vmatmul.mubr.bf16.gmra.mrb[0].mxu0 %v4136
  %v4663 = vpop.f32.mrb[0].mxu0
  %v4664 = vadd.f32 0.0, %v4663
  %v4665 = vpop.f32.mrb[0].mxu0
  %v4666 = vpop.f32.mrb[0].mxu0
  %v4667 = vadd.f32 0.0, %v4666
  %v4668 = vpop.f32.mrb[0].mxu0
  %4669 = vmatprep.mubr.bf16.mxu0 0
  %4670 = vmatmul.mubr.bf16.gmra.mrb[0].mxu0 %v4139
  %v4671 = vpop.f32.mrb[0].mxu0
  %v4672 = vadd.f32 0.0, %v4671
  %v4673 = vpop.f32.mrb[0].mxu0
  %v4674 = vpop.f32.mrb[0].mxu0
  %v4675 = vadd.f32 0.0, %v4674
  %v4676 = vpop.f32.mrb[0].mxu0
  %4677 = vmatprep.mubr.bf16.mxu0 0
  %4678 = vmatmul.mubr.bf16.gmra.mrb[0].mxu0 %v4142
  %v4679 = vpop.f32.mrb[0].mxu0
  %v4680 = vadd.f32 0.0, %v4679
  %v4681 = vpop.f32.mrb[0].mxu0
  %v4682 = vpop.f32.mrb[0].mxu0
  %v4683 = vadd.f32 0.0, %v4682
  %v4684 = vpop.f32.mrb[0].mxu0
  %4685 = vmatprep.mubr.bf16.mxu0 0
  %4686 = vmatmul.mubr.bf16.gmra.mrb[0].mxu0 %v4145
  %v4687 = vpop.f32.mrb[0].mxu0
  %v4688 = vadd.f32 0.0, %v4687
  %v4689 = vpop.f32.mrb[0].mxu0
  %v4690 = vpop.f32.mrb[0].mxu0
  %v4691 = vadd.f32 0.0, %v4690
  %v4692 = vpop.f32.mrb[0].mxu0
  %4693 = vmatprep.mubr.bf16.mxu0 0
  %4694 = vmatmul.mubr.bf16.gmra.mrb[0].mxu0 %v4148
  %v4695 = vpop.f32.mrb[0].mxu0
  %v4696 = vadd.f32 0.0, %v4695
  %v4697 = vpop.f32.mrb[0].mxu0
  %v4698 = vpop.f32.mrb[0].mxu0
  %v4699 = vadd.f32 0.0, %v4698
  %v4700 = vpop.f32.mrb[0].mxu0
  %4701 = vmatprep.mubr.bf16.mxu0 0
  %4702 = vmatmul.mubr.bf16.gmra.mrb[0].mxu0 %v4151
  %v4703 = vpop.f32.mrb[0].mxu0
  %v4704 = vadd.f32 0.0, %v4703
  %v4705 = vpop.f32.mrb[0].mxu0
  %v4706 = vpop.f32.mrb[0].mxu0
  %v4707 = vadd.f32 0.0, %v4706
  %v4708 = vpop.f32.mrb[0].mxu0
  %4709 = vmatprep.mubr.bf16.mxu0 0
  %4710 = vmatmul.mubr.bf16.gmra.mrb[0].mxu0 %v4154
  %v4711 = vpop.f32.mrb[0].mxu0
  %v4712 = vadd.f32 0.0, %v4711
  %v4713 = vpop.f32.mrb[0].mxu0
  %v4714 = vpop.f32.mrb[0].mxu0
  %v4715 = vadd.f32 0.0, %v4714
  %v4716 = vpop.f32.mrb[0].mxu0
  %4717 = vmatprep.mubr.bf16.mxu0 0
  %4718 = vmatmul.mubr.bf16.gmra.mrb[0].mxu0 %v4157
  %v4719 = vpop.f32.mrb[0].mxu0
  %v4720 = vadd.f32 0.0, %v4719
  %v4721 = vpop.f32.mrb[0].mxu0
  %v4722 = vpop.f32.mrb[0].mxu0
  %v4723 = vadd.f32 0.0, %v4722
  %v4724 = vpop.f32.mrb[0].mxu0
  %4725 = vmatprep.mubr.bf16.mxu0 0
  %4726 = vmatmul.mubr.bf16.gmra.mrb[0].mxu0 %v4160
  %v4727 = vpop.f32.mrb[0].mxu0
  %v4728 = vadd.f32 0.0, %v4727
  %v4729 = vpop.f32.mrb[0].mxu0
  %v4730 = vpop.f32.mrb[0].mxu0
  %v4731 = vadd.f32 0.0, %v4730
  %v4732 = vpop.f32.mrb[0].mxu0
  %4733 = vmatprep.mubr.bf16.mxu0 0
  %4734 = vmatmul.mubr.bf16.gmra.mrb[0].mxu0 %v4163
  %v4735 = vpop.f32.mrb[0].mxu0
  %v4736 = vadd.f32 0.0, %v4735
  %v4737 = vpop.f32.mrb[0].mxu0
  %v4738 = vpop.f32.mrb[0].mxu0
  %v4739 = vadd.f32 0.0, %v4738
  %v4740 = vpop.f32.mrb[0].mxu0
  %4741 = vmatprep.mubr.bf16.mxu0 0
  %4742 = vmatmul.mubr.bf16.gmra.mrb[0].mxu0 %v4166
  %v4743 = vpop.f32.mrb[0].mxu0
  %v4744 = vadd.f32 0.0, %v4743
  %v4745 = vpop.f32.mrb[0].mxu0
  %v4746 = vpop.f32.mrb[0].mxu0
  %v4747 = vadd.f32 0.0, %v4746
  %v4748 = vpop.f32.mrb[0].mxu0
  %4749 = vmatprep.mubr.bf16.mxu0 0
  %4750 = vmatmul.mubr.bf16.gmra.mrb[0].mxu0 %v4169
  %v4751 = vpop.f32.mrb[0].mxu0
  %v4752 = vadd.f32 0.0, %v4751
  %v4753 = vpop.f32.mrb[0].mxu0
  %v4754 = vpop.f32.mrb[0].mxu0
  %v4755 = vadd.f32 0.0, %v4754
  %v4756 = vpop.f32.mrb[0].mxu0
  %4757 = vmatprep.mubr.bf16.mxu0 0
  %4758 = vmatmul.mubr.bf16.gmra.mrb[0].mxu0 %v4172
  %v4759 = vpop.f32.mrb[0].mxu0
  %v4760 = vadd.f32 0.0, %v4759
  %v4761 = vpop.f32.mrb[0].mxu0
  %v4762 = vpop.f32.mrb[0].mxu0
  %v4763 = vadd.f32 0.0, %v4762
  %v4764 = vpop.f32.mrb[0].mxu0
  %4765 = vmatprep.mubr.bf16.mxu0 0
  %4766 = vmatmul.mubr.bf16.gmra.mrb[0].mxu0 %v4175
  %v4767 = vpop.f32.mrb[0].mxu0
  %v4768 = vadd.f32 0.0, %v4767
  %v4769 = vpop.f32.mrb[0].mxu0
  %v4770 = vpop.f32.mrb[0].mxu0
  %v4771 = vadd.f32 0.0, %v4770
  %v4772 = vpop.f32.mrb[0].mxu0
  %4773 = vmatprep.mubr.bf16.mxu0 0
  %4774 = vmatmul.mubr.bf16.gmra.mrb[0].mxu0 %v4178
  %v4775 = vpop.f32.mrb[0].mxu0
  %v4776 = vadd.f32 0.0, %v4775
  %v4777 = vpop.f32.mrb[0].mxu0
  %v4778 = vpop.f32.mrb[0].mxu0
  %v4779 = vadd.f32 0.0, %v4778
  %v4780 = vpop.f32.mrb[0].mxu0
  %4781 = vmatprep.mubr.bf16.mxu0 0
  %4782 = vmatmul.mubr.bf16.gmra.mrb[0].mxu0 %v4181
  %v4783 = vpop.f32.mrb[0].mxu0
  %v4784 = vadd.f32 0.0, %v4783
  %v4785 = vpop.f32.mrb[0].mxu0
  %v4786 = vpop.f32.mrb[0].mxu0
  %v4787 = vadd.f32 0.0, %v4786
  %v4788 = vpop.f32.mrb[0].mxu0
  %4789 = vmatprep.mubr.bf16.mxu0 0
  %4790 = vmatmul.mubr.bf16.gmra.mrb[0].mxu0 %v4184
  %v4791 = vpop.f32.mrb[0].mxu0
  %v4792 = vadd.f32 0.0, %v4791
  %v4793 = vpop.f32.mrb[0].mxu0
  %v4794 = vpop.f32.mrb[0].mxu0
  %v4795 = vadd.f32 0.0, %v4794
  %v4796 = vpop.f32.mrb[0].mxu0
  %4797 = vdwg.mxu0
  %v4798 = vmax.f32 %v4224, %v4368
  %v4799 = vmax.f32 %v4227, %v4371
  %v4800 = vmax.f32 %v4232, %v4376
  %v4801 = vmax.f32 %v4235, %v4379
  %v4802 = vmax.f32 %v4240, %v4384
  %v4803 = vmax.f32 %v4243, %v4387
  %v4804 = vmax.f32 %v4248, %v4392
  %v4805 = vmax.f32 %v4251, %v4395
  %v4806 = vmax.f32 %v4256, %v4400
  %v4807 = vmax.f32 %v4259, %v4403
  %v4808 = vmax.f32 %v4264, %v4408
  %v4809 = vmax.f32 %v4267, %v4411
  %v4810 = vmax.f32 %v4272, %v4416
  %v4811 = vmax.f32 %v4275, %v4419
  %v4812 = vmax.f32 %v4280, %v4424
  %v4813 = vmax.f32 %v4283, %v4427
  %v4814 = vmax.f32 %v4288, %v4432
  %v4815 = vmax.f32 %v4291, %v4435
  %v4816 = vmax.f32 %v4296, %v4440
  %v4817 = vmax.f32 %v4299, %v4443
  %v4818 = vmax.f32 %v4304, %v4448
  %v4819 = vmax.f32 %v4307, %v4451
  %v4820 = vmax.f32 %v4312, %v4456
  %v4821 = vmax.f32 %v4315, %v4459
  %v4822 = vmax.f32 %v4320, %v4464
  %v4823 = vmax.f32 %v4323, %v4467
  %v4824 = vmax.f32 %v4328, %v4472
  %v4825 = vmax.f32 %v4331, %v4475
  %v4826 = vmax.f32 %v4336, %v4480
  %v4827 = vmax.f32 %v4339, %v4483
  %v4828 = vmax.f32 %v4344, %v4488
  %v4829 = vmax.f32 %v4347, %v4491
  %v4830 = vmax.f32 %v4352, %v4496
  %v4831 = vmax.f32 %v4355, %v4499
  %v4832 = vmax.f32 %v4360, %v4504
  %v4833 = vmax.f32 %v4363, %v4507
  %v4834 = vmax.f32 %v4512, %v4656
  %v4835 = vmax.f32 %v4515, %v4659
  %v4836 = vmax.f32 %v4520, %v4664
  %v4837 = vmax.f32 %v4523, %v4667
  %v4838 = vmax.f32 %v4528, %v4672
  %v4839 = vmax.f32 %v4531, %v4675
  %v4840 = vmax.f32 %v4536, %v4680
  %v4841 = vmax.f32 %v4539, %v4683
  %v4842 = vmax.f32 %v4544, %v4688
  %v4843 = vmax.f32 %v4547, %v4691
  %v4844 = vmax.f32 %v4552, %v4696
  %v4845 = vmax.f32 %v4555, %v4699
  %v4846 = vmax.f32 %v4560, %v4704
  %v4847 = vmax.f32 %v4563, %v4707
  %v4848 = vmax.f32 %v4568, %v4712
  %v4849 = vmax.f32 %v4571, %v4715
  %v4850 = vmax.f32 %v4576, %v4720
  %v4851 = vmax.f32 %v4579, %v4723
  %v4852 = vmax.f32 %v4584, %v4728
  %v4853 = vmax.f32 %v4587, %v4731
  %v4854 = vmax.f32 %v4592, %v4736
  %v4855 = vmax.f32 %v4595, %v4739
  %v4856 = vmax.f32 %v4600, %v4744
  %v4857 = vmax.f32 %v4603, %v4747
  %v4858 = vmax.f32 %v4608, %v4752
  %v4859 = vmax.f32 %v4611, %v4755
  %v4860 = vmax.f32 %v4616, %v4760
  %v4861 = vmax.f32 %v4619, %v4763
  %v4862 = vmax.f32 %v4624, %v4768
  %v4863 = vmax.f32 %v4627, %v4771
  %v4864 = vmax.f32 %v4632, %v4776
  %v4865 = vmax.f32 %v4635, %v4779
  %v4866 = vmax.f32 %v4640, %v4784
  %v4867 = vmax.f32 %v4643, %v4787
  %v4868 = vmax.f32 %v4648, %v4792
  %v4869 = vmax.f32 %v4651, %v4795
  %v4870 = vmax.f32 %v4798, %v4834
  %v4871 = vmax.f32 %v4799, %v4835
  %v4872 = vmax.f32 %v4800, %v4836
  %v4873 = vmax.f32 %v4801, %v4837
  %v4874 = vmax.f32 %v4802, %v4838
  %v4875 = vmax.f32 %v4803, %v4839
  %v4876 = vmax.f32 %v4804, %v4840
  %v4877 = vmax.f32 %v4805, %v4841
  %v4878 = vmax.f32 %v4806, %v4842
  %v4879 = vmax.f32 %v4807, %v4843
  %v4880 = vmax.f32 %v4808, %v4844
  %v4881 = vmax.f32 %v4809, %v4845
  %v4882 = vmax.f32 %v4810, %v4846
  %v4883 = vmax.f32 %v4811, %v4847
  %v4884 = vmax.f32 %v4812, %v4848
  %v4885 = vmax.f32 %v4813, %v4849
  %v4886 = vmax.f32 %v4814, %v4850
  %v4887 = vmax.f32 %v4815, %v4851
  %v4888 = vmax.f32 %v4816, %v4852
  %v4889 = vmax.f32 %v4817, %v4853
  %v4890 = vmax.f32 %v4818, %v4854
  %v4891 = vmax.f32 %v4819, %v4855
  %v4892 = vmax.f32 %v4820, %v4856
  %v4893 = vmax.f32 %v4821, %v4857
  %v4894 = vmax.f32 %v4822, %v4858
  %v4895 = vmax.f32 %v4823, %v4859
  %v4896 = vmax.f32 %v4824, %v4860
  %v4897 = vmax.f32 %v4825, %v4861
  %v4898 = vmax.f32 %v4826, %v4862
  %v4899 = vmax.f32 %v4827, %v4863
  %v4900 = vmax.f32 %v4828, %v4864
  %v4901 = vmax.f32 %v4829, %v4865
  %v4902 = vmax.f32 %v4830, %v4866
  %v4903 = vmax.f32 %v4831, %v4867
  %v4904 = vmax.f32 %v4832, %v4868
  %v4905 = vmax.f32 %v4833, %v4869
  %v4906 = vlaneseq
  %v4907 = vshrl.u32 %v4906, 7
  %v4908 = vsub.s32 0, %v4907
  %v4909 = vrot.slane %v3456, %v4908
  %v4910 = vadd.f32 %v4870, %v4909
  %v4911 = vadd.f32 %v4871, %v4909
  %v4912 = vadd.f32 %v4872, %v4909
  %v4913 = vadd.f32 %v4873, %v4909
  %v4914 = vadd.f32 %v4874, %v4909
  %v4915 = vadd.f32 %v4875, %v4909
  %v4916 = vadd.f32 %v4876, %v4909
  %v4917 = vadd.f32 %v4877, %v4909
  %v4918 = vadd.f32 %v4878, %v4909
  %v4919 = vadd.f32 %v4879, %v4909
  %v4920 = vadd.f32 %v4880, %v4909
  %v4921 = vadd.f32 %v4881, %v4909
  %v4922 = vadd.f32 %v4882, %v4909
  %v4923 = vadd.f32 %v4883, %v4909
  %v4924 = vadd.f32 %v4884, %v4909
  %v4925 = vadd.f32 %v4885, %v4909
  %v4926 = vadd.f32 %v4886, %v4909
  %v4927 = vadd.f32 %v4887, %v4909
  %v4928 = vadd.f32 %v4888, %v4909
  %v4929 = vadd.f32 %v4889, %v4909
  %v4930 = vadd.f32 %v4890, %v4909
  %v4931 = vadd.f32 %v4891, %v4909
  %v4932 = vadd.f32 %v4892, %v4909
  %v4933 = vadd.f32 %v4893, %v4909
  %v4934 = vadd.f32 %v4894, %v4909
  %v4935 = vadd.f32 %v4895, %v4909
  %v4936 = vadd.f32 %v4896, %v4909
  %v4937 = vadd.f32 %v4897, %v4909
  %v4938 = vadd.f32 %v4898, %v4909
  %v4939 = vadd.f32 %v4899, %v4909
  %v4940 = vadd.f32 %v4900, %v4909
  %v4941 = vadd.f32 %v4901, %v4909
  %v4942 = vadd.f32 %v4902, %v4909
  %v4943 = vadd.f32 %v4903, %v4909
  %v4944 = vadd.f32 %v4904, %v4909
  %v4945 = vadd.f32 %v4905, %v4909
  %v4946 = vtanh.pop %v4910
  %v4947 = vtanh.pop %v4911
  %v4948 = vtanh.pop %v4912
  %v4949 = vtanh.pop %v4913
  %v4950 = vtanh.pop %v4914
  %v4951 = vtanh.pop %v4915
  %v4952 = vtanh.pop %v4916
  %v4953 = vtanh.pop %v4917
  %v4954 = vtanh.pop %v4918
  %v4955 = vtanh.pop %v4919
  %v4956 = vtanh.pop %v4920
  %v4957 = vtanh.pop %v4921
  %v4958 = vtanh.pop %v4922
  %v4959 = vtanh.pop %v4923
  %v4960 = vtanh.pop %v4924
  %v4961 = vtanh.pop %v4925
  %v4962 = vtanh.pop %v4926
  %v4963 = vtanh.pop %v4927
  %v4964 = vtanh.pop %v4928
  %v4965 = vtanh.pop %v4929
  %v4966 = vtanh.pop %v4930
  %v4967 = vtanh.pop %v4931
  %v4968 = vtanh.pop %v4932
  %v4969 = vtanh.pop %v4933
  %v4970 = vtanh.pop %v4934
  %v4971 = vtanh.pop %v4935
  %v4972 = vtanh.pop %v4936
  %v4973 = vtanh.pop %v4937
  %v4974 = vtanh.pop %v4938
  %v4975 = vtanh.pop %v4939
  %v4976 = vtanh.pop %v4940
  %v4977 = vtanh.pop %v4941
  %v4978 = vtanh.pop %v4942
  %v4979 = vtanh.pop %v4943
  %v4980 = vtanh.pop %v4944
  %v4981 = vtanh.pop %v4945
  %v4982 = vtanh.pop %v4946
  %v4983 = vtanh.pop %v4947
  %v4984 = vtanh.pop %v4948
  %v4985 = vtanh.pop %v4949
  %v4986 = vtanh.pop %v4950
  %v4987 = vtanh.pop %v4951
  %v4988 = vtanh.pop %v4952
  %v4989 = vtanh.pop %v4953
  %v4990 = vtanh.pop %v4954
  %v4991 = vtanh.pop %v4955
  %v4992 = vtanh.pop %v4956
  %v4993 = vtanh.pop %v4957
  %v4994 = vtanh.pop %v4958
  %v4995 = vtanh.pop %v4959
  %v4996 = vtanh.pop %v4960
  %v4997 = vtanh.pop %v4961
  %v4998 = vtanh.pop %v4962
  %v4999 = vtanh.pop %v4963
  %v5000 = vtanh.pop %v4964
  %v5001 = vtanh.pop %v4965
  %v5002 = vtanh.pop %v4966
  %v5003 = vtanh.pop %v4967
  %v5004 = vtanh.pop %v4968
  %v5005 = vtanh.pop %v4969
  %v5006 = vtanh.pop %v4970
  %v5007 = vtanh.pop %v4971
  %v5008 = vtanh.pop %v4972
  %v5009 = vtanh.pop %v4973
  %v5010 = vtanh.pop %v4974
  %v5011 = vtanh.pop %v4975
  %v5012 = vtanh.pop %v4976
  %v5013 = vtanh.pop %v4977
  %v5014 = vtanh.pop %v4978
  %v5015 = vtanh.pop %v4979
  %v5016 = vtanh.pop %v4980
  %v5017 = vtanh.pop %v4981
  %v5018 = vpack.c.bf16 %v4983, %v4982
  %v5019 = vpack.c.bf16 %v4985, %v4984
  %v5020 = vpack.c.bf16 %v4987, %v4986
  %v5021 = vpack.c.bf16 %v4989, %v4988
  %v5022 = vpack.c.bf16 %v4991, %v4990
  %v5023 = vpack.c.bf16 %v4993, %v4992
  %v5024 = vpack.c.bf16 %v4995, %v4994
  %v5025 = vpack.c.bf16 %v4997, %v4996
  %v5026 = vpack.c.bf16 %v4999, %v4998
  %v5027 = vpack.c.bf16 %v5001, %v5000
  %v5028 = vpack.c.bf16 %v5003, %v5002
  %s5029 = scalar_lea.vmem %s2, 144
  %v5030 = vld [vmem:[%s5029] sm:$0xf]
  %v5031 = vld [vmem:[%s5029 + $0x4] sm:$0xf]
  %v5032 = vld [vmem:[%s5029 + $0x8] sm:$0xf]
  %v5033 = vld [vmem:[%s5029 + $0xc] sm:$0xf]
  %v5034 = vpack.c.bf16 %v4984, %v4983
  %v5035 = vpack.c.bf16 %v4986, %v4985
  %v5036 = vpack.c.bf16 %v4988, %v4987
  %v5037 = vpack.c.bf16 %v4990, %v4989
  %v5038 = vpack.c.bf16 %v4992, %v4991
  %v5039 = vpack.c.bf16 %v4994, %v4993
  %v5040 = vpack.c.bf16 %v4996, %v4995
  %v5041 = vpack.c.bf16 %v4998, %v4997
  %v5042 = vpack.c.bf16 %v5000, %v4999
  %v5043 = vpack.c.bf16 %v5002, %v5001
  %v5044 = vpack.c.bf16 %v5004, %v5003
  %s5045 = scalar_lea.vmem %s2, 160
  %v5046 = vld [vmem:[%s5045] sm:$0xf]
  %v5047 = vld [vmem:[%s5045 + $0x4] sm:$0xf]
  %v5048 = vld [vmem:[%s5045 + $0x8] sm:$0xf]
  %v5049 = vld [vmem:[%s5045 + $0xc] sm:$0xf]
  %v5054 = vunpack.c.l.b16 %v5046
  %v5055 = vunpack.c.l.b16 %v5047
  %v5056 = vunpack.c.l.b16 %v5048
  %v5057 = vunpack.c.l.b16 %v5049
  %v5058 = vpack.c.b16 %v5055, %v5054
  %v5059 = vpack.c.b16 %v5057, %v5056
  %v5063 = vsel %vm1638, %v5034, 0
  %v5066 = vsel %vm1638, %v5035, 0
  %v5069 = vsel %vm1638, %v5036, 0
  %v5072 = vsel %vm1638, %v5037, 0
  %v5075 = vsel %vm1638, %v5038, 0
  %v5078 = vsel %vm1638, %v5039, 0
  %v5081 = vsel %vm1638, %v5040, 0
  %v5084 = vsel %vm1638, %v5041, 0
  %v5087 = vsel %vm1638, %v5042, 0
  %v5090 = vsel %vm1638, %v5043, 0
  %v5093 = vsel %vm1638, %v5044, 0
  %5095 = vmatprep.subr.bf16.mxu0 0
  %5096 = vmatpush1.bf16.msra.mxu0 %v5058
  %5097 = vmatprep.subr.bf16.mxu0 0
  %5098 = vmatpush1.bf16.msra.mxu0 %v5059
  %5099 = vmatprep.subr.bf16.mxu0 0
  %5100 = vmatpush1.bf16.msra.mxu0 0
  %5101 = vmatprep.subr.bf16.mxu0 0
  %5102 = vmatpush1.bf16.msra.mxu0 0
  %5103 = vmatprep.subr.bf16.mxu0 0
  %5104 = vmatpush1.bf16.msra.mxu0 0
  %5105 = vmatprep.subr.bf16.mxu0 0
  %5106 = vmatpush1.bf16.msra.mxu0 0
  %5107 = vmatprep.subr.bf16.mxu0 0
  %5108 = vmatpush1.bf16.msra.mxu0 0
  %5109 = vmatprep.subr.bf16.mxu0 0
  %5110 = vmatpush1.bf16.msra.mxu0 0
  %5111 = vmatprep.subr.bf16.mxu0 0
  %5112 = vmatpush1.bf16.msra.mxu0 0
  %5113 = vmatprep.subr.bf16.mxu0 0
  %5114 = vmatpush1.bf16.msra.mxu0 0
  %5115 = vmatprep.subr.bf16.mxu0 0
  %5116 = vmatpush1.bf16.msra.mxu0 0
  %5117 = vmatprep.subr.bf16.mxu0 0
  %5118 = vmatpush1.bf16.msra.mxu0 0
  %5119 = vmatprep.subr.bf16.mxu0 0
  %5120 = vmatpush1.bf16.msra.mxu0 0
  %5121 = vmatprep.subr.bf16.mxu0 0
  %5122 = vmatpush1.bf16.msra.mxu0 0
  %5123 = vmatprep.subr.bf16.mxu0 0
  %5124 = vmatpush1.bf16.msra.mxu0 0
  %5125 = vmatprep.subr.bf16.mxu0 0
  %5126 = vmatpush1.bf16.msra.mxu0 0
  %5127 = vmatprep.mubr.bf16.mxu0 0
  %5128 = vmatmul.mubr.bf16.gmra.mrb[0].mxu0 %v5063
  %v5129 = vpop.f32.mrb[0].mxu0
  %v5130 = vadd.f32 0.0, %v5129
  %v5131 = vpop.f32.mrb[0].mxu0
  %v5132 = vpop.f32.mrb[0].mxu0
  %v5133 = vadd.f32 0.0, %v5132
  %v5134 = vpop.f32.mrb[0].mxu0
  %5135 = vmatprep.mubr.bf16.mxu0 0
  %5136 = vmatmul.mubr.bf16.gmra.mrb[0].mxu0 %v5066
  %v5137 = vpop.f32.mrb[0].mxu0
  %v5138 = vadd.f32 0.0, %v5137
  %v5139 = vpop.f32.mrb[0].mxu0
  %v5140 = vpop.f32.mrb[0].mxu0
  %v5141 = vadd.f32 0.0, %v5140
  %v5142 = vpop.f32.mrb[0].mxu0
  %5143 = vmatprep.mubr.bf16.mxu0 0
  %5144 = vmatmul.mubr.bf16.gmra.mrb[0].mxu0 %v5069
  %v5145 = vpop.f32.mrb[0].mxu0
  %v5146 = vpop.f32.mrb[0].mxu0
  %v5147 = vpop.f32.mrb[0].mxu0
  %v5148 = vpop.f32.mrb[0].mxu0
  %5149 = vmatprep.mubr.bf16.mxu0 0
  %5150 = vmatmul.mubr.bf16.gmra.mrb[0].mxu0 %v5072
  %v5151 = vpop.f32.mrb[0].mxu0
  %v5152 = vadd.f32 0.0, %v5151
  %v5153 = vpop.f32.mrb[0].mxu0
  %v5154 = vpop.f32.mrb[0].mxu0
  %v5155 = vadd.f32 0.0, %v5154
  %v5156 = vpop.f32.mrb[0].mxu0
  %5157 = vmatprep.mubr.bf16.mxu0 0
  %5158 = vmatmul.mubr.bf16.gmra.mrb[0].mxu0 %v5075
  %v5159 = vpop.f32.mrb[0].mxu0
  %v5160 = vadd.f32 0.0, %v5159
  %v5161 = vpop.f32.mrb[0].mxu0
  %v5162 = vpop.f32.mrb[0].mxu0
  %v5163 = vadd.f32 0.0, %v5162
  %v5164 = vpop.f32.mrb[0].mxu0
  %5165 = vmatprep.mubr.bf16.mxu0 0
  %5166 = vmatmul.mubr.bf16.gmra.mrb[0].mxu0 %v5078
  %v5167 = vpop.f32.mrb[0].mxu0
  %v5168 = vpop.f32.mrb[0].mxu0
  %v5169 = vpop.f32.mrb[0].mxu0
  %v5170 = vpop.f32.mrb[0].mxu0
  %5171 = vmatprep.mubr.bf16.mxu0 0
  %5172 = vmatmul.mubr.bf16.gmra.mrb[0].mxu0 %v5081
  %v5173 = vpop.f32.mrb[0].mxu0
  %v5174 = vadd.f32 0.0, %v5173
  %v5175 = vpop.f32.mrb[0].mxu0
  %v5176 = vpop.f32.mrb[0].mxu0
  %v5177 = vadd.f32 0.0, %v5176
  %v5178 = vpop.f32.mrb[0].mxu0
  %5179 = vmatprep.mubr.bf16.mxu0 0
  %5180 = vmatmul.mubr.bf16.gmra.mrb[0].mxu0 %v5084
  %v5181 = vpop.f32.mrb[0].mxu0
  %v5182 = vadd.f32 0.0, %v5181
  %v5183 = vpop.f32.mrb[0].mxu0
  %v5184 = vpop.f32.mrb[0].mxu0
  %v5185 = vadd.f32 0.0, %v5184
  %v5186 = vpop.f32.mrb[0].mxu0
  %5187 = vmatprep.mubr.bf16.mxu0 0
  %5188 = vmatmul.mubr.bf16.gmra.mrb[0].mxu0 %v5087
  %v5189 = vpop.f32.mrb[0].mxu0
  %v5190 = vpop.f32.mrb[0].mxu0
  %v5191 = vpop.f32.mrb[0].mxu0
  %v5192 = vpop.f32.mrb[0].mxu0
  %5193 = vmatprep.mubr.bf16.mxu0 0
  %5194 = vmatmul.mubr.bf16.gmra.mrb[0].mxu0 %v5090
  %v5195 = vpop.f32.mrb[0].mxu0
  %v5196 = vadd.f32 0.0, %v5195
  %v5197 = vpop.f32.mrb[0].mxu0
  %v5198 = vpop.f32.mrb[0].mxu0
  %v5199 = vadd.f32 0.0, %v5198
  %v5200 = vpop.f32.mrb[0].mxu0
  %5201 = vmatprep.mubr.bf16.mxu0 0
  %5202 = vmatmul.mubr.bf16.gmra.mrb[0].mxu0 %v5093
  %v5203 = vpop.f32.mrb[0].mxu0
  %v5204 = vadd.f32 0.0, %v5203
  %v5205 = vpop.f32.mrb[0].mxu0
  %v5206 = vpop.f32.mrb[0].mxu0
  %v5207 = vadd.f32 0.0, %v5206
  %v5208 = vpop.f32.mrb[0].mxu0
  %5209 = vdwg.mxu0
  %v5214 = vunpack.c.l.b16 %v5030
  %v5215 = vunpack.c.l.b16 %v5031
  %v5216 = vunpack.c.l.b16 %v5032
  %v5217 = vunpack.c.l.b16 %v5033
  %v5218 = vpack.c.b16 %v5215, %v5214
  %v5219 = vpack.c.b16 %v5217, %v5216
  %v5223 = vsel %vm1638, %v5018, 0
  %v5226 = vsel %vm1638, %v5019, 0
  %v5229 = vsel %vm1638, %v5020, 0
  %v5232 = vsel %vm1638, %v5021, 0
  %v5235 = vsel %vm1638, %v5022, 0
  %v5238 = vsel %vm1638, %v5023, 0
  %v5241 = vsel %vm1638, %v5024, 0
  %v5244 = vsel %vm1638, %v5025, 0
  %v5247 = vsel %vm1638, %v5026, 0
  %v5250 = vsel %vm1638, %v5027, 0
  %v5253 = vsel %vm1638, %v5028, 0
  %5255 = vmatprep.subr.bf16.mxu0 0
  %5256 = vmatpush1.bf16.msra.mxu0 %v5218
  %5257 = vmatprep.subr.bf16.mxu0 0
  %5258 = vmatpush1.bf16.msra.mxu0 %v5219
  %5259 = vmatprep.subr.bf16.mxu0 0
  %5260 = vmatpush1.bf16.msra.mxu0 0
  %5261 = vmatprep.subr.bf16.mxu0 0
  %5262 = vmatpush1.bf16.msra.mxu0 0
  %5263 = vmatprep.subr.bf16.mxu0 0
  %5264 = vmatpush1.bf16.msra.mxu0 0
  %5265 = vmatprep.subr.bf16.mxu0 0
  %5266 = vmatpush1.bf16.msra.mxu0 0
  %5267 = vmatprep.subr.bf16.mxu0 0
  %5268 = vmatpush1.bf16.msra.mxu0 0
  %5269 = vmatprep.subr.bf16.mxu0 0
  %5270 = vmatpush1.bf16.msra.mxu0 0
  %5271 = vmatprep.subr.bf16.mxu0 0
  %5272 = vmatpush1.bf16.msra.mxu0 0
  %5273 = vmatprep.subr.bf16.mxu0 0
  %5274 = vmatpush1.bf16.msra.mxu0 0
  %5275 = vmatprep.subr.bf16.mxu0 0
  %5276 = vmatpush1.bf16.msra.mxu0 0
  %5277 = vmatprep.subr.bf16.mxu0 0
  %5278 = vmatpush1.bf16.msra.mxu0 0
  %5279 = vmatprep.subr.bf16.mxu0 0
  %5280 = vmatpush1.bf16.msra.mxu0 0
  %5281 = vmatprep.subr.bf16.mxu0 0
  %5282 = vmatpush1.bf16.msra.mxu0 0
  %5283 = vmatprep.subr.bf16.mxu0 0
  %5284 = vmatpush1.bf16.msra.mxu0 0
  %5285 = vmatprep.subr.bf16.mxu0 0
  %5286 = vmatpush1.bf16.msra.mxu0 0
  %5287 = vmatprep.mubr.bf16.mxu0 0
  %5288 = vmatmul.mubr.bf16.gmra.mrb[0].mxu0 %v5223
  %v5289 = vpop.f32.mrb[0].mxu0
  %v5290 = vadd.f32 %v5130, %v5289
  %v5291 = vpop.f32.mrb[0].mxu0
  %v5292 = vpop.f32.mrb[0].mxu0
  %v5293 = vadd.f32 %v5133, %v5292
  %v5294 = vpop.f32.mrb[0].mxu0
  %5295 = vmatprep.mubr.bf16.mxu0 0
  %5296 = vmatmul.mubr.bf16.gmra.mrb[0].mxu0 %v5226
  %v5297 = vpop.f32.mrb[0].mxu0
  %v5298 = vadd.f32 %v5138, %v5297
  %v5299 = vpop.f32.mrb[0].mxu0
  %v5300 = vpop.f32.mrb[0].mxu0
  %v5301 = vadd.f32 %v5141, %v5300
  %v5302 = vpop.f32.mrb[0].mxu0
  %5303 = vmatprep.mubr.bf16.mxu0 0
  %5304 = vmatmul.mubr.bf16.gmra.mrb[0].mxu0 %v5229
  %v5305 = vpop.f32.mrb[0].mxu0
  %v5306 = vpop.f32.mrb[0].mxu0
  %v5307 = vpop.f32.mrb[0].mxu0
  %v5308 = vpop.f32.mrb[0].mxu0
  %5309 = vmatprep.mubr.bf16.mxu0 0
  %5310 = vmatmul.mubr.bf16.gmra.mrb[0].mxu0 %v5232
  %v5311 = vpop.f32.mrb[0].mxu0
  %v5312 = vadd.f32 %v5152, %v5311
  %v5313 = vpop.f32.mrb[0].mxu0
  %v5314 = vpop.f32.mrb[0].mxu0
  %v5315 = vadd.f32 %v5155, %v5314
  %v5316 = vpop.f32.mrb[0].mxu0
  %5317 = vmatprep.mubr.bf16.mxu0 0
  %5318 = vmatmul.mubr.bf16.gmra.mrb[0].mxu0 %v5235
  %v5319 = vpop.f32.mrb[0].mxu0
  %v5320 = vadd.f32 %v5160, %v5319
  %v5321 = vpop.f32.mrb[0].mxu0
  %v5322 = vpop.f32.mrb[0].mxu0
  %v5323 = vadd.f32 %v5163, %v5322
  %v5324 = vpop.f32.mrb[0].mxu0
  %5325 = vmatprep.mubr.bf16.mxu0 0
  %5326 = vmatmul.mubr.bf16.gmra.mrb[0].mxu0 %v5238
  %v5327 = vpop.f32.mrb[0].mxu0
  %v5328 = vpop.f32.mrb[0].mxu0
  %v5329 = vpop.f32.mrb[0].mxu0
  %v5330 = vpop.f32.mrb[0].mxu0
  %5331 = vmatprep.mubr.bf16.mxu0 0
  %5332 = vmatmul.mubr.bf16.gmra.mrb[0].mxu0 %v5241
  %v5333 = vpop.f32.mrb[0].mxu0
  %v5334 = vadd.f32 %v5174, %v5333
  %v5335 = vpop.f32.mrb[0].mxu0
  %v5336 = vpop.f32.mrb[0].mxu0
  %v5337 = vadd.f32 %v5177, %v5336
  %v5338 = vpop.f32.mrb[0].mxu0
  %5339 = vmatprep.mubr.bf16.mxu0 0
  %5340 = vmatmul.mubr.bf16.gmra.mrb[0].mxu0 %v5244
  %v5341 = vpop.f32.mrb[0].mxu0
  %v5342 = vadd.f32 %v5182, %v5341
  %v5343 = vpop.f32.mrb[0].mxu0
  %v5344 = vpop.f32.mrb[0].mxu0
  %v5345 = vadd.f32 %v5185, %v5344
  %v5346 = vpop.f32.mrb[0].mxu0
  %5347 = vmatprep.mubr.bf16.mxu0 0
  %5348 = vmatmul.mubr.bf16.gmra.mrb[0].mxu0 %v5247
  %v5349 = vpop.f32.mrb[0].mxu0
  %v5350 = vpop.f32.mrb[0].mxu0
  %v5351 = vpop.f32.mrb[0].mxu0
  %v5352 = vpop.f32.mrb[0].mxu0
  %5353 = vmatprep.mubr.bf16.mxu0 0
  %5354 = vmatmul.mubr.bf16.gmra.mrb[0].mxu0 %v5250
  %v5355 = vpop.f32.mrb[0].mxu0
  %v5356 = vadd.f32 %v5196, %v5355
  %v5357 = vpop.f32.mrb[0].mxu0
  %v5358 = vpop.f32.mrb[0].mxu0
  %v5359 = vadd.f32 %v5199, %v5358
  %v5360 = vpop.f32.mrb[0].mxu0
  %5361 = vmatprep.mubr.bf16.mxu0 0
  %5362 = vmatmul.mubr.bf16.gmra.mrb[0].mxu0 %v5253
  %v5363 = vpop.f32.mrb[0].mxu0
  %v5364 = vadd.f32 %v5204, %v5363
  %v5365 = vpop.f32.mrb[0].mxu0
  %v5366 = vpop.f32.mrb[0].mxu0
  %v5367 = vadd.f32 %v5207, %v5366
  %v5368 = vpop.f32.mrb[0].mxu0
  %5369 = vdwg.mxu0
  %v5370 = vpack.c.bf16 %v5005, %v5004
  %s5371 = scalar_lea.vmem %s2, 176
  %v5372 = vld [vmem:[%s5371] sm:$0xf]
  %v5373 = vld [vmem:[%s5371 + $0x4] sm:$0xf]
  %v5374 = vld [vmem:[%s5371 + $0x8] sm:$0xf]
  %v5375 = vld [vmem:[%s5371 + $0xc] sm:$0xf]
  %v5380 = vunpack.c.l.b16 %v5372
  %v5381 = vunpack.c.l.b16 %v5373
  %v5382 = vunpack.c.l.b16 %v5374
  %v5383 = vunpack.c.l.b16 %v5375
  %v5384 = vpack.c.b16 %v5381, %v5380
  %v5385 = vpack.c.b16 %v5383, %v5382
  %v5389 = vsel %vm1638, %v5370, 0
  %5391 = vmatprep.subr.bf16.mxu0 0
  %5392 = vmatpush1.bf16.msra.mxu0 %v5384
  %5393 = vmatprep.subr.bf16.mxu0 0
  %5394 = vmatpush1.bf16.msra.mxu0 %v5385
  %5395 = vmatprep.subr.bf16.mxu0 0
  %5396 = vmatpush1.bf16.msra.mxu0 0
  %5397 = vmatprep.subr.bf16.mxu0 0
  %5398 = vmatpush1.bf16.msra.mxu0 0
  %5399 = vmatprep.subr.bf16.mxu0 0
  %5400 = vmatpush1.bf16.msra.mxu0 0
  %5401 = vmatprep.subr.bf16.mxu0 0
  %5402 = vmatpush1.bf16.msra.mxu0 0
  %5403 = vmatprep.subr.bf16.mxu0 0
  %5404 = vmatpush1.bf16.msra.mxu0 0
  %5405 = vmatprep.subr.bf16.mxu0 0
  %5406 = vmatpush1.bf16.msra.mxu0 0
  %5407 = vmatprep.subr.bf16.mxu0 0
  %5408 = vmatpush1.bf16.msra.mxu0 0
  %5409 = vmatprep.subr.bf16.mxu0 0
  %5410 = vmatpush1.bf16.msra.mxu0 0
  %5411 = vmatprep.subr.bf16.mxu0 0
  %5412 = vmatpush1.bf16.msra.mxu0 0
  %5413 = vmatprep.subr.bf16.mxu0 0
  %5414 = vmatpush1.bf16.msra.mxu0 0
  %5415 = vmatprep.subr.bf16.mxu0 0
  %5416 = vmatpush1.bf16.msra.mxu0 0
  %5417 = vmatprep.subr.bf16.mxu0 0
  %5418 = vmatpush1.bf16.msra.mxu0 0
  %5419 = vmatprep.subr.bf16.mxu0 0
  %5420 = vmatpush1.bf16.msra.mxu0 0
  %5421 = vmatprep.subr.bf16.mxu0 0
  %5422 = vmatpush1.bf16.msra.mxu0 0
  %5423 = vmatprep.mubr.bf16.mxu0 0
  %5424 = vmatmul.mubr.bf16.gmra.mrb[0].mxu0 %v5226
  %v5425 = vpop.f32.mrb[0].mxu0
  %v5426 = vadd.f32 0.0, %v5425
  %v5427 = vpop.f32.mrb[0].mxu0
  %v5428 = vpop.f32.mrb[0].mxu0
  %v5429 = vadd.f32 0.0, %v5428
  %v5430 = vpop.f32.mrb[0].mxu0
  %5431 = vmatprep.mubr.bf16.mxu0 0
  %5432 = vmatmul.mubr.bf16.gmra.mrb[0].mxu0 %v5229
  %v5433 = vpop.f32.mrb[0].mxu0
  %v5434 = vadd.f32 0.0, %v5433
  %v5435 = vpop.f32.mrb[0].mxu0
  %v5436 = vpop.f32.mrb[0].mxu0
  %v5437 = vadd.f32 0.0, %v5436
  %v5438 = vpop.f32.mrb[0].mxu0
  %5439 = vmatprep.mubr.bf16.mxu0 0
  %5440 = vmatmul.mubr.bf16.gmra.mrb[0].mxu0 %v5232
  %v5441 = vpop.f32.mrb[0].mxu0
  %v5442 = vpop.f32.mrb[0].mxu0
  %v5443 = vpop.f32.mrb[0].mxu0
  %v5444 = vpop.f32.mrb[0].mxu0
  %5445 = vmatprep.mubr.bf16.mxu0 0
  %5446 = vmatmul.mubr.bf16.gmra.mrb[0].mxu0 %v5235
  %v5447 = vpop.f32.mrb[0].mxu0
  %v5448 = vadd.f32 0.0, %v5447
  %v5449 = vpop.f32.mrb[0].mxu0
  %v5450 = vpop.f32.mrb[0].mxu0
  %v5451 = vadd.f32 0.0, %v5450
  %v5452 = vpop.f32.mrb[0].mxu0
  %5453 = vmatprep.mubr.bf16.mxu0 0
  %5454 = vmatmul.mubr.bf16.gmra.mrb[0].mxu0 %v5238
  %v5455 = vpop.f32.mrb[0].mxu0
  %v5456 = vadd.f32 0.0, %v5455
  %v5457 = vpop.f32.mrb[0].mxu0
  %v5458 = vpop.f32.mrb[0].mxu0
  %v5459 = vadd.f32 0.0, %v5458
  %v5460 = vpop.f32.mrb[0].mxu0
  %5461 = vmatprep.mubr.bf16.mxu0 0
  %5462 = vmatmul.mubr.bf16.gmra.mrb[0].mxu0 %v5241
  %v5463 = vpop.f32.mrb[0].mxu0
  %v5464 = vpop.f32.mrb[0].mxu0
  %v5465 = vpop.f32.mrb[0].mxu0
  %v5466 = vpop.f32.mrb[0].mxu0
  %5467 = vmatprep.mubr.bf16.mxu0 0
  %5468 = vmatmul.mubr.bf16.gmra.mrb[0].mxu0 %v5244
  %v5469 = vpop.f32.mrb[0].mxu0
  %v5470 = vadd.f32 0.0, %v5469
  %v5471 = vpop.f32.mrb[0].mxu0
  %v5472 = vpop.f32.mrb[0].mxu0
  %v5473 = vadd.f32 0.0, %v5472
  %v5474 = vpop.f32.mrb[0].mxu0
  %5475 = vmatprep.mubr.bf16.mxu0 0
  %5476 = vmatmul.mubr.bf16.gmra.mrb[0].mxu0 %v5247
  %v5477 = vpop.f32.mrb[0].mxu0
  %v5478 = vadd.f32 0.0, %v5477
  %v5479 = vpop.f32.mrb[0].mxu0
  %v5480 = vpop.f32.mrb[0].mxu0
  %v5481 = vadd.f32 0.0, %v5480
  %v5482 = vpop.f32.mrb[0].mxu0
  %5483 = vmatprep.mubr.bf16.mxu0 0
  %5484 = vmatmul.mubr.bf16.gmra.mrb[0].mxu0 %v5250
  %v5485 = vpop.f32.mrb[0].mxu0
  %v5486 = vpop.f32.mrb[0].mxu0
  %v5487 = vpop.f32.mrb[0].mxu0
  %v5488 = vpop.f32.mrb[0].mxu0
  %5489 = vmatprep.mubr.bf16.mxu0 0
  %5490 = vmatmul.mubr.bf16.gmra.mrb[0].mxu0 %v5253
  %v5491 = vpop.f32.mrb[0].mxu0
  %v5492 = vadd.f32 0.0, %v5491
  %v5493 = vpop.f32.mrb[0].mxu0
  %v5494 = vpop.f32.mrb[0].mxu0
  %v5495 = vadd.f32 0.0, %v5494
  %v5496 = vpop.f32.mrb[0].mxu0
  %5497 = vmatprep.mubr.bf16.mxu0 0
  %5498 = vmatmul.mubr.bf16.gmra.mrb[0].mxu0 %v5389
  %v5499 = vpop.f32.mrb[0].mxu0
  %v5500 = vadd.f32 0.0, %v5499
  %v5501 = vpop.f32.mrb[0].mxu0
  %v5502 = vpop.f32.mrb[0].mxu0
  %v5503 = vadd.f32 0.0, %v5502
  %v5504 = vpop.f32.mrb[0].mxu0
  %5505 = vdwg.mxu0
  %v5506 = vadd.f32 %v5290, %v5426
  %v5507 = vadd.f32 %v5293, %v5429
  %v5508 = vadd.f32 %v5298, %v5434
  %v5509 = vadd.f32 %v5301, %v5437
  %v5510 = vadd.f32 %v5312, %v5448
  %v5511 = vadd.f32 %v5315, %v5451
  %v5512 = vadd.f32 %v5320, %v5456
  %v5513 = vadd.f32 %v5323, %v5459
  %v5514 = vadd.f32 %v5334, %v5470
  %v5515 = vadd.f32 %v5337, %v5473
  %v5516 = vadd.f32 %v5342, %v5478
  %v5517 = vadd.f32 %v5345, %v5481
  %v5518 = vadd.f32 %v5356, %v5492
  %v5519 = vadd.f32 %v5359, %v5495
  %v5520 = vadd.f32 %v5364, %v5500
  %v5521 = vadd.f32 %v5367, %v5503
  %v5522 = vpack.c.bf16 %v5007, %v5006
  %v5523 = vpack.c.bf16 %v5009, %v5008
  %s5524 = scalar_lea.vmem %s2, 192
  %v5525 = vld [vmem:[%s5524] sm:$0xf]
  %v5526 = vld [vmem:[%s5524 + $0x4] sm:$0xf]
  %v5527 = vld [vmem:[%s5524 + $0x8] sm:$0xf]
  %v5528 = vld [vmem:[%s5524 + $0xc] sm:$0xf]
  %v5533 = vunpack.c.l.b16 %v5525
  %v5534 = vunpack.c.l.b16 %v5526
  %v5535 = vunpack.c.l.b16 %v5527
  %v5536 = vunpack.c.l.b16 %v5528
  %v5537 = vpack.c.b16 %v5534, %v5533
  %v5538 = vpack.c.b16 %v5536, %v5535
  %v5542 = vsel %vm1638, %v5522, 0
  %v5545 = vsel %vm1638, %v5523, 0
  %5547 = vmatprep.subr.bf16.mxu0 0
  %5548 = vmatpush1.bf16.msra.mxu0 %v5537
  %5549 = vmatprep.subr.bf16.mxu0 0
  %5550 = vmatpush1.bf16.msra.mxu0 %v5538
  %5551 = vmatprep.subr.bf16.mxu0 0
  %5552 = vmatpush1.bf16.msra.mxu0 0
  %5553 = vmatprep.subr.bf16.mxu0 0
  %5554 = vmatpush1.bf16.msra.mxu0 0
  %5555 = vmatprep.subr.bf16.mxu0 0
  %5556 = vmatpush1.bf16.msra.mxu0 0
  %5557 = vmatprep.subr.bf16.mxu0 0
  %5558 = vmatpush1.bf16.msra.mxu0 0
  %5559 = vmatprep.subr.bf16.mxu0 0
  %5560 = vmatpush1.bf16.msra.mxu0 0
  %5561 = vmatprep.subr.bf16.mxu0 0
  %5562 = vmatpush1.bf16.msra.mxu0 0
  %5563 = vmatprep.subr.bf16.mxu0 0
  %5564 = vmatpush1.bf16.msra.mxu0 0
  %5565 = vmatprep.subr.bf16.mxu0 0
  %5566 = vmatpush1.bf16.msra.mxu0 0
  %5567 = vmatprep.subr.bf16.mxu0 0
  %5568 = vmatpush1.bf16.msra.mxu0 0
  %5569 = vmatprep.subr.bf16.mxu0 0
  %5570 = vmatpush1.bf16.msra.mxu0 0
  %5571 = vmatprep.subr.bf16.mxu0 0
  %5572 = vmatpush1.bf16.msra.mxu0 0
  %5573 = vmatprep.subr.bf16.mxu0 0
  %5574 = vmatpush1.bf16.msra.mxu0 0
  %5575 = vmatprep.subr.bf16.mxu0 0
  %5576 = vmatpush1.bf16.msra.mxu0 0
  %5577 = vmatprep.subr.bf16.mxu0 0
  %5578 = vmatpush1.bf16.msra.mxu0 0
  %5579 = vmatprep.mubr.bf16.mxu0 0
  %5580 = vmatmul.mubr.bf16.gmra.mrb[0].mxu0 %v5232
  %v5581 = vpop.f32.mrb[0].mxu0
  %v5582 = vadd.f32 0.0, %v5581
  %v5583 = vpop.f32.mrb[0].mxu0
  %v5584 = vpop.f32.mrb[0].mxu0
  %v5585 = vadd.f32 0.0, %v5584
  %v5586 = vpop.f32.mrb[0].mxu0
  %5587 = vmatprep.mubr.bf16.mxu0 0
  %5588 = vmatmul.mubr.bf16.gmra.mrb[0].mxu0 %v5235
  %v5589 = vpop.f32.mrb[0].mxu0
  %v5590 = vadd.f32 0.0, %v5589
  %v5591 = vpop.f32.mrb[0].mxu0
  %v5592 = vpop.f32.mrb[0].mxu0
  %v5593 = vadd.f32 0.0, %v5592
  %v5594 = vpop.f32.mrb[0].mxu0
  %5595 = vmatprep.mubr.bf16.mxu0 0
  %5596 = vmatmul.mubr.bf16.gmra.mrb[0].mxu0 %v5238
  %v5597 = vpop.f32.mrb[0].mxu0
  %v5598 = vpop.f32.mrb[0].mxu0
  %v5599 = vpop.f32.mrb[0].mxu0
  %v5600 = vpop.f32.mrb[0].mxu0
  %5601 = vmatprep.mubr.bf16.mxu0 0
  %5602 = vmatmul.mubr.bf16.gmra.mrb[0].mxu0 %v5241
  %v5603 = vpop.f32.mrb[0].mxu0
  %v5604 = vadd.f32 0.0, %v5603
  %v5605 = vpop.f32.mrb[0].mxu0
  %v5606 = vpop.f32.mrb[0].mxu0
  %v5607 = vadd.f32 0.0, %v5606
  %v5608 = vpop.f32.mrb[0].mxu0
  %5609 = vmatprep.mubr.bf16.mxu0 0
  %5610 = vmatmul.mubr.bf16.gmra.mrb[0].mxu0 %v5244
  %v5611 = vpop.f32.mrb[0].mxu0
  %v5612 = vadd.f32 0.0, %v5611
  %v5613 = vpop.f32.mrb[0].mxu0
  %v5614 = vpop.f32.mrb[0].mxu0
  %v5615 = vadd.f32 0.0, %v5614
  %v5616 = vpop.f32.mrb[0].mxu0
  %5617 = vmatprep.mubr.bf16.mxu0 0
  %5618 = vmatmul.mubr.bf16.gmra.mrb[0].mxu0 %v5247
  %v5619 = vpop.f32.mrb[0].mxu0
  %v5620 = vpop.f32.mrb[0].mxu0
  %v5621 = vpop.f32.mrb[0].mxu0
  %v5622 = vpop.f32.mrb[0].mxu0
  %5623 = vmatprep.mubr.bf16.mxu0 0
  %5624 = vmatmul.mubr.bf16.gmra.mrb[0].mxu0 %v5250
  %v5625 = vpop.f32.mrb[0].mxu0
  %v5626 = vadd.f32 0.0, %v5625
  %v5627 = vpop.f32.mrb[0].mxu0
  %v5628 = vpop.f32.mrb[0].mxu0
  %v5629 = vadd.f32 0.0, %v5628
  %v5630 = vpop.f32.mrb[0].mxu0
  %5631 = vmatprep.mubr.bf16.mxu0 0
  %5632 = vmatmul.mubr.bf16.gmra.mrb[0].mxu0 %v5253
  %v5633 = vpop.f32.mrb[0].mxu0
  %v5634 = vadd.f32 0.0, %v5633
  %v5635 = vpop.f32.mrb[0].mxu0
  %v5636 = vpop.f32.mrb[0].mxu0
  %v5637 = vadd.f32 0.0, %v5636
  %v5638 = vpop.f32.mrb[0].mxu0
  %5639 = vmatprep.mubr.bf16.mxu0 0
  %5640 = vmatmul.mubr.bf16.gmra.mrb[0].mxu0 %v5389
  %v5641 = vpop.f32.mrb[0].mxu0
  %v5642 = vpop.f32.mrb[0].mxu0
  %v5643 = vpop.f32.mrb[0].mxu0
  %v5644 = vpop.f32.mrb[0].mxu0
  %5645 = vmatprep.mubr.bf16.mxu0 0
  %5646 = vmatmul.mubr.bf16.gmra.mrb[0].mxu0 %v5542
  %v5647 = vpop.f32.mrb[0].mxu0
  %v5648 = vadd.f32 0.0, %v5647
  %v5649 = vpop.f32.mrb[0].mxu0
  %v5650 = vpop.f32.mrb[0].mxu0
  %v5651 = vadd.f32 0.0, %v5650
  %v5652 = vpop.f32.mrb[0].mxu0
  %5653 = vmatprep.mubr.bf16.mxu0 0
  %5654 = vmatmul.mubr.bf16.gmra.mrb[0].mxu0 %v5545
  %v5655 = vpop.f32.mrb[0].mxu0
  %v5656 = vadd.f32 0.0, %v5655
  %v5657 = vpop.f32.mrb[0].mxu0
  %v5658 = vpop.f32.mrb[0].mxu0
  %v5659 = vadd.f32 0.0, %v5658
  %v5660 = vpop.f32.mrb[0].mxu0
  %5661 = vdwg.mxu0
  %v5662 = vadd.f32 %v5506, %v5582
  %v5663 = vadd.f32 %v5507, %v5585
  %v5664 = vadd.f32 %v5508, %v5590
  %v5665 = vadd.f32 %v5509, %v5593
  %v5666 = vadd.f32 %v5510, %v5604
  %v5667 = vadd.f32 %v5511, %v5607
  %v5668 = vadd.f32 %v5512, %v5612
  %v5669 = vadd.f32 %v5513, %v5615
  %v5670 = vadd.f32 %v5514, %v5626
  %v5671 = vadd.f32 %v5515, %v5629
  %v5672 = vadd.f32 %v5516, %v5634
  %v5673 = vadd.f32 %v5517, %v5637
  %v5674 = vadd.f32 %v5518, %v5648
  %v5675 = vadd.f32 %v5519, %v5651
  %v5676 = vadd.f32 %v5520, %v5656
  %v5677 = vadd.f32 %v5521, %v5659
  %v5678 = vpack.c.bf16 %v5006, %v5005
  %v5679 = vpack.c.bf16 %v5008, %v5007
  %v5680 = vpack.c.bf16 %v5010, %v5009
  %s5681 = scalar_lea.vmem %s2, 208
  %v5682 = vld [vmem:[%s5681] sm:$0xf]
  %v5683 = vld [vmem:[%s5681 + $0x4] sm:$0xf]
  %v5684 = vld [vmem:[%s5681 + $0x8] sm:$0xf]
  %v5685 = vld [vmem:[%s5681 + $0xc] sm:$0xf]
  %v5690 = vunpack.c.l.b16 %v5682
  %v5691 = vunpack.c.l.b16 %v5683
  %v5692 = vunpack.c.l.b16 %v5684
  %v5693 = vunpack.c.l.b16 %v5685
  %v5694 = vpack.c.b16 %v5691, %v5690
  %v5695 = vpack.c.b16 %v5693, %v5692
  %v5699 = vsel %vm1638, %v5678, 0
  %v5702 = vsel %vm1638, %v5679, 0
  %v5705 = vsel %vm1638, %v5680, 0
  %5707 = vmatprep.subr.bf16.mxu0 0
  %5708 = vmatpush1.bf16.msra.mxu0 %v5694
  %5709 = vmatprep.subr.bf16.mxu0 0
  %5710 = vmatpush1.bf16.msra.mxu0 %v5695
  %5711 = vmatprep.subr.bf16.mxu0 0
  %5712 = vmatpush1.bf16.msra.mxu0 0
  %5713 = vmatprep.subr.bf16.mxu0 0
  %5714 = vmatpush1.bf16.msra.mxu0 0
  %5715 = vmatprep.subr.bf16.mxu0 0
  %5716 = vmatpush1.bf16.msra.mxu0 0
  %5717 = vmatprep.subr.bf16.mxu0 0
  %5718 = vmatpush1.bf16.msra.mxu0 0
  %5719 = vmatprep.subr.bf16.mxu0 0
  %5720 = vmatpush1.bf16.msra.mxu0 0
  %5721 = vmatprep.subr.bf16.mxu0 0
  %5722 = vmatpush1.bf16.msra.mxu0 0
  %5723 = vmatprep.subr.bf16.mxu0 0
  %5724 = vmatpush1.bf16.msra.mxu0 0
  %5725 = vmatprep.subr.bf16.mxu0 0
  %5726 = vmatpush1.bf16.msra.mxu0 0
  %5727 = vmatprep.subr.bf16.mxu0 0
  %5728 = vmatpush1.bf16.msra.mxu0 0
  %5729 = vmatprep.subr.bf16.mxu0 0
  %5730 = vmatpush1.bf16.msra.mxu0 0
  %5731 = vmatprep.subr.bf16.mxu0 0
  %5732 = vmatpush1.bf16.msra.mxu0 0
  %5733 = vmatprep.subr.bf16.mxu0 0
  %5734 = vmatpush1.bf16.msra.mxu0 0
  %5735 = vmatprep.subr.bf16.mxu0 0
  %5736 = vmatpush1.bf16.msra.mxu0 0
  %5737 = vmatprep.subr.bf16.mxu0 0
  %5738 = vmatpush1.bf16.msra.mxu0 0
  %5739 = vmatprep.mubr.bf16.mxu0 0
  %5740 = vmatmul.mubr.bf16.gmra.mrb[0].mxu0 %v5072
  %v5741 = vpop.f32.mrb[0].mxu0
  %v5742 = vadd.f32 0.0, %v5741
  %v5743 = vpop.f32.mrb[0].mxu0
  %v5744 = vpop.f32.mrb[0].mxu0
  %v5745 = vadd.f32 0.0, %v5744
  %v5746 = vpop.f32.mrb[0].mxu0
  %5747 = vmatprep.mubr.bf16.mxu0 0
  %5748 = vmatmul.mubr.bf16.gmra.mrb[0].mxu0 %v5075
  %v5749 = vpop.f32.mrb[0].mxu0
  %v5750 = vadd.f32 0.0, %v5749
  %v5751 = vpop.f32.mrb[0].mxu0
  %v5752 = vpop.f32.mrb[0].mxu0
  %v5753 = vadd.f32 0.0, %v5752
  %v5754 = vpop.f32.mrb[0].mxu0
  %5755 = vmatprep.mubr.bf16.mxu0 0
  %5756 = vmatmul.mubr.bf16.gmra.mrb[0].mxu0 %v5078
  %v5757 = vpop.f32.mrb[0].mxu0
  %v5758 = vpop.f32.mrb[0].mxu0
  %v5759 = vpop.f32.mrb[0].mxu0
  %v5760 = vpop.f32.mrb[0].mxu0
  %5761 = vmatprep.mubr.bf16.mxu0 0
  %5762 = vmatmul.mubr.bf16.gmra.mrb[0].mxu0 %v5081
  %v5763 = vpop.f32.mrb[0].mxu0
  %v5764 = vadd.f32 0.0, %v5763
  %v5765 = vpop.f32.mrb[0].mxu0
  %v5766 = vpop.f32.mrb[0].mxu0
  %v5767 = vadd.f32 0.0, %v5766
  %v5768 = vpop.f32.mrb[0].mxu0
  %5769 = vmatprep.mubr.bf16.mxu0 0
  %5770 = vmatmul.mubr.bf16.gmra.mrb[0].mxu0 %v5084
  %v5771 = vpop.f32.mrb[0].mxu0
  %v5772 = vadd.f32 0.0, %v5771
  %v5773 = vpop.f32.mrb[0].mxu0
  %v5774 = vpop.f32.mrb[0].mxu0
  %v5775 = vadd.f32 0.0, %v5774
  %v5776 = vpop.f32.mrb[0].mxu0
  %5777 = vmatprep.mubr.bf16.mxu0 0
  %5778 = vmatmul.mubr.bf16.gmra.mrb[0].mxu0 %v5087
  %v5779 = vpop.f32.mrb[0].mxu0
  %v5780 = vpop.f32.mrb[0].mxu0
  %v5781 = vpop.f32.mrb[0].mxu0
  %v5782 = vpop.f32.mrb[0].mxu0
  %5783 = vmatprep.mubr.bf16.mxu0 0
  %5784 = vmatmul.mubr.bf16.gmra.mrb[0].mxu0 %v5090
  %v5785 = vpop.f32.mrb[0].mxu0
  %v5786 = vadd.f32 0.0, %v5785
  %v5787 = vpop.f32.mrb[0].mxu0
  %v5788 = vpop.f32.mrb[0].mxu0
  %v5789 = vadd.f32 0.0, %v5788
  %v5790 = vpop.f32.mrb[0].mxu0
  %5791 = vmatprep.mubr.bf16.mxu0 0
  %5792 = vmatmul.mubr.bf16.gmra.mrb[0].mxu0 %v5093
  %v5793 = vpop.f32.mrb[0].mxu0
  %v5794 = vadd.f32 0.0, %v5793
  %v5795 = vpop.f32.mrb[0].mxu0
  %v5796 = vpop.f32.mrb[0].mxu0
  %v5797 = vadd.f32 0.0, %v5796
  %v5798 = vpop.f32.mrb[0].mxu0
  %5799 = vmatprep.mubr.bf16.mxu0 0
  %5800 = vmatmul.mubr.bf16.gmra.mrb[0].mxu0 %v5699
  %v5801 = vpop.f32.mrb[0].mxu0
  %v5802 = vpop.f32.mrb[0].mxu0
  %v5803 = vpop.f32.mrb[0].mxu0
  %v5804 = vpop.f32.mrb[0].mxu0
  %5805 = vmatprep.mubr.bf16.mxu0 0
  %5806 = vmatmul.mubr.bf16.gmra.mrb[0].mxu0 %v5702
  %v5807 = vpop.f32.mrb[0].mxu0
  %v5808 = vadd.f32 0.0, %v5807
  %v5809 = vpop.f32.mrb[0].mxu0
  %v5810 = vpop.f32.mrb[0].mxu0
  %v5811 = vadd.f32 0.0, %v5810
  %v5812 = vpop.f32.mrb[0].mxu0
  %5813 = vmatprep.mubr.bf16.mxu0 0
  %5814 = vmatmul.mubr.bf16.gmra.mrb[0].mxu0 %v5705
  %v5815 = vpop.f32.mrb[0].mxu0
  %v5816 = vadd.f32 0.0, %v5815
  %v5817 = vpop.f32.mrb[0].mxu0
  %v5818 = vpop.f32.mrb[0].mxu0
  %v5819 = vadd.f32 0.0, %v5818
  %v5820 = vpop.f32.mrb[0].mxu0
  %5821 = vdwg.mxu0
  %v5822 = vadd.f32 %v5662, %v5742
  %v5823 = vadd.f32 %v5663, %v5745
  %v5824 = vadd.f32 %v5664, %v5750
  %v5825 = vadd.f32 %v5665, %v5753
  %v5826 = vadd.f32 %v5666, %v5764
  %v5827 = vadd.f32 %v5667, %v5767
  %v5828 = vadd.f32 %v5668, %v5772
  %v5829 = vadd.f32 %v5669, %v5775
  %v5830 = vadd.f32 %v5670, %v5786
  %v5831 = vadd.f32 %v5671, %v5789
  %v5832 = vadd.f32 %v5672, %v5794
  %v5833 = vadd.f32 %v5673, %v5797
  %v5834 = vadd.f32 %v5674, %v5808
  %v5835 = vadd.f32 %v5675, %v5811
  %v5836 = vadd.f32 %v5676, %v5816
  %v5837 = vadd.f32 %v5677, %v5819
  %v5838 = vpack.c.bf16 %v5011, %v5010
  %s5839 = scalar_lea.vmem %s2, 224
  %v5840 = vld [vmem:[%s5839] sm:$0xf]
  %v5841 = vld [vmem:[%s5839 + $0x4] sm:$0xf]
  %v5842 = vld [vmem:[%s5839 + $0x8] sm:$0xf]
  %v5843 = vld [vmem:[%s5839 + $0xc] sm:$0xf]
  %v5848 = vunpack.c.l.b16 %v5840
  %v5849 = vunpack.c.l.b16 %v5841
  %v5850 = vunpack.c.l.b16 %v5842
  %v5851 = vunpack.c.l.b16 %v5843
  %v5852 = vpack.c.b16 %v5849, %v5848
  %v5853 = vpack.c.b16 %v5851, %v5850
  %v5857 = vsel %vm1638, %v5838, 0
  %5859 = vmatprep.subr.bf16.mxu0 0
  %5860 = vmatpush1.bf16.msra.mxu0 %v5852
  %5861 = vmatprep.subr.bf16.mxu0 0
  %5862 = vmatpush1.bf16.msra.mxu0 %v5853
  %5863 = vmatprep.subr.bf16.mxu0 0
  %5864 = vmatpush1.bf16.msra.mxu0 0
  %5865 = vmatprep.subr.bf16.mxu0 0
  %5866 = vmatpush1.bf16.msra.mxu0 0
  %5867 = vmatprep.subr.bf16.mxu0 0
  %5868 = vmatpush1.bf16.msra.mxu0 0
  %5869 = vmatprep.subr.bf16.mxu0 0
  %5870 = vmatpush1.bf16.msra.mxu0 0
  %5871 = vmatprep.subr.bf16.mxu0 0
  %5872 = vmatpush1.bf16.msra.mxu0 0
  %5873 = vmatprep.subr.bf16.mxu0 0
  %5874 = vmatpush1.bf16.msra.mxu0 0
  %5875 = vmatprep.subr.bf16.mxu0 0
  %5876 = vmatpush1.bf16.msra.mxu0 0
  %5877 = vmatprep.subr.bf16.mxu0 0
  %5878 = vmatpush1.bf16.msra.mxu0 0
  %5879 = vmatprep.subr.bf16.mxu0 0
  %5880 = vmatpush1.bf16.msra.mxu0 0
  %5881 = vmatprep.subr.bf16.mxu0 0
  %5882 = vmatpush1.bf16.msra.mxu0 0
  %5883 = vmatprep.subr.bf16.mxu0 0
  %5884 = vmatpush1.bf16.msra.mxu0 0
  %5885 = vmatprep.subr.bf16.mxu0 0
  %5886 = vmatpush1.bf16.msra.mxu0 0
  %5887 = vmatprep.subr.bf16.mxu0 0
  %5888 = vmatpush1.bf16.msra.mxu0 0
  %5889 = vmatprep.subr.bf16.mxu0 0
  %5890 = vmatpush1.bf16.msra.mxu0 0
  %5891 = vmatprep.mubr.bf16.mxu0 0
  %5892 = vmatmul.mubr.bf16.gmra.mrb[0].mxu0 %v5235
  %v5893 = vpop.f32.mrb[0].mxu0
  %v5894 = vadd.f32 0.0, %v5893
  %v5895 = vpop.f32.mrb[0].mxu0
  %v5896 = vpop.f32.mrb[0].mxu0
  %v5897 = vadd.f32 0.0, %v5896
  %v5898 = vpop.f32.mrb[0].mxu0
  %5899 = vmatprep.mubr.bf16.mxu0 0
  %5900 = vmatmul.mubr.bf16.gmra.mrb[0].mxu0 %v5238
  %v5901 = vpop.f32.mrb[0].mxu0
  %v5902 = vadd.f32 0.0, %v5901
  %v5903 = vpop.f32.mrb[0].mxu0
  %v5904 = vpop.f32.mrb[0].mxu0
  %v5905 = vadd.f32 0.0, %v5904
  %v5906 = vpop.f32.mrb[0].mxu0
  %5907 = vmatprep.mubr.bf16.mxu0 0
  %5908 = vmatmul.mubr.bf16.gmra.mrb[0].mxu0 %v5241
  %v5909 = vpop.f32.mrb[0].mxu0
  %v5910 = vpop.f32.mrb[0].mxu0
  %v5911 = vpop.f32.mrb[0].mxu0
  %v5912 = vpop.f32.mrb[0].mxu0
  %5913 = vmatprep.mubr.bf16.mxu0 0
  %5914 = vmatmul.mubr.bf16.gmra.mrb[0].mxu0 %v5244
  %v5915 = vpop.f32.mrb[0].mxu0
  %v5916 = vadd.f32 0.0, %v5915
  %v5917 = vpop.f32.mrb[0].mxu0
  %v5918 = vpop.f32.mrb[0].mxu0
  %v5919 = vadd.f32 0.0, %v5918
  %v5920 = vpop.f32.mrb[0].mxu0
  %5921 = vmatprep.mubr.bf16.mxu0 0
  %5922 = vmatmul.mubr.bf16.gmra.mrb[0].mxu0 %v5247
  %v5923 = vpop.f32.mrb[0].mxu0
  %v5924 = vadd.f32 0.0, %v5923
  %v5925 = vpop.f32.mrb[0].mxu0
  %v5926 = vpop.f32.mrb[0].mxu0
  %v5927 = vadd.f32 0.0, %v5926
  %v5928 = vpop.f32.mrb[0].mxu0
  %5929 = vmatprep.mubr.bf16.mxu0 0
  %5930 = vmatmul.mubr.bf16.gmra.mrb[0].mxu0 %v5250
  %v5931 = vpop.f32.mrb[0].mxu0
  %v5932 = vpop.f32.mrb[0].mxu0
  %v5933 = vpop.f32.mrb[0].mxu0
  %v5934 = vpop.f32.mrb[0].mxu0
  %5935 = vmatprep.mubr.bf16.mxu0 0
  %5936 = vmatmul.mubr.bf16.gmra.mrb[0].mxu0 %v5253
  %v5937 = vpop.f32.mrb[0].mxu0
  %v5938 = vadd.f32 0.0, %v5937
  %v5939 = vpop.f32.mrb[0].mxu0
  %v5940 = vpop.f32.mrb[0].mxu0
  %v5941 = vadd.f32 0.0, %v5940
  %v5942 = vpop.f32.mrb[0].mxu0
  %5943 = vmatprep.mubr.bf16.mxu0 0
  %5944 = vmatmul.mubr.bf16.gmra.mrb[0].mxu0 %v5389
  %v5945 = vpop.f32.mrb[0].mxu0
  %v5946 = vadd.f32 0.0, %v5945
  %v5947 = vpop.f32.mrb[0].mxu0
  %v5948 = vpop.f32.mrb[0].mxu0
  %v5949 = vadd.f32 0.0, %v5948
  %v5950 = vpop.f32.mrb[0].mxu0
  %5951 = vmatprep.mubr.bf16.mxu0 0
  %5952 = vmatmul.mubr.bf16.gmra.mrb[0].mxu0 %v5542
  %v5953 = vpop.f32.mrb[0].mxu0
  %v5954 = vpop.f32.mrb[0].mxu0
  %v5955 = vpop.f32.mrb[0].mxu0
  %v5956 = vpop.f32.mrb[0].mxu0
  %5957 = vmatprep.mubr.bf16.mxu0 0
  %5958 = vmatmul.mubr.bf16.gmra.mrb[0].mxu0 %v5545
  %v5959 = vpop.f32.mrb[0].mxu0
  %v5960 = vadd.f32 0.0, %v5959
  %v5961 = vpop.f32.mrb[0].mxu0
  %v5962 = vpop.f32.mrb[0].mxu0
  %v5963 = vadd.f32 0.0, %v5962
  %v5964 = vpop.f32.mrb[0].mxu0
  %5965 = vmatprep.mubr.bf16.mxu0 0
  %5966 = vmatmul.mubr.bf16.gmra.mrb[0].mxu0 %v5857
  %v5967 = vpop.f32.mrb[0].mxu0
  %v5968 = vadd.f32 0.0, %v5967
  %v5969 = vpop.f32.mrb[0].mxu0
  %v5970 = vpop.f32.mrb[0].mxu0
  %v5971 = vadd.f32 0.0, %v5970
  %v5972 = vpop.f32.mrb[0].mxu0
  %5973 = vdwg.mxu0
  %v5974 = vadd.f32 %v5822, %v5894
  %v5975 = vadd.f32 %v5823, %v5897
  %v5976 = vadd.f32 %v5824, %v5902
  %v5977 = vadd.f32 %v5825, %v5905
  %v5978 = vadd.f32 %v5826, %v5916
  %v5979 = vadd.f32 %v5827, %v5919
  %v5980 = vadd.f32 %v5828, %v5924
  %v5981 = vadd.f32 %v5829, %v5927
  %v5982 = vadd.f32 %v5830, %v5938
  %v5983 = vadd.f32 %v5831, %v5941
  %v5984 = vadd.f32 %v5832, %v5946
  %v5985 = vadd.f32 %v5833, %v5949
  %v5986 = vadd.f32 %v5834, %v5960
  %v5987 = vadd.f32 %v5835, %v5963
  %v5988 = vadd.f32 %v5836, %v5968
  %v5989 = vadd.f32 %v5837, %v5971
  %v5990 = vpack.c.bf16 %v5013, %v5012
  %v5991 = vpack.c.bf16 %v5015, %v5014
  %s5992 = scalar_lea.vmem %s2, 240
  %v5993 = vld [vmem:[%s5992] sm:$0xf]
  %v5994 = vld [vmem:[%s5992 + $0x4] sm:$0xf]
  %v5995 = vld [vmem:[%s5992 + $0x8] sm:$0xf]
  %v5996 = vld [vmem:[%s5992 + $0xc] sm:$0xf]
  %v6001 = vunpack.c.l.b16 %v5993
  %v6002 = vunpack.c.l.b16 %v5994
  %v6003 = vunpack.c.l.b16 %v5995
  %v6004 = vunpack.c.l.b16 %v5996
  %v6005 = vpack.c.b16 %v6002, %v6001
  %v6006 = vpack.c.b16 %v6004, %v6003
  %v6010 = vsel %vm1638, %v5990, 0
  %v6013 = vsel %vm1638, %v5991, 0
  %6015 = vmatprep.subr.bf16.mxu0 0
  %6016 = vmatpush1.bf16.msra.mxu0 %v6005
  %6017 = vmatprep.subr.bf16.mxu0 0
  %6018 = vmatpush1.bf16.msra.mxu0 %v6006
  %6019 = vmatprep.subr.bf16.mxu0 0
  %6020 = vmatpush1.bf16.msra.mxu0 0
  %6021 = vmatprep.subr.bf16.mxu0 0
  %6022 = vmatpush1.bf16.msra.mxu0 0
  %6023 = vmatprep.subr.bf16.mxu0 0
  %6024 = vmatpush1.bf16.msra.mxu0 0
  %6025 = vmatprep.subr.bf16.mxu0 0
  %6026 = vmatpush1.bf16.msra.mxu0 0
  %6027 = vmatprep.subr.bf16.mxu0 0
  %6028 = vmatpush1.bf16.msra.mxu0 0
  %6029 = vmatprep.subr.bf16.mxu0 0
  %6030 = vmatpush1.bf16.msra.mxu0 0
  %6031 = vmatprep.subr.bf16.mxu0 0
  %6032 = vmatpush1.bf16.msra.mxu0 0
  %6033 = vmatprep.subr.bf16.mxu0 0
  %6034 = vmatpush1.bf16.msra.mxu0 0
  %6035 = vmatprep.subr.bf16.mxu0 0
  %6036 = vmatpush1.bf16.msra.mxu0 0
  %6037 = vmatprep.subr.bf16.mxu0 0
  %6038 = vmatpush1.bf16.msra.mxu0 0
  %6039 = vmatprep.subr.bf16.mxu0 0
  %6040 = vmatpush1.bf16.msra.mxu0 0
  %6041 = vmatprep.subr.bf16.mxu0 0
  %6042 = vmatpush1.bf16.msra.mxu0 0
  %6043 = vmatprep.subr.bf16.mxu0 0
  %6044 = vmatpush1.bf16.msra.mxu0 0
  %6045 = vmatprep.subr.bf16.mxu0 0
  %6046 = vmatpush1.bf16.msra.mxu0 0
  %6047 = vmatprep.mubr.bf16.mxu0 0
  %6048 = vmatmul.mubr.bf16.gmra.mrb[0].mxu0 %v5241
  %v6049 = vpop.f32.mrb[0].mxu0
  %v6050 = vadd.f32 0.0, %v6049
  %v6051 = vpop.f32.mrb[0].mxu0
  %v6052 = vpop.f32.mrb[0].mxu0
  %v6053 = vadd.f32 0.0, %v6052
  %v6054 = vpop.f32.mrb[0].mxu0
  %6055 = vmatprep.mubr.bf16.mxu0 0
  %6056 = vmatmul.mubr.bf16.gmra.mrb[0].mxu0 %v5244
  %v6057 = vpop.f32.mrb[0].mxu0
  %v6058 = vadd.f32 0.0, %v6057
  %v6059 = vpop.f32.mrb[0].mxu0
  %v6060 = vpop.f32.mrb[0].mxu0
  %v6061 = vadd.f32 0.0, %v6060
  %v6062 = vpop.f32.mrb[0].mxu0
  %6063 = vmatprep.mubr.bf16.mxu0 0
  %6064 = vmatmul.mubr.bf16.gmra.mrb[0].mxu0 %v5247
  %v6065 = vpop.f32.mrb[0].mxu0
  %v6066 = vpop.f32.mrb[0].mxu0
  %v6067 = vpop.f32.mrb[0].mxu0
  %v6068 = vpop.f32.mrb[0].mxu0
  %6069 = vmatprep.mubr.bf16.mxu0 0
  %6070 = vmatmul.mubr.bf16.gmra.mrb[0].mxu0 %v5250
  %v6071 = vpop.f32.mrb[0].mxu0
  %v6072 = vadd.f32 0.0, %v6071
  %v6073 = vpop.f32.mrb[0].mxu0
  %v6074 = vpop.f32.mrb[0].mxu0
  %v6075 = vadd.f32 0.0, %v6074
  %v6076 = vpop.f32.mrb[0].mxu0
  %6077 = vmatprep.mubr.bf16.mxu0 0
  %6078 = vmatmul.mubr.bf16.gmra.mrb[0].mxu0 %v5253
  %v6079 = vpop.f32.mrb[0].mxu0
  %v6080 = vadd.f32 0.0, %v6079
  %v6081 = vpop.f32.mrb[0].mxu0
  %v6082 = vpop.f32.mrb[0].mxu0
  %v6083 = vadd.f32 0.0, %v6082
  %v6084 = vpop.f32.mrb[0].mxu0
  %6085 = vmatprep.mubr.bf16.mxu0 0
  %6086 = vmatmul.mubr.bf16.gmra.mrb[0].mxu0 %v5389
  %v6087 = vpop.f32.mrb[0].mxu0
  %v6088 = vpop.f32.mrb[0].mxu0
  %v6089 = vpop.f32.mrb[0].mxu0
  %v6090 = vpop.f32.mrb[0].mxu0
  %6091 = vmatprep.mubr.bf16.mxu0 0
  %6092 = vmatmul.mubr.bf16.gmra.mrb[0].mxu0 %v5542
  %v6093 = vpop.f32.mrb[0].mxu0
  %v6094 = vadd.f32 0.0, %v6093
  %v6095 = vpop.f32.mrb[0].mxu0
  %v6096 = vpop.f32.mrb[0].mxu0
  %v6097 = vadd.f32 0.0, %v6096
  %v6098 = vpop.f32.mrb[0].mxu0
  %6099 = vmatprep.mubr.bf16.mxu0 0
  %6100 = vmatmul.mubr.bf16.gmra.mrb[0].mxu0 %v5545
  %v6101 = vpop.f32.mrb[0].mxu0
  %v6102 = vadd.f32 0.0, %v6101
  %v6103 = vpop.f32.mrb[0].mxu0
  %v6104 = vpop.f32.mrb[0].mxu0
  %v6105 = vadd.f32 0.0, %v6104
  %v6106 = vpop.f32.mrb[0].mxu0
  %6107 = vmatprep.mubr.bf16.mxu0 0
  %6108 = vmatmul.mubr.bf16.gmra.mrb[0].mxu0 %v5857
  %v6109 = vpop.f32.mrb[0].mxu0
  %v6110 = vpop.f32.mrb[0].mxu0
  %v6111 = vpop.f32.mrb[0].mxu0
  %v6112 = vpop.f32.mrb[0].mxu0
  %6113 = vmatprep.mubr.bf16.mxu0 0
  %6114 = vmatmul.mubr.bf16.gmra.mrb[0].mxu0 %v6010
  %v6115 = vpop.f32.mrb[0].mxu0
  %v6116 = vadd.f32 0.0, %v6115
  %v6117 = vpop.f32.mrb[0].mxu0
  %v6118 = vpop.f32.mrb[0].mxu0
  %v6119 = vadd.f32 0.0, %v6118
  %v6120 = vpop.f32.mrb[0].mxu0
  %6121 = vmatprep.mubr.bf16.mxu0 0
  %6122 = vmatmul.mubr.bf16.gmra.mrb[0].mxu0 %v6013
  %v6123 = vpop.f32.mrb[0].mxu0
  %v6124 = vadd.f32 0.0, %v6123
  %v6125 = vpop.f32.mrb[0].mxu0
  %v6126 = vpop.f32.mrb[0].mxu0
  %v6127 = vadd.f32 0.0, %v6126
  %v6128 = vpop.f32.mrb[0].mxu0
  %6129 = vdwg.mxu0
  %v6130 = vadd.f32 %v5974, %v6050
  %v6131 = vadd.f32 %v5975, %v6053
  %v6132 = vadd.f32 %v5976, %v6058
  %v6133 = vadd.f32 %v5977, %v6061
  %v6134 = vadd.f32 %v5978, %v6072
  %v6135 = vadd.f32 %v5979, %v6075
  %v6136 = vadd.f32 %v5980, %v6080
  %v6137 = vadd.f32 %v5981, %v6083
  %v6138 = vadd.f32 %v5982, %v6094
  %v6139 = vadd.f32 %v5983, %v6097
  %v6140 = vadd.f32 %v5984, %v6102
  %v6141 = vadd.f32 %v5985, %v6105
  %v6142 = vadd.f32 %v5986, %v6116
  %v6143 = vadd.f32 %v5987, %v6119
  %v6144 = vadd.f32 %v5988, %v6124
  %v6145 = vadd.f32 %v5989, %v6127
  %v6146 = vpack.c.bf16 %v5012, %v5011
  %v6147 = vpack.c.bf16 %v5014, %v5013
  %v6148 = vpack.c.bf16 %v5016, %v5015
  %s6149 = scalar_lea.vmem %s2, 256
  %v6150 = vld [vmem:[%s6149] sm:$0xf]
  %v6151 = vld [vmem:[%s6149 + $0x4] sm:$0xf]
  %v6152 = vld [vmem:[%s6149 + $0x8] sm:$0xf]
  %v6153 = vld [vmem:[%s6149 + $0xc] sm:$0xf]
  %v6158 = vunpack.c.l.b16 %v6150
  %v6159 = vunpack.c.l.b16 %v6151
  %v6160 = vunpack.c.l.b16 %v6152
  %v6161 = vunpack.c.l.b16 %v6153
  %v6162 = vpack.c.b16 %v6159, %v6158
  %v6163 = vpack.c.b16 %v6161, %v6160
  %v6167 = vsel %vm1638, %v6146, 0
  %v6170 = vsel %vm1638, %v6147, 0
  %v6173 = vsel %vm1638, %v6148, 0
  %6175 = vmatprep.subr.bf16.mxu0 0
  %6176 = vmatpush1.bf16.msra.mxu0 %v6162
  %6177 = vmatprep.subr.bf16.mxu0 0
  %6178 = vmatpush1.bf16.msra.mxu0 %v6163
  %6179 = vmatprep.subr.bf16.mxu0 0
  %6180 = vmatpush1.bf16.msra.mxu0 0
  %6181 = vmatprep.subr.bf16.mxu0 0
  %6182 = vmatpush1.bf16.msra.mxu0 0
  %6183 = vmatprep.subr.bf16.mxu0 0
  %6184 = vmatpush1.bf16.msra.mxu0 0
  %6185 = vmatprep.subr.bf16.mxu0 0
  %6186 = vmatpush1.bf16.msra.mxu0 0
  %6187 = vmatprep.subr.bf16.mxu0 0
  %6188 = vmatpush1.bf16.msra.mxu0 0
  %6189 = vmatprep.subr.bf16.mxu0 0
  %6190 = vmatpush1.bf16.msra.mxu0 0
  %6191 = vmatprep.subr.bf16.mxu0 0
  %6192 = vmatpush1.bf16.msra.mxu0 0
  %6193 = vmatprep.subr.bf16.mxu0 0
  %6194 = vmatpush1.bf16.msra.mxu0 0
  %6195 = vmatprep.subr.bf16.mxu0 0
  %6196 = vmatpush1.bf16.msra.mxu0 0
  %6197 = vmatprep.subr.bf16.mxu0 0
  %6198 = vmatpush1.bf16.msra.mxu0 0
  %6199 = vmatprep.subr.bf16.mxu0 0
  %6200 = vmatpush1.bf16.msra.mxu0 0
  %6201 = vmatprep.subr.bf16.mxu0 0
  %6202 = vmatpush1.bf16.msra.mxu0 0
  %6203 = vmatprep.subr.bf16.mxu0 0
  %6204 = vmatpush1.bf16.msra.mxu0 0
  %6205 = vmatprep.subr.bf16.mxu0 0
  %6206 = vmatpush1.bf16.msra.mxu0 0
  %6207 = vmatprep.mubr.bf16.mxu0 0
  %6208 = vmatmul.mubr.bf16.gmra.mrb[0].mxu0 %v5081
  %v6209 = vpop.f32.mrb[0].mxu0
  %v6210 = vadd.f32 0.0, %v6209
  %v6211 = vpop.f32.mrb[0].mxu0
  %v6212 = vpop.f32.mrb[0].mxu0
  %v6213 = vadd.f32 0.0, %v6212
  %v6214 = vpop.f32.mrb[0].mxu0
  %6215 = vmatprep.mubr.bf16.mxu0 0
  %6216 = vmatmul.mubr.bf16.gmra.mrb[0].mxu0 %v5084
  %v6217 = vpop.f32.mrb[0].mxu0
  %v6218 = vadd.f32 0.0, %v6217
  %v6219 = vpop.f32.mrb[0].mxu0
  %v6220 = vpop.f32.mrb[0].mxu0
  %v6221 = vadd.f32 0.0, %v6220
  %v6222 = vpop.f32.mrb[0].mxu0
  %6223 = vmatprep.mubr.bf16.mxu0 0
  %6224 = vmatmul.mubr.bf16.gmra.mrb[0].mxu0 %v5087
  %v6225 = vpop.f32.mrb[0].mxu0
  %v6226 = vpop.f32.mrb[0].mxu0
  %v6227 = vpop.f32.mrb[0].mxu0
  %v6228 = vpop.f32.mrb[0].mxu0
  %6229 = vmatprep.mubr.bf16.mxu0 0
  %6230 = vmatmul.mubr.bf16.gmra.mrb[0].mxu0 %v5090
  %v6231 = vpop.f32.mrb[0].mxu0
  %v6232 = vadd.f32 0.0, %v6231
  %v6233 = vpop.f32.mrb[0].mxu0
  %v6234 = vpop.f32.mrb[0].mxu0
  %v6235 = vadd.f32 0.0, %v6234
  %v6236 = vpop.f32.mrb[0].mxu0
  %6237 = vmatprep.mubr.bf16.mxu0 0
  %6238 = vmatmul.mubr.bf16.gmra.mrb[0].mxu0 %v5093
  %v6239 = vpop.f32.mrb[0].mxu0
  %v6240 = vadd.f32 0.0, %v6239
  %v6241 = vpop.f32.mrb[0].mxu0
  %v6242 = vpop.f32.mrb[0].mxu0
  %v6243 = vadd.f32 0.0, %v6242
  %v6244 = vpop.f32.mrb[0].mxu0
  %6245 = vmatprep.mubr.bf16.mxu0 0
  %6246 = vmatmul.mubr.bf16.gmra.mrb[0].mxu0 %v5699
  %v6247 = vpop.f32.mrb[0].mxu0
  %v6248 = vpop.f32.mrb[0].mxu0
  %v6249 = vpop.f32.mrb[0].mxu0
  %v6250 = vpop.f32.mrb[0].mxu0
  %6251 = vmatprep.mubr.bf16.mxu0 0
  %6252 = vmatmul.mubr.bf16.gmra.mrb[0].mxu0 %v5702
  %v6253 = vpop.f32.mrb[0].mxu0
  %v6254 = vadd.f32 0.0, %v6253
  %v6255 = vpop.f32.mrb[0].mxu0
  %v6256 = vpop.f32.mrb[0].mxu0
  %v6257 = vadd.f32 0.0, %v6256
  %v6258 = vpop.f32.mrb[0].mxu0
  %6259 = vmatprep.mubr.bf16.mxu0 0
  %6260 = vmatmul.mubr.bf16.gmra.mrb[0].mxu0 %v5705
  %v6261 = vpop.f32.mrb[0].mxu0
  %v6262 = vadd.f32 0.0, %v6261
  %v6263 = vpop.f32.mrb[0].mxu0
  %v6264 = vpop.f32.mrb[0].mxu0
  %v6265 = vadd.f32 0.0, %v6264
  %v6266 = vpop.f32.mrb[0].mxu0
  %6267 = vmatprep.mubr.bf16.mxu0 0
  %6268 = vmatmul.mubr.bf16.gmra.mrb[0].mxu0 %v6167
  %v6269 = vpop.f32.mrb[0].mxu0
  %v6270 = vpop.f32.mrb[0].mxu0
  %v6271 = vpop.f32.mrb[0].mxu0
  %v6272 = vpop.f32.mrb[0].mxu0
  %6273 = vmatprep.mubr.bf16.mxu0 0
  %6274 = vmatmul.mubr.bf16.gmra.mrb[0].mxu0 %v6170
  %v6275 = vpop.f32.mrb[0].mxu0
  %v6276 = vadd.f32 0.0, %v6275
  %v6277 = vpop.f32.mrb[0].mxu0
  %v6278 = vpop.f32.mrb[0].mxu0
  %v6279 = vadd.f32 0.0, %v6278
  %v6280 = vpop.f32.mrb[0].mxu0
  %6281 = vmatprep.mubr.bf16.mxu0 0
  %6282 = vmatmul.mubr.bf16.gmra.mrb[0].mxu0 %v6173
  %v6283 = vpop.f32.mrb[0].mxu0
  %v6284 = vadd.f32 0.0, %v6283
  %v6285 = vpop.f32.mrb[0].mxu0
  %v6286 = vpop.f32.mrb[0].mxu0
  %v6287 = vadd.f32 0.0, %v6286
  %v6288 = vpop.f32.mrb[0].mxu0
  %6289 = vdwg.mxu0
  %v6290 = vadd.f32 %v6130, %v6210
  %v6291 = vadd.f32 %v6131, %v6213
  %v6292 = vadd.f32 %v6132, %v6218
  %v6293 = vadd.f32 %v6133, %v6221
  %v6294 = vadd.f32 %v6134, %v6232
  %v6295 = vadd.f32 %v6135, %v6235
  %v6296 = vadd.f32 %v6136, %v6240
  %v6297 = vadd.f32 %v6137, %v6243
  %v6298 = vadd.f32 %v6138, %v6254
  %v6299 = vadd.f32 %v6139, %v6257
  %v6300 = vadd.f32 %v6140, %v6262
  %v6301 = vadd.f32 %v6141, %v6265
  %v6302 = vadd.f32 %v6142, %v6276
  %v6303 = vadd.f32 %v6143, %v6279
  %v6304 = vadd.f32 %v6144, %v6284
  %v6305 = vadd.f32 %v6145, %v6287
  %v6306 = vpack.c.bf16 %v5017, %v5016
  %s6307 = scalar_lea.vmem %s2, 272
  %v6308 = vld [vmem:[%s6307] sm:$0xf]
  %v6309 = vld [vmem:[%s6307 + $0x4] sm:$0xf]
  %v6310 = vld [vmem:[%s6307 + $0x8] sm:$0xf]
  %v6311 = vld [vmem:[%s6307 + $0xc] sm:$0xf]
  %v6316 = vunpack.c.l.b16 %v6308
  %v6317 = vunpack.c.l.b16 %v6309
  %v6318 = vunpack.c.l.b16 %v6310
  %v6319 = vunpack.c.l.b16 %v6311
  %v6320 = vpack.c.b16 %v6317, %v6316
  %v6321 = vpack.c.b16 %v6319, %v6318
  %v6325 = vsel %vm1638, %v6306, 0
  %6327 = vmatprep.subr.bf16.mxu0 0
  %6328 = vmatpush1.bf16.msra.mxu0 %v6320
  %6329 = vmatprep.subr.bf16.mxu0 0
  %6330 = vmatpush1.bf16.msra.mxu0 %v6321
  %6331 = vmatprep.subr.bf16.mxu0 0
  %6332 = vmatpush1.bf16.msra.mxu0 0
  %6333 = vmatprep.subr.bf16.mxu0 0
  %6334 = vmatpush1.bf16.msra.mxu0 0
  %6335 = vmatprep.subr.bf16.mxu0 0
  %6336 = vmatpush1.bf16.msra.mxu0 0
  %6337 = vmatprep.subr.bf16.mxu0 0
  %6338 = vmatpush1.bf16.msra.mxu0 0
  %6339 = vmatprep.subr.bf16.mxu0 0
  %6340 = vmatpush1.bf16.msra.mxu0 0
  %6341 = vmatprep.subr.bf16.mxu0 0
  %6342 = vmatpush1.bf16.msra.mxu0 0
  %6343 = vmatprep.subr.bf16.mxu0 0
  %6344 = vmatpush1.bf16.msra.mxu0 0
  %6345 = vmatprep.subr.bf16.mxu0 0
  %6346 = vmatpush1.bf16.msra.mxu0 0
  %6347 = vmatprep.subr.bf16.mxu0 0
  %6348 = vmatpush1.bf16.msra.mxu0 0
  %6349 = vmatprep.subr.bf16.mxu0 0
  %6350 = vmatpush1.bf16.msra.mxu0 0
  %6351 = vmatprep.subr.bf16.mxu0 0
  %6352 = vmatpush1.bf16.msra.mxu0 0
  %6353 = vmatprep.subr.bf16.mxu0 0
  %6354 = vmatpush1.bf16.msra.mxu0 0
  %6355 = vmatprep.subr.bf16.mxu0 0
  %6356 = vmatpush1.bf16.msra.mxu0 0
  %6357 = vmatprep.subr.bf16.mxu0 0
  %6358 = vmatpush1.bf16.msra.mxu0 0
  %6359 = vmatprep.mubr.bf16.mxu0 0
  %6360 = vmatmul.mubr.bf16.gmra.mrb[0].mxu0 %v5244
  %v6361 = vpop.f32.mrb[0].mxu0
  %v6362 = vadd.f32 0.0, %v6361
  %v6363 = vpop.f32.mrb[0].mxu0
  %v6364 = vpop.f32.mrb[0].mxu0
  %v6365 = vadd.f32 0.0, %v6364
  %v6366 = vpop.f32.mrb[0].mxu0
  %6367 = vmatprep.mubr.bf16.mxu0 0
  %6368 = vmatmul.mubr.bf16.gmra.mrb[0].mxu0 %v5247
  %v6369 = vpop.f32.mrb[0].mxu0
  %v6370 = vadd.f32 0.0, %v6369
  %v6371 = vpop.f32.mrb[0].mxu0
  %v6372 = vpop.f32.mrb[0].mxu0
  %v6373 = vadd.f32 0.0, %v6372
  %v6374 = vpop.f32.mrb[0].mxu0
  %6375 = vmatprep.mubr.bf16.mxu0 0
  %6376 = vmatmul.mubr.bf16.gmra.mrb[0].mxu0 %v5250
  %v6377 = vpop.f32.mrb[0].mxu0
  %v6378 = vpop.f32.mrb[0].mxu0
  %v6379 = vpop.f32.mrb[0].mxu0
  %v6380 = vpop.f32.mrb[0].mxu0
  %6381 = vmatprep.mubr.bf16.mxu0 0
  %6382 = vmatmul.mubr.bf16.gmra.mrb[0].mxu0 %v5253
  %v6383 = vpop.f32.mrb[0].mxu0
  %v6384 = vadd.f32 0.0, %v6383
  %v6385 = vpop.f32.mrb[0].mxu0
  %v6386 = vpop.f32.mrb[0].mxu0
  %v6387 = vadd.f32 0.0, %v6386
  %v6388 = vpop.f32.mrb[0].mxu0
  %6389 = vmatprep.mubr.bf16.mxu0 0
  %6390 = vmatmul.mubr.bf16.gmra.mrb[0].mxu0 %v5389
  %v6391 = vpop.f32.mrb[0].mxu0
  %v6392 = vadd.f32 0.0, %v6391
  %v6393 = vpop.f32.mrb[0].mxu0
  %v6394 = vpop.f32.mrb[0].mxu0
  %v6395 = vadd.f32 0.0, %v6394
  %v6396 = vpop.f32.mrb[0].mxu0
  %6397 = vmatprep.mubr.bf16.mxu0 0
  %6398 = vmatmul.mubr.bf16.gmra.mrb[0].mxu0 %v5542
  %v6399 = vpop.f32.mrb[0].mxu0
  %v6400 = vpop.f32.mrb[0].mxu0
  %v6401 = vpop.f32.mrb[0].mxu0
  %v6402 = vpop.f32.mrb[0].mxu0
  %6403 = vmatprep.mubr.bf16.mxu0 0
  %6404 = vmatmul.mubr.bf16.gmra.mrb[0].mxu0 %v5545
  %v6405 = vpop.f32.mrb[0].mxu0
  %v6406 = vadd.f32 0.0, %v6405
  %v6407 = vpop.f32.mrb[0].mxu0
  %v6408 = vpop.f32.mrb[0].mxu0
  %v6409 = vadd.f32 0.0, %v6408
  %v6410 = vpop.f32.mrb[0].mxu0
  %6411 = vmatprep.mubr.bf16.mxu0 0
  %6412 = vmatmul.mubr.bf16.gmra.mrb[0].mxu0 %v5857
  %v6413 = vpop.f32.mrb[0].mxu0
  %v6414 = vadd.f32 0.0, %v6413
  %v6415 = vpop.f32.mrb[0].mxu0
  %v6416 = vpop.f32.mrb[0].mxu0
  %v6417 = vadd.f32 0.0, %v6416
  %v6418 = vpop.f32.mrb[0].mxu0
  %6419 = vmatprep.mubr.bf16.mxu0 0
  %6420 = vmatmul.mubr.bf16.gmra.mrb[0].mxu0 %v6010
  %v6421 = vpop.f32.mrb[0].mxu0
  %v6422 = vpop.f32.mrb[0].mxu0
  %v6423 = vpop.f32.mrb[0].mxu0
  %v6424 = vpop.f32.mrb[0].mxu0
  %6425 = vmatprep.mubr.bf16.mxu0 0
  %6426 = vmatmul.mubr.bf16.gmra.mrb[0].mxu0 %v6013
  %v6427 = vpop.f32.mrb[0].mxu0
  %v6428 = vadd.f32 0.0, %v6427
  %v6429 = vpop.f32.mrb[0].mxu0
  %v6430 = vpop.f32.mrb[0].mxu0
  %v6431 = vadd.f32 0.0, %v6430
  %v6432 = vpop.f32.mrb[0].mxu0
  %6433 = vmatprep.mubr.bf16.mxu0 0
  %6434 = vmatmul.mubr.bf16.gmra.mrb[0].mxu0 %v6325
  %v6435 = vpop.f32.mrb[0].mxu0
  %v6436 = vadd.f32 0.0, %v6435
  %v6437 = vpop.f32.mrb[0].mxu0
  %v6438 = vpop.f32.mrb[0].mxu0
  %v6439 = vadd.f32 0.0, %v6438
  %v6440 = vpop.f32.mrb[0].mxu0
  %6441 = vdwg.mxu0
  %v6442 = vadd.f32 %v6290, %v6362
  %v6443 = vadd.f32 %v6291, %v6365
  %v6444 = vadd.f32 %v6292, %v6370
  %v6445 = vadd.f32 %v6293, %v6373
  %v6446 = vadd.f32 %v6294, %v6384
  %v6447 = vadd.f32 %v6295, %v6387
  %v6448 = vadd.f32 %v6296, %v6392
  %v6449 = vadd.f32 %v6297, %v6395
  %v6450 = vadd.f32 %v6298, %v6406
  %v6451 = vadd.f32 %v6299, %v6409
  %v6452 = vadd.f32 %v6300, %v6414
  %v6453 = vadd.f32 %v6301, %v6417
  %v6454 = vadd.f32 %v6302, %v6428
  %v6455 = vadd.f32 %v6303, %v6431
  %v6456 = vadd.f32 %v6304, %v6436
  %v6457 = vadd.f32 %v6305, %v6439
  %v6458 = vmax.f32 %v6442, %v6443
  %v6459 = vmax.f32 %v6458, %v6446
  %v6460 = vmax.f32 %v6459, %v6447
  %v6461 = vlaneseq
  %v6462 = vshrl.u32 %v6461, 7
  %v6463 = vsub.s32 1, %v6462
  %v6464 = vrot.slane %v3456, %v6463
  %v6465 = vadd.f32 %v6460, %v6464
  %v6466 = vmax.f32 %v6444, %v6445
  %v6467 = vmax.f32 %v6466, %v6448
  %v6468 = vmax.f32 %v6467, %v6449
  %v6469 = vadd.f32 %v6468, %v6464
  %v6470 = vmax.f32 %v6450, %v6451
  %v6471 = vmax.f32 %v6470, %v6454
  %v6472 = vmax.f32 %v6471, %v6455
  %v6473 = vadd.f32 %v6472, %v6464
  %v6474 = vmax.f32 %v6452, %v6453
  %v6475 = vmax.f32 %v6474, %v6456
  %v6476 = vmax.f32 %v6475, %v6457
  %v6477 = vadd.f32 %v6476, %v6464
  %6479 = vrot.lane.b32.xlu0 %v6469, 64
  %v6480 = vpop.permute.xlu0 %6479
  %6483 = vrot.lane.b32.xlu0 %v6477, 64
  %v6484 = vpop.permute.xlu0 %6483
  %v6486 = vsel %vm3063, %v6465, %v6480
  %v6487 = vsel %vm3063, %v6473, %v6484
  %v6488 = vtanh.pop %v6486
  %v6489 = vtanh.pop %v6487
  %v6490 = vtanh.pop %v6488
  %v6491 = vtanh.pop %v6489
  %v6492 = vpack.c.bf16 %v6490, %v6490
  %v6493 = vpack.c.bf16 %v6491, %v6491
  %s6494 = scalar_lea.vmem %s3, 128
  %v6495 = vld [vmem:[%s6494] sm:$0xf]
  %v6496 = vld [vmem:[%s6494 + $0x4] sm:$0xf]
  %v6497 = vld [vmem:[%s6494 + $0x8] sm:$0xf]
  %v6498 = vld [vmem:[%s6494 + $0xc] sm:$0xf]
  %v6499 = vld [vmem:[%s6494 + $0x10] sm:$0xf]
  %v6500 = vld [vmem:[%s6494 + $0x14] sm:$0xf]
  %v6501 = vld [vmem:[%s6494 + $0x18] sm:$0xf]
  %v6502 = vld [vmem:[%s6494 + $0x1c] sm:$0xf]
  %v6503 = vld [vmem:[%s6494 + $0x20] sm:$0xf]
  %v6504 = vld [vmem:[%s6494 + $0x24] sm:$0xf]
  %v6505 = vld [vmem:[%s6494 + $0x28] sm:$0xf]
  %v6506 = vld [vmem:[%s6494 + $0x2c] sm:$0xf]
  %v6507 = vld [vmem:[%s6494 + $0x30] sm:$0xf]
  %v6508 = vld [vmem:[%s6494 + $0x34] sm:$0xf]
  %v6509 = vld [vmem:[%s6494 + $0x38] sm:$0xf]
  %v6510 = vld [vmem:[%s6494 + $0x3c] sm:$0xf]
  %v6511 = vld [vmem:[%s6494 + $0x40] sm:$0xf]
  %v6512 = vld [vmem:[%s6494 + $0x44] sm:$0xf]
  %v6513 = vld [vmem:[%s6494 + $0x48] sm:$0xf]
  %v6514 = vld [vmem:[%s6494 + $0x4c] sm:$0xf]
  %v6515 = vld [vmem:[%s6494 + $0x50] sm:$0xf]
  %v6516 = vld [vmem:[%s6494 + $0x54] sm:$0xf]
  %v6517 = vld [vmem:[%s6494 + $0x58] sm:$0xf]
  %v6518 = vld [vmem:[%s6494 + $0x5c] sm:$0xf]
  %v6519 = vld [vmem:[%s6494 + $0x60] sm:$0xf]
  %v6520 = vld [vmem:[%s6494 + $0x64] sm:$0xf]
  %v6521 = vld [vmem:[%s6494 + $0x68] sm:$0xf]
  %v6522 = vld [vmem:[%s6494 + $0x6c] sm:$0xf]
  %v6523 = vld [vmem:[%s6494 + $0x70] sm:$0xf]
  %v6524 = vld [vmem:[%s6494 + $0x74] sm:$0xf]
  %v6525 = vld [vmem:[%s6494 + $0x78] sm:$0xf]
  %v6526 = vld [vmem:[%s6494 + $0x7c] sm:$0xf]
  %v6527 = vlaneseq
  %v6528 = vshrl.u32 %v6527, 7
  %v6529 = vsub.s32 2, %v6528
  %v6530 = vrot.slane %v3456, %v6529
  %v6563 = vunpack.c.l.b16 %v6495
  %v6564 = vunpack.c.l.b16 %v6496
  %v6565 = vunpack.c.l.b16 %v6497
  %v6566 = vunpack.c.l.b16 %v6498
  %v6567 = vunpack.c.l.b16 %v6499
  %v6568 = vunpack.c.l.b16 %v6500
  %v6569 = vunpack.c.l.b16 %v6501
  %v6570 = vunpack.c.l.b16 %v6502
  %v6571 = vunpack.c.l.b16 %v6503
  %v6572 = vunpack.c.l.b16 %v6504
  %v6573 = vunpack.c.l.b16 %v6505
  %v6574 = vunpack.c.l.b16 %v6506
  %v6575 = vunpack.c.l.b16 %v6507
  %v6576 = vunpack.c.l.b16 %v6508
  %v6577 = vunpack.c.l.b16 %v6509
  %v6578 = vunpack.c.l.b16 %v6510
  %v6579 = vunpack.c.l.b16 %v6511
  %v6580 = vunpack.c.l.b16 %v6512
  %v6581 = vunpack.c.l.b16 %v6513
  %v6582 = vunpack.c.l.b16 %v6514
  %v6583 = vunpack.c.l.b16 %v6515
  %v6584 = vunpack.c.l.b16 %v6516
  %v6585 = vunpack.c.l.b16 %v6517
  %v6586 = vunpack.c.l.b16 %v6518
  %v6587 = vunpack.c.l.b16 %v6519
  %v6588 = vunpack.c.l.b16 %v6520
  %v6589 = vunpack.c.l.b16 %v6521
  %v6590 = vunpack.c.l.b16 %v6522
  %v6591 = vunpack.c.l.b16 %v6523
  %v6592 = vunpack.c.l.b16 %v6524
  %v6593 = vunpack.c.l.b16 %v6525
  %v6594 = vunpack.c.l.b16 %v6526
  %v6595 = vpack.c.b16 %v6564, %v6563
  %v6596 = vpack.c.b16 %v6566, %v6565
  %v6597 = vpack.c.b16 %v6568, %v6567
  %v6598 = vpack.c.b16 %v6570, %v6569
  %v6599 = vpack.c.b16 %v6572, %v6571
  %v6600 = vpack.c.b16 %v6574, %v6573
  %v6601 = vpack.c.b16 %v6576, %v6575
  %v6602 = vpack.c.b16 %v6578, %v6577
  %v6603 = vpack.c.b16 %v6580, %v6579
  %v6604 = vpack.c.b16 %v6582, %v6581
  %v6605 = vpack.c.b16 %v6584, %v6583
  %v6606 = vpack.c.b16 %v6586, %v6585
  %v6607 = vpack.c.b16 %v6588, %v6587
  %v6608 = vpack.c.b16 %v6590, %v6589
  %v6609 = vpack.c.b16 %v6592, %v6591
  %v6610 = vpack.c.b16 %v6594, %v6593
  %6627 = vmatprep.subr.bf16.mxu0 0
  %6628 = vmatpush1.bf16.msra.mxu0 %v6595
  %6629 = vmatprep.subr.bf16.mxu0 0
  %6630 = vmatpush1.bf16.msra.mxu0 %v6596
  %6631 = vmatprep.subr.bf16.mxu0 0
  %6632 = vmatpush1.bf16.msra.mxu0 %v6597
  %6633 = vmatprep.subr.bf16.mxu0 0
  %6634 = vmatpush1.bf16.msra.mxu0 %v6598
  %6635 = vmatprep.subr.bf16.mxu0 0
  %6636 = vmatpush1.bf16.msra.mxu0 %v6599
  %6637 = vmatprep.subr.bf16.mxu0 0
  %6638 = vmatpush1.bf16.msra.mxu0 %v6600
  %6639 = vmatprep.subr.bf16.mxu0 0
  %6640 = vmatpush1.bf16.msra.mxu0 %v6601
  %6641 = vmatprep.subr.bf16.mxu0 0
  %6642 = vmatpush1.bf16.msra.mxu0 %v6602
  %6643 = vmatprep.subr.bf16.mxu0 0
  %6644 = vmatpush1.bf16.msra.mxu0 %v6603
  %6645 = vmatprep.subr.bf16.mxu0 0
  %6646 = vmatpush1.bf16.msra.mxu0 %v6604
  %6647 = vmatprep.subr.bf16.mxu0 0
  %6648 = vmatpush1.bf16.msra.mxu0 %v6605
  %6649 = vmatprep.subr.bf16.mxu0 0
  %6650 = vmatpush1.bf16.msra.mxu0 %v6606
  %6651 = vmatprep.subr.bf16.mxu0 0
  %6652 = vmatpush1.bf16.msra.mxu0 %v6607
  %6653 = vmatprep.subr.bf16.mxu0 0
  %6654 = vmatpush1.bf16.msra.mxu0 %v6608
  %6655 = vmatprep.subr.bf16.mxu0 0
  %6656 = vmatpush1.bf16.msra.mxu0 %v6609
  %6657 = vmatprep.subr.bf16.mxu0 0
  %6658 = vmatpush1.bf16.msra.mxu0 %v6610
  %6659 = vmatprep.mubr.bf16.mxu0 %v6493
  %6660 = vmatmul.mubr.bf16.gmra.mrb[0].mxu0 %v6492
  %v6661 = vpop.f32.mrb[0].mxu0
  %v6662 = vadd.f32 %v6530, %v6661
  %v6663 = vpop.f32.mrb[0].mxu0
  %v6664 = vpop.f32.mrb[0].mxu0
  %v6665 = vpop.f32.mrb[0].mxu0
  %6666 = vdwg.mxu0
  %v6667 = vtanh.pop %v6662
  %v6668 = vpack.c.bf16 %v6667, %v6667
  %s6669 = scalar_lea.vmem %s4, 60
  %v6670 = vld [vmem:[%s6669] sm:$0xf]
  %v6671 = vld [vmem:[%s6669 + $0x4] sm:$0xf]
  %v6672 = vld [vmem:[%s6669 + $0x8] sm:$0xf]
  %v6673 = vld [vmem:[%s6669 + $0xc] sm:$0xf]
  %v6674 = vld [vmem:[%s6669 + $0x10] sm:$0xf]
  %v6675 = vld [vmem:[%s6669 + $0x14] sm:$0xf]
  %v6676 = vld [vmem:[%s6669 + $0x18] sm:$0xf]
  %v6677 = vld [vmem:[%s6669 + $0x1c] sm:$0xf]
  %v6678 = vld [vmem:[%s6669 + $0x20] sm:$0xf]
  %v6679 = vld [vmem:[%s6669 + $0x24] sm:$0xf]
  %v6680 = vld [vmem:[%s6669 + $0x28] sm:$0xf]
  %v6681 = vld [vmem:[%s6669 + $0x2c] sm:$0xf]
  %v6682 = vld [vmem:[%s6669 + $0x30] sm:$0xf]
  %v6683 = vld [vmem:[%s6669 + $0x34] sm:$0xf]
  %v6684 = vld [vmem:[%s6669 + $0x38] sm:$0xf]
  %v6685 = vlaneseq
  %v6686 = vshrl.u32 %v6685, 7
  %v6687 = vsub.s32 3, %v6686
  %v6688 = vrot.slane %v3456, %v6687
  %v6704 = vunpack.c.l.b16 %v6670
  %v6705 = vunpack.c.l.b16 %v6671
  %v6706 = vunpack.c.l.b16 %v6672
  %v6707 = vunpack.c.l.b16 %v6673
  %v6708 = vunpack.c.l.b16 %v6674
  %v6709 = vunpack.c.l.b16 %v6675
  %v6710 = vunpack.c.l.b16 %v6676
  %v6711 = vunpack.c.l.b16 %v6677
  %v6712 = vunpack.c.l.b16 %v6678
  %v6713 = vunpack.c.l.b16 %v6679
  %v6714 = vunpack.c.l.b16 %v6680
  %v6715 = vunpack.c.l.b16 %v6681
  %v6716 = vunpack.c.l.b16 %v6682
  %v6717 = vunpack.c.l.b16 %v6683
  %v6718 = vunpack.c.l.b16 %v6684
  %v6719 = vpack.c.b16 %v6705, %v6704
  %v6720 = vpack.c.b16 %v6707, %v6706
  %v6721 = vpack.c.b16 %v6709, %v6708
  %v6722 = vpack.c.b16 %v6711, %v6710
  %v6723 = vpack.c.b16 %v6713, %v6712
  %v6724 = vpack.c.b16 %v6715, %v6714
  %v6725 = vpack.c.b16 %v6717, %v6716
  %v6726 = vpack.c.b16 %v6718, %v6718
  %v6735 = vsel %vm3310, %v6668, 0
  %v6738 = vsel %vm759, %v6726, 0
  %6740 = vmatprep.subr.bf16.mxu0 0
  %6741 = vmatpush1.bf16.msra.mxu0 %v6719
  %6742 = vmatprep.subr.bf16.mxu0 0
  %6743 = vmatpush1.bf16.msra.mxu0 %v6720
  %6744 = vmatprep.subr.bf16.mxu0 0
  %6745 = vmatpush1.bf16.msra.mxu0 %v6721
  %6746 = vmatprep.subr.bf16.mxu0 0
  %6747 = vmatpush1.bf16.msra.mxu0 %v6722
  %6748 = vmatprep.subr.bf16.mxu0 0
  %6749 = vmatpush1.bf16.msra.mxu0 %v6723
  %6750 = vmatprep.subr.bf16.mxu0 0
  %6751 = vmatpush1.bf16.msra.mxu0 %v6724
  %6752 = vmatprep.subr.bf16.mxu0 0
  %6753 = vmatpush1.bf16.msra.mxu0 %v6725
  %6754 = vmatprep.subr.bf16.mxu0 0
  %6755 = vmatpush1.bf16.msra.mxu0 %v6738
  %6756 = vmatprep.subr.bf16.mxu0 0
  %6757 = vmatpush1.bf16.msra.mxu0 0
  %6758 = vmatprep.subr.bf16.mxu0 0
  %6759 = vmatpush1.bf16.msra.mxu0 0
  %6760 = vmatprep.subr.bf16.mxu0 0
  %6761 = vmatpush1.bf16.msra.mxu0 0
  %6762 = vmatprep.subr.bf16.mxu0 0
  %6763 = vmatpush1.bf16.msra.mxu0 0
  %6764 = vmatprep.subr.bf16.mxu0 0
  %6765 = vmatpush1.bf16.msra.mxu0 0
  %6766 = vmatprep.subr.bf16.mxu0 0
  %6767 = vmatpush1.bf16.msra.mxu0 0
  %6768 = vmatprep.subr.bf16.mxu0 0
  %6769 = vmatpush1.bf16.msra.mxu0 0
  %6770 = vmatprep.subr.bf16.mxu0 0
  %6771 = vmatpush1.bf16.msra.mxu0 0
  %6772 = vmatprep.mubr.bf16.mxu0 0
  %6773 = vmatmul.mubr.bf16.gmra.mrb[0].mxu0 %v6735
  %v6774 = vpop.f32.mrb[0].mxu0
  %v6775 = vadd.f32 %v6688, %v6774
  %v6776 = vpop.f32.mrb[0].mxu0
  %v6777 = vpop.f32.mrb[0].mxu0
  %v6778 = vpop.f32.mrb[0].mxu0
  %6779 = vdwg.mxu0
  %v6780 = vtanh.pop %v6775
  %v6781 = vpack.c.bf16 %v6780, %v6780
  %v6782 = vlaneseq
  %v6783 = vshrl.u32 %v6782, 7
  %v6784 = vsub.s32 4, %v6783
  %v6785 = vrot.slane %v3456, %v6784
  %v6787 = vsel %vm3407, %v6781, 0
  %6789 = vmatprep.subr.bf16.mxu0 0
  %6790 = vmatpush1.bf16.msra.mxu0 %v3396
  %6791 = vmatprep.subr.bf16.mxu0 0
  %6792 = vmatpush1.bf16.msra.mxu0 %v3397
  %6793 = vmatprep.subr.bf16.mxu0 0
  %6794 = vmatpush1.bf16.msra.mxu0 %v3398
  %6795 = vmatprep.subr.bf16.mxu0 0
  %6796 = vmatpush1.bf16.msra.mxu0 %v3399
  %6797 = vmatprep.subr.bf16.mxu0 0
  %6798 = vmatpush1.bf16.msra.mxu0 %v3400
  %6799 = vmatprep.subr.bf16.mxu0 0
  %6800 = vmatpush1.bf16.msra.mxu0 %v3413
  %6801 = vmatprep.subr.bf16.mxu0 0
  %6802 = vmatpush1.bf16.msra.mxu0 0
  %6803 = vmatprep.subr.bf16.mxu0 0
  %6804 = vmatpush1.bf16.msra.mxu0 0
  %6805 = vmatprep.subr.bf16.mxu0 0
  %6806 = vmatpush1.bf16.msra.mxu0 0
  %6807 = vmatprep.subr.bf16.mxu0 0
  %6808 = vmatpush1.bf16.msra.mxu0 0
  %6809 = vmatprep.subr.bf16.mxu0 0
  %6810 = vmatpush1.bf16.msra.mxu0 0
  %6811 = vmatprep.subr.bf16.mxu0 0
  %6812 = vmatpush1.bf16.msra.mxu0 0
  %6813 = vmatprep.subr.bf16.mxu0 0
  %6814 = vmatpush1.bf16.msra.mxu0 0
  %6815 = vmatprep.subr.bf16.mxu0 0
  %6816 = vmatpush1.bf16.msra.mxu0 0
  %6817 = vmatprep.subr.bf16.mxu0 0
  %6818 = vmatpush1.bf16.msra.mxu0 0
  %6819 = vmatprep.subr.bf16.mxu0 0
  %6820 = vmatpush1.bf16.msra.mxu0 0
  %6821 = vmatprep.mubr.bf16.mxu0 0
  %6822 = vmatmul.mubr.bf16.gmra.mrb[0].mxu0 %v6787
  %v6823 = vpop.f32.mrb[0].mxu0
  %v6824 = vadd.f32 %v6785, %v6823
  %v6825 = vpop.f32.mrb[0].mxu0
  %v6826 = vpop.f32.mrb[0].mxu0
  %v6827 = vpop.f32.mrb[0].mxu0
  %6828 = vdwg.mxu0
  %v6829 = vpack.c.bf16 %v3450, %v3450
  %v6830 = vld [vmem:[%s6] sm:$0xf]
  %v6831 = vld [vmem:[%s6 + $0x4] sm:$0x1]
  %v6832 = vpack.c.bf16 %v6824, %v6824
  %s6833 = scalar_lea.vmem %s6, 8
  %v6834 = vld [vmem:[%s6833] sm:$0xf]
  %v6835 = vld [vmem:[%s6833 + $0x4] sm:$0x1]
  %v6838 = vunpack.c.l.b16 %v6834
  %v6839 = vunpack.c.l.b16 %v6835
  %v6840 = vpack.c.b16 %v6839, %v6838
  %vm6841 = vcmask 80896
  %v6843 = vsel %vm6841, %v6832, 0
  %v6846 = vsel %vm760, %v6840, 0
  %6848 = vmatprep.subr.bf16.mxu0 0
  %6849 = vmatpush1.bf16.msra.mxu0 %v6846
  %6850 = vmatprep.subr.bf16.mxu0 0
  %6851 = vmatpush1.bf16.msra.mxu0 0
  %6852 = vmatprep.subr.bf16.mxu0 0
  %6853 = vmatpush1.bf16.msra.mxu0 0
  %6854 = vmatprep.subr.bf16.mxu0 0
  %6855 = vmatpush1.bf16.msra.mxu0 0
  %6856 = vmatprep.subr.bf16.mxu0 0
  %6857 = vmatpush1.bf16.msra.mxu0 0
  %6858 = vmatprep.subr.bf16.mxu0 0
  %6859 = vmatpush1.bf16.msra.mxu0 0
  %6860 = vmatprep.subr.bf16.mxu0 0
  %6861 = vmatpush1.bf16.msra.mxu0 0
  %6862 = vmatprep.subr.bf16.mxu0 0
  %6863 = vmatpush1.bf16.msra.mxu0 0
  %6864 = vmatprep.subr.bf16.mxu0 0
  %6865 = vmatpush1.bf16.msra.mxu0 0
  %6866 = vmatprep.subr.bf16.mxu0 0
  %6867 = vmatpush1.bf16.msra.mxu0 0
  %6868 = vmatprep.subr.bf16.mxu0 0
  %6869 = vmatpush1.bf16.msra.mxu0 0
  %6870 = vmatprep.subr.bf16.mxu0 0
  %6871 = vmatpush1.bf16.msra.mxu0 0
  %6872 = vmatprep.subr.bf16.mxu0 0
  %6873 = vmatpush1.bf16.msra.mxu0 0
  %6874 = vmatprep.subr.bf16.mxu0 0
  %6875 = vmatpush1.bf16.msra.mxu0 0
  %6876 = vmatprep.subr.bf16.mxu0 0
  %6877 = vmatpush1.bf16.msra.mxu0 0
  %6878 = vmatprep.subr.bf16.mxu0 0
  %6879 = vmatpush1.bf16.msra.mxu0 0
  %6880 = vmatprep.mubr.bf16.mxu0 0
  %6881 = vmatmul.mubr.bf16.gmra.mrb[0].mxu0 %v6843
  %v6882 = vpop.f32.mrb[0].mxu0
  %v6883 = vadd.f32 0.0, %v6882
  %v6884 = vpop.f32.mrb[0].mxu0
  %v6885 = vpop.f32.mrb[0].mxu0
  %v6886 = vpop.f32.mrb[0].mxu0
  %6887 = vdwg.mxu0
  %v6890 = vunpack.c.l.b16 %v6830
  %v6891 = vunpack.c.l.b16 %v6831
  %v6892 = vpack.c.b16 %v6891, %v6890
  %v6894 = vsel %vm6841, %v6829, 0
  %v6897 = vsel %vm760, %v6892, 0
  %6899 = vmatprep.subr.bf16.mxu0 0
  %6900 = vmatpush1.bf16.msra.mxu0 %v6897
  %6901 = vmatprep.subr.bf16.mxu0 0
  %6902 = vmatpush1.bf16.msra.mxu0 0
  %6903 = vmatprep.subr.bf16.mxu0 0
  %6904 = vmatpush1.bf16.msra.mxu0 0
  %6905 = vmatprep.subr.bf16.mxu0 0
  %6906 = vmatpush1.bf16.msra.mxu0 0
  %6907 = vmatprep.subr.bf16.mxu0 0
  %6908 = vmatpush1.bf16.msra.mxu0 0
  %6909 = vmatprep.subr.bf16.mxu0 0
  %6910 = vmatpush1.bf16.msra.mxu0 0
  %6911 = vmatprep.subr.bf16.mxu0 0
  %6912 = vmatpush1.bf16.msra.mxu0 0
  %6913 = vmatprep.subr.bf16.mxu0 0
  %6914 = vmatpush1.bf16.msra.mxu0 0
  %6915 = vmatprep.subr.bf16.mxu0 0
  %6916 = vmatpush1.bf16.msra.mxu0 0
  %6917 = vmatprep.subr.bf16.mxu0 0
  %6918 = vmatpush1.bf16.msra.mxu0 0
  %6919 = vmatprep.subr.bf16.mxu0 0
  %6920 = vmatpush1.bf16.msra.mxu0 0
  %6921 = vmatprep.subr.bf16.mxu0 0
  %6922 = vmatpush1.bf16.msra.mxu0 0
  %6923 = vmatprep.subr.bf16.mxu0 0
  %6924 = vmatpush1.bf16.msra.mxu0 0
  %6925 = vmatprep.subr.bf16.mxu0 0
  %6926 = vmatpush1.bf16.msra.mxu0 0
  %6927 = vmatprep.subr.bf16.mxu0 0
  %6928 = vmatpush1.bf16.msra.mxu0 0
  %6929 = vmatprep.subr.bf16.mxu0 0
  %6930 = vmatpush1.bf16.msra.mxu0 0
  %6931 = vmatprep.mubr.bf16.mxu0 0
  %6932 = vmatmul.mubr.bf16.gmra.mrb[0].mxu0 %v6894
  %v6933 = vpop.f32.mrb[0].mxu0
  %v6934 = vadd.f32 %v6883, %v6933
  %v6935 = vpop.f32.mrb[0].mxu0
  %v6936 = vpop.f32.mrb[0].mxu0
  %v6937 = vpop.f32.mrb[0].mxu0
  %6938 = vdwg.mxu0
  %v6939 = vlaneseq
  %v6940 = vshrl.u32 %v6939, 7
  %v6941 = vsub.s32 5, %v6940
  %v6942 = vrot.slane %v30, %v6941
  %v6943 = vadd.f32 %v6934, %v6942
  %6944 = vst [vmem:[%s8] sm:$0xff] %v3450
  %s6945 = scalar_lea.vmem %s8, 8
  %6946 = vst [vmem:[%s6945] sm:$0xff] %v6824
  %s6947 = scalar_lea.vmem %s8, 16
  %6948 = vst [vmem:[%s6947] sm:$0xff] %v6943
  // Predicated region
  $region34: #{cnnet_forward_prepared.1} parent=0 // pred_check
    _
  $region35: #{cnnet_forward_prepared.1} parent=0 // pred_check_branch
    %6950 = sbr.rel (0) target = $region37
  $region36: #{cnnet_forward_prepared.1} parent=0 // pred_region
    _
  $region37: #{cnnet_forward_prepared.1} parent=0 // pred_fallthru
    _
  // Predicated region
  $region38: #{cnnet_forward_prepared.1} parent=0 // pred_check
    _
  $region39: #{cnnet_forward_prepared.1} parent=0 // pred_check_branch
    %6952 = sbr.rel (0) target = $region41
  $region40: #{cnnet_forward_prepared.1} parent=0 // pred_region
    _
  $region41: #{cnnet_forward_prepared.1} parent=0 // pred_fallthru
    _

</llo_original>
